<compile_context>
chip_gen: v7x
topology: tpu7x:2x2x1
jax: 0.10.0
libtpu: 0.0.40
codegen_flags: <defaults>
</compile_context>

<pallas_src>
import math
import functools

import jax
import jax.numpy as jnp
import numpy as np
from jax.experimental import pallas as pl
from jax.experimental.pallas import tpu as pltpu


LN_EPS = 1e-5  # PyTorch nn.LayerNorm default


def _layernorm(x, gamma, beta):
    mu = jnp.mean(x, axis=-1, keepdims=True)
    xc = x - mu
    var = jnp.mean(xc * xc, axis=-1, keepdims=True)
    inv = jax.lax.rsqrt(var + LN_EPS)
    return xc * inv * gamma + beta


def _cross_layer_kernel(x_ref, cross_ref,
                        wq_ref, bq_ref, wkv_ref, bkv_ref,
                        wo_ref, bo_ref,
                        g1_ref, be1_ref,
                        w1_ref, b1_ref, w2_ref, b2_ref,
                        g2_ref, be2_ref,
                        out_ref,
                        *, n_heads, seq_q, seq_kv, batch_block):
    f32 = jnp.float32
    mm = jnp.bfloat16  # MXU operand dtype; accumulation stays in f32.

    BB, L, S, H = batch_block, seq_q, seq_kv, n_heads
    hd = wq_ref.shape[-1]
    dk = hd // H

    xb = x_ref[...]                  # (BB*L, D) f32, queries
    cb = cross_ref[...]              # (BB*S, D) f32, keys/values source

    # ---- projections: Q (scale pre-folded into wq/bq) and fused K|V.
    # Weights arrive pre-cast to bf16; only the activations get cast here.
    q = jnp.dot(xb.astype(mm), wq_ref[...],
                preferred_element_type=f32) + bq_ref[...]          # (BB*L, HD)
    kv = jnp.dot(cb.astype(mm), wkv_ref[...],
                 preferred_element_type=f32) + bkv_ref[...]        # (BB*S, 2*HD)

    # Row-split into (batch, seq, feat).  L and S are multiples of 8 whenever
    # BB > 1 (enforced by the wrapper), so the (8,128) sublane tiling is kept.
    q3 = q.reshape(BB, L, hd)
    kv3 = kv.reshape(BB, S, 2 * hd)

    # ---- attention: one batch-dim contraction per head; batch block is the
    # dot_general batch dim (no unrolled per-batch-element loop, no stack).
    o_heads = []
    for h in range(H):
        qh = q3[:, :, h * dk:(h + 1) * dk].astype(mm)              # (BB, L, dk)
        kh = kv3[:, :, h * dk:(h + 1) * dk].astype(mm)             # (BB, S, dk)
        vh = kv3[:, :, hd + h * dk:hd + (h + 1) * dk].astype(mm)   # (BB, S, dk)

        s = jnp.einsum('bld,bsd->bls', qh, kh,
                       preferred_element_type=f32)                 # (BB, L, S) f32
        s = s - jnp.max(s, axis=-1, keepdims=True)
        p = jnp.exp(s)
        # EUP approximate reciprocal (~1e-3 rel error) -- fine for eval-mode.
        p = p * pl.reciprocal(jnp.sum(p, axis=-1, keepdims=True), approx=True)
        o_heads.append(jnp.einsum('bls,bsd->bld', p.astype(mm), vh,
                                  preferred_element_type=f32).astype(mm))

    # ---- merge heads once, single full-K output projection (HD -> D).
    o = jnp.concatenate(o_heads, axis=-1).reshape(BB * L, hd)      # (BB*L, HD) bf16
    ctx = jnp.dot(o, wo_ref[...], preferred_element_type=f32) + bo_ref[...]

    # ---- residual + norm1  (dropout == identity in eval mode)
    xn = _layernorm(xb + ctx, g1_ref[...], be1_ref[...])

    # ---- feed-forward: conv1d(k=1) -> relu -> conv1d(k=1)  (pointwise MLP)
    y = jnp.dot(xn.astype(mm), w1_ref[...],
                preferred_element_type=f32) + b1_ref[...]           # (BB*L, d_ff)
    y = jnp.maximum(y, 0.0)
    y = jnp.dot(y.astype(mm), w2_ref[...],
                preferred_element_type=f32) + b2_ref[...]           # (BB*L, D)

    # ---- residual + norm2
    out_ref[...] = _layernorm(xn + y, g2_ref[...], be2_ref[...]).astype(out_ref.dtype)


def _const_index_map(ndim):
    return lambda b: (0,) * ndim


def _tpu_defaults():
    """VMEM budget, minimum grid steps and row cap for the local part.

    v7x: 64 MiB VMEM per TC, 2 TCs  -> tighter budget, keep >=2 grid steps.
    v5e/v6e: 128 MiB VMEM, 1 TC     -> bigger budget, a single grid step is
                                        fine (no second core to feed).
    """
    vmem_budget = 32 * 1024 * 1024
    min_steps = 2
    max_rows = 512
    try:
        info = pltpu.get_tpu_info()
        cap = int(getattr(info, "vmem_capacity_bytes", 0))
        if cap >= 96 * 1024 * 1024:
            vmem_budget = 64 * 1024 * 1024
            min_steps = 1
            max_rows = 1024
    except Exception:
        pass
    return vmem_budget, min_steps, max_rows


def _pick_batch_block(B, L, S, min_steps, max_rows):
    """Batch elements per grid step.

    Bigger blocks amortize the ~0.35us/step overhead; blocks > 1 are only
    allowed when L and S are sublane (8) aligned so the in-kernel row-split
    reshapes stay layout-preserving.  Keep >= min_steps grid steps (feeds both
    v7x TensorCores) and cap the row count for VMEM headroom.
    """
    if L % 8 == 0 and S % 8 == 0:
        valid = [bb for bb in range(1, B + 1) if B % bb == 0]
    else:
        valid = [1]
    preferred = [bb for bb in valid
                 if bb * max(L, S) <= max_rows and (B // bb >= min_steps or bb == 1)]
    return max(preferred) if preferred else 1


def cross_layer_forward(x, cross, params, *, n_heads, batch_block=None):
    """x: (B, L, D), cross: (B, S, D).  Returns (B, L, D)."""
    B, L, D = x.shape
    S = cross.shape[1]
    (wq, bq, wk, bk, wv, bv, wo, bo, g1, be1, w1, b1, w2, b2, g2, be2) = params
    hd = wq.shape[1]
    assert hd % n_heads == 0
    dk = hd // n_heads

    vmem_budget, min_steps, max_rows = _tpu_defaults()
    if batch_block is None:
        batch_block = _pick_batch_block(B, L, S, min_steps, max_rows)
    assert B % batch_block == 0

    mm = jnp.bfloat16
    scale = 1.0 / math.sqrt(dk)
    # One-time static parameter prep (not per-step activation work):
    #   * fold the 1/sqrt(dk) softmax scale into wq / bq,
    #   * fuse the K and V projection weights into one (D, 2*HD) matrix,
    #   * pre-cast the big matmul weights to bf16 (biases / LN params stay f32).
    wq_s = (wq * scale).astype(mm)
    bq_s = bq * scale
    wkv = jnp.concatenate([wk, wv], axis=1).astype(mm)     # (D, 2*HD)
    bkv = jnp.concatenate([bk, bv], axis=1)                # (1, 2*HD) f32
    param_list = [wq_s, bq_s, wkv, bkv, wo.astype(mm), bo,
                  g1, be1, w1.astype(mm), b1, w2.astype(mm), b2, g2, be2]

    # Feed row-major (B*L, D) / (B*S, D) slabs so the kernel's matmuls and the
    # output stores see large 2-D tiles (batch rows are contiguous; free reshape).
    x2 = x.reshape(B * L, D)
    c2 = cross.reshape(B * S, D)

    kernel = functools.partial(_cross_layer_kernel, n_heads=n_heads,
                               seq_q=L, seq_kv=S, batch_block=batch_block)

    def build(single_buffer_weights):
        pspecs = []
        for p in param_list:
            kwargs = {}
            if single_buffer_weights:
                # Constant index_map => nothing to pipeline; don't double-buffer
                # the weights (matters at production d_model/d_ff VMEM budgets).
                kwargs["pipeline_mode"] = pl.Buffered(1)
            pspecs.append(pl.BlockSpec(p.shape, _const_index_map(p.ndim), **kwargs))
        return pl.pallas_call(
            kernel,
            out_shape=jax.ShapeDtypeStruct((B * L, D), x.dtype),
            grid_spec=pltpu.PrefetchScalarGridSpec(
                num_scalar_prefetch=0,
                grid=(B // batch_block,),
                in_specs=[
                    pl.BlockSpec((batch_block * L, D), lambda b: (b, 0)),
                    pl.BlockSpec((batch_block * S, D), lambda b: (b, 0)),
                ] + pspecs,
                out_specs=pl.BlockSpec((batch_block * L, D), lambda b: (b, 0)),
            ),
            compiler_params=pltpu.CompilerParams(
                dimension_semantics=("parallel",),
                vmem_limit_bytes=vmem_budget,
            ),
        )

    try:
        out2 = build(True)(x2, c2, *param_list)
    except Exception:
        # Only a pl.Buffered(1) rejection is absorbed here: a genuine kernel
        # error raises again from the default-buffered build below.
        out2 = build(False)(x2, c2, *param_list)
    return out2.reshape(B, L, D)


def reference_forward(x, cross, params, *, n_heads):
    """Pure-JAX f32 reference with PyTorch-equivalent math."""
    (wq, bq, wk, bk, wv, bv, wo, bo, g1, be1, w1, b1, w2, b2, g2, be2) = params
    q = x @ wq + bq
    k = cross @ wk + bk
    v = cross @ wv + bv
    B, L, HD = q.shape
    S = k.shape[1]
    dk = HD // n_heads
    qh = q.reshape(B, L, n_heads, dk)
    kh = k.reshape(B, S, n_heads, dk)
    vh = v.reshape(B, S, n_heads, dk)
    scores = jnp.einsum('blhe,bshe->bhls', qh, kh) / math.sqrt(dk)
    p = jax.nn.softmax(scores, axis=-1)
    o = jnp.einsum('bhls,bshd->blhd', p, vh).reshape(B, L, HD)
    attn = o @ wo + bo
    xn = _layernorm(x + attn, g1, be1)
    y = jnp.maximum(xn @ w1 + b1, 0.0)
    y = y @ w2 + b2
    return _layernorm(xn + y, g2, be2)


def make_params(key, d_model, d_ff, n_heads):
    d_keys = d_model // n_heads
    hd = n_heads * d_keys
    ks = jax.random.split(key, 16)
    s = 0.05

    def rnd(k, shape, scale=s):
        return jax.random.normal(k, shape, jnp.float32) * scale

    wq = rnd(ks[0], (d_model, hd))
    wk = rnd(ks[1], (d_model, hd))
    wv = rnd(ks[2], (d_model, hd))
    wo = rnd(ks[3], (hd, d_model))
    w1 = rnd(ks[4], (d_model, d_ff))        # conv1 (kernel_size=1) weight
    w2 = rnd(ks[5], (d_ff, d_model))        # conv2 (kernel_size=1) weight
    bq = rnd(ks[6], (1, hd))
    bk = rnd(ks[7], (1, hd))
    bv = rnd(ks[8], (1, hd))
    bo = rnd(ks[9], (1, d_model))
    b1 = rnd(ks[10], (1, d_ff))
    b2 = rnd(ks[11], (1, d_model))
    g1 = 1.0 + rnd(ks[12], (1, d_model))
    be1 = rnd(ks[13], (1, d_model))
    g2 = 1.0 + rnd(ks[14], (1, d_model))
    be2 = rnd(ks[15], (1, d_model))
    return (wq, bq, wk, bk, wv, bv, wo, bo, g1, be1, w1, b1, w2, b2, g2, be2)


if __name__ == "__main__":
    # Small but representative shapes (B=4 exercises batch blocking and, on
    # multi-TC parts, >=2 parallel grid steps; L != S exercises the cross
    # attention shapes; d_model divisible by the default n_heads=6).
    B, L, S = 4, 16, 8
    n_heads = 6
    d_model = 48
    d_ff = 4 * d_model

    key = jax.random.PRNGKey(0)
    kx, kc, kp = jax.random.split(key, 3)
    x = jax.random.normal(kx, (B, L, d_model), jnp.float32)
    cross = jax.random.normal(kc, (B, S, d_model), jnp.float32)
    params = make_params(kp, d_model, d_ff, n_heads)

    out = cross_layer_forward(x, cross, params, n_heads=n_heads)
    out = jax.block_until_ready(out)

    ref = reference_forward(x, cross, params, n_heads=n_heads)
    # Matmul operands run in bf16 on the MXU (f32 accumulation) and the softmax
    # denominator uses the EUP approximate reciprocal, so compare against the
    # f32 reference at a bf16-level tolerance.
    np.testing.assert_allclose(np.asarray(out), np.asarray(ref),
                               atol=2e-2, rtol=2e-2)

    print("KERNEL_OK")
</pallas_src>

<mosaic_0001>
module attributes {stable_mosaic.version = 11 : i64} {
  func.func @_cross_layer_kernel(%arg0: i32, %arg1: memref<32x48xf32, #tpu.memory_space<vmem>>, %arg2: memref<16x48xf32, #tpu.memory_space<vmem>>, %arg3: memref<48x48xbf16, #tpu.memory_space<vmem>>, %arg4: memref<1x48xf32, #tpu.memory_space<vmem>>, %arg5: memref<48x96xbf16, #tpu.memory_space<vmem>>, %arg6: memref<1x96xf32, #tpu.memory_space<vmem>>, %arg7: memref<48x48xbf16, #tpu.memory_space<vmem>>, %arg8: memref<1x48xf32, #tpu.memory_space<vmem>>, %arg9: memref<1x48xf32, #tpu.memory_space<vmem>>, %arg10: memref<1x48xf32, #tpu.memory_space<vmem>>, %arg11: memref<48x192xbf16, #tpu.memory_space<vmem>>, %arg12: memref<1x192xf32, #tpu.memory_space<vmem>>, %arg13: memref<192x48xbf16, #tpu.memory_space<vmem>>, %arg14: memref<1x48xf32, #tpu.memory_space<vmem>>, %arg15: memref<1x48xf32, #tpu.memory_space<vmem>>, %arg16: memref<1x48xf32, #tpu.memory_space<vmem>>, %arg17: memref<32x48xf32, #tpu.memory_space<vmem>>) attributes {dimension_semantics = [#tpu.dimension_semantics<parallel>], iteration_bounds = array<i64: 2>, scalar_prefetch = 0 : i64, scratch_operands = 0 : i64, tpu.core_type = #tpu.core_type<tc>, window_params = [{transform_indices = @transform_0, window_bounds = array<i64: 32, 48>}, {transform_indices = @transform_1, window_bounds = array<i64: 16, 48>}, {pipeline_mode = #tpu.pipeline_mode<synchronous>, transform_indices = @transform_2, window_bounds = array<i64: 48, 48>}, {pipeline_mode = #tpu.pipeline_mode<synchronous>, transform_indices = @transform_3, window_bounds = array<i64: 1, 48>}, {pipeline_mode = #tpu.pipeline_mode<synchronous>, transform_indices = @transform_4, window_bounds = array<i64: 48, 96>}, {pipeline_mode = #tpu.pipeline_mode<synchronous>, transform_indices = @transform_5, window_bounds = array<i64: 1, 96>}, {pipeline_mode = #tpu.pipeline_mode<synchronous>, transform_indices = @transform_6, window_bounds = array<i64: 48, 48>}, {pipeline_mode = #tpu.pipeline_mode<synchronous>, transform_indices = @transform_7, window_bounds = array<i64: 1, 48>}, {pipeline_mode = #tpu.pipeline_mode<synchronous>, transform_indices = @transform_8, window_bounds = array<i64: 1, 48>}, {pipeline_mode = #tpu.pipeline_mode<synchronous>, transform_indices = @transform_9, window_bounds = array<i64: 1, 48>}, {pipeline_mode = #tpu.pipeline_mode<synchronous>, transform_indices = @transform_10, window_bounds = array<i64: 48, 192>}, {pipeline_mode = #tpu.pipeline_mode<synchronous>, transform_indices = @transform_11, window_bounds = array<i64: 1, 192>}, {pipeline_mode = #tpu.pipeline_mode<synchronous>, transform_indices = @transform_12, window_bounds = array<i64: 192, 48>}, {pipeline_mode = #tpu.pipeline_mode<synchronous>, transform_indices = @transform_13, window_bounds = array<i64: 1, 48>}, {pipeline_mode = #tpu.pipeline_mode<synchronous>, transform_indices = @transform_14, window_bounds = array<i64: 1, 48>}, {pipeline_mode = #tpu.pipeline_mode<synchronous>, transform_indices = @transform_15, window_bounds = array<i64: 1, 48>}, {transform_indices = @transform_16, window_bounds = array<i64: 32, 48>}]} {
    %c0 = arith.constant 0 : index
    %c0_0 = arith.constant 0 : index
    %0 = vector.load %arg1[%c0, %c0_0] : memref<32x48xf32, #tpu.memory_space<vmem>>, vector<32x48xf32>
    %c0_1 = arith.constant 0 : index
    %c0_2 = arith.constant 0 : index
    %1 = vector.load %arg2[%c0_1, %c0_2] : memref<16x48xf32, #tpu.memory_space<vmem>>, vector<16x48xf32>
    %2 = arith.truncf %0 : vector<32x48xf32> to vector<32x48xbf16>
    %c0_3 = arith.constant 0 : index
    %c0_4 = arith.constant 0 : index
    %3 = vector.load %arg3[%c0_3, %c0_4] : memref<48x48xbf16, #tpu.memory_space<vmem>>, vector<48x48xbf16>
    %cst = arith.constant dense<0.000000e+00> : vector<32x48xf32>
    %4 = tpu.matmul %2, %3, %cst {dimension_numbers = #tpu.dot_dimension_numbers<[1], [0], [0], [1], [0, 0, 1, 1], [], []>} : vector<32x48xbf16>, vector<48x48xbf16>, vector<32x48xf32> -> vector<32x48xf32>
    %c0_5 = arith.constant 0 : index
    %c0_6 = arith.constant 0 : index
    %5 = vector.load %arg4[%c0_5, %c0_6] : memref<1x48xf32, #tpu.memory_space<vmem>>, vector<1x48xf32>
    %6 = vector.broadcast %5 : vector<1x48xf32> to vector<32x48xf32>
    %7 = arith.addf %4, %6 : vector<32x48xf32>
    %8 = arith.truncf %1 : vector<16x48xf32> to vector<16x48xbf16>
    %c0_7 = arith.constant 0 : index
    %c0_8 = arith.constant 0 : index
    %9 = vector.load %arg5[%c0_7, %c0_8] : memref<48x96xbf16, #tpu.memory_space<vmem>>, vector<48x96xbf16>
    %cst_9 = arith.constant dense<0.000000e+00> : vector<16x96xf32>
    %10 = tpu.matmul %8, %9, %cst_9 {dimension_numbers = #tpu.dot_dimension_numbers<[1], [0], [0], [1], [0, 0, 1, 1], [], []>} : vector<16x48xbf16>, vector<48x96xbf16>, vector<16x96xf32> -> vector<16x96xf32>
    %c0_10 = arith.constant 0 : index
    %c0_11 = arith.constant 0 : index
    %11 = vector.load %arg6[%c0_10, %c0_11] : memref<1x96xf32, #tpu.memory_space<vmem>>, vector<1x96xf32>
    %12 = vector.broadcast %11 : vector<1x96xf32> to vector<16x96xf32>
    %13 = arith.addf %10, %12 : vector<16x96xf32>
    %14 = vector.shape_cast %7 : vector<32x48xf32> to vector<2x16x48xf32>
    %15 = vector.shape_cast %13 : vector<16x96xf32> to vector<2x8x96xf32>
    %16 = vector.extract_strided_slice %14 {offsets = [0, 0, 0], sizes = [2, 16, 8], strides = [1, 1, 1]} : vector<2x16x48xf32> to vector<2x16x8xf32>
    %17 = arith.truncf %16 : vector<2x16x8xf32> to vector<2x16x8xbf16>
    %18 = vector.extract_strided_slice %15 {offsets = [0, 0, 0], sizes = [2, 8, 8], strides = [1, 1, 1]} : vector<2x8x96xf32> to vector<2x8x8xf32>
    %19 = arith.truncf %18 : vector<2x8x8xf32> to vector<2x8x8xbf16>
    %20 = vector.extract_strided_slice %15 {offsets = [0, 0, 48], sizes = [2, 8, 8], strides = [1, 1, 1]} : vector<2x8x96xf32> to vector<2x8x8xf32>
    %21 = arith.truncf %20 : vector<2x8x8xf32> to vector<2x8x8xbf16>
    "tpu.trace_start"() <{level = 10 : i32, message = "bld,bsd->bls"}> : () -> ()
    %cst_12 = arith.constant dense<0.000000e+00> : vector<2x16x8xf32>
    %22 = tpu.matmul %17, %19, %cst_12 {dimension_numbers = #tpu.dot_dimension_numbers<[2], [2], [1], [1], [0, 0, 0, 1, 1, 1], [0], [0]>} : vector<2x16x8xbf16>, vector<2x8x8xbf16>, vector<2x16x8xf32> -> vector<2x16x8xf32>
    "tpu.trace_stop"() : () -> ()
    %cst_13 = arith.constant dense<0xFF800000> : vector<2x16xf32>
    %23 = vector.multi_reduction <maximumf>, %22, %cst_13 [2] : vector<2x16x8xf32> to vector<2x16xf32>
    %24 = vector.shape_cast %23 : vector<2x16xf32> to vector<2x16x1xf32>
    %25 = vector.broadcast %24 : vector<2x16x1xf32> to vector<2x16x8xf32>
    %26 = arith.subf %22, %25 : vector<2x16x8xf32>
    %27 = math.exp %26 : vector<2x16x8xf32>
    %cst_14 = arith.constant dense<0.000000e+00> : vector<2x16xf32>
    %28 = vector.multi_reduction <add>, %27, %cst_14 [2] : vector<2x16x8xf32> to vector<2x16xf32>
    %29 = vector.shape_cast %28 : vector<2x16xf32> to vector<2x16x1xf32>
    %30 = tpu.reciprocal %29 {approx = true} : vector<2x16x1xf32> -> vector<2x16x1xf32>
    %31 = vector.broadcast %30 : vector<2x16x1xf32> to vector<2x16x8xf32>
    %32 = arith.mulf %27, %31 : vector<2x16x8xf32>
    %33 = arith.truncf %32 : vector<2x16x8xf32> to vector<2x16x8xbf16>
    "tpu.trace_start"() <{level = 10 : i32, message = "bls,bsd->bld"}> : () -> ()
    %cst_15 = arith.constant dense<0.000000e+00> : vector<2x16x8xf32>
    %34 = tpu.matmul %33, %21, %cst_15 {dimension_numbers = #tpu.dot_dimension_numbers<[2], [1], [1], [2], [0, 0, 0, 1, 1, 2], [0], [0]>} : vector<2x16x8xbf16>, vector<2x8x8xbf16>, vector<2x16x8xf32> -> vector<2x16x8xf32>
    "tpu.trace_stop"() : () -> ()
    %35 = arith.truncf %34 : vector<2x16x8xf32> to vector<2x16x8xbf16>
    %36 = vector.extract_strided_slice %14 {offsets = [0, 0, 8], sizes = [2, 16, 8], strides = [1, 1, 1]} : vector<2x16x48xf32> to vector<2x16x8xf32>
    %37 = arith.truncf %36 : vector<2x16x8xf32> to vector<2x16x8xbf16>
    %38 = vector.extract_strided_slice %15 {offsets = [0, 0, 8], sizes = [2, 8, 8], strides = [1, 1, 1]} : vector<2x8x96xf32> to vector<2x8x8xf32>
    %39 = arith.truncf %38 : vector<2x8x8xf32> to vector<2x8x8xbf16>
    %40 = vector.extract_strided_slice %15 {offsets = [0, 0, 56], sizes = [2, 8, 8], strides = [1, 1, 1]} : vector<2x8x96xf32> to vector<2x8x8xf32>
    %41 = arith.truncf %40 : vector<2x8x8xf32> to vector<2x8x8xbf16>
    "tpu.trace_start"() <{level = 10 : i32, message = "bld,bsd->bls"}> : () -> ()
    %cst_16 = arith.constant dense<0.000000e+00> : vector<2x16x8xf32>
    %42 = tpu.matmul %37, %39, %cst_16 {dimension_numbers = #tpu.dot_dimension_numbers<[2], [2], [1], [1], [0, 0, 0, 1, 1, 1], [0], [0]>} : vector<2x16x8xbf16>, vector<2x8x8xbf16>, vector<2x16x8xf32> -> vector<2x16x8xf32>
    "tpu.trace_stop"() : () -> ()
    %cst_17 = arith.constant dense<0xFF800000> : vector<2x16xf32>
    %43 = vector.multi_reduction <maximumf>, %42, %cst_17 [2] : vector<2x16x8xf32> to vector<2x16xf32>
    %44 = vector.shape_cast %43 : vector<2x16xf32> to vector<2x16x1xf32>
    %45 = vector.broadcast %44 : vector<2x16x1xf32> to vector<2x16x8xf32>
    %46 = arith.subf %42, %45 : vector<2x16x8xf32>
    %47 = math.exp %46 : vector<2x16x8xf32>
    %cst_18 = arith.constant dense<0.000000e+00> : vector<2x16xf32>
    %48 = vector.multi_reduction <add>, %47, %cst_18 [2] : vector<2x16x8xf32> to vector<2x16xf32>
    %49 = vector.shape_cast %48 : vector<2x16xf32> to vector<2x16x1xf32>
    %50 = tpu.reciprocal %49 {approx = true} : vector<2x16x1xf32> -> vector<2x16x1xf32>
    %51 = vector.broadcast %50 : vector<2x16x1xf32> to vector<2x16x8xf32>
    %52 = arith.mulf %47, %51 : vector<2x16x8xf32>
    %53 = arith.truncf %52 : vector<2x16x8xf32> to vector<2x16x8xbf16>
    "tpu.trace_start"() <{level = 10 : i32, message = "bls,bsd->bld"}> : () -> ()
    %cst_19 = arith.constant dense<0.000000e+00> : vector<2x16x8xf32>
    %54 = tpu.matmul %53, %41, %cst_19 {dimension_numbers = #tpu.dot_dimension_numbers<[2], [1], [1], [2], [0, 0, 0, 1, 1, 2], [0], [0]>} : vector<2x16x8xbf16>, vector<2x8x8xbf16>, vector<2x16x8xf32> -> vector<2x16x8xf32>
    "tpu.trace_stop"() : () -> ()
    %55 = arith.truncf %54 : vector<2x16x8xf32> to vector<2x16x8xbf16>
    %56 = vector.extract_strided_slice %14 {offsets = [0, 0, 16], sizes = [2, 16, 8], strides = [1, 1, 1]} : vector<2x16x48xf32> to vector<2x16x8xf32>
    %57 = arith.truncf %56 : vector<2x16x8xf32> to vector<2x16x8xbf16>
    %58 = vector.extract_strided_slice %15 {offsets = [0, 0, 16], sizes = [2, 8, 8], strides = [1, 1, 1]} : vector<2x8x96xf32> to vector<2x8x8xf32>
    %59 = arith.truncf %58 : vector<2x8x8xf32> to vector<2x8x8xbf16>
    %60 = vector.extract_strided_slice %15 {offsets = [0, 0, 64], sizes = [2, 8, 8], strides = [1, 1, 1]} : vector<2x8x96xf32> to vector<2x8x8xf32>
    %61 = arith.truncf %60 : vector<2x8x8xf32> to vector<2x8x8xbf16>
    "tpu.trace_start"() <{level = 10 : i32, message = "bld,bsd->bls"}> : () -> ()
    %cst_20 = arith.constant dense<0.000000e+00> : vector<2x16x8xf32>
    %62 = tpu.matmul %57, %59, %cst_20 {dimension_numbers = #tpu.dot_dimension_numbers<[2], [2], [1], [1], [0, 0, 0, 1, 1, 1], [0], [0]>} : vector<2x16x8xbf16>, vector<2x8x8xbf16>, vector<2x16x8xf32> -> vector<2x16x8xf32>
    "tpu.trace_stop"() : () -> ()
    %cst_21 = arith.constant dense<0xFF800000> : vector<2x16xf32>
    %63 = vector.multi_reduction <maximumf>, %62, %cst_21 [2] : vector<2x16x8xf32> to vector<2x16xf32>
    %64 = vector.shape_cast %63 : vector<2x16xf32> to vector<2x16x1xf32>
    %65 = vector.broadcast %64 : vector<2x16x1xf32> to vector<2x16x8xf32>
    %66 = arith.subf %62, %65 : vector<2x16x8xf32>
    %67 = math.exp %66 : vector<2x16x8xf32>
    %cst_22 = arith.constant dense<0.000000e+00> : vector<2x16xf32>
    %68 = vector.multi_reduction <add>, %67, %cst_22 [2] : vector<2x16x8xf32> to vector<2x16xf32>
    %69 = vector.shape_cast %68 : vector<2x16xf32> to vector<2x16x1xf32>
    %70 = tpu.reciprocal %69 {approx = true} : vector<2x16x1xf32> -> vector<2x16x1xf32>
    %71 = vector.broadcast %70 : vector<2x16x1xf32> to vector<2x16x8xf32>
    %72 = arith.mulf %67, %71 : vector<2x16x8xf32>
    %73 = arith.truncf %72 : vector<2x16x8xf32> to vector<2x16x8xbf16>
    "tpu.trace_start"() <{level = 10 : i32, message = "bls,bsd->bld"}> : () -> ()
    %cst_23 = arith.constant dense<0.000000e+00> : vector<2x16x8xf32>
    %74 = tpu.matmul %73, %61, %cst_23 {dimension_numbers = #tpu.dot_dimension_numbers<[2], [1], [1], [2], [0, 0, 0, 1, 1, 2], [0], [0]>} : vector<2x16x8xbf16>, vector<2x8x8xbf16>, vector<2x16x8xf32> -> vector<2x16x8xf32>
    "tpu.trace_stop"() : () -> ()
    %75 = arith.truncf %74 : vector<2x16x8xf32> to vector<2x16x8xbf16>
    %76 = vector.extract_strided_slice %14 {offsets = [0, 0, 24], sizes = [2, 16, 8], strides = [1, 1, 1]} : vector<2x16x48xf32> to vector<2x16x8xf32>
    %77 = arith.truncf %76 : vector<2x16x8xf32> to vector<2x16x8xbf16>
    %78 = vector.extract_strided_slice %15 {offsets = [0, 0, 24], sizes = [2, 8, 8], strides = [1, 1, 1]} : vector<2x8x96xf32> to vector<2x8x8xf32>
    %79 = arith.truncf %78 : vector<2x8x8xf32> to vector<2x8x8xbf16>
    %80 = vector.extract_strided_slice %15 {offsets = [0, 0, 72], sizes = [2, 8, 8], strides = [1, 1, 1]} : vector<2x8x96xf32> to vector<2x8x8xf32>
    %81 = arith.truncf %80 : vector<2x8x8xf32> to vector<2x8x8xbf16>
    "tpu.trace_start"() <{level = 10 : i32, message = "bld,bsd->bls"}> : () -> ()
    %cst_24 = arith.constant dense<0.000000e+00> : vector<2x16x8xf32>
    %82 = tpu.matmul %77, %79, %cst_24 {dimension_numbers = #tpu.dot_dimension_numbers<[2], [2], [1], [1], [0, 0, 0, 1, 1, 1], [0], [0]>} : vector<2x16x8xbf16>, vector<2x8x8xbf16>, vector<2x16x8xf32> -> vector<2x16x8xf32>
    "tpu.trace_stop"() : () -> ()
    %cst_25 = arith.constant dense<0xFF800000> : vector<2x16xf32>
    %83 = vector.multi_reduction <maximumf>, %82, %cst_25 [2] : vector<2x16x8xf32> to vector<2x16xf32>
    %84 = vector.shape_cast %83 : vector<2x16xf32> to vector<2x16x1xf32>
    %85 = vector.broadcast %84 : vector<2x16x1xf32> to vector<2x16x8xf32>
    %86 = arith.subf %82, %85 : vector<2x16x8xf32>
    %87 = math.exp %86 : vector<2x16x8xf32>
    %cst_26 = arith.constant dense<0.000000e+00> : vector<2x16xf32>
    %88 = vector.multi_reduction <add>, %87, %cst_26 [2] : vector<2x16x8xf32> to vector<2x16xf32>
    %89 = vector.shape_cast %88 : vector<2x16xf32> to vector<2x16x1xf32>
    %90 = tpu.reciprocal %89 {approx = true} : vector<2x16x1xf32> -> vector<2x16x1xf32>
    %91 = vector.broadcast %90 : vector<2x16x1xf32> to vector<2x16x8xf32>
    %92 = arith.mulf %87, %91 : vector<2x16x8xf32>
    %93 = arith.truncf %92 : vector<2x16x8xf32> to vector<2x16x8xbf16>
    "tpu.trace_start"() <{level = 10 : i32, message = "bls,bsd->bld"}> : () -> ()
    %cst_27 = arith.constant dense<0.000000e+00> : vector<2x16x8xf32>
    %94 = tpu.matmul %93, %81, %cst_27 {dimension_numbers = #tpu.dot_dimension_numbers<[2], [1], [1], [2], [0, 0, 0, 1, 1, 2], [0], [0]>} : vector<2x16x8xbf16>, vector<2x8x8xbf16>, vector<2x16x8xf32> -> vector<2x16x8xf32>
    "tpu.trace_stop"() : () -> ()
    %95 = arith.truncf %94 : vector<2x16x8xf32> to vector<2x16x8xbf16>
    %96 = vector.extract_strided_slice %14 {offsets = [0, 0, 32], sizes = [2, 16, 8], strides = [1, 1, 1]} : vector<2x16x48xf32> to vector<2x16x8xf32>
    %97 = arith.truncf %96 : vector<2x16x8xf32> to vector<2x16x8xbf16>
    %98 = vector.extract_strided_slice %15 {offsets = [0, 0, 32], sizes = [2, 8, 8], strides = [1, 1, 1]} : vector<2x8x96xf32> to vector<2x8x8xf32>
    %99 = arith.truncf %98 : vector<2x8x8xf32> to vector<2x8x8xbf16>
    %100 = vector.extract_strided_slice %15 {offsets = [0, 0, 80], sizes = [2, 8, 8], strides = [1, 1, 1]} : vector<2x8x96xf32> to vector<2x8x8xf32>
    %101 = arith.truncf %100 : vector<2x8x8xf32> to vector<2x8x8xbf16>
    "tpu.trace_start"() <{level = 10 : i32, message = "bld,bsd->bls"}> : () -> ()
    %cst_28 = arith.constant dense<0.000000e+00> : vector<2x16x8xf32>
    %102 = tpu.matmul %97, %99, %cst_28 {dimension_numbers = #tpu.dot_dimension_numbers<[2], [2], [1], [1], [0, 0, 0, 1, 1, 1], [0], [0]>} : vector<2x16x8xbf16>, vector<2x8x8xbf16>, vector<2x16x8xf32> -> vector<2x16x8xf32>
    "tpu.trace_stop"() : () -> ()
    %cst_29 = arith.constant dense<0xFF800000> : vector<2x16xf32>
    %103 = vector.multi_reduction <maximumf>, %102, %cst_29 [2] : vector<2x16x8xf32> to vector<2x16xf32>
    %104 = vector.shape_cast %103 : vector<2x16xf32> to vector<2x16x1xf32>
    %105 = vector.broadcast %104 : vector<2x16x1xf32> to vector<2x16x8xf32>
    %106 = arith.subf %102, %105 : vector<2x16x8xf32>
    %107 = math.exp %106 : vector<2x16x8xf32>
    %cst_30 = arith.constant dense<0.000000e+00> : vector<2x16xf32>
    %108 = vector.multi_reduction <add>, %107, %cst_30 [2] : vector<2x16x8xf32> to vector<2x16xf32>
    %109 = vector.shape_cast %108 : vector<2x16xf32> to vector<2x16x1xf32>
    %110 = tpu.reciprocal %109 {approx = true} : vector<2x16x1xf32> -> vector<2x16x1xf32>
    %111 = vector.broadcast %110 : vector<2x16x1xf32> to vector<2x16x8xf32>
    %112 = arith.mulf %107, %111 : vector<2x16x8xf32>
    %113 = arith.truncf %112 : vector<2x16x8xf32> to vector<2x16x8xbf16>
    "tpu.trace_start"() <{level = 10 : i32, message = "bls,bsd->bld"}> : () -> ()
    %cst_31 = arith.constant dense<0.000000e+00> : vector<2x16x8xf32>
    %114 = tpu.matmul %113, %101, %cst_31 {dimension_numbers = #tpu.dot_dimension_numbers<[2], [1], [1], [2], [0, 0, 0, 1, 1, 2], [0], [0]>} : vector<2x16x8xbf16>, vector<2x8x8xbf16>, vector<2x16x8xf32> -> vector<2x16x8xf32>
    "tpu.trace_stop"() : () -> ()
    %115 = arith.truncf %114 : vector<2x16x8xf32> to vector<2x16x8xbf16>
    %116 = vector.extract_strided_slice %14 {offsets = [0, 0, 40], sizes = [2, 16, 8], strides = [1, 1, 1]} : vector<2x16x48xf32> to vector<2x16x8xf32>
    %117 = arith.truncf %116 : vector<2x16x8xf32> to vector<2x16x8xbf16>
    %118 = vector.extract_strided_slice %15 {offsets = [0, 0, 40], sizes = [2, 8, 8], strides = [1, 1, 1]} : vector<2x8x96xf32> to vector<2x8x8xf32>
    %119 = arith.truncf %118 : vector<2x8x8xf32> to vector<2x8x8xbf16>
    %120 = vector.extract_strided_slice %15 {offsets = [0, 0, 88], sizes = [2, 8, 8], strides = [1, 1, 1]} : vector<2x8x96xf32> to vector<2x8x8xf32>
    %121 = arith.truncf %120 : vector<2x8x8xf32> to vector<2x8x8xbf16>
    "tpu.trace_start"() <{level = 10 : i32, message = "bld,bsd->bls"}> : () -> ()
    %cst_32 = arith.constant dense<0.000000e+00> : vector<2x16x8xf32>
    %122 = tpu.matmul %117, %119, %cst_32 {dimension_numbers = #tpu.dot_dimension_numbers<[2], [2], [1], [1], [0, 0, 0, 1, 1, 1], [0], [0]>} : vector<2x16x8xbf16>, vector<2x8x8xbf16>, vector<2x16x8xf32> -> vector<2x16x8xf32>
    "tpu.trace_stop"() : () -> ()
    %cst_33 = arith.constant dense<0xFF800000> : vector<2x16xf32>
    %123 = vector.multi_reduction <maximumf>, %122, %cst_33 [2] : vector<2x16x8xf32> to vector<2x16xf32>
    %124 = vector.shape_cast %123 : vector<2x16xf32> to vector<2x16x1xf32>
    %125 = vector.broadcast %124 : vector<2x16x1xf32> to vector<2x16x8xf32>
    %126 = arith.subf %122, %125 : vector<2x16x8xf32>
    %127 = math.exp %126 : vector<2x16x8xf32>
    %cst_34 = arith.constant dense<0.000000e+00> : vector<2x16xf32>
    %128 = vector.multi_reduction <add>, %127, %cst_34 [2] : vector<2x16x8xf32> to vector<2x16xf32>
    %129 = vector.shape_cast %128 : vector<2x16xf32> to vector<2x16x1xf32>
    %130 = tpu.reciprocal %129 {approx = true} : vector<2x16x1xf32> -> vector<2x16x1xf32>
    %131 = vector.broadcast %130 : vector<2x16x1xf32> to vector<2x16x8xf32>
    %132 = arith.mulf %127, %131 : vector<2x16x8xf32>
    %133 = arith.truncf %132 : vector<2x16x8xf32> to vector<2x16x8xbf16>
    "tpu.trace_start"() <{level = 10 : i32, message = "bls,bsd->bld"}> : () -> ()
    %cst_35 = arith.constant dense<0.000000e+00> : vector<2x16x8xf32>
    %134 = tpu.matmul %133, %121, %cst_35 {dimension_numbers = #tpu.dot_dimension_numbers<[2], [1], [1], [2], [0, 0, 0, 1, 1, 2], [0], [0]>} : vector<2x16x8xbf16>, vector<2x8x8xbf16>, vector<2x16x8xf32> -> vector<2x16x8xf32>
    "tpu.trace_stop"() : () -> ()
    %135 = arith.truncf %134 : vector<2x16x8xf32> to vector<2x16x8xbf16>
    %136 = tpu.concatenate %35, %55, %75, %95, %115, %135 in 2 : vector<2x16x8xbf16>, vector<2x16x8xbf16>, vector<2x16x8xbf16>, vector<2x16x8xbf16>, vector<2x16x8xbf16>, vector<2x16x8xbf16> -> vector<2x16x48xbf16>
    %137 = vector.shape_cast %136 : vector<2x16x48xbf16> to vector<32x48xbf16>
    %c0_36 = arith.constant 0 : index
    %c0_37 = arith.constant 0 : index
    %138 = vector.load %arg7[%c0_36, %c0_37] : memref<48x48xbf16, #tpu.memory_space<vmem>>, vector<48x48xbf16>
    %cst_38 = arith.constant dense<0.000000e+00> : vector<32x48xf32>
    %139 = tpu.matmul %137, %138, %cst_38 {dimension_numbers = #tpu.dot_dimension_numbers<[1], [0], [0], [1], [0, 0, 1, 1], [], []>} : vector<32x48xbf16>, vector<48x48xbf16>, vector<32x48xf32> -> vector<32x48xf32>
    %c0_39 = arith.constant 0 : index
    %c0_40 = arith.constant 0 : index
    %140 = vector.load %arg8[%c0_39, %c0_40] : memref<1x48xf32, #tpu.memory_space<vmem>>, vector<1x48xf32>
    %141 = vector.broadcast %140 : vector<1x48xf32> to vector<32x48xf32>
    %142 = arith.addf %139, %141 : vector<32x48xf32>
    %143 = arith.addf %0, %142 : vector<32x48xf32>
    %c0_41 = arith.constant 0 : index
    %c0_42 = arith.constant 0 : index
    %144 = vector.load %arg9[%c0_41, %c0_42] : memref<1x48xf32, #tpu.memory_space<vmem>>, vector<1x48xf32>
    %c0_43 = arith.constant 0 : index
    %c0_44 = arith.constant 0 : index
    %145 = vector.load %arg10[%c0_43, %c0_44] : memref<1x48xf32, #tpu.memory_space<vmem>>, vector<1x48xf32>
    %cst_45 = arith.constant dense<0.000000e+00> : vector<32xf32>
    %146 = vector.multi_reduction <add>, %143, %cst_45 [1] : vector<32x48xf32> to vector<32xf32>
    %147 = vector.shape_cast %146 : vector<32xf32> to vector<32x1xf32>
    %cst_46 = arith.constant 4.800000e+01 : f32
    %148 = vector.broadcast %cst_46 : f32 to vector<32x1xf32>
    %149 = arith.divf %147, %148 : vector<32x1xf32>
    %150 = vector.broadcast %149 : vector<32x1xf32> to vector<32x48xf32>
    %151 = arith.subf %143, %150 : vector<32x48xf32>
    %152 = arith.mulf %151, %151 : vector<32x48xf32>
    %cst_47 = arith.constant dense<0.000000e+00> : vector<32xf32>
    %153 = vector.multi_reduction <add>, %152, %cst_47 [1] : vector<32x48xf32> to vector<32xf32>
    %154 = vector.shape_cast %153 : vector<32xf32> to vector<32x1xf32>
    %cst_48 = arith.constant 4.800000e+01 : f32
    %155 = vector.broadcast %cst_48 : f32 to vector<32x1xf32>
    %156 = arith.divf %154, %155 : vector<32x1xf32>
    %cst_49 = arith.constant 9.99999974E-6 : f32
    %157 = vector.broadcast %cst_49 : f32 to vector<32x1xf32>
    %158 = arith.addf %156, %157 : vector<32x1xf32>
    %159 = math.rsqrt %158 : vector<32x1xf32>
    %160 = vector.broadcast %159 : vector<32x1xf32> to vector<32x48xf32>
    %161 = arith.mulf %151, %160 : vector<32x48xf32>
    %162 = vector.broadcast %144 : vector<1x48xf32> to vector<32x48xf32>
    %163 = arith.mulf %161, %162 : vector<32x48xf32>
    %164 = vector.broadcast %145 : vector<1x48xf32> to vector<32x48xf32>
    %165 = arith.addf %163, %164 : vector<32x48xf32>
    %166 = arith.truncf %165 : vector<32x48xf32> to vector<32x48xbf16>
    %c0_50 = arith.constant 0 : index
    %c0_51 = arith.constant 0 : index
    %167 = vector.load %arg11[%c0_50, %c0_51] : memref<48x192xbf16, #tpu.memory_space<vmem>>, vector<48x192xbf16>
    %cst_52 = arith.constant dense<0.000000e+00> : vector<32x192xf32>
    %168 = tpu.matmul %166, %167, %cst_52 {dimension_numbers = #tpu.dot_dimension_numbers<[1], [0], [0], [1], [0, 0, 1, 1], [], []>} : vector<32x48xbf16>, vector<48x192xbf16>, vector<32x192xf32> -> vector<32x192xf32>
    %c0_53 = arith.constant 0 : index
    %c0_54 = arith.constant 0 : index
    %169 = vector.load %arg12[%c0_53, %c0_54] : memref<1x192xf32, #tpu.memory_space<vmem>>, vector<1x192xf32>
    %170 = vector.broadcast %169 : vector<1x192xf32> to vector<32x192xf32>
    %171 = arith.addf %168, %170 : vector<32x192xf32>
    %cst_55 = arith.constant 0.000000e+00 : f32
    %172 = vector.broadcast %cst_55 : f32 to vector<32x192xf32>
    %173 = arith.maximumf %171, %172 : vector<32x192xf32>
    %174 = arith.truncf %173 : vector<32x192xf32> to vector<32x192xbf16>
    %c0_56 = arith.constant 0 : index
    %c0_57 = arith.constant 0 : index
    %175 = vector.load %arg13[%c0_56, %c0_57] : memref<192x48xbf16, #tpu.memory_space<vmem>>, vector<192x48xbf16>
    %cst_58 = arith.constant dense<0.000000e+00> : vector<32x48xf32>
    %176 = tpu.matmul %174, %175, %cst_58 {dimension_numbers = #tpu.dot_dimension_numbers<[1], [0], [0], [1], [0, 0, 1, 1], [], []>} : vector<32x192xbf16>, vector<192x48xbf16>, vector<32x48xf32> -> vector<32x48xf32>
    %c0_59 = arith.constant 0 : index
    %c0_60 = arith.constant 0 : index
    %177 = vector.load %arg14[%c0_59, %c0_60] : memref<1x48xf32, #tpu.memory_space<vmem>>, vector<1x48xf32>
    %178 = vector.broadcast %177 : vector<1x48xf32> to vector<32x48xf32>
    %179 = arith.addf %176, %178 : vector<32x48xf32>
    %180 = arith.addf %165, %179 : vector<32x48xf32>
    %c0_61 = arith.constant 0 : index
    %c0_62 = arith.constant 0 : index
    %181 = vector.load %arg15[%c0_61, %c0_62] : memref<1x48xf32, #tpu.memory_space<vmem>>, vector<1x48xf32>
    %c0_63 = arith.constant 0 : index
    %c0_64 = arith.constant 0 : index
    %182 = vector.load %arg16[%c0_63, %c0_64] : memref<1x48xf32, #tpu.memory_space<vmem>>, vector<1x48xf32>
    %cst_65 = arith.constant dense<0.000000e+00> : vector<32xf32>
    %183 = vector.multi_reduction <add>, %180, %cst_65 [1] : vector<32x48xf32> to vector<32xf32>
    %184 = vector.shape_cast %183 : vector<32xf32> to vector<32x1xf32>
    %cst_66 = arith.constant 4.800000e+01 : f32
    %185 = vector.broadcast %cst_66 : f32 to vector<32x1xf32>
    %186 = arith.divf %184, %185 : vector<32x1xf32>
    %187 = vector.broadcast %186 : vector<32x1xf32> to vector<32x48xf32>
    %188 = arith.subf %180, %187 : vector<32x48xf32>
    %189 = arith.mulf %188, %188 : vector<32x48xf32>
    %cst_67 = arith.constant dense<0.000000e+00> : vector<32xf32>
    %190 = vector.multi_reduction <add>, %189, %cst_67 [1] : vector<32x48xf32> to vector<32xf32>
    %191 = vector.shape_cast %190 : vector<32xf32> to vector<32x1xf32>
    %cst_68 = arith.constant 4.800000e+01 : f32
    %192 = vector.broadcast %cst_68 : f32 to vector<32x1xf32>
    %193 = arith.divf %191, %192 : vector<32x1xf32>
    %cst_69 = arith.constant 9.99999974E-6 : f32
    %194 = vector.broadcast %cst_69 : f32 to vector<32x1xf32>
    %195 = arith.addf %193, %194 : vector<32x1xf32>
    %196 = math.rsqrt %195 : vector<32x1xf32>
    %197 = vector.broadcast %196 : vector<32x1xf32> to vector<32x48xf32>
    %198 = arith.mulf %188, %197 : vector<32x48xf32>
    %199 = vector.broadcast %181 : vector<1x48xf32> to vector<32x48xf32>
    %200 = arith.mulf %198, %199 : vector<32x48xf32>
    %201 = vector.broadcast %182 : vector<1x48xf32> to vector<32x48xf32>
    %202 = arith.addf %200, %201 : vector<32x48xf32>
    %c0_70 = arith.constant 0 : index
    %c0_71 = arith.constant 0 : index
    %203 = vector.load %arg17[%c0_70, %c0_71] : memref<32x48xf32, #tpu.memory_space<vmem>>, vector<32x48xf32>
    tpu.vector_store %arg17[%c0_70, %c0_71], %202 {strides = array<i32>} : memref<32x48xf32, #tpu.memory_space<vmem>>, vector<32x48xf32>,
    return
  }
  func.func @transform_0(%arg0: i32) -> (i32, i32) {
    %c0_i32 = arith.constant 0 : i32
    %c0_i32_0 = arith.constant 0 : i32
    return %arg0, %c0_i32 : i32, i32
  }
  func.func @transform_1(%arg0: i32) -> (i32, i32) {
    %c0_i32 = arith.constant 0 : i32
    %c0_i32_0 = arith.constant 0 : i32
    return %arg0, %c0_i32 : i32, i32
  }
  func.func @transform_2(%arg0: i32) -> (i32, i32) {
    %c0_i32 = arith.constant 0 : i32
    %c0_i32_0 = arith.constant 0 : i32
    %c0_i32_1 = arith.constant 0 : i32
    return %c0_i32, %c0_i32_0 : i32, i32
  }
  func.func @transform_3(%arg0: i32) -> (i32, i32) {
    %c0_i32 = arith.constant 0 : i32
    %c0_i32_0 = arith.constant 0 : i32
    %c0_i32_1 = arith.constant 0 : i32
    return %c0_i32, %c0_i32_0 : i32, i32
  }
  func.func @transform_4(%arg0: i32) -> (i32, i32) {
    %c0_i32 = arith.constant 0 : i32
    %c0_i32_0 = arith.constant 0 : i32
    %c0_i32_1 = arith.constant 0 : i32
    return %c0_i32, %c0_i32_0 : i32, i32
  }
  func.func @transform_5(%arg0: i32) -> (i32, i32) {
    %c0_i32 = arith.constant 0 : i32
    %c0_i32_0 = arith.constant 0 : i32
    %c0_i32_1 = arith.constant 0 : i32
    return %c0_i32, %c0_i32_0 : i32, i32
  }
  func.func @transform_6(%arg0: i32) -> (i32, i32) {
    %c0_i32 = arith.constant 0 : i32
    %c0_i32_0 = arith.constant 0 : i32
    %c0_i32_1 = arith.constant 0 : i32
    return %c0_i32, %c0_i32_0 : i32, i32
  }
  func.func @transform_7(%arg0: i32) -> (i32, i32) {
    %c0_i32 = arith.constant 0 : i32
    %c0_i32_0 = arith.constant 0 : i32
    %c0_i32_1 = arith.constant 0 : i32
    return %c0_i32, %c0_i32_0 : i32, i32
  }
  func.func @transform_8(%arg0: i32) -> (i32, i32) {
    %c0_i32 = arith.constant 0 : i32
    %c0_i32_0 = arith.constant 0 : i32
    %c0_i32_1 = arith.constant 0 : i32
    return %c0_i32, %c0_i32_0 : i32, i32
  }
  func.func @transform_9(%arg0: i32) -> (i32, i32) {
    %c0_i32 = arith.constant 0 : i32
    %c0_i32_0 = arith.constant 0 : i32
    %c0_i32_1 = arith.constant 0 : i32
    return %c0_i32, %c0_i32_0 : i32, i32
  }
  func.func @transform_10(%arg0: i32) -> (i32, i32) {
    %c0_i32 = arith.constant 0 : i32
    %c0_i32_0 = arith.constant 0 : i32
    %c0_i32_1 = arith.constant 0 : i32
    return %c0_i32, %c0_i32_0 : i32, i32
  }
  func.func @transform_11(%arg0: i32) -> (i32, i32) {
    %c0_i32 = arith.constant 0 : i32
    %c0_i32_0 = arith.constant 0 : i32
    %c0_i32_1 = arith.constant 0 : i32
    return %c0_i32, %c0_i32_0 : i32, i32
  }
  func.func @transform_12(%arg0: i32) -> (i32, i32) {
    %c0_i32 = arith.constant 0 : i32
    %c0_i32_0 = arith.constant 0 : i32
    %c0_i32_1 = arith.constant 0 : i32
    return %c0_i32, %c0_i32_0 : i32, i32
  }
  func.func @transform_13(%arg0: i32) -> (i32, i32) {
    %c0_i32 = arith.constant 0 : i32
    %c0_i32_0 = arith.constant 0 : i32
    %c0_i32_1 = arith.constant 0 : i32
    return %c0_i32, %c0_i32_0 : i32, i32
  }
  func.func @transform_14(%arg0: i32) -> (i32, i32) {
    %c0_i32 = arith.constant 0 : i32
    %c0_i32_0 = arith.constant 0 : i32
    %c0_i32_1 = arith.constant 0 : i32
    return %c0_i32, %c0_i32_0 : i32, i32
  }
  func.func @transform_15(%arg0: i32) -> (i32, i32) {
    %c0_i32 = arith.constant 0 : i32
    %c0_i32_0 = arith.constant 0 : i32
    %c0_i32_1 = arith.constant 0 : i32
    return %c0_i32, %c0_i32_0 : i32, i32
  }
  func.func @transform_16(%arg0: i32) -> (i32, i32) {
    %c0_i32 = arith.constant 0 : i32
    %c0_i32_0 = arith.constant 0 : i32
    return %arg0, %c0_i32 : i32, i32
  }
}

module attributes {stable_mosaic.version = 11 : i64} {
  func.func @_cross_layer_kernel(%arg0: i32, %arg1: memref<32x48xf32, #tpu.memory_space<vmem>>, %arg2: memref<16x48xf32, #tpu.memory_space<vmem>>, %arg3: memref<48x48xbf16, #tpu.memory_space<vmem>>, %arg4: memref<1x48xf32, #tpu.memory_space<vmem>>, %arg5: memref<48x96xbf16, #tpu.memory_space<vmem>>, %arg6: memref<1x96xf32, #tpu.memory_space<vmem>>, %arg7: memref<48x48xbf16, #tpu.memory_space<vmem>>, %arg8: memref<1x48xf32, #tpu.memory_space<vmem>>, %arg9: memref<1x48xf32, #tpu.memory_space<vmem>>, %arg10: memref<1x48xf32, #tpu.memory_space<vmem>>, %arg11: memref<48x192xbf16, #tpu.memory_space<vmem>>, %arg12: memref<1x192xf32, #tpu.memory_space<vmem>>, %arg13: memref<192x48xbf16, #tpu.memory_space<vmem>>, %arg14: memref<1x48xf32, #tpu.memory_space<vmem>>, %arg15: memref<1x48xf32, #tpu.memory_space<vmem>>, %arg16: memref<1x48xf32, #tpu.memory_space<vmem>>, %arg17: memref<32x48xf32, #tpu.memory_space<vmem>>) attributes {dimension_semantics = [#tpu.dimension_semantics<parallel>], iteration_bounds = array<i64: 2>, scalar_prefetch = 0 : i64, scratch_operands = 0 : i64, tpu.core_type = #tpu.core_type<tc>, window_params = [{transform_indices = @transform_0, window_bounds = array<i64: 32, 48>}, {transform_indices = @transform_1, window_bounds = array<i64: 16, 48>}, {pipeline_mode = #tpu.pipeline_mode<synchronous>, transform_indices = @transform_2, window_bounds = array<i64: 48, 48>}, {pipeline_mode = #tpu.pipeline_mode<synchronous>, transform_indices = @transform_3, window_bounds = array<i64: 1, 48>}, {pipeline_mode = #tpu.pipeline_mode<synchronous>, transform_indices = @transform_4, window_bounds = array<i64: 48, 96>}, {pipeline_mode = #tpu.pipeline_mode<synchronous>, transform_indices = @transform_5, window_bounds = array<i64: 1, 96>}, {pipeline_mode = #tpu.pipeline_mode<synchronous>, transform_indices = @transform_6, window_bounds = array<i64: 48, 48>}, {pipeline_mode = #tpu.pipeline_mode<synchronous>, transform_indices = @transform_7, window_bounds = array<i64: 1, 48>}, {pipeline_mode = #tpu.pipeline_mode<synchronous>, transform_indices = @transform_8, window_bounds = array<i64: 1, 48>}, {pipeline_mode = #tpu.pipeline_mode<synchronous>, transform_indices = @transform_9, window_bounds = array<i64: 1, 48>}, {pipeline_mode = #tpu.pipeline_mode<synchronous>, transform_indices = @transform_10, window_bounds = array<i64: 48, 192>}, {pipeline_mode = #tpu.pipeline_mode<synchronous>, transform_indices = @transform_11, window_bounds = array<i64: 1, 192>}, {pipeline_mode = #tpu.pipeline_mode<synchronous>, transform_indices = @transform_12, window_bounds = array<i64: 192, 48>}, {pipeline_mode = #tpu.pipeline_mode<synchronous>, transform_indices = @transform_13, window_bounds = array<i64: 1, 48>}, {pipeline_mode = #tpu.pipeline_mode<synchronous>, transform_indices = @transform_14, window_bounds = array<i64: 1, 48>}, {pipeline_mode = #tpu.pipeline_mode<synchronous>, transform_indices = @transform_15, window_bounds = array<i64: 1, 48>}, {transform_indices = @transform_16, window_bounds = array<i64: 32, 48>}]} {
    %c0 = arith.constant 0 : index
    %c0_0 = arith.constant 0 : index
    %0 = vector.load %arg1[%c0, %c0_0] : memref<32x48xf32, #tpu.memory_space<vmem>>, vector<32x48xf32>
    %c0_1 = arith.constant 0 : index
    %c0_2 = arith.constant 0 : index
    %1 = vector.load %arg2[%c0_1, %c0_2] : memref<16x48xf32, #tpu.memory_space<vmem>>, vector<16x48xf32>
    %2 = arith.truncf %0 : vector<32x48xf32> to vector<32x48xbf16>
    %c0_3 = arith.constant 0 : index
    %c0_4 = arith.constant 0 : index
    %3 = vector.load %arg3[%c0_3, %c0_4] : memref<48x48xbf16, #tpu.memory_space<vmem>>, vector<48x48xbf16>
    %cst = arith.constant dense<0.000000e+00> : vector<32x48xf32>
    %4 = tpu.matmul %2, %3, %cst {dimension_numbers = #tpu.dot_dimension_numbers<[1], [0], [0], [1], [0, 0, 1, 1], [], []>} : vector<32x48xbf16>, vector<48x48xbf16>, vector<32x48xf32> -> vector<32x48xf32>
    %c0_5 = arith.constant 0 : index
    %c0_6 = arith.constant 0 : index
    %5 = vector.load %arg4[%c0_5, %c0_6] : memref<1x48xf32, #tpu.memory_space<vmem>>, vector<1x48xf32>
    %6 = vector.broadcast %5 : vector<1x48xf32> to vector<32x48xf32>
    %7 = arith.addf %4, %6 : vector<32x48xf32>
    %8 = arith.truncf %1 : vector<16x48xf32> to vector<16x48xbf16>
    %c0_7 = arith.constant 0 : index
    %c0_8 = arith.constant 0 : index
    %9 = vector.load %arg5[%c0_7, %c0_8] : memref<48x96xbf16, #tpu.memory_space<vmem>>, vector<48x96xbf16>
    %cst_9 = arith.constant dense<0.000000e+00> : vector<16x96xf32>
    %10 = tpu.matmul %8, %9, %cst_9 {dimension_numbers = #tpu.dot_dimension_numbers<[1], [0], [0], [1], [0, 0, 1, 1], [], []>} : vector<16x48xbf16>, vector<48x96xbf16>, vector<16x96xf32> -> vector<16x96xf32>
    %c0_10 = arith.constant 0 : index
    %c0_11 = arith.constant 0 : index
    %11 = vector.load %arg6[%c0_10, %c0_11] : memref<1x96xf32, #tpu.memory_space<vmem>>, vector<1x96xf32>
    %12 = vector.broadcast %11 : vector<1x96xf32> to vector<16x96xf32>
    %13 = arith.addf %10, %12 : vector<16x96xf32>
    %14 = vector.shape_cast %7 : vector<32x48xf32> to vector<2x16x48xf32>
    %15 = vector.shape_cast %13 : vector<16x96xf32> to vector<2x8x96xf32>
    %16 = vector.extract_strided_slice %14 {offsets = [0, 0, 0], sizes = [2, 16, 8], strides = [1, 1, 1]} : vector<2x16x48xf32> to vector<2x16x8xf32>
    %17 = arith.truncf %16 : vector<2x16x8xf32> to vector<2x16x8xbf16>
    %18 = vector.extract_strided_slice %15 {offsets = [0, 0, 0], sizes = [2, 8, 8], strides = [1, 1, 1]} : vector<2x8x96xf32> to vector<2x8x8xf32>
    %19 = arith.truncf %18 : vector<2x8x8xf32> to vector<2x8x8xbf16>
    %20 = vector.extract_strided_slice %15 {offsets = [0, 0, 48], sizes = [2, 8, 8], strides = [1, 1, 1]} : vector<2x8x96xf32> to vector<2x8x8xf32>
    %21 = arith.truncf %20 : vector<2x8x8xf32> to vector<2x8x8xbf16>
    "tpu.trace_start"() <{level = 10 : i32, message = "bld,bsd->bls"}> : () -> ()
    %cst_12 = arith.constant dense<0.000000e+00> : vector<2x16x8xf32>
    %22 = tpu.matmul %17, %19, %cst_12 {dimension_numbers = #tpu.dot_dimension_numbers<[2], [2], [1], [1], [0, 0, 0, 1, 1, 1], [0], [0]>} : vector<2x16x8xbf16>, vector<2x8x8xbf16>, vector<2x16x8xf32> -> vector<2x16x8xf32>
    "tpu.trace_stop"() : () -> ()
    %cst_13 = arith.constant dense<0xFF800000> : vector<2x16xf32>
    %23 = vector.multi_reduction <maximumf>, %22, %cst_13 [2] : vector<2x16x8xf32> to vector<2x16xf32>
    %24 = vector.shape_cast %23 : vector<2x16xf32> to vector<2x16x1xf32>
    %25 = vector.broadcast %24 : vector<2x16x1xf32> to vector<2x16x8xf32>
    %26 = arith.subf %22, %25 : vector<2x16x8xf32>
    %27 = math.exp %26 : vector<2x16x8xf32>
    %cst_14 = arith.constant dense<0.000000e+00> : vector<2x16xf32>
    %28 = vector.multi_reduction <add>, %27, %cst_14 [2] : vector<2x16x8xf32> to vector<2x16xf32>
    %29 = vector.shape_cast %28 : vector<2x16xf32> to vector<2x16x1xf32>
    %30 = tpu.reciprocal %29 {approx = true} : vector<2x16x1xf32> -> vector<2x16x1xf32>
    %31 = vector.broadcast %30 : vector<2x16x1xf32> to vector<2x16x8xf32>
    %32 = arith.mulf %27, %31 : vector<2x16x8xf32>
    %33 = arith.truncf %32 : vector<2x16x8xf32> to vector<2x16x8xbf16>
    "tpu.trace_start"() <{level = 10 : i32, message = "bls,bsd->bld"}> : () -> ()
    %cst_15 = arith.constant dense<0.000000e+00> : vector<2x16x8xf32>
    %34 = tpu.matmul %33, %21, %cst_15 {dimension_numbers = #tpu.dot_dimension_numbers<[2], [1], [1], [2], [0, 0, 0, 1, 1, 2], [0], [0]>} : vector<2x16x8xbf16>, vector<2x8x8xbf16>, vector<2x16x8xf32> -> vector<2x16x8xf32>
    "tpu.trace_stop"() : () -> ()
    %35 = arith.truncf %34 : vector<2x16x8xf32> to vector<2x16x8xbf16>
    %36 = vector.extract_strided_slice %14 {offsets = [0, 0, 8], sizes = [2, 16, 8], strides = [1, 1, 1]} : vector<2x16x48xf32> to vector<2x16x8xf32>
    %37 = arith.truncf %36 : vector<2x16x8xf32> to vector<2x16x8xbf16>
    %38 = vector.extract_strided_slice %15 {offsets = [0, 0, 8], sizes = [2, 8, 8], strides = [1, 1, 1]} : vector<2x8x96xf32> to vector<2x8x8xf32>
    %39 = arith.truncf %38 : vector<2x8x8xf32> to vector<2x8x8xbf16>
    %40 = vector.extract_strided_slice %15 {offsets = [0, 0, 56], sizes = [2, 8, 8], strides = [1, 1, 1]} : vector<2x8x96xf32> to vector<2x8x8xf32>
    %41 = arith.truncf %40 : vector<2x8x8xf32> to vector<2x8x8xbf16>
    "tpu.trace_start"() <{level = 10 : i32, message = "bld,bsd->bls"}> : () -> ()
    %cst_16 = arith.constant dense<0.000000e+00> : vector<2x16x8xf32>
    %42 = tpu.matmul %37, %39, %cst_16 {dimension_numbers = #tpu.dot_dimension_numbers<[2], [2], [1], [1], [0, 0, 0, 1, 1, 1], [0], [0]>} : vector<2x16x8xbf16>, vector<2x8x8xbf16>, vector<2x16x8xf32> -> vector<2x16x8xf32>
    "tpu.trace_stop"() : () -> ()
    %cst_17 = arith.constant dense<0xFF800000> : vector<2x16xf32>
    %43 = vector.multi_reduction <maximumf>, %42, %cst_17 [2] : vector<2x16x8xf32> to vector<2x16xf32>
    %44 = vector.shape_cast %43 : vector<2x16xf32> to vector<2x16x1xf32>
    %45 = vector.broadcast %44 : vector<2x16x1xf32> to vector<2x16x8xf32>
    %46 = arith.subf %42, %45 : vector<2x16x8xf32>
    %47 = math.exp %46 : vector<2x16x8xf32>
    %cst_18 = arith.constant dense<0.000000e+00> : vector<2x16xf32>
    %48 = vector.multi_reduction <add>, %47, %cst_18 [2] : vector<2x16x8xf32> to vector<2x16xf32>
    %49 = vector.shape_cast %48 : vector<2x16xf32> to vector<2x16x1xf32>
    %50 = tpu.reciprocal %49 {approx = true} : vector<2x16x1xf32> -> vector<2x16x1xf32>
    %51 = vector.broadcast %50 : vector<2x16x1xf32> to vector<2x16x8xf32>
    %52 = arith.mulf %47, %51 : vector<2x16x8xf32>
    %53 = arith.truncf %52 : vector<2x16x8xf32> to vector<2x16x8xbf16>
    "tpu.trace_start"() <{level = 10 : i32, message = "bls,bsd->bld"}> : () -> ()
    %cst_19 = arith.constant dense<0.000000e+00> : vector<2x16x8xf32>
    %54 = tpu.matmul %53, %41, %cst_19 {dimension_numbers = #tpu.dot_dimension_numbers<[2], [1], [1], [2], [0, 0, 0, 1, 1, 2], [0], [0]>} : vector<2x16x8xbf16>, vector<2x8x8xbf16>, vector<2x16x8xf32> -> vector<2x16x8xf32>
    "tpu.trace_stop"() : () -> ()
    %55 = arith.truncf %54 : vector<2x16x8xf32> to vector<2x16x8xbf16>
    %56 = vector.extract_strided_slice %14 {offsets = [0, 0, 16], sizes = [2, 16, 8], strides = [1, 1, 1]} : vector<2x16x48xf32> to vector<2x16x8xf32>
    %57 = arith.truncf %56 : vector<2x16x8xf32> to vector<2x16x8xbf16>
    %58 = vector.extract_strided_slice %15 {offsets = [0, 0, 16], sizes = [2, 8, 8], strides = [1, 1, 1]} : vector<2x8x96xf32> to vector<2x8x8xf32>
    %59 = arith.truncf %58 : vector<2x8x8xf32> to vector<2x8x8xbf16>
    %60 = vector.extract_strided_slice %15 {offsets = [0, 0, 64], sizes = [2, 8, 8], strides = [1, 1, 1]} : vector<2x8x96xf32> to vector<2x8x8xf32>
    %61 = arith.truncf %60 : vector<2x8x8xf32> to vector<2x8x8xbf16>
    "tpu.trace_start"() <{level = 10 : i32, message = "bld,bsd->bls"}> : () -> ()
    %cst_20 = arith.constant dense<0.000000e+00> : vector<2x16x8xf32>
    %62 = tpu.matmul %57, %59, %cst_20 {dimension_numbers = #tpu.dot_dimension_numbers<[2], [2], [1], [1], [0, 0, 0, 1, 1, 1], [0], [0]>} : vector<2x16x8xbf16>, vector<2x8x8xbf16>, vector<2x16x8xf32> -> vector<2x16x8xf32>
    "tpu.trace_stop"() : () -> ()
    %cst_21 = arith.constant dense<0xFF800000> : vector<2x16xf32>
    %63 = vector.multi_reduction <maximumf>, %62, %cst_21 [2] : vector<2x16x8xf32> to vector<2x16xf32>
    %64 = vector.shape_cast %63 : vector<2x16xf32> to vector<2x16x1xf32>
    %65 = vector.broadcast %64 : vector<2x16x1xf32> to vector<2x16x8xf32>
    %66 = arith.subf %62, %65 : vector<2x16x8xf32>
    %67 = math.exp %66 : vector<2x16x8xf32>
    %cst_22 = arith.constant dense<0.000000e+00> : vector<2x16xf32>
    %68 = vector.multi_reduction <add>, %67, %cst_22 [2] : vector<2x16x8xf32> to vector<2x16xf32>
    %69 = vector.shape_cast %68 : vector<2x16xf32> to vector<2x16x1xf32>
    %70 = tpu.reciprocal %69 {approx = true} : vector<2x16x1xf32> -> vector<2x16x1xf32>
    %71 = vector.broadcast %70 : vector<2x16x1xf32> to vector<2x16x8xf32>
    %72 = arith.mulf %67, %71 : vector<2x16x8xf32>
    %73 = arith.truncf %72 : vector<2x16x8xf32> to vector<2x16x8xbf16>
    "tpu.trace_start"() <{level = 10 : i32, message = "bls,bsd->bld"}> : () -> ()
    %cst_23 = arith.constant dense<0.000000e+00> : vector<2x16x8xf32>
    %74 = tpu.matmul %73, %61, %cst_23 {dimension_numbers = #tpu.dot_dimension_numbers<[2], [1], [1], [2], [0, 0, 0, 1, 1, 2], [0], [0]>} : vector<2x16x8xbf16>, vector<2x8x8xbf16>, vector<2x16x8xf32> -> vector<2x16x8xf32>
    "tpu.trace_stop"() : () -> ()
    %75 = arith.truncf %74 : vector<2x16x8xf32> to vector<2x16x8xbf16>
    %76 = vector.extract_strided_slice %14 {offsets = [0, 0, 24], sizes = [2, 16, 8], strides = [1, 1, 1]} : vector<2x16x48xf32> to vector<2x16x8xf32>
    %77 = arith.truncf %76 : vector<2x16x8xf32> to vector<2x16x8xbf16>
    %78 = vector.extract_strided_slice %15 {offsets = [0, 0, 24], sizes = [2, 8, 8], strides = [1, 1, 1]} : vector<2x8x96xf32> to vector<2x8x8xf32>
    %79 = arith.truncf %78 : vector<2x8x8xf32> to vector<2x8x8xbf16>
    %80 = vector.extract_strided_slice %15 {offsets = [0, 0, 72], sizes = [2, 8, 8], strides = [1, 1, 1]} : vector<2x8x96xf32> to vector<2x8x8xf32>
    %81 = arith.truncf %80 : vector<2x8x8xf32> to vector<2x8x8xbf16>
    "tpu.trace_start"() <{level = 10 : i32, message = "bld,bsd->bls"}> : () -> ()
    %cst_24 = arith.constant dense<0.000000e+00> : vector<2x16x8xf32>
    %82 = tpu.matmul %77, %79, %cst_24 {dimension_numbers = #tpu.dot_dimension_numbers<[2], [2], [1], [1], [0, 0, 0, 1, 1, 1], [0], [0]>} : vector<2x16x8xbf16>, vector<2x8x8xbf16>, vector<2x16x8xf32> -> vector<2x16x8xf32>
    "tpu.trace_stop"() : () -> ()
    %cst_25 = arith.constant dense<0xFF800000> : vector<2x16xf32>
    %83 = vector.multi_reduction <maximumf>, %82, %cst_25 [2] : vector<2x16x8xf32> to vector<2x16xf32>
    %84 = vector.shape_cast %83 : vector<2x16xf32> to vector<2x16x1xf32>
    %85 = vector.broadcast %84 : vector<2x16x1xf32> to vector<2x16x8xf32>
    %86 = arith.subf %82, %85 : vector<2x16x8xf32>
    %87 = math.exp %86 : vector<2x16x8xf32>
    %cst_26 = arith.constant dense<0.000000e+00> : vector<2x16xf32>
    %88 = vector.multi_reduction <add>, %87, %cst_26 [2] : vector<2x16x8xf32> to vector<2x16xf32>
    %89 = vector.shape_cast %88 : vector<2x16xf32> to vector<2x16x1xf32>
    %90 = tpu.reciprocal %89 {approx = true} : vector<2x16x1xf32> -> vector<2x16x1xf32>
    %91 = vector.broadcast %90 : vector<2x16x1xf32> to vector<2x16x8xf32>
    %92 = arith.mulf %87, %91 : vector<2x16x8xf32>
    %93 = arith.truncf %92 : vector<2x16x8xf32> to vector<2x16x8xbf16>
    "tpu.trace_start"() <{level = 10 : i32, message = "bls,bsd->bld"}> : () -> ()
    %cst_27 = arith.constant dense<0.000000e+00> : vector<2x16x8xf32>
    %94 = tpu.matmul %93, %81, %cst_27 {dimension_numbers = #tpu.dot_dimension_numbers<[2], [1], [1], [2], [0, 0, 0, 1, 1, 2], [0], [0]>} : vector<2x16x8xbf16>, vector<2x8x8xbf16>, vector<2x16x8xf32> -> vector<2x16x8xf32>
    "tpu.trace_stop"() : () -> ()
    %95 = arith.truncf %94 : vector<2x16x8xf32> to vector<2x16x8xbf16>
    %96 = vector.extract_strided_slice %14 {offsets = [0, 0, 32], sizes = [2, 16, 8], strides = [1, 1, 1]} : vector<2x16x48xf32> to vector<2x16x8xf32>
    %97 = arith.truncf %96 : vector<2x16x8xf32> to vector<2x16x8xbf16>
    %98 = vector.extract_strided_slice %15 {offsets = [0, 0, 32], sizes = [2, 8, 8], strides = [1, 1, 1]} : vector<2x8x96xf32> to vector<2x8x8xf32>
    %99 = arith.truncf %98 : vector<2x8x8xf32> to vector<2x8x8xbf16>
    %100 = vector.extract_strided_slice %15 {offsets = [0, 0, 80], sizes = [2, 8, 8], strides = [1, 1, 1]} : vector<2x8x96xf32> to vector<2x8x8xf32>
    %101 = arith.truncf %100 : vector<2x8x8xf32> to vector<2x8x8xbf16>
    "tpu.trace_start"() <{level = 10 : i32, message = "bld,bsd->bls"}> : () -> ()
    %cst_28 = arith.constant dense<0.000000e+00> : vector<2x16x8xf32>
    %102 = tpu.matmul %97, %99, %cst_28 {dimension_numbers = #tpu.dot_dimension_numbers<[2], [2], [1], [1], [0, 0, 0, 1, 1, 1], [0], [0]>} : vector<2x16x8xbf16>, vector<2x8x8xbf16>, vector<2x16x8xf32> -> vector<2x16x8xf32>
    "tpu.trace_stop"() : () -> ()
    %cst_29 = arith.constant dense<0xFF800000> : vector<2x16xf32>
    %103 = vector.multi_reduction <maximumf>, %102, %cst_29 [2] : vector<2x16x8xf32> to vector<2x16xf32>
    %104 = vector.shape_cast %103 : vector<2x16xf32> to vector<2x16x1xf32>
    %105 = vector.broadcast %104 : vector<2x16x1xf32> to vector<2x16x8xf32>
    %106 = arith.subf %102, %105 : vector<2x16x8xf32>
    %107 = math.exp %106 : vector<2x16x8xf32>
    %cst_30 = arith.constant dense<0.000000e+00> : vector<2x16xf32>
    %108 = vector.multi_reduction <add>, %107, %cst_30 [2] : vector<2x16x8xf32> to vector<2x16xf32>
    %109 = vector.shape_cast %108 : vector<2x16xf32> to vector<2x16x1xf32>
    %110 = tpu.reciprocal %109 {approx = true} : vector<2x16x1xf32> -> vector<2x16x1xf32>
    %111 = vector.broadcast %110 : vector<2x16x1xf32> to vector<2x16x8xf32>
    %112 = arith.mulf %107, %111 : vector<2x16x8xf32>
    %113 = arith.truncf %112 : vector<2x16x8xf32> to vector<2x16x8xbf16>
    "tpu.trace_start"() <{level = 10 : i32, message = "bls,bsd->bld"}> : () -> ()
    %cst_31 = arith.constant dense<0.000000e+00> : vector<2x16x8xf32>
    %114 = tpu.matmul %113, %101, %cst_31 {dimension_numbers = #tpu.dot_dimension_numbers<[2], [1], [1], [2], [0, 0, 0, 1, 1, 2], [0], [0]>} : vector<2x16x8xbf16>, vector<2x8x8xbf16>, vector<2x16x8xf32> -> vector<2x16x8xf32>
    "tpu.trace_stop"() : () -> ()
    %115 = arith.truncf %114 : vector<2x16x8xf32> to vector<2x16x8xbf16>
    %116 = vector.extract_strided_slice %14 {offsets = [0, 0, 40], sizes = [2, 16, 8], strides = [1, 1, 1]} : vector<2x16x48xf32> to vector<2x16x8xf32>
    %117 = arith.truncf %116 : vector<2x16x8xf32> to vector<2x16x8xbf16>
    %118 = vector.extract_strided_slice %15 {offsets = [0, 0, 40], sizes = [2, 8, 8], strides = [1, 1, 1]} : vector<2x8x96xf32> to vector<2x8x8xf32>
    %119 = arith.truncf %118 : vector<2x8x8xf32> to vector<2x8x8xbf16>
    %120 = vector.extract_strided_slice %15 {offsets = [0, 0, 88], sizes = [2, 8, 8], strides = [1, 1, 1]} : vector<2x8x96xf32> to vector<2x8x8xf32>
    %121 = arith.truncf %120 : vector<2x8x8xf32> to vector<2x8x8xbf16>
    "tpu.trace_start"() <{level = 10 : i32, message = "bld,bsd->bls"}> : () -> ()
    %cst_32 = arith.constant dense<0.000000e+00> : vector<2x16x8xf32>
    %122 = tpu.matmul %117, %119, %cst_32 {dimension_numbers = #tpu.dot_dimension_numbers<[2], [2], [1], [1], [0, 0, 0, 1, 1, 1], [0], [0]>} : vector<2x16x8xbf16>, vector<2x8x8xbf16>, vector<2x16x8xf32> -> vector<2x16x8xf32>
    "tpu.trace_stop"() : () -> ()
    %cst_33 = arith.constant dense<0xFF800000> : vector<2x16xf32>
    %123 = vector.multi_reduction <maximumf>, %122, %cst_33 [2] : vector<2x16x8xf32> to vector<2x16xf32>
    %124 = vector.shape_cast %123 : vector<2x16xf32> to vector<2x16x1xf32>
    %125 = vector.broadcast %124 : vector<2x16x1xf32> to vector<2x16x8xf32>
    %126 = arith.subf %122, %125 : vector<2x16x8xf32>
    %127 = math.exp %126 : vector<2x16x8xf32>
    %cst_34 = arith.constant dense<0.000000e+00> : vector<2x16xf32>
    %128 = vector.multi_reduction <add>, %127, %cst_34 [2] : vector<2x16x8xf32> to vector<2x16xf32>
    %129 = vector.shape_cast %128 : vector<2x16xf32> to vector<2x16x1xf32>
    %130 = tpu.reciprocal %129 {approx = true} : vector<2x16x1xf32> -> vector<2x16x1xf32>
    %131 = vector.broadcast %130 : vector<2x16x1xf32> to vector<2x16x8xf32>
    %132 = arith.mulf %127, %131 : vector<2x16x8xf32>
    %133 = arith.truncf %132 : vector<2x16x8xf32> to vector<2x16x8xbf16>
    "tpu.trace_start"() <{level = 10 : i32, message = "bls,bsd->bld"}> : () -> ()
    %cst_35 = arith.constant dense<0.000000e+00> : vector<2x16x8xf32>
    %134 = tpu.matmul %133, %121, %cst_35 {dimension_numbers = #tpu.dot_dimension_numbers<[2], [1], [1], [2], [0, 0, 0, 1, 1, 2], [0], [0]>} : vector<2x16x8xbf16>, vector<2x8x8xbf16>, vector<2x16x8xf32> -> vector<2x16x8xf32>
    "tpu.trace_stop"() : () -> ()
    %135 = arith.truncf %134 : vector<2x16x8xf32> to vector<2x16x8xbf16>
    %136 = tpu.concatenate %35, %55, %75, %95, %115, %135 in 2 : vector<2x16x8xbf16>, vector<2x16x8xbf16>, vector<2x16x8xbf16>, vector<2x16x8xbf16>, vector<2x16x8xbf16>, vector<2x16x8xbf16> -> vector<2x16x48xbf16>
    %137 = vector.shape_cast %136 : vector<2x16x48xbf16> to vector<32x48xbf16>
    %c0_36 = arith.constant 0 : index
    %c0_37 = arith.constant 0 : index
    %138 = vector.load %arg7[%c0_36, %c0_37] : memref<48x48xbf16, #tpu.memory_space<vmem>>, vector<48x48xbf16>
    %cst_38 = arith.constant dense<0.000000e+00> : vector<32x48xf32>
    %139 = tpu.matmul %137, %138, %cst_38 {dimension_numbers = #tpu.dot_dimension_numbers<[1], [0], [0], [1], [0, 0, 1, 1], [], []>} : vector<32x48xbf16>, vector<48x48xbf16>, vector<32x48xf32> -> vector<32x48xf32>
    %c0_39 = arith.constant 0 : index
    %c0_40 = arith.constant 0 : index
    %140 = vector.load %arg8[%c0_39, %c0_40] : memref<1x48xf32, #tpu.memory_space<vmem>>, vector<1x48xf32>
    %141 = vector.broadcast %140 : vector<1x48xf32> to vector<32x48xf32>
    %142 = arith.addf %139, %141 : vector<32x48xf32>
    %143 = arith.addf %0, %142 : vector<32x48xf32>
    %c0_41 = arith.constant 0 : index
    %c0_42 = arith.constant 0 : index
    %144 = vector.load %arg9[%c0_41, %c0_42] : memref<1x48xf32, #tpu.memory_space<vmem>>, vector<1x48xf32>
    %c0_43 = arith.constant 0 : index
    %c0_44 = arith.constant 0 : index
    %145 = vector.load %arg10[%c0_43, %c0_44] : memref<1x48xf32, #tpu.memory_space<vmem>>, vector<1x48xf32>
    %cst_45 = arith.constant dense<0.000000e+00> : vector<32xf32>
    %146 = vector.multi_reduction <add>, %143, %cst_45 [1] : vector<32x48xf32> to vector<32xf32>
    %147 = vector.shape_cast %146 : vector<32xf32> to vector<32x1xf32>
    %cst_46 = arith.constant 4.800000e+01 : f32
    %148 = vector.broadcast %cst_46 : f32 to vector<32x1xf32>
    %149 = arith.divf %147, %148 : vector<32x1xf32>
    %150 = vector.broadcast %149 : vector<32x1xf32> to vector<32x48xf32>
    %151 = arith.subf %143, %150 : vector<32x48xf32>
    %152 = arith.mulf %151, %151 : vector<32x48xf32>
    %cst_47 = arith.constant dense<0.000000e+00> : vector<32xf32>
    %153 = vector.multi_reduction <add>, %152, %cst_47 [1] : vector<32x48xf32> to vector<32xf32>
    %154 = vector.shape_cast %153 : vector<32xf32> to vector<32x1xf32>
    %cst_48 = arith.constant 4.800000e+01 : f32
    %155 = vector.broadcast %cst_48 : f32 to vector<32x1xf32>
    %156 = arith.divf %154, %155 : vector<32x1xf32>
    %cst_49 = arith.constant 9.99999974E-6 : f32
    %157 = vector.broadcast %cst_49 : f32 to vector<32x1xf32>
    %158 = arith.addf %156, %157 : vector<32x1xf32>
    %159 = math.rsqrt %158 : vector<32x1xf32>
    %160 = vector.broadcast %159 : vector<32x1xf32> to vector<32x48xf32>
    %161 = arith.mulf %151, %160 : vector<32x48xf32>
    %162 = vector.broadcast %144 : vector<1x48xf32> to vector<32x48xf32>
    %163 = arith.mulf %161, %162 : vector<32x48xf32>
    %164 = vector.broadcast %145 : vector<1x48xf32> to vector<32x48xf32>
    %165 = arith.addf %163, %164 : vector<32x48xf32>
    %166 = arith.truncf %165 : vector<32x48xf32> to vector<32x48xbf16>
    %c0_50 = arith.constant 0 : index
    %c0_51 = arith.constant 0 : index
    %167 = vector.load %arg11[%c0_50, %c0_51] : memref<48x192xbf16, #tpu.memory_space<vmem>>, vector<48x192xbf16>
    %cst_52 = arith.constant dense<0.000000e+00> : vector<32x192xf32>
    %168 = tpu.matmul %166, %167, %cst_52 {dimension_numbers = #tpu.dot_dimension_numbers<[1], [0], [0], [1], [0, 0, 1, 1], [], []>} : vector<32x48xbf16>, vector<48x192xbf16>, vector<32x192xf32> -> vector<32x192xf32>
    %c0_53 = arith.constant 0 : index
    %c0_54 = arith.constant 0 : index
    %169 = vector.load %arg12[%c0_53, %c0_54] : memref<1x192xf32, #tpu.memory_space<vmem>>, vector<1x192xf32>
    %170 = vector.broadcast %169 : vector<1x192xf32> to vector<32x192xf32>
    %171 = arith.addf %168, %170 : vector<32x192xf32>
    %cst_55 = arith.constant 0.000000e+00 : f32
    %172 = vector.broadcast %cst_55 : f32 to vector<32x192xf32>
    %173 = arith.maximumf %171, %172 : vector<32x192xf32>
    %174 = arith.truncf %173 : vector<32x192xf32> to vector<32x192xbf16>
    %c0_56 = arith.constant 0 : index
    %c0_57 = arith.constant 0 : index
    %175 = vector.load %arg13[%c0_56, %c0_57] : memref<192x48xbf16, #tpu.memory_space<vmem>>, vector<192x48xbf16>
    %cst_58 = arith.constant dense<0.000000e+00> : vector<32x48xf32>
    %176 = tpu.matmul %174, %175, %cst_58 {dimension_numbers = #tpu.dot_dimension_numbers<[1], [0], [0], [1], [0, 0, 1, 1], [], []>} : vector<32x192xbf16>, vector<192x48xbf16>, vector<32x48xf32> -> vector<32x48xf32>
    %c0_59 = arith.constant 0 : index
    %c0_60 = arith.constant 0 : index
    %177 = vector.load %arg14[%c0_59, %c0_60] : memref<1x48xf32, #tpu.memory_space<vmem>>, vector<1x48xf32>
    %178 = vector.broadcast %177 : vector<1x48xf32> to vector<32x48xf32>
    %179 = arith.addf %176, %178 : vector<32x48xf32>
    %180 = arith.addf %165, %179 : vector<32x48xf32>
    %c0_61 = arith.constant 0 : index
    %c0_62 = arith.constant 0 : index
    %181 = vector.load %arg15[%c0_61, %c0_62] : memref<1x48xf32, #tpu.memory_space<vmem>>, vector<1x48xf32>
    %c0_63 = arith.constant 0 : index
    %c0_64 = arith.constant 0 : index
    %182 = vector.load %arg16[%c0_63, %c0_64] : memref<1x48xf32, #tpu.memory_space<vmem>>, vector<1x48xf32>
    %cst_65 = arith.constant dense<0.000000e+00> : vector<32xf32>
    %183 = vector.multi_reduction <add>, %180, %cst_65 [1] : vector<32x48xf32> to vector<32xf32>
    %184 = vector.shape_cast %183 : vector<32xf32> to vector<32x1xf32>
    %cst_66 = arith.constant 4.800000e+01 : f32
    %185 = vector.broadcast %cst_66 : f32 to vector<32x1xf32>
    %186 = arith.divf %184, %185 : vector<32x1xf32>
    %187 = vector.broadcast %186 : vector<32x1xf32> to vector<32x48xf32>
    %188 = arith.subf %180, %187 : vector<32x48xf32>
    %189 = arith.mulf %188, %188 : vector<32x48xf32>
    %cst_67 = arith.constant dense<0.000000e+00> : vector<32xf32>
    %190 = vector.multi_reduction <add>, %189, %cst_67 [1] : vector<32x48xf32> to vector<32xf32>
    %191 = vector.shape_cast %190 : vector<32xf32> to vector<32x1xf32>
    %cst_68 = arith.constant 4.800000e+01 : f32
    %192 = vector.broadcast %cst_68 : f32 to vector<32x1xf32>
    %193 = arith.divf %191, %192 : vector<32x1xf32>
    %cst_69 = arith.constant 9.99999974E-6 : f32
    %194 = vector.broadcast %cst_69 : f32 to vector<32x1xf32>
    %195 = arith.addf %193, %194 : vector<32x1xf32>
    %196 = math.rsqrt %195 : vector<32x1xf32>
    %197 = vector.broadcast %196 : vector<32x1xf32> to vector<32x48xf32>
    %198 = arith.mulf %188, %197 : vector<32x48xf32>
    %199 = vector.broadcast %181 : vector<1x48xf32> to vector<32x48xf32>
    %200 = arith.mulf %198, %199 : vector<32x48xf32>
    %201 = vector.broadcast %182 : vector<1x48xf32> to vector<32x48xf32>
    %202 = arith.addf %200, %201 : vector<32x48xf32>
    %c0_70 = arith.constant 0 : index
    %c0_71 = arith.constant 0 : index
    %203 = vector.load %arg17[%c0_70, %c0_71] : memref<32x48xf32, #tpu.memory_space<vmem>>, vector<32x48xf32>
    tpu.vector_store %arg17[%c0_70, %c0_71], %202 {strides = array<i32>} : memref<32x48xf32, #tpu.memory_space<vmem>>, vector<32x48xf32>,
    return
  }
  func.func @transform_0(%arg0: i32) -> (i32, i32) {
    %c0_i32 = arith.constant 0 : i32
    %c0_i32_0 = arith.constant 0 : i32
    return %arg0, %c0_i32 : i32, i32
  }
  func.func @transform_1(%arg0: i32) -> (i32, i32) {
    %c0_i32 = arith.constant 0 : i32
    %c0_i32_0 = arith.constant 0 : i32
    return %arg0, %c0_i32 : i32, i32
  }
  func.func @transform_2(%arg0: i32) -> (i32, i32) {
    %c0_i32 = arith.constant 0 : i32
    %c0_i32_0 = arith.constant 0 : i32
    %c0_i32_1 = arith.constant 0 : i32
    return %c0_i32, %c0_i32_0 : i32, i32
  }
  func.func @transform_3(%arg0: i32) -> (i32, i32) {
    %c0_i32 = arith.constant 0 : i32
    %c0_i32_0 = arith.constant 0 : i32
    %c0_i32_1 = arith.constant 0 : i32
    return %c0_i32, %c0_i32_0 : i32, i32
  }
  func.func @transform_4(%arg0: i32) -> (i32, i32) {
    %c0_i32 = arith.constant 0 : i32
    %c0_i32_0 = arith.constant 0 : i32
    %c0_i32_1 = arith.constant 0 : i32
    return %c0_i32, %c0_i32_0 : i32, i32
  }
  func.func @transform_5(%arg0: i32) -> (i32, i32) {
    %c0_i32 = arith.constant 0 : i32
    %c0_i32_0 = arith.constant 0 : i32
    %c0_i32_1 = arith.constant 0 : i32
    return %c0_i32, %c0_i32_0 : i32, i32
  }
  func.func @transform_6(%arg0: i32) -> (i32, i32) {
    %c0_i32 = arith.constant 0 : i32
    %c0_i32_0 = arith.constant 0 : i32
    %c0_i32_1 = arith.constant 0 : i32
    return %c0_i32, %c0_i32_0 : i32, i32
  }
  func.func @transform_7(%arg0: i32) -> (i32, i32) {
    %c0_i32 = arith.constant 0 : i32
    %c0_i32_0 = arith.constant 0 : i32
    %c0_i32_1 = arith.constant 0 : i32
    return %c0_i32, %c0_i32_0 : i32, i32
  }
  func.func @transform_8(%arg0: i32) -> (i32, i32) {
    %c0_i32 = arith.constant 0 : i32
    %c0_i32_0 = arith.constant 0 : i32
    %c0_i32_1 = arith.constant 0 : i32
    return %c0_i32, %c0_i32_0 : i32, i32
  }
  func.func @transform_9(%arg0: i32) -> (i32, i32) {
    %c0_i32 = arith.constant 0 : i32
    %c0_i32_0 = arith.constant 0 : i32
    %c0_i32_1 = arith.constant 0 : i32
    return %c0_i32, %c0_i32_0 : i32, i32
  }
  func.func @transform_10(%arg0: i32) -> (i32, i32) {
    %c0_i32 = arith.constant 0 : i32
    %c0_i32_0 = arith.constant 0 : i32
    %c0_i32_1 = arith.constant 0 : i32
    return %c0_i32, %c0_i32_0 : i32, i32
  }
  func.func @transform_11(%arg0: i32) -> (i32, i32) {
    %c0_i32 = arith.constant 0 : i32
    %c0_i32_0 = arith.constant 0 : i32
    %c0_i32_1 = arith.constant 0 : i32
    return %c0_i32, %c0_i32_0 : i32, i32
  }
  func.func @transform_12(%arg0: i32) -> (i32, i32) {
    %c0_i32 = arith.constant 0 : i32
    %c0_i32_0 = arith.constant 0 : i32
    %c0_i32_1 = arith.constant 0 : i32
    return %c0_i32, %c0_i32_0 : i32, i32
  }
  func.func @transform_13(%arg0: i32) -> (i32, i32) {
    %c0_i32 = arith.constant 0 : i32
    %c0_i32_0 = arith.constant 0 : i32
    %c0_i32_1 = arith.constant 0 : i32
    return %c0_i32, %c0_i32_0 : i32, i32
  }
  func.func @transform_14(%arg0: i32) -> (i32, i32) {
    %c0_i32 = arith.constant 0 : i32
    %c0_i32_0 = arith.constant 0 : i32
    %c0_i32_1 = arith.constant 0 : i32
    return %c0_i32, %c0_i32_0 : i32, i32
  }
  func.func @transform_15(%arg0: i32) -> (i32, i32) {
    %c0_i32 = arith.constant 0 : i32
    %c0_i32_0 = arith.constant 0 : i32
    %c0_i32_1 = arith.constant 0 : i32
    return %c0_i32, %c0_i32_0 : i32, i32
  }
  func.func @transform_16(%arg0: i32) -> (i32, i32) {
    %c0_i32 = arith.constant 0 : i32
    %c0_i32_0 = arith.constant 0 : i32
    return %arg0, %c0_i32 : i32, i32
  }
}

</mosaic_0001>

<llo_original>
// kernel: tpu_custom_call.1
$region0: #{tpu_custom_call.1}
  #allocation0 [shape = 'u32[]', space=smem, size = 0x4, offset = 0x4, fixed_abs, tag = 'smem constant byte address 0x4 - core index']
  #allocation1 [shape = 'u32[144,128]{1,0:T(1,128)}', space=vmem, size = 0x12000, scoped, tag = 'internal scratch']
  %s0 = inlined_call_operand.vmem [shape: f32[64,48], index: 0, kind: input, shape index: {}]
  %s1 = inlined_call_operand.vmem [shape: f32[32,48], index: 1, kind: input, shape index: {}]
  %s2 = inlined_call_operand.vmem [shape: bf16[48,48], index: 2, kind: input, shape index: {}]
  %s3 = inlined_call_operand.vmem [shape: f32[1,48], index: 3, kind: input, shape index: {}]
  %s4 = inlined_call_operand.vmem [shape: bf16[48,96], index: 4, kind: input, shape index: {}]
  %s5 = inlined_call_operand.vmem [shape: f32[1,96], index: 5, kind: input, shape index: {}]
  %s6 = inlined_call_operand.vmem [shape: bf16[48,48], index: 6, kind: input, shape index: {}]
  %s7 = inlined_call_operand.vmem [shape: f32[1,48], index: 7, kind: input, shape index: {}]
  %s8 = inlined_call_operand.vmem [shape: f32[1,48], index: 8, kind: input, shape index: {}]
  %s9 = inlined_call_operand.vmem [shape: f32[1,48], index: 9, kind: input, shape index: {}]
  %s10 = inlined_call_operand.vmem [shape: bf16[48,192], index: 10, kind: input, shape index: {}]
  %s11 = inlined_call_operand.vmem [shape: f32[1,192], index: 11, kind: input, shape index: {}]
  %s12 = inlined_call_operand.vmem [shape: bf16[192,48], index: 12, kind: input, shape index: {}]
  %s13 = inlined_call_operand.vmem [shape: f32[1,48], index: 13, kind: input, shape index: {}]
  %s14 = inlined_call_operand.vmem [shape: f32[1,48], index: 14, kind: input, shape index: {}]
  %s15 = inlined_call_operand.vmem [shape: f32[1,48], index: 15, kind: input, shape index: {}]
  %s16 = inlined_call_operand.vmem [shape: f32[64,48], index: 16, kind: output, shape index: {}]
  %s17 = sld [smem:[#allocation0]]
  $region97: #{tpu_custom_call.1} parent=0
    _
  %s19 = ssub.s32 1, %s17
  %s20 = scalar_select 0, %s19, %s17
  loop: start=0, step=1, limit=4
  $region2: #{tpu_custom_call.1} parent=0 // loop_pre_header
    _
  $region3: #{tpu_custom_call.1} parent=0 // loop_header
    %s22 = sphi 0, %s26
    %p23 = scmp.ge.s32.totalorder %s22, 4
    %s32 = sphi 0, %s34
    %s35 = sphi 0, %s32
    %s36 = sphi 0, %s35
    %s52 = sphi 0, %s36
    %s58 = sphi 0, %s60
    %s61 = sphi 0, %s58
    %s62 = sphi 0, %s61
    %s78 = sphi 0, %s62
    %s82 = sphi 0, %s82
    %s84 = sphi 0, %s82
    %s85 = sphi 0, %s84
    %s99 = sphi 0, %s85
    %s103 = sphi 0, %s103
    %s105 = sphi 0, %s103
    %s106 = sphi 0, %s105
    %s120 = sphi 0, %s106
    %s124 = sphi 0, %s124
    %s126 = sphi 0, %s124
    %s127 = sphi 0, %s126
    %s141 = sphi 0, %s127
    %s145 = sphi 0, %s145
    %s147 = sphi 0, %s145
    %s148 = sphi 0, %s147
    %s162 = sphi 0, %s148
    %s166 = sphi 0, %s166
    %s168 = sphi 0, %s166
    %s169 = sphi 0, %s168
    %s183 = sphi 0, %s169
    %s187 = sphi 0, %s187
    %s189 = sphi 0, %s187
    %s190 = sphi 0, %s189
    %s204 = sphi 0, %s190
    %s208 = sphi 0, %s208
    %s210 = sphi 0, %s208
    %s211 = sphi 0, %s210
    %s225 = sphi 0, %s211
    %s229 = sphi 0, %s229
    %s231 = sphi 0, %s229
    %s232 = sphi 0, %s231
    %s246 = sphi 0, %s232
    %s250 = sphi 0, %s250
    %s252 = sphi 0, %s250
    %s253 = sphi 0, %s252
    %s267 = sphi 0, %s253
    %s271 = sphi 0, %s271
    %s273 = sphi 0, %s271
    %s274 = sphi 0, %s273
    %s288 = sphi 0, %s274
    %s292 = sphi 0, %s292
    %s294 = sphi 0, %s292
    %s295 = sphi 0, %s294
    %s309 = sphi 0, %s295
    %s313 = sphi 0, %s313
    %s315 = sphi 0, %s313
    %s316 = sphi 0, %s315
    %s330 = sphi 0, %s316
    %s334 = sphi 0, %s334
    %s336 = sphi 0, %s334
    %s337 = sphi 0, %s336
    %s351 = sphi 0, %s337
    %s355 = sphi 0, %s355
    %s357 = sphi 0, %s355
    %s358 = sphi 0, %s357
    %s372 = sphi 0, %s358
    %s378 = sphi 0, %s380
    %s381 = sphi 0, %s378
    %s382 = sphi 0, %s381
    %s398 = sphi 0, %s382
  $region4: #{tpu_custom_call.1} parent=0 // loop_header_branch
    %25 = sbr.rel (%p23) target = $region8
  $region5: #{tpu_custom_call.1} parent=0 // loop_body
    %s27 = ssub.s32 %s22, 1
    %s28 = ssub.s32 %s22, 2
    %s29 = sadd.s32 %s22, 1
    %s30 = ssub.s32 %s22, %s29
    %p31 = scmp.eq.s32.totalorder %s30, 0
    %s33 = sadd.s32 %s32, 1
    %s34 = scalar_select %p31, %s32, %s33
    %p37 = pneg %p31
    %p38 = scmp.eq.s32.totalorder %s22, 1
    %p39 = por %p37, %p38
    %p40 = scmp.ne.s32.totalorder %s32, %s35
    %p41 = scmp.eq.s32.totalorder %s22, 0
    %p42 = por %p40, %p41
    %p43 = scmp.ne.s32.totalorder %s32, %s35
    %p44 = scmp.eq.s32.totalorder %s27, 1
    %p45 = por %p43, %p44
    %p46 = scmp.ne.s32.totalorder %s35, %s36
    %p47 = scmp.eq.s32.totalorder %s27, 0
    %p48 = por %p46, %p47
    %p49 = scmp.ne.s32.totalorder %s35, %s36
    %p50 = scmp.eq.s32.totalorder %s28, 1
    %p51 = por %p49, %p50
    %p53 = scmp.ne.s32.totalorder %s36, %s52
    %p54 = scmp.eq.s32.totalorder %s28, 0
    %p55 = por %p53, %p54
    %s56 = ssub.s32 %s22, %s29
    %p57 = scmp.eq.s32.totalorder %s56, 0
    %s59 = sadd.s32 %s58, 1
    %s60 = scalar_select %p57, %s58, %s59
    %p63 = pneg %p57
    %p64 = scmp.eq.s32.totalorder %s22, 1
    %p65 = por %p63, %p64
    %p66 = scmp.ne.s32.totalorder %s58, %s61
    %p67 = scmp.eq.s32.totalorder %s22, 0
    %p68 = por %p66, %p67
    %p69 = scmp.ne.s32.totalorder %s58, %s61
    %p70 = scmp.eq.s32.totalorder %s27, 1
    %p71 = por %p69, %p70
    %p72 = scmp.ne.s32.totalorder %s61, %s62
    %p73 = scmp.eq.s32.totalorder %s27, 0
    %p74 = por %p72, %p73
    %p75 = scmp.ne.s32.totalorder %s61, %s62
    %p76 = scmp.eq.s32.totalorder %s28, 1
    %p77 = por %p75, %p76
    %p79 = scmp.ne.s32.totalorder %s62, %s78
    %p80 = scmp.eq.s32.totalorder %s28, 0
    %p81 = por %p79, %p80
    %s83 = sadd.s32 %s82, 1
    %p86 = scmp.eq.s32.totalorder %s22, 1
    %p87 = scmp.ne.s32.totalorder %s82, %s84
    %p88 = scmp.eq.s32.totalorder %s22, 0
    %p89 = por %p87, %p88
    %p90 = scmp.ne.s32.totalorder %s82, %s84
    %p91 = scmp.eq.s32.totalorder %s27, 1
    %p92 = por %p90, %p91
    %p93 = scmp.ne.s32.totalorder %s84, %s85
    %p94 = scmp.eq.s32.totalorder %s27, 0
    %p95 = por %p93, %p94
    %p96 = scmp.ne.s32.totalorder %s84, %s85
    %p97 = scmp.eq.s32.totalorder %s28, 1
    %p98 = por %p96, %p97
    %p100 = scmp.ne.s32.totalorder %s85, %s99
    %p101 = scmp.eq.s32.totalorder %s28, 0
    %p102 = por %p100, %p101
    %s104 = sadd.s32 %s103, 1
    %p107 = scmp.eq.s32.totalorder %s22, 1
    %p108 = scmp.ne.s32.totalorder %s103, %s105
    %p109 = scmp.eq.s32.totalorder %s22, 0
    %p110 = por %p108, %p109
    %p111 = scmp.ne.s32.totalorder %s103, %s105
    %p112 = scmp.eq.s32.totalorder %s27, 1
    %p113 = por %p111, %p112
    %p114 = scmp.ne.s32.totalorder %s105, %s106
    %p115 = scmp.eq.s32.totalorder %s27, 0
    %p116 = por %p114, %p115
    %p117 = scmp.ne.s32.totalorder %s105, %s106
    %p118 = scmp.eq.s32.totalorder %s28, 1
    %p119 = por %p117, %p118
    %p121 = scmp.ne.s32.totalorder %s106, %s120
    %p122 = scmp.eq.s32.totalorder %s28, 0
    %p123 = por %p121, %p122
    %s125 = sadd.s32 %s124, 1
    %p128 = scmp.eq.s32.totalorder %s22, 1
    %p129 = scmp.ne.s32.totalorder %s124, %s126
    %p130 = scmp.eq.s32.totalorder %s22, 0
    %p131 = por %p129, %p130
    %p132 = scmp.ne.s32.totalorder %s124, %s126
    %p133 = scmp.eq.s32.totalorder %s27, 1
    %p134 = por %p132, %p133
    %p135 = scmp.ne.s32.totalorder %s126, %s127
    %p136 = scmp.eq.s32.totalorder %s27, 0
    %p137 = por %p135, %p136
    %p138 = scmp.ne.s32.totalorder %s126, %s127
    %p139 = scmp.eq.s32.totalorder %s28, 1
    %p140 = por %p138, %p139
    %p142 = scmp.ne.s32.totalorder %s127, %s141
    %p143 = scmp.eq.s32.totalorder %s28, 0
    %p144 = por %p142, %p143
    %s146 = sadd.s32 %s145, 1
    %p149 = scmp.eq.s32.totalorder %s22, 1
    %p150 = scmp.ne.s32.totalorder %s145, %s147
    %p151 = scmp.eq.s32.totalorder %s22, 0
    %p152 = por %p150, %p151
    %p153 = scmp.ne.s32.totalorder %s145, %s147
    %p154 = scmp.eq.s32.totalorder %s27, 1
    %p155 = por %p153, %p154
    %p156 = scmp.ne.s32.totalorder %s147, %s148
    %p157 = scmp.eq.s32.totalorder %s27, 0
    %p158 = por %p156, %p157
    %p159 = scmp.ne.s32.totalorder %s147, %s148
    %p160 = scmp.eq.s32.totalorder %s28, 1
    %p161 = por %p159, %p160
    %p163 = scmp.ne.s32.totalorder %s148, %s162
    %p164 = scmp.eq.s32.totalorder %s28, 0
    %p165 = por %p163, %p164
    %s167 = sadd.s32 %s166, 1
    %p170 = scmp.eq.s32.totalorder %s22, 1
    %p171 = scmp.ne.s32.totalorder %s166, %s168
    %p172 = scmp.eq.s32.totalorder %s22, 0
    %p173 = por %p171, %p172
    %p174 = scmp.ne.s32.totalorder %s166, %s168
    %p175 = scmp.eq.s32.totalorder %s27, 1
    %p176 = por %p174, %p175
    %p177 = scmp.ne.s32.totalorder %s168, %s169
    %p178 = scmp.eq.s32.totalorder %s27, 0
    %p179 = por %p177, %p178
    %p180 = scmp.ne.s32.totalorder %s168, %s169
    %p181 = scmp.eq.s32.totalorder %s28, 1
    %p182 = por %p180, %p181
    %p184 = scmp.ne.s32.totalorder %s169, %s183
    %p185 = scmp.eq.s32.totalorder %s28, 0
    %p186 = por %p184, %p185
    %s188 = sadd.s32 %s187, 1
    %p191 = scmp.eq.s32.totalorder %s22, 1
    %p192 = scmp.ne.s32.totalorder %s187, %s189
    %p193 = scmp.eq.s32.totalorder %s22, 0
    %p194 = por %p192, %p193
    %p195 = scmp.ne.s32.totalorder %s187, %s189
    %p196 = scmp.eq.s32.totalorder %s27, 1
    %p197 = por %p195, %p196
    %p198 = scmp.ne.s32.totalorder %s189, %s190
    %p199 = scmp.eq.s32.totalorder %s27, 0
    %p200 = por %p198, %p199
    %p201 = scmp.ne.s32.totalorder %s189, %s190
    %p202 = scmp.eq.s32.totalorder %s28, 1
    %p203 = por %p201, %p202
    %p205 = scmp.ne.s32.totalorder %s190, %s204
    %p206 = scmp.eq.s32.totalorder %s28, 0
    %p207 = por %p205, %p206
    %s209 = sadd.s32 %s208, 1
    %p212 = scmp.eq.s32.totalorder %s22, 1
    %p213 = scmp.ne.s32.totalorder %s208, %s210
    %p214 = scmp.eq.s32.totalorder %s22, 0
    %p215 = por %p213, %p214
    %p216 = scmp.ne.s32.totalorder %s208, %s210
    %p217 = scmp.eq.s32.totalorder %s27, 1
    %p218 = por %p216, %p217
    %p219 = scmp.ne.s32.totalorder %s210, %s211
    %p220 = scmp.eq.s32.totalorder %s27, 0
    %p221 = por %p219, %p220
    %p222 = scmp.ne.s32.totalorder %s210, %s211
    %p223 = scmp.eq.s32.totalorder %s28, 1
    %p224 = por %p222, %p223
    %p226 = scmp.ne.s32.totalorder %s211, %s225
    %p227 = scmp.eq.s32.totalorder %s28, 0
    %p228 = por %p226, %p227
    %s230 = sadd.s32 %s229, 1
    %p233 = scmp.eq.s32.totalorder %s22, 1
    %p234 = scmp.ne.s32.totalorder %s229, %s231
    %p235 = scmp.eq.s32.totalorder %s22, 0
    %p236 = por %p234, %p235
    %p237 = scmp.ne.s32.totalorder %s229, %s231
    %p238 = scmp.eq.s32.totalorder %s27, 1
    %p239 = por %p237, %p238
    %p240 = scmp.ne.s32.totalorder %s231, %s232
    %p241 = scmp.eq.s32.totalorder %s27, 0
    %p242 = por %p240, %p241
    %p243 = scmp.ne.s32.totalorder %s231, %s232
    %p244 = scmp.eq.s32.totalorder %s28, 1
    %p245 = por %p243, %p244
    %p247 = scmp.ne.s32.totalorder %s232, %s246
    %p248 = scmp.eq.s32.totalorder %s28, 0
    %p249 = por %p247, %p248
    %s251 = sadd.s32 %s250, 1
    %p254 = scmp.eq.s32.totalorder %s22, 1
    %p255 = scmp.ne.s32.totalorder %s250, %s252
    %p256 = scmp.eq.s32.totalorder %s22, 0
    %p257 = por %p255, %p256
    %p258 = scmp.ne.s32.totalorder %s250, %s252
    %p259 = scmp.eq.s32.totalorder %s27, 1
    %p260 = por %p258, %p259
    %p261 = scmp.ne.s32.totalorder %s252, %s253
    %p262 = scmp.eq.s32.totalorder %s27, 0
    %p263 = por %p261, %p262
    %p264 = scmp.ne.s32.totalorder %s252, %s253
    %p265 = scmp.eq.s32.totalorder %s28, 1
    %p266 = por %p264, %p265
    %p268 = scmp.ne.s32.totalorder %s253, %s267
    %p269 = scmp.eq.s32.totalorder %s28, 0
    %p270 = por %p268, %p269
    %s272 = sadd.s32 %s271, 1
    %p275 = scmp.eq.s32.totalorder %s22, 1
    %p276 = scmp.ne.s32.totalorder %s271, %s273
    %p277 = scmp.eq.s32.totalorder %s22, 0
    %p278 = por %p276, %p277
    %p279 = scmp.ne.s32.totalorder %s271, %s273
    %p280 = scmp.eq.s32.totalorder %s27, 1
    %p281 = por %p279, %p280
    %p282 = scmp.ne.s32.totalorder %s273, %s274
    %p283 = scmp.eq.s32.totalorder %s27, 0
    %p284 = por %p282, %p283
    %p285 = scmp.ne.s32.totalorder %s273, %s274
    %p286 = scmp.eq.s32.totalorder %s28, 1
    %p287 = por %p285, %p286
    %p289 = scmp.ne.s32.totalorder %s274, %s288
    %p290 = scmp.eq.s32.totalorder %s28, 0
    %p291 = por %p289, %p290
    %s293 = sadd.s32 %s292, 1
    %p296 = scmp.eq.s32.totalorder %s22, 1
    %p297 = scmp.ne.s32.totalorder %s292, %s294
    %p298 = scmp.eq.s32.totalorder %s22, 0
    %p299 = por %p297, %p298
    %p300 = scmp.ne.s32.totalorder %s292, %s294
    %p301 = scmp.eq.s32.totalorder %s27, 1
    %p302 = por %p300, %p301
    %p303 = scmp.ne.s32.totalorder %s294, %s295
    %p304 = scmp.eq.s32.totalorder %s27, 0
    %p305 = por %p303, %p304
    %p306 = scmp.ne.s32.totalorder %s294, %s295
    %p307 = scmp.eq.s32.totalorder %s28, 1
    %p308 = por %p306, %p307
    %p310 = scmp.ne.s32.totalorder %s295, %s309
    %p311 = scmp.eq.s32.totalorder %s28, 0
    %p312 = por %p310, %p311
    %s314 = sadd.s32 %s313, 1
    %p317 = scmp.eq.s32.totalorder %s22, 1
    %p318 = scmp.ne.s32.totalorder %s313, %s315
    %p319 = scmp.eq.s32.totalorder %s22, 0
    %p320 = por %p318, %p319
    %p321 = scmp.ne.s32.totalorder %s313, %s315
    %p322 = scmp.eq.s32.totalorder %s27, 1
    %p323 = por %p321, %p322
    %p324 = scmp.ne.s32.totalorder %s315, %s316
    %p325 = scmp.eq.s32.totalorder %s27, 0
    %p326 = por %p324, %p325
    %p327 = scmp.ne.s32.totalorder %s315, %s316
    %p328 = scmp.eq.s32.totalorder %s28, 1
    %p329 = por %p327, %p328
    %p331 = scmp.ne.s32.totalorder %s316, %s330
    %p332 = scmp.eq.s32.totalorder %s28, 0
    %p333 = por %p331, %p332
    %s335 = sadd.s32 %s334, 1
    %p338 = scmp.eq.s32.totalorder %s22, 1
    %p339 = scmp.ne.s32.totalorder %s334, %s336
    %p340 = scmp.eq.s32.totalorder %s22, 0
    %p341 = por %p339, %p340
    %p342 = scmp.ne.s32.totalorder %s334, %s336
    %p343 = scmp.eq.s32.totalorder %s27, 1
    %p344 = por %p342, %p343
    %p345 = scmp.ne.s32.totalorder %s336, %s337
    %p346 = scmp.eq.s32.totalorder %s27, 0
    %p347 = por %p345, %p346
    %p348 = scmp.ne.s32.totalorder %s336, %s337
    %p349 = scmp.eq.s32.totalorder %s28, 1
    %p350 = por %p348, %p349
    %p352 = scmp.ne.s32.totalorder %s337, %s351
    %p353 = scmp.eq.s32.totalorder %s28, 0
    %p354 = por %p352, %p353
    %s356 = sadd.s32 %s355, 1
    %p359 = scmp.eq.s32.totalorder %s22, 1
    %p360 = scmp.ne.s32.totalorder %s355, %s357
    %p361 = scmp.eq.s32.totalorder %s22, 0
    %p362 = por %p360, %p361
    %p363 = scmp.ne.s32.totalorder %s355, %s357
    %p364 = scmp.eq.s32.totalorder %s27, 1
    %p365 = por %p363, %p364
    %p366 = scmp.ne.s32.totalorder %s357, %s358
    %p367 = scmp.eq.s32.totalorder %s27, 0
    %p368 = por %p366, %p367
    %p369 = scmp.ne.s32.totalorder %s357, %s358
    %p370 = scmp.eq.s32.totalorder %s28, 1
    %p371 = por %p369, %p370
    %p373 = scmp.ne.s32.totalorder %s358, %s372
    %p374 = scmp.eq.s32.totalorder %s28, 0
    %p375 = por %p373, %p374
    %s376 = ssub.s32 %s22, %s29
    %p377 = scmp.eq.s32.totalorder %s376, 0
    %s379 = sadd.s32 %s378, 1
    %s380 = scalar_select %p377, %s378, %s379
    %p383 = pneg %p377
    %p384 = scmp.eq.s32.totalorder %s22, 1
    %p385 = por %p383, %p384
    %p386 = scmp.ne.s32.totalorder %s378, %s381
    %p387 = scmp.eq.s32.totalorder %s22, 0
    %p388 = por %p386, %p387
    %p389 = scmp.ne.s32.totalorder %s378, %s381
    %p390 = scmp.eq.s32.totalorder %s27, 1
    %p391 = por %p389, %p390
    %p392 = scmp.ne.s32.totalorder %s381, %s382
    %p393 = scmp.eq.s32.totalorder %s27, 0
    %p394 = por %p392, %p393
    %p395 = scmp.ne.s32.totalorder %s381, %s382
    %p396 = scmp.eq.s32.totalorder %s28, 1
    %p397 = por %p395, %p396
    %p399 = scmp.ne.s32.totalorder %s382, %s398
    %p400 = scmp.eq.s32.totalorder %s28, 0
    %p401 = por %p399, %p400
    %p402 = scmp.le.s32.totalorder 1, %s22
    %p403 = scmp.lt.s32.totalorder %s22, 3
    %p404 = pnand %p402, %p403
    %p405 = pneg %p404
    // Predicated region
    $region9: #{tpu_custom_call.1} parent=5 // pred_check
      _
    $region10: #{tpu_custom_call.1} parent=5 // pred_check_branch
      %407 = sbr.rel (%p404) target = $region12
    $region11: #{tpu_custom_call.1} parent=5 // pred_region
      %s408 = ssub.s32 %s22, 1
      // Predicated region
      $region13: #{tpu_custom_call.1} parent=11 // pred_check
        %p409 = pneg %p95
      $region14: #{tpu_custom_call.1} parent=11 // pred_check_branch
        %411 = sbr.rel (%p409) target = $region16
      $region15: #{tpu_custom_call.1} parent=11 // pred_region
        _
      $region16: #{tpu_custom_call.1} parent=11 // pred_fallthru
        _
      // Predicated region
      $region17: #{tpu_custom_call.1} parent=11 // pred_check
        %p412 = pneg %p116
      $region18: #{tpu_custom_call.1} parent=11 // pred_check_branch
        %414 = sbr.rel (%p412) target = $region20
      $region19: #{tpu_custom_call.1} parent=11 // pred_region
        _
      $region20: #{tpu_custom_call.1} parent=11 // pred_fallthru
        _
      // Predicated region
      $region21: #{tpu_custom_call.1} parent=11 // pred_check
        %p415 = pneg %p137
      $region22: #{tpu_custom_call.1} parent=11 // pred_check_branch
        %417 = sbr.rel (%p415) target = $region24
      $region23: #{tpu_custom_call.1} parent=11 // pred_region
        _
      $region24: #{tpu_custom_call.1} parent=11 // pred_fallthru
        _
      // Predicated region
      $region25: #{tpu_custom_call.1} parent=11 // pred_check
        %p418 = pneg %p158
      $region26: #{tpu_custom_call.1} parent=11 // pred_check_branch
        %420 = sbr.rel (%p418) target = $region28
      $region27: #{tpu_custom_call.1} parent=11 // pred_region
        _
      $region28: #{tpu_custom_call.1} parent=11 // pred_fallthru
        _
      // Predicated region
      $region29: #{tpu_custom_call.1} parent=11 // pred_check
        %p421 = pneg %p179
      $region30: #{tpu_custom_call.1} parent=11 // pred_check_branch
        %423 = sbr.rel (%p421) target = $region32
      $region31: #{tpu_custom_call.1} parent=11 // pred_region
        _
      $region32: #{tpu_custom_call.1} parent=11 // pred_fallthru
        _
      // Predicated region
      $region33: #{tpu_custom_call.1} parent=11 // pred_check
        %p424 = pneg %p200
      $region34: #{tpu_custom_call.1} parent=11 // pred_check_branch
        %426 = sbr.rel (%p424) target = $region36
      $region35: #{tpu_custom_call.1} parent=11 // pred_region
        _
      $region36: #{tpu_custom_call.1} parent=11 // pred_fallthru
        _
      // Predicated region
      $region37: #{tpu_custom_call.1} parent=11 // pred_check
        %p427 = pneg %p221
      $region38: #{tpu_custom_call.1} parent=11 // pred_check_branch
        %429 = sbr.rel (%p427) target = $region40
      $region39: #{tpu_custom_call.1} parent=11 // pred_region
        _
      $region40: #{tpu_custom_call.1} parent=11 // pred_fallthru
        _
      // Predicated region
      $region41: #{tpu_custom_call.1} parent=11 // pred_check
        %p430 = pneg %p242
      $region42: #{tpu_custom_call.1} parent=11 // pred_check_branch
        %432 = sbr.rel (%p430) target = $region44
      $region43: #{tpu_custom_call.1} parent=11 // pred_region
        _
      $region44: #{tpu_custom_call.1} parent=11 // pred_fallthru
        _
      // Predicated region
      $region45: #{tpu_custom_call.1} parent=11 // pred_check
        %p433 = pneg %p263
      $region46: #{tpu_custom_call.1} parent=11 // pred_check_branch
        %435 = sbr.rel (%p433) target = $region48
      $region47: #{tpu_custom_call.1} parent=11 // pred_region
        _
      $region48: #{tpu_custom_call.1} parent=11 // pred_fallthru
        _
      // Predicated region
      $region49: #{tpu_custom_call.1} parent=11 // pred_check
        %p436 = pneg %p284
      $region50: #{tpu_custom_call.1} parent=11 // pred_check_branch
        %438 = sbr.rel (%p436) target = $region52
      $region51: #{tpu_custom_call.1} parent=11 // pred_region
        _
      $region52: #{tpu_custom_call.1} parent=11 // pred_fallthru
        _
      // Predicated region
      $region53: #{tpu_custom_call.1} parent=11 // pred_check
        %p439 = pneg %p305
      $region54: #{tpu_custom_call.1} parent=11 // pred_check_branch
        %441 = sbr.rel (%p439) target = $region56
      $region55: #{tpu_custom_call.1} parent=11 // pred_region
        _
      $region56: #{tpu_custom_call.1} parent=11 // pred_fallthru
        _
      // Predicated region
      $region57: #{tpu_custom_call.1} parent=11 // pred_check
        %p442 = pneg %p326
      $region58: #{tpu_custom_call.1} parent=11 // pred_check_branch
        %444 = sbr.rel (%p442) target = $region60
      $region59: #{tpu_custom_call.1} parent=11 // pred_region
        _
      $region60: #{tpu_custom_call.1} parent=11 // pred_fallthru
        _
      // Predicated region
      $region61: #{tpu_custom_call.1} parent=11 // pred_check
        %p445 = pneg %p347
      $region62: #{tpu_custom_call.1} parent=11 // pred_check_branch
        %447 = sbr.rel (%p445) target = $region64
      $region63: #{tpu_custom_call.1} parent=11 // pred_region
        _
      $region64: #{tpu_custom_call.1} parent=11 // pred_fallthru
        _
      // Predicated region
      $region65: #{tpu_custom_call.1} parent=11 // pred_check
        %p448 = pneg %p368
      $region66: #{tpu_custom_call.1} parent=11 // pred_check_branch
        %450 = sbr.rel (%p448) target = $region68
      $region67: #{tpu_custom_call.1} parent=11 // pred_region
        _
      $region68: #{tpu_custom_call.1} parent=11 // pred_fallthru
        _
    $region12: #{tpu_custom_call.1} parent=5 // pred_fallthru
      _
    %p451 = scmp.lt.s32.totalorder %s22, 2
    // Predicated region
    $region69: #{tpu_custom_call.1} parent=5 // pred_check
      %p452 = pneg %p451
    $region70: #{tpu_custom_call.1} parent=5 // pred_check_branch
      %454 = sbr.rel (%p452) target = $region72
    $region71: #{tpu_custom_call.1} parent=5 // pred_region
      // Predicated region
      $region73: #{tpu_custom_call.1} parent=71 // pred_check
        %p455 = pneg %p42
      $region74: #{tpu_custom_call.1} parent=71 // pred_check_branch
        %457 = sbr.rel (%p455) target = $region76
      $region75: #{tpu_custom_call.1} parent=71 // pred_region
        %s458 = smul.u32 4, %s22
        %p459 = scmp.lt.s32.totalorder %s458, 7
        %s460 = scalar_select %p459, %s458, 7
        %s461 = smul.addr %s460, 8
        %s462 = scalar_lea.vmem %s0, %s461
        %s463 = smul.u32 4, %s22
      $region76: #{tpu_custom_call.1} parent=71 // pred_fallthru
        _
      // Predicated region
      $region77: #{tpu_custom_call.1} parent=71 // pred_check
        %p464 = pneg %p68
      $region78: #{tpu_custom_call.1} parent=71 // pred_check_branch
        %466 = sbr.rel (%p464) target = $region80
      $region79: #{tpu_custom_call.1} parent=71 // pred_region
        %s467 = smul.u32 2, %s22
        %p468 = scmp.lt.s32.totalorder %s467, 3
        %s469 = scalar_select %p468, %s467, 3
        %s470 = smul.addr %s469, 8
        %s471 = scalar_lea.vmem %s1, %s470
        %s472 = smul.u32 2, %s22
      $region80: #{tpu_custom_call.1} parent=71 // pred_fallthru
        _
    $region72: #{tpu_custom_call.1} parent=5 // pred_fallthru
      _
    %p473 = scmp.le.s32.totalorder 1, %s22
    %p474 = scmp.lt.s32.totalorder %s22, 3
    %p475 = pnand %p473, %p474
    %p476 = pneg %p475
    // Predicated region
    $region81: #{tpu_custom_call.1} parent=5 // pred_check
      _
    $region82: #{tpu_custom_call.1} parent=5 // pred_check_branch
      %478 = sbr.rel (%p475) target = $region84
    $region83: #{tpu_custom_call.1} parent=5 // pred_region
      %s479 = ssub.s32 %s22, 1
      %s480 = smul.u32 4, %s27
      %p481 = scmp.lt.s32.totalorder %s480, 7
      %s482 = scalar_select %p481, %s480, 7
      %s483 = smul.addr %s482, 8
      %s484 = scalar_lea.vmem %s0, %s483
      %p485 = pneg %p48
      %p486 = pneg %p45
      %s487 = smul.u32 2, %s27
      %p488 = scmp.lt.s32.totalorder %s487, 3
      %s489 = scalar_select %p488, %s487, 3
      %s490 = smul.addr %s489, 8
      %s491 = scalar_lea.vmem %s1, %s490
      %p492 = pneg %p74
      %p493 = pneg %p71
      %p494 = pneg %p95
      %p495 = pneg %p92
      %p496 = pneg %p116
      %p497 = pneg %p113
      %p498 = pneg %p137
      %p499 = pneg %p134
      %p500 = pneg %p158
      %p501 = pneg %p155
      %p502 = pneg %p179
      %p503 = pneg %p176
      %p504 = pneg %p200
      %p505 = pneg %p197
      %p506 = pneg %p221
      %p507 = pneg %p218
      %p508 = pneg %p242
      %p509 = pneg %p239
      %p510 = pneg %p263
      %p511 = pneg %p260
      %p512 = pneg %p284
      %p513 = pneg %p281
      %p514 = pneg %p305
      %p515 = pneg %p302
      %p516 = pneg %p326
      %p517 = pneg %p323
      %p518 = pneg %p347
      %p519 = pneg %p344
      %p520 = pneg %p368
      %p521 = pneg %p365
      %p522 = pneg %p394
      %p523 = pneg %p391
      %s524 = smul.u32 4, %s27
      %p525 = scmp.lt.s32.totalorder %s524, 7
      %s526 = scalar_select %p525, %s524, 7
      %s527 = smul.addr %s526, 8
      %s528 = scalar_lea.vmem %s16, %s527
      %s529 = smul.u32 4, %s27
      %p530 = scmp.lt.s32.totalorder %s529, 7
      %s531 = scalar_select %p530, %s529, 7
      %s532 = smul.addr %s531, 8
      %s533 = scalar_lea.vmem %s0, %s532
      %s534 = smul.u32 4, %s27
      %s535 = smul.u32 2, %s27
      %p536 = scmp.lt.s32.totalorder %s535, 3
      %s537 = scalar_select %p536, %s535, 3
      %s538 = smul.addr %s537, 8
      %s539 = scalar_lea.vmem %s1, %s538
      %s540 = smul.u32 2, %s27
      %s541 = smul.u32 4, %s27
      %p542 = scmp.lt.s32.totalorder %s541, 7
      %s543 = scalar_select %p542, %s541, 7
      %s544 = smul.addr %s543, 8
      %s545 = scalar_lea.vmem %s16, %s544
      %s546 = smul.u32 4, %s27
      %v548 = vld [vmem:[%s533] sm:$0xff]
      %v549 = vld [vmem:[%s533 + $0x8] sm:$0xff]
      %v550 = vld [vmem:[%s533 + $0x10] sm:$0xff]
      %v551 = vld [vmem:[%s533 + $0x18] sm:$0xff]
      %v552 = vld [vmem:[%s539] sm:$0xff]
      %v553 = vld [vmem:[%s539 + $0x8] sm:$0xff]
      %v554 = vpack.c.bf16 %v549, %v548
      %v555 = vpack.c.bf16 %v551, %v550
      %v556 = vld [vmem:[%s2] sm:$0xf]
      %v557 = vld [vmem:[%s2 + $0x4] sm:$0xf]
      %v558 = vld [vmem:[%s2 + $0x8] sm:$0xf]
      %v559 = vld [vmem:[%s2 + $0xc] sm:$0xf]
      %v560 = vld [vmem:[%s2 + $0x10] sm:$0xf]
      %v561 = vld [vmem:[%s2 + $0x14] sm:$0xf]
      %v562 = vld [vmem:[%s3] sm:$0x1]
      %v564 = vlaneseq
      %v565 = vshrl.u32 %v564, 7
      %v566 = vsub.s32 0, %v565
      %v567 = vrot.slane %v562, %v566
      %v575 = vunpack.c.l.b16 %v556
      %v576 = vunpack.c.l.b16 %v557
      %v577 = vunpack.c.l.b16 %v558
      %v578 = vunpack.c.l.b16 %v559
      %v579 = vunpack.c.l.b16 %v560
      %v580 = vunpack.c.l.b16 %v561
      %v581 = vpack.c.b16 %v576, %v575
      %v582 = vpack.c.b16 %v578, %v577
      %v583 = vpack.c.b16 %v580, %v579
      %vm587 = vcmask 392192
      %v589 = vsel %vm587, %v554, 0
      %v592 = vsel %vm587, %v555, 0
      %594 = vmatprep.subr.bf16.mxu0 0
      %595 = vmatpush1.bf16.msra.mxu0 %v581
      %596 = vmatprep.subr.bf16.mxu0 0
      %597 = vmatpush1.bf16.msra.mxu0 %v582
      %598 = vmatprep.subr.bf16.mxu0 0
      %599 = vmatpush1.bf16.msra.mxu0 %v583
      %600 = vmatprep.subr.bf16.mxu0 0
      %601 = vmatpush1.bf16.msra.mxu0 0
      %602 = vmatprep.subr.bf16.mxu0 0
      %603 = vmatpush1.bf16.msra.mxu0 0
      %604 = vmatprep.subr.bf16.mxu0 0
      %605 = vmatpush1.bf16.msra.mxu0 0
      %606 = vmatprep.subr.bf16.mxu0 0
      %607 = vmatpush1.bf16.msra.mxu0 0
      %608 = vmatprep.subr.bf16.mxu0 0
      %609 = vmatpush1.bf16.msra.mxu0 0
      %610 = vmatprep.subr.bf16.mxu0 0
      %611 = vmatpush1.bf16.msra.mxu0 0
      %612 = vmatprep.subr.bf16.mxu0 0
      %613 = vmatpush1.bf16.msra.mxu0 0
      %614 = vmatprep.subr.bf16.mxu0 0
      %615 = vmatpush1.bf16.msra.mxu0 0
      %616 = vmatprep.subr.bf16.mxu0 0
      %617 = vmatpush1.bf16.msra.mxu0 0
      %618 = vmatprep.subr.bf16.mxu0 0
      %619 = vmatpush1.bf16.msra.mxu0 0
      %620 = vmatprep.subr.bf16.mxu0 0
      %621 = vmatpush1.bf16.msra.mxu0 0
      %622 = vmatprep.subr.bf16.mxu0 0
      %623 = vmatpush1.bf16.msra.mxu0 0
      %624 = vmatprep.subr.bf16.mxu0 0
      %625 = vmatpush1.bf16.msra.mxu0 0
      %626 = vmatprep.mubr.bf16.mxu0 0
      %627 = vmatmul.mubr.bf16.gmra.mrb[0].mxu0 %v589
      %v628 = vpop.f32.mrb[0].mxu0
      %v629 = vadd.f32 %v567, %v628
      %v630 = vpop.f32.mrb[0].mxu0
      %v631 = vpop.f32.mrb[0].mxu0
      %v632 = vadd.f32 %v567, %v631
      %v633 = vpop.f32.mrb[0].mxu0
      %634 = vmatprep.mubr.bf16.mxu0 0
      %635 = vmatmul.mubr.bf16.gmra.mrb[0].mxu0 %v592
      %v636 = vpop.f32.mrb[0].mxu0
      %v637 = vadd.f32 %v567, %v636
      %v638 = vpop.f32.mrb[0].mxu0
      %v639 = vpop.f32.mrb[0].mxu0
      %v640 = vadd.f32 %v567, %v639
      %v641 = vpop.f32.mrb[0].mxu0
      %642 = vdwg.mxu0
      %v643 = vpack.c.bf16 %v553, %v552
      %v644 = vld [vmem:[%s4] sm:$0xf]
      %v645 = vld [vmem:[%s4 + $0x4] sm:$0xf]
      %v646 = vld [vmem:[%s4 + $0x8] sm:$0xf]
      %v647 = vld [vmem:[%s4 + $0xc] sm:$0xf]
      %v648 = vld [vmem:[%s4 + $0x10] sm:$0xf]
      %v649 = vld [vmem:[%s4 + $0x14] sm:$0xf]
      %v650 = vld [vmem:[%s5] sm:$0x1]
      %v652 = vlaneseq
      %v653 = vshrl.u32 %v652, 7
      %v654 = vsub.s32 0, %v653
      %v655 = vrot.slane %v650, %v654
      %v663 = vunpack.c.l.b16 %v644
      %v664 = vunpack.c.l.b16 %v645
      %v665 = vunpack.c.l.b16 %v646
      %v666 = vunpack.c.l.b16 %v647
      %v667 = vunpack.c.l.b16 %v648
      %v668 = vunpack.c.l.b16 %v649
      %v669 = vpack.c.b16 %v664, %v663
      %v670 = vpack.c.b16 %v666, %v665
      %v671 = vpack.c.b16 %v668, %v667
      %v676 = vsel %vm587, %v643, 0
      %678 = vmatprep.subr.bf16.mxu0 0
      %679 = vmatpush1.bf16.msra.mxu0 %v669
      %680 = vmatprep.subr.bf16.mxu0 0
      %681 = vmatpush1.bf16.msra.mxu0 %v670
      %682 = vmatprep.subr.bf16.mxu0 0
      %683 = vmatpush1.bf16.msra.mxu0 %v671
      %684 = vmatprep.subr.bf16.mxu0 0
      %685 = vmatpush1.bf16.msra.mxu0 0
      %686 = vmatprep.subr.bf16.mxu0 0
      %687 = vmatpush1.bf16.msra.mxu0 0
      %688 = vmatprep.subr.bf16.mxu0 0
      %689 = vmatpush1.bf16.msra.mxu0 0
      %690 = vmatprep.subr.bf16.mxu0 0
      %691 = vmatpush1.bf16.msra.mxu0 0
      %692 = vmatprep.subr.bf16.mxu0 0
      %693 = vmatpush1.bf16.msra.mxu0 0
      %694 = vmatprep.subr.bf16.mxu0 0
      %695 = vmatpush1.bf16.msra.mxu0 0
      %696 = vmatprep.subr.bf16.mxu0 0
      %697 = vmatpush1.bf16.msra.mxu0 0
      %698 = vmatprep.subr.bf16.mxu0 0
      %699 = vmatpush1.bf16.msra.mxu0 0
      %700 = vmatprep.subr.bf16.mxu0 0
      %701 = vmatpush1.bf16.msra.mxu0 0
      %702 = vmatprep.subr.bf16.mxu0 0
      %703 = vmatpush1.bf16.msra.mxu0 0
      %704 = vmatprep.subr.bf16.mxu0 0
      %705 = vmatpush1.bf16.msra.mxu0 0
      %706 = vmatprep.subr.bf16.mxu0 0
      %707 = vmatpush1.bf16.msra.mxu0 0
      %708 = vmatprep.subr.bf16.mxu0 0
      %709 = vmatpush1.bf16.msra.mxu0 0
      %710 = vmatprep.mubr.bf16.mxu0 0
      %711 = vmatmul.mubr.bf16.gmra.mrb[0].mxu0 %v676
      %v712 = vpop.f32.mrb[0].mxu0
      %v713 = vadd.f32 %v655, %v712
      %v714 = vpop.f32.mrb[0].mxu0
      %v715 = vpop.f32.mrb[0].mxu0
      %v716 = vadd.f32 %v655, %v715
      %v717 = vpop.f32.mrb[0].mxu0
      %718 = vdwg.mxu0
      %v719 = vpack.c.bf16 %v632, %v629
      %v720 = vpack.c.bf16 %v640, %v637
      %v721 = vpack.c.bf16 %v713, %v713
      %v722 = vpack.c.bf16 %v716, %v716
      %vm723 = vcmask 64512
      %v725 = vsel %vm723, %v719, 0
      %v728 = vsel %vm723, %v721, 0
      %730 = vmatprep.subr.bf16.mxu0 0
      %731 = vmatpush1.bf16.xpose.msra.mxu0 %v728
      %732 = vmatprep.subr.bf16.mxu0 0
      %733 = vmatpush1.bf16.xpose.msra.mxu0 0
      %734 = vmatprep.subr.bf16.mxu0 0
      %735 = vmatpush1.bf16.xpose.msra.mxu0 0
      %736 = vmatprep.subr.bf16.mxu0 0
      %737 = vmatpush1.bf16.xpose.msra.mxu0 0
      %738 = vmatprep.subr.bf16.mxu0 0
      %739 = vmatpush1.bf16.xpose.msra.mxu0 0
      %740 = vmatprep.subr.bf16.mxu0 0
      %741 = vmatpush1.bf16.xpose.msra.mxu0 0
      %742 = vmatprep.subr.bf16.mxu0 0
      %743 = vmatpush1.bf16.xpose.msra.mxu0 0
      %744 = vmatprep.subr.bf16.mxu0 0
      %745 = vmatpush1.bf16.xpose.msra.mxu0 0
      %746 = vmatprep.subr.bf16.mxu0 0
      %747 = vmatpush1.bf16.xpose.msra.mxu0 0
      %748 = vmatprep.subr.bf16.mxu0 0
      %749 = vmatpush1.bf16.xpose.msra.mxu0 0
      %750 = vmatprep.subr.bf16.mxu0 0
      %751 = vmatpush1.bf16.xpose.msra.mxu0 0
      %752 = vmatprep.subr.bf16.mxu0 0
      %753 = vmatpush1.bf16.xpose.msra.mxu0 0
      %754 = vmatprep.subr.bf16.mxu0 0
      %755 = vmatpush1.bf16.xpose.msra.mxu0 0
      %756 = vmatprep.subr.bf16.mxu0 0
      %757 = vmatpush1.bf16.xpose.msra.mxu0 0
      %758 = vmatprep.subr.bf16.mxu0 0
      %759 = vmatpush1.bf16.xpose.msra.mxu0 0
      %760 = vmatprep.subr.bf16.mxu0 0
      %761 = vmatpush1.bf16.xpose.msra.mxu0 0
      %762 = vmatprep.mubr.bf16.mxu0 0
      %763 = vmatmul.mubr.bf16.gmra.mrb[0].mxu0 %v725
      %v764 = vpop.f32.mrb[0].mxu0
      %v765 = vadd.f32 0.0, %v764
      %v766 = vpop.f32.mrb[0].mxu0
      %v767 = vpop.f32.mrb[0].mxu0
      %v768 = vadd.f32 0.0, %v767
      %v769 = vpop.f32.mrb[0].mxu0
      %770 = vdwg.mxu0
      %v772 = vsel %vm723, %v720, 0
      %v775 = vsel %vm723, %v722, 0
      %777 = vmatprep.subr.bf16.mxu0 0
      %778 = vmatpush1.bf16.xpose.msra.mxu0 %v775
      %779 = vmatprep.subr.bf16.mxu0 0
      %780 = vmatpush1.bf16.xpose.msra.mxu0 0
      %781 = vmatprep.subr.bf16.mxu0 0
      %782 = vmatpush1.bf16.xpose.msra.mxu0 0
      %783 = vmatprep.subr.bf16.mxu0 0
      %784 = vmatpush1.bf16.xpose.msra.mxu0 0
      %785 = vmatprep.subr.bf16.mxu0 0
      %786 = vmatpush1.bf16.xpose.msra.mxu0 0
      %787 = vmatprep.subr.bf16.mxu0 0
      %788 = vmatpush1.bf16.xpose.msra.mxu0 0
      %789 = vmatprep.subr.bf16.mxu0 0
      %790 = vmatpush1.bf16.xpose.msra.mxu0 0
      %791 = vmatprep.subr.bf16.mxu0 0
      %792 = vmatpush1.bf16.xpose.msra.mxu0 0
      %793 = vmatprep.subr.bf16.mxu0 0
      %794 = vmatpush1.bf16.xpose.msra.mxu0 0
      %795 = vmatprep.subr.bf16.mxu0 0
      %796 = vmatpush1.bf16.xpose.msra.mxu0 0
      %797 = vmatprep.subr.bf16.mxu0 0
      %798 = vmatpush1.bf16.xpose.msra.mxu0 0
      %799 = vmatprep.subr.bf16.mxu0 0
      %800 = vmatpush1.bf16.xpose.msra.mxu0 0
      %801 = vmatprep.subr.bf16.mxu0 0
      %802 = vmatpush1.bf16.xpose.msra.mxu0 0
      %803 = vmatprep.subr.bf16.mxu0 0
      %804 = vmatpush1.bf16.xpose.msra.mxu0 0
      %805 = vmatprep.subr.bf16.mxu0 0
      %806 = vmatpush1.bf16.xpose.msra.mxu0 0
      %807 = vmatprep.subr.bf16.mxu0 0
      %808 = vmatpush1.bf16.xpose.msra.mxu0 0
      %809 = vmatprep.mubr.bf16.mxu0 0
      %810 = vmatmul.mubr.bf16.gmra.mrb[0].mxu0 %v772
      %v811 = vpop.f32.mrb[0].mxu0
      %v812 = vadd.f32 0.0, %v811
      %v813 = vpop.f32.mrb[0].mxu0
      %v814 = vpop.f32.mrb[0].mxu0
      %v815 = vadd.f32 0.0, %v814
      %v816 = vpop.f32.mrb[0].mxu0
      %817 = vdwg.mxu0
      %v818 = vsel %vm723, %v765, -inf
      %819 = vmax.xlane.f32.xlu0 %v818
      %v820 = vpop.xlane.xlu0 %819
      %v821 = vsel %vm723, %v768, -inf
      %822 = vmax.xlane.f32.xlu0 %v821
      %v823 = vpop.xlane.xlu0 %822
      %v824 = vsel %vm723, %v812, -inf
      %825 = vmax.xlane.f32.xlu0 %v824
      %v826 = vpop.xlane.xlu0 %825
      %v827 = vsel %vm723, %v815, -inf
      %828 = vmax.xlane.f32.xlu0 %v827
      %v829 = vpop.xlane.xlu0 %828
      %v830 = vsub.f32 %v765, %v820
      %v831 = vsub.f32 %v768, %v823
      %v832 = vsub.f32 %v812, %v826
      %v833 = vsub.f32 %v815, %v829
      %v834 = vmul.f32 %v830, 1.442695
      %v835 = vpow.pop %v834
      %v836 = vmul.f32 %v831, 1.442695
      %v837 = vpow.pop %v836
      %v838 = vmul.f32 %v832, 1.442695
      %v839 = vpow.pop %v838
      %v840 = vmul.f32 %v833, 1.442695
      %v841 = vpow.pop %v840
      %v842 = vsel %vm723, %v835, 0.0
      %843 = vadd.xlane.f32.xlu0 %v842
      %v844 = vpop.xlane.xlu0 %843
      %v845 = vsel %vm723, %v837, 0.0
      %846 = vadd.xlane.f32.xlu0 %v845
      %v847 = vpop.xlane.xlu0 %846
      %v848 = vsel %vm723, %v839, 0.0
      %849 = vadd.xlane.f32.xlu0 %v848
      %v850 = vpop.xlane.xlu0 %849
      %v851 = vsel %vm723, %v841, 0.0
      %852 = vadd.xlane.f32.xlu0 %v851
      %v853 = vpop.xlane.xlu0 %852
      %v854 = vrcp.pop %v844
      %v855 = vrcp.pop %v847
      %v856 = vrcp.pop %v850
      %v857 = vrcp.pop %v853
      %v858 = vmul.f32 %v835, %v854
      %v859 = vmul.f32 %v837, %v855
      %v860 = vmul.f32 %v839, %v856
      %v861 = vmul.f32 %v841, %v857
      %v862 = vpack.c.bf16 %v859, %v858
      %v863 = vpack.c.bf16 %v861, %v860
      %865 = vrot.lane.b32.xlu0 %v721, 80
      %v866 = vpop.permute.xlu0 %865
      %v868 = vsel %vm723, %v862, 0
      %vm870 = vcmask 1043456
      %v872 = vsel %vm870, %v866, 0
      %874 = vmatprep.subr.bf16.mxu0 0
      %875 = vmatpush1.bf16.msra.mxu0 %v872
      %876 = vmatprep.subr.bf16.mxu0 0
      %877 = vmatpush1.bf16.msra.mxu0 0
      %878 = vmatprep.subr.bf16.mxu0 0
      %879 = vmatpush1.bf16.msra.mxu0 0
      %880 = vmatprep.subr.bf16.mxu0 0
      %881 = vmatpush1.bf16.msra.mxu0 0
      %882 = vmatprep.subr.bf16.mxu0 0
      %883 = vmatpush1.bf16.msra.mxu0 0
      %884 = vmatprep.subr.bf16.mxu0 0
      %885 = vmatpush1.bf16.msra.mxu0 0
      %886 = vmatprep.subr.bf16.mxu0 0
      %887 = vmatpush1.bf16.msra.mxu0 0
      %888 = vmatprep.subr.bf16.mxu0 0
      %889 = vmatpush1.bf16.msra.mxu0 0
      %890 = vmatprep.subr.bf16.mxu0 0
      %891 = vmatpush1.bf16.msra.mxu0 0
      %892 = vmatprep.subr.bf16.mxu0 0
      %893 = vmatpush1.bf16.msra.mxu0 0
      %894 = vmatprep.subr.bf16.mxu0 0
      %895 = vmatpush1.bf16.msra.mxu0 0
      %896 = vmatprep.subr.bf16.mxu0 0
      %897 = vmatpush1.bf16.msra.mxu0 0
      %898 = vmatprep.subr.bf16.mxu0 0
      %899 = vmatpush1.bf16.msra.mxu0 0
      %900 = vmatprep.subr.bf16.mxu0 0
      %901 = vmatpush1.bf16.msra.mxu0 0
      %902 = vmatprep.subr.bf16.mxu0 0
      %903 = vmatpush1.bf16.msra.mxu0 0
      %904 = vmatprep.subr.bf16.mxu0 0
      %905 = vmatpush1.bf16.msra.mxu0 0
      %906 = vmatprep.mubr.bf16.mxu0 0
      %907 = vmatmul.mubr.bf16.gmra.mrb[0].mxu0 %v868
      %v908 = vpop.f32.mrb[0].mxu0
      %v909 = vadd.f32 0.0, %v908
      %v910 = vpop.f32.mrb[0].mxu0
      %v911 = vpop.f32.mrb[0].mxu0
      %v912 = vadd.f32 0.0, %v911
      %v913 = vpop.f32.mrb[0].mxu0
      %914 = vdwg.mxu0
      %916 = vrot.lane.b32.xlu0 %v722, 80
      %v917 = vpop.permute.xlu0 %916
      %v919 = vsel %vm723, %v863, 0
      %v922 = vsel %vm870, %v917, 0
      %924 = vmatprep.subr.bf16.mxu0 0
      %925 = vmatpush1.bf16.msra.mxu0 %v922
      %926 = vmatprep.subr.bf16.mxu0 0
      %927 = vmatpush1.bf16.msra.mxu0 0
      %928 = vmatprep.subr.bf16.mxu0 0
      %929 = vmatpush1.bf16.msra.mxu0 0
      %930 = vmatprep.subr.bf16.mxu0 0
      %931 = vmatpush1.bf16.msra.mxu0 0
      %932 = vmatprep.subr.bf16.mxu0 0
      %933 = vmatpush1.bf16.msra.mxu0 0
      %934 = vmatprep.subr.bf16.mxu0 0
      %935 = vmatpush1.bf16.msra.mxu0 0
      %936 = vmatprep.subr.bf16.mxu0 0
      %937 = vmatpush1.bf16.msra.mxu0 0
      %938 = vmatprep.subr.bf16.mxu0 0
      %939 = vmatpush1.bf16.msra.mxu0 0
      %940 = vmatprep.subr.bf16.mxu0 0
      %941 = vmatpush1.bf16.msra.mxu0 0
      %942 = vmatprep.subr.bf16.mxu0 0
      %943 = vmatpush1.bf16.msra.mxu0 0
      %944 = vmatprep.subr.bf16.mxu0 0
      %945 = vmatpush1.bf16.msra.mxu0 0
      %946 = vmatprep.subr.bf16.mxu0 0
      %947 = vmatpush1.bf16.msra.mxu0 0
      %948 = vmatprep.subr.bf16.mxu0 0
      %949 = vmatpush1.bf16.msra.mxu0 0
      %950 = vmatprep.subr.bf16.mxu0 0
      %951 = vmatpush1.bf16.msra.mxu0 0
      %952 = vmatprep.subr.bf16.mxu0 0
      %953 = vmatpush1.bf16.msra.mxu0 0
      %954 = vmatprep.subr.bf16.mxu0 0
      %955 = vmatpush1.bf16.msra.mxu0 0
      %956 = vmatprep.mubr.bf16.mxu0 0
      %957 = vmatmul.mubr.bf16.gmra.mrb[0].mxu0 %v919
      %v958 = vpop.f32.mrb[0].mxu0
      %v959 = vadd.f32 0.0, %v958
      %v960 = vpop.f32.mrb[0].mxu0
      %v961 = vpop.f32.mrb[0].mxu0
      %v962 = vadd.f32 0.0, %v961
      %v963 = vpop.f32.mrb[0].mxu0
      %964 = vdwg.mxu0
      %v965 = vpack.c.bf16 %v912, %v909
      %v966 = vpack.c.bf16 %v962, %v959
      %968 = vrot.lane.b32.xlu0 %v719, 120
      %v969 = vpop.permute.xlu0 %968
      %970 = vrot.lane.b32.xlu0 %v721, 120
      %v971 = vpop.permute.xlu0 %970
      %v973 = vsel %vm723, %v969, 0
      %v976 = vsel %vm723, %v971, 0
      %978 = vmatprep.subr.bf16.mxu0 0
      %979 = vmatpush1.bf16.xpose.msra.mxu0 %v976
      %980 = vmatprep.subr.bf16.mxu0 0
      %981 = vmatpush1.bf16.xpose.msra.mxu0 0
      %982 = vmatprep.subr.bf16.mxu0 0
      %983 = vmatpush1.bf16.xpose.msra.mxu0 0
      %984 = vmatprep.subr.bf16.mxu0 0
      %985 = vmatpush1.bf16.xpose.msra.mxu0 0
      %986 = vmatprep.subr.bf16.mxu0 0
      %987 = vmatpush1.bf16.xpose.msra.mxu0 0
      %988 = vmatprep.subr.bf16.mxu0 0
      %989 = vmatpush1.bf16.xpose.msra.mxu0 0
      %990 = vmatprep.subr.bf16.mxu0 0
      %991 = vmatpush1.bf16.xpose.msra.mxu0 0
      %992 = vmatprep.subr.bf16.mxu0 0
      %993 = vmatpush1.bf16.xpose.msra.mxu0 0
      %994 = vmatprep.subr.bf16.mxu0 0
      %995 = vmatpush1.bf16.xpose.msra.mxu0 0
      %996 = vmatprep.subr.bf16.mxu0 0
      %997 = vmatpush1.bf16.xpose.msra.mxu0 0
      %998 = vmatprep.subr.bf16.mxu0 0
      %999 = vmatpush1.bf16.xpose.msra.mxu0 0
      %1000 = vmatprep.subr.bf16.mxu0 0
      %1001 = vmatpush1.bf16.xpose.msra.mxu0 0
      %1002 = vmatprep.subr.bf16.mxu0 0
      %1003 = vmatpush1.bf16.xpose.msra.mxu0 0
      %1004 = vmatprep.subr.bf16.mxu0 0
      %1005 = vmatpush1.bf16.xpose.msra.mxu0 0
      %1006 = vmatprep.subr.bf16.mxu0 0
      %1007 = vmatpush1.bf16.xpose.msra.mxu0 0
      %1008 = vmatprep.subr.bf16.mxu0 0
      %1009 = vmatpush1.bf16.xpose.msra.mxu0 0
      %1010 = vmatprep.mubr.bf16.mxu0 0
      %1011 = vmatmul.mubr.bf16.gmra.mrb[0].mxu0 %v973
      %v1012 = vpop.f32.mrb[0].mxu0
      %v1013 = vadd.f32 0.0, %v1012
      %v1014 = vpop.f32.mrb[0].mxu0
      %v1015 = vpop.f32.mrb[0].mxu0
      %v1016 = vadd.f32 0.0, %v1015
      %v1017 = vpop.f32.mrb[0].mxu0
      %1018 = vdwg.mxu0
      %1020 = vrot.lane.b32.xlu0 %v720, 120
      %v1021 = vpop.permute.xlu0 %1020
      %1022 = vrot.lane.b32.xlu0 %v722, 120
      %v1023 = vpop.permute.xlu0 %1022
      %v1025 = vsel %vm723, %v1021, 0
      %v1028 = vsel %vm723, %v1023, 0
      %1030 = vmatprep.subr.bf16.mxu0 0
      %1031 = vmatpush1.bf16.xpose.msra.mxu0 %v1028
      %1032 = vmatprep.subr.bf16.mxu0 0
      %1033 = vmatpush1.bf16.xpose.msra.mxu0 0
      %1034 = vmatprep.subr.bf16.mxu0 0
      %1035 = vmatpush1.bf16.xpose.msra.mxu0 0
      %1036 = vmatprep.subr.bf16.mxu0 0
      %1037 = vmatpush1.bf16.xpose.msra.mxu0 0
      %1038 = vmatprep.subr.bf16.mxu0 0
      %1039 = vmatpush1.bf16.xpose.msra.mxu0 0
      %1040 = vmatprep.subr.bf16.mxu0 0
      %1041 = vmatpush1.bf16.xpose.msra.mxu0 0
      %1042 = vmatprep.subr.bf16.mxu0 0
      %1043 = vmatpush1.bf16.xpose.msra.mxu0 0
      %1044 = vmatprep.subr.bf16.mxu0 0
      %1045 = vmatpush1.bf16.xpose.msra.mxu0 0
      %1046 = vmatprep.subr.bf16.mxu0 0
      %1047 = vmatpush1.bf16.xpose.msra.mxu0 0
      %1048 = vmatprep.subr.bf16.mxu0 0
      %1049 = vmatpush1.bf16.xpose.msra.mxu0 0
      %1050 = vmatprep.subr.bf16.mxu0 0
      %1051 = vmatpush1.bf16.xpose.msra.mxu0 0
      %1052 = vmatprep.subr.bf16.mxu0 0
      %1053 = vmatpush1.bf16.xpose.msra.mxu0 0
      %1054 = vmatprep.subr.bf16.mxu0 0
      %1055 = vmatpush1.bf16.xpose.msra.mxu0 0
      %1056 = vmatprep.subr.bf16.mxu0 0
      %1057 = vmatpush1.bf16.xpose.msra.mxu0 0
      %1058 = vmatprep.subr.bf16.mxu0 0
      %1059 = vmatpush1.bf16.xpose.msra.mxu0 0
      %1060 = vmatprep.subr.bf16.mxu0 0
      %1061 = vmatpush1.bf16.xpose.msra.mxu0 0
      %1062 = vmatprep.mubr.bf16.mxu0 0
      %1063 = vmatmul.mubr.bf16.gmra.mrb[0].mxu0 %v1025
      %v1064 = vpop.f32.mrb[0].mxu0
      %v1065 = vadd.f32 0.0, %v1064
      %v1066 = vpop.f32.mrb[0].mxu0
      %v1067 = vpop.f32.mrb[0].mxu0
      %v1068 = vadd.f32 0.0, %v1067
      %v1069 = vpop.f32.mrb[0].mxu0
      %1070 = vdwg.mxu0
      %v1071 = vsel %vm723, %v1013, -inf
      %1072 = vmax.xlane.f32.xlu0 %v1071
      %v1073 = vpop.xlane.xlu0 %1072
      %v1074 = vsel %vm723, %v1016, -inf
      %1075 = vmax.xlane.f32.xlu0 %v1074
      %v1076 = vpop.xlane.xlu0 %1075
      %v1077 = vsel %vm723, %v1065, -inf
      %1078 = vmax.xlane.f32.xlu0 %v1077
      %v1079 = vpop.xlane.xlu0 %1078
      %v1080 = vsel %vm723, %v1068, -inf
      %1081 = vmax.xlane.f32.xlu0 %v1080
      %v1082 = vpop.xlane.xlu0 %1081
      %v1083 = vsub.f32 %v1013, %v1073
      %v1084 = vsub.f32 %v1016, %v1076
      %v1085 = vsub.f32 %v1065, %v1079
      %v1086 = vsub.f32 %v1068, %v1082
      %v1087 = vmul.f32 %v1083, 1.442695
      %v1088 = vpow.pop %v1087
      %v1089 = vmul.f32 %v1084, 1.442695
      %v1090 = vpow.pop %v1089
      %v1091 = vmul.f32 %v1085, 1.442695
      %v1092 = vpow.pop %v1091
      %v1093 = vmul.f32 %v1086, 1.442695
      %v1094 = vpow.pop %v1093
      %v1095 = vsel %vm723, %v1088, 0.0
      %1096 = vadd.xlane.f32.xlu0 %v1095
      %v1097 = vpop.xlane.xlu0 %1096
      %v1098 = vsel %vm723, %v1090, 0.0
      %1099 = vadd.xlane.f32.xlu0 %v1098
      %v1100 = vpop.xlane.xlu0 %1099
      %v1101 = vsel %vm723, %v1092, 0.0
      %1102 = vadd.xlane.f32.xlu0 %v1101
      %v1103 = vpop.xlane.xlu0 %1102
      %v1104 = vsel %vm723, %v1094, 0.0
      %1105 = vadd.xlane.f32.xlu0 %v1104
      %v1106 = vpop.xlane.xlu0 %1105
      %v1107 = vrcp.pop %v1097
      %v1108 = vrcp.pop %v1100
      %v1109 = vrcp.pop %v1103
      %v1110 = vrcp.pop %v1106
      %v1111 = vmul.f32 %v1088, %v1107
      %v1112 = vmul.f32 %v1090, %v1108
      %v1113 = vmul.f32 %v1092, %v1109
      %v1114 = vmul.f32 %v1094, %v1110
      %v1115 = vpack.c.bf16 %v1112, %v1111
      %v1116 = vpack.c.bf16 %v1114, %v1113
      %1117 = vrot.lane.b32.xlu0 %v721, 72
      %v1118 = vpop.permute.xlu0 %1117
      %v1120 = vsel %vm723, %v1115, 0
      %v1123 = vsel %vm870, %v1118, 0
      %1125 = vmatprep.subr.bf16.mxu0 0
      %1126 = vmatpush1.bf16.msra.mxu0 %v1123
      %1127 = vmatprep.subr.bf16.mxu0 0
      %1128 = vmatpush1.bf16.msra.mxu0 0
      %1129 = vmatprep.subr.bf16.mxu0 0
      %1130 = vmatpush1.bf16.msra.mxu0 0
      %1131 = vmatprep.subr.bf16.mxu0 0
      %1132 = vmatpush1.bf16.msra.mxu0 0
      %1133 = vmatprep.subr.bf16.mxu0 0
      %1134 = vmatpush1.bf16.msra.mxu0 0
      %1135 = vmatprep.subr.bf16.mxu0 0
      %1136 = vmatpush1.bf16.msra.mxu0 0
      %1137 = vmatprep.subr.bf16.mxu0 0
      %1138 = vmatpush1.bf16.msra.mxu0 0
      %1139 = vmatprep.subr.bf16.mxu0 0
      %1140 = vmatpush1.bf16.msra.mxu0 0
      %1141 = vmatprep.subr.bf16.mxu0 0
      %1142 = vmatpush1.bf16.msra.mxu0 0
      %1143 = vmatprep.subr.bf16.mxu0 0
      %1144 = vmatpush1.bf16.msra.mxu0 0
      %1145 = vmatprep.subr.bf16.mxu0 0
      %1146 = vmatpush1.bf16.msra.mxu0 0
      %1147 = vmatprep.subr.bf16.mxu0 0
      %1148 = vmatpush1.bf16.msra.mxu0 0
      %1149 = vmatprep.subr.bf16.mxu0 0
      %1150 = vmatpush1.bf16.msra.mxu0 0
      %1151 = vmatprep.subr.bf16.mxu0 0
      %1152 = vmatpush1.bf16.msra.mxu0 0
      %1153 = vmatprep.subr.bf16.mxu0 0
      %1154 = vmatpush1.bf16.msra.mxu0 0
      %1155 = vmatprep.subr.bf16.mxu0 0
      %1156 = vmatpush1.bf16.msra.mxu0 0
      %1157 = vmatprep.mubr.bf16.mxu0 0
      %1158 = vmatmul.mubr.bf16.gmra.mrb[0].mxu0 %v1120
      %v1159 = vpop.f32.mrb[0].mxu0
      %v1160 = vadd.f32 0.0, %v1159
      %v1161 = vpop.f32.mrb[0].mxu0
      %v1162 = vpop.f32.mrb[0].mxu0
      %v1163 = vadd.f32 0.0, %v1162
      %v1164 = vpop.f32.mrb[0].mxu0
      %1165 = vdwg.mxu0
      %1166 = vrot.lane.b32.xlu0 %v722, 72
      %v1167 = vpop.permute.xlu0 %1166
      %v1169 = vsel %vm723, %v1116, 0
      %v1172 = vsel %vm870, %v1167, 0
      %1174 = vmatprep.subr.bf16.mxu0 0
      %1175 = vmatpush1.bf16.msra.mxu0 %v1172
      %1176 = vmatprep.subr.bf16.mxu0 0
      %1177 = vmatpush1.bf16.msra.mxu0 0
      %1178 = vmatprep.subr.bf16.mxu0 0
      %1179 = vmatpush1.bf16.msra.mxu0 0
      %1180 = vmatprep.subr.bf16.mxu0 0
      %1181 = vmatpush1.bf16.msra.mxu0 0
      %1182 = vmatprep.subr.bf16.mxu0 0
      %1183 = vmatpush1.bf16.msra.mxu0 0
      %1184 = vmatprep.subr.bf16.mxu0 0
      %1185 = vmatpush1.bf16.msra.mxu0 0
      %1186 = vmatprep.subr.bf16.mxu0 0
      %1187 = vmatpush1.bf16.msra.mxu0 0
      %1188 = vmatprep.subr.bf16.mxu0 0
      %1189 = vmatpush1.bf16.msra.mxu0 0
      %1190 = vmatprep.subr.bf16.mxu0 0
      %1191 = vmatpush1.bf16.msra.mxu0 0
      %1192 = vmatprep.subr.bf16.mxu0 0
      %1193 = vmatpush1.bf16.msra.mxu0 0
      %1194 = vmatprep.subr.bf16.mxu0 0
      %1195 = vmatpush1.bf16.msra.mxu0 0
      %1196 = vmatprep.subr.bf16.mxu0 0
      %1197 = vmatpush1.bf16.msra.mxu0 0
      %1198 = vmatprep.subr.bf16.mxu0 0
      %1199 = vmatpush1.bf16.msra.mxu0 0
      %1200 = vmatprep.subr.bf16.mxu0 0
      %1201 = vmatpush1.bf16.msra.mxu0 0
      %1202 = vmatprep.subr.bf16.mxu0 0
      %1203 = vmatpush1.bf16.msra.mxu0 0
      %1204 = vmatprep.subr.bf16.mxu0 0
      %1205 = vmatpush1.bf16.msra.mxu0 0
      %1206 = vmatprep.mubr.bf16.mxu0 0
      %1207 = vmatmul.mubr.bf16.gmra.mrb[0].mxu0 %v1169
      %v1208 = vpop.f32.mrb[0].mxu0
      %v1209 = vadd.f32 0.0, %v1208
      %v1210 = vpop.f32.mrb[0].mxu0
      %v1211 = vpop.f32.mrb[0].mxu0
      %v1212 = vadd.f32 0.0, %v1211
      %v1213 = vpop.f32.mrb[0].mxu0
      %1214 = vdwg.mxu0
      %v1215 = vpack.c.bf16 %v1163, %v1160
      %v1216 = vpack.c.bf16 %v1212, %v1209
      %1217 = vrot.lane.b32.xlu0 %v719, 112
      %v1218 = vpop.permute.xlu0 %1217
      %1219 = vrot.lane.b32.xlu0 %v721, 112
      %v1220 = vpop.permute.xlu0 %1219
      %v1222 = vsel %vm723, %v1218, 0
      %v1225 = vsel %vm723, %v1220, 0
      %1227 = vmatprep.subr.bf16.mxu0 0
      %1228 = vmatpush1.bf16.xpose.msra.mxu0 %v1225
      %1229 = vmatprep.subr.bf16.mxu0 0
      %1230 = vmatpush1.bf16.xpose.msra.mxu0 0
      %1231 = vmatprep.subr.bf16.mxu0 0
      %1232 = vmatpush1.bf16.xpose.msra.mxu0 0
      %1233 = vmatprep.subr.bf16.mxu0 0
      %1234 = vmatpush1.bf16.xpose.msra.mxu0 0
      %1235 = vmatprep.subr.bf16.mxu0 0
      %1236 = vmatpush1.bf16.xpose.msra.mxu0 0
      %1237 = vmatprep.subr.bf16.mxu0 0
      %1238 = vmatpush1.bf16.xpose.msra.mxu0 0
      %1239 = vmatprep.subr.bf16.mxu0 0
      %1240 = vmatpush1.bf16.xpose.msra.mxu0 0
      %1241 = vmatprep.subr.bf16.mxu0 0
      %1242 = vmatpush1.bf16.xpose.msra.mxu0 0
      %1243 = vmatprep.subr.bf16.mxu0 0
      %1244 = vmatpush1.bf16.xpose.msra.mxu0 0
      %1245 = vmatprep.subr.bf16.mxu0 0
      %1246 = vmatpush1.bf16.xpose.msra.mxu0 0
      %1247 = vmatprep.subr.bf16.mxu0 0
      %1248 = vmatpush1.bf16.xpose.msra.mxu0 0
      %1249 = vmatprep.subr.bf16.mxu0 0
      %1250 = vmatpush1.bf16.xpose.msra.mxu0 0
      %1251 = vmatprep.subr.bf16.mxu0 0
      %1252 = vmatpush1.bf16.xpose.msra.mxu0 0
      %1253 = vmatprep.subr.bf16.mxu0 0
      %1254 = vmatpush1.bf16.xpose.msra.mxu0 0
      %1255 = vmatprep.subr.bf16.mxu0 0
      %1256 = vmatpush1.bf16.xpose.msra.mxu0 0
      %1257 = vmatprep.subr.bf16.mxu0 0
      %1258 = vmatpush1.bf16.xpose.msra.mxu0 0
      %1259 = vmatprep.mubr.bf16.mxu0 0
      %1260 = vmatmul.mubr.bf16.gmra.mrb[0].mxu0 %v1222
      %v1261 = vpop.f32.mrb[0].mxu0
      %v1262 = vadd.f32 0.0, %v1261
      %v1263 = vpop.f32.mrb[0].mxu0
      %v1264 = vpop.f32.mrb[0].mxu0
      %v1265 = vadd.f32 0.0, %v1264
      %v1266 = vpop.f32.mrb[0].mxu0
      %1267 = vdwg.mxu0
      %1268 = vrot.lane.b32.xlu0 %v720, 112
      %v1269 = vpop.permute.xlu0 %1268
      %1270 = vrot.lane.b32.xlu0 %v722, 112
      %v1271 = vpop.permute.xlu0 %1270
      %v1273 = vsel %vm723, %v1269, 0
      %v1276 = vsel %vm723, %v1271, 0
      %1278 = vmatprep.subr.bf16.mxu0 0
      %1279 = vmatpush1.bf16.xpose.msra.mxu0 %v1276
      %1280 = vmatprep.subr.bf16.mxu0 0
      %1281 = vmatpush1.bf16.xpose.msra.mxu0 0
      %1282 = vmatprep.subr.bf16.mxu0 0
      %1283 = vmatpush1.bf16.xpose.msra.mxu0 0
      %1284 = vmatprep.subr.bf16.mxu0 0
      %1285 = vmatpush1.bf16.xpose.msra.mxu0 0
      %1286 = vmatprep.subr.bf16.mxu0 0
      %1287 = vmatpush1.bf16.xpose.msra.mxu0 0
      %1288 = vmatprep.subr.bf16.mxu0 0
      %1289 = vmatpush1.bf16.xpose.msra.mxu0 0
      %1290 = vmatprep.subr.bf16.mxu0 0
      %1291 = vmatpush1.bf16.xpose.msra.mxu0 0
      %1292 = vmatprep.subr.bf16.mxu0 0
      %1293 = vmatpush1.bf16.xpose.msra.mxu0 0
      %1294 = vmatprep.subr.bf16.mxu0 0
      %1295 = vmatpush1.bf16.xpose.msra.mxu0 0
      %1296 = vmatprep.subr.bf16.mxu0 0
      %1297 = vmatpush1.bf16.xpose.msra.mxu0 0
      %1298 = vmatprep.subr.bf16.mxu0 0
      %1299 = vmatpush1.bf16.xpose.msra.mxu0 0
      %1300 = vmatprep.subr.bf16.mxu0 0
      %1301 = vmatpush1.bf16.xpose.msra.mxu0 0
      %1302 = vmatprep.subr.bf16.mxu0 0
      %1303 = vmatpush1.bf16.xpose.msra.mxu0 0
      %1304 = vmatprep.subr.bf16.mxu0 0
      %1305 = vmatpush1.bf16.xpose.msra.mxu0 0
      %1306 = vmatprep.subr.bf16.mxu0 0
      %1307 = vmatpush1.bf16.xpose.msra.mxu0 0
      %1308 = vmatprep.subr.bf16.mxu0 0
      %1309 = vmatpush1.bf16.xpose.msra.mxu0 0
      %1310 = vmatprep.mubr.bf16.mxu0 0
      %1311 = vmatmul.mubr.bf16.gmra.mrb[0].mxu0 %v1273
      %v1312 = vpop.f32.mrb[0].mxu0
      %v1313 = vadd.f32 0.0, %v1312
      %v1314 = vpop.f32.mrb[0].mxu0
      %v1315 = vpop.f32.mrb[0].mxu0
      %v1316 = vadd.f32 0.0, %v1315
      %v1317 = vpop.f32.mrb[0].mxu0
      %1318 = vdwg.mxu0
      %v1319 = vsel %vm723, %v1262, -inf
      %1320 = vmax.xlane.f32.xlu0 %v1319
      %v1321 = vpop.xlane.xlu0 %1320
      %v1322 = vsel %vm723, %v1265, -inf
      %1323 = vmax.xlane.f32.xlu0 %v1322
      %v1324 = vpop.xlane.xlu0 %1323
      %v1325 = vsel %vm723, %v1313, -inf
      %1326 = vmax.xlane.f32.xlu0 %v1325
      %v1327 = vpop.xlane.xlu0 %1326
      %v1328 = vsel %vm723, %v1316, -inf
      %1329 = vmax.xlane.f32.xlu0 %v1328
      %v1330 = vpop.xlane.xlu0 %1329
      %v1331 = vsub.f32 %v1262, %v1321
      %v1332 = vsub.f32 %v1265, %v1324
      %v1333 = vsub.f32 %v1313, %v1327
      %v1334 = vsub.f32 %v1316, %v1330
      %v1335 = vmul.f32 %v1331, 1.442695
      %v1336 = vpow.pop %v1335
      %v1337 = vmul.f32 %v1332, 1.442695
      %v1338 = vpow.pop %v1337
      %v1339 = vmul.f32 %v1333, 1.442695
      %v1340 = vpow.pop %v1339
      %v1341 = vmul.f32 %v1334, 1.442695
      %v1342 = vpow.pop %v1341
      %v1343 = vsel %vm723, %v1336, 0.0
      %1344 = vadd.xlane.f32.xlu0 %v1343
      %v1345 = vpop.xlane.xlu0 %1344
      %v1346 = vsel %vm723, %v1338, 0.0
      %1347 = vadd.xlane.f32.xlu0 %v1346
      %v1348 = vpop.xlane.xlu0 %1347
      %v1349 = vsel %vm723, %v1340, 0.0
      %1350 = vadd.xlane.f32.xlu0 %v1349
      %v1351 = vpop.xlane.xlu0 %1350
      %v1352 = vsel %vm723, %v1342, 0.0
      %1353 = vadd.xlane.f32.xlu0 %v1352
      %v1354 = vpop.xlane.xlu0 %1353
      %v1355 = vrcp.pop %v1345
      %v1356 = vrcp.pop %v1348
      %v1357 = vrcp.pop %v1351
      %v1358 = vrcp.pop %v1354
      %v1359 = vmul.f32 %v1336, %v1355
      %v1360 = vmul.f32 %v1338, %v1356
      %v1361 = vmul.f32 %v1340, %v1357
      %v1362 = vmul.f32 %v1342, %v1358
      %v1363 = vpack.c.bf16 %v1360, %v1359
      %v1364 = vpack.c.bf16 %v1362, %v1361
      %1365 = vrot.lane.b32.xlu0 %v721, 64
      %v1366 = vpop.permute.xlu0 %1365
      %v1368 = vsel %vm723, %v1363, 0
      %v1371 = vsel %vm870, %v1366, 0
      %1373 = vmatprep.subr.bf16.mxu0 0
      %1374 = vmatpush1.bf16.msra.mxu0 %v1371
      %1375 = vmatprep.subr.bf16.mxu0 0
      %1376 = vmatpush1.bf16.msra.mxu0 0
      %1377 = vmatprep.subr.bf16.mxu0 0
      %1378 = vmatpush1.bf16.msra.mxu0 0
      %1379 = vmatprep.subr.bf16.mxu0 0
      %1380 = vmatpush1.bf16.msra.mxu0 0
      %1381 = vmatprep.subr.bf16.mxu0 0
      %1382 = vmatpush1.bf16.msra.mxu0 0
      %1383 = vmatprep.subr.bf16.mxu0 0
      %1384 = vmatpush1.bf16.msra.mxu0 0
      %1385 = vmatprep.subr.bf16.mxu0 0
      %1386 = vmatpush1.bf16.msra.mxu0 0
      %1387 = vmatprep.subr.bf16.mxu0 0
      %1388 = vmatpush1.bf16.msra.mxu0 0
      %1389 = vmatprep.subr.bf16.mxu0 0
      %1390 = vmatpush1.bf16.msra.mxu0 0
      %1391 = vmatprep.subr.bf16.mxu0 0
      %1392 = vmatpush1.bf16.msra.mxu0 0
      %1393 = vmatprep.subr.bf16.mxu0 0
      %1394 = vmatpush1.bf16.msra.mxu0 0
      %1395 = vmatprep.subr.bf16.mxu0 0
      %1396 = vmatpush1.bf16.msra.mxu0 0
      %1397 = vmatprep.subr.bf16.mxu0 0
      %1398 = vmatpush1.bf16.msra.mxu0 0
      %1399 = vmatprep.subr.bf16.mxu0 0
      %1400 = vmatpush1.bf16.msra.mxu0 0
      %1401 = vmatprep.subr.bf16.mxu0 0
      %1402 = vmatpush1.bf16.msra.mxu0 0
      %1403 = vmatprep.subr.bf16.mxu0 0
      %1404 = vmatpush1.bf16.msra.mxu0 0
      %1405 = vmatprep.mubr.bf16.mxu0 0
      %1406 = vmatmul.mubr.bf16.gmra.mrb[0].mxu0 %v1368
      %v1407 = vpop.f32.mrb[0].mxu0
      %v1408 = vadd.f32 0.0, %v1407
      %v1409 = vpop.f32.mrb[0].mxu0
      %v1410 = vpop.f32.mrb[0].mxu0
      %v1411 = vadd.f32 0.0, %v1410
      %v1412 = vpop.f32.mrb[0].mxu0
      %1413 = vdwg.mxu0
      %1414 = vrot.lane.b32.xlu0 %v722, 64
      %v1415 = vpop.permute.xlu0 %1414
      %v1417 = vsel %vm723, %v1364, 0
      %v1420 = vsel %vm870, %v1415, 0
      %1422 = vmatprep.subr.bf16.mxu0 0
      %1423 = vmatpush1.bf16.msra.mxu0 %v1420
      %1424 = vmatprep.subr.bf16.mxu0 0
      %1425 = vmatpush1.bf16.msra.mxu0 0
      %1426 = vmatprep.subr.bf16.mxu0 0
      %1427 = vmatpush1.bf16.msra.mxu0 0
      %1428 = vmatprep.subr.bf16.mxu0 0
      %1429 = vmatpush1.bf16.msra.mxu0 0
      %1430 = vmatprep.subr.bf16.mxu0 0
      %1431 = vmatpush1.bf16.msra.mxu0 0
      %1432 = vmatprep.subr.bf16.mxu0 0
      %1433 = vmatpush1.bf16.msra.mxu0 0
      %1434 = vmatprep.subr.bf16.mxu0 0
      %1435 = vmatpush1.bf16.msra.mxu0 0
      %1436 = vmatprep.subr.bf16.mxu0 0
      %1437 = vmatpush1.bf16.msra.mxu0 0
      %1438 = vmatprep.subr.bf16.mxu0 0
      %1439 = vmatpush1.bf16.msra.mxu0 0
      %1440 = vmatprep.subr.bf16.mxu0 0
      %1441 = vmatpush1.bf16.msra.mxu0 0
      %1442 = vmatprep.subr.bf16.mxu0 0
      %1443 = vmatpush1.bf16.msra.mxu0 0
      %1444 = vmatprep.subr.bf16.mxu0 0
      %1445 = vmatpush1.bf16.msra.mxu0 0
      %1446 = vmatprep.subr.bf16.mxu0 0
      %1447 = vmatpush1.bf16.msra.mxu0 0
      %1448 = vmatprep.subr.bf16.mxu0 0
      %1449 = vmatpush1.bf16.msra.mxu0 0
      %1450 = vmatprep.subr.bf16.mxu0 0
      %1451 = vmatpush1.bf16.msra.mxu0 0
      %1452 = vmatprep.subr.bf16.mxu0 0
      %1453 = vmatpush1.bf16.msra.mxu0 0
      %1454 = vmatprep.mubr.bf16.mxu0 0
      %1455 = vmatmul.mubr.bf16.gmra.mrb[0].mxu0 %v1417
      %v1456 = vpop.f32.mrb[0].mxu0
      %v1457 = vadd.f32 0.0, %v1456
      %v1458 = vpop.f32.mrb[0].mxu0
      %v1459 = vpop.f32.mrb[0].mxu0
      %v1460 = vadd.f32 0.0, %v1459
      %v1461 = vpop.f32.mrb[0].mxu0
      %1462 = vdwg.mxu0
      %v1463 = vpack.c.bf16 %v1411, %v1408
      %v1464 = vpack.c.bf16 %v1460, %v1457
      %1465 = vrot.lane.b32.xlu0 %v719, 104
      %v1466 = vpop.permute.xlu0 %1465
      %1467 = vrot.lane.b32.xlu0 %v721, 104
      %v1468 = vpop.permute.xlu0 %1467
      %v1470 = vsel %vm723, %v1466, 0
      %v1473 = vsel %vm723, %v1468, 0
      %1475 = vmatprep.subr.bf16.mxu0 0
      %1476 = vmatpush1.bf16.xpose.msra.mxu0 %v1473
      %1477 = vmatprep.subr.bf16.mxu0 0
      %1478 = vmatpush1.bf16.xpose.msra.mxu0 0
      %1479 = vmatprep.subr.bf16.mxu0 0
      %1480 = vmatpush1.bf16.xpose.msra.mxu0 0
      %1481 = vmatprep.subr.bf16.mxu0 0
      %1482 = vmatpush1.bf16.xpose.msra.mxu0 0
      %1483 = vmatprep.subr.bf16.mxu0 0
      %1484 = vmatpush1.bf16.xpose.msra.mxu0 0
      %1485 = vmatprep.subr.bf16.mxu0 0
      %1486 = vmatpush1.bf16.xpose.msra.mxu0 0
      %1487 = vmatprep.subr.bf16.mxu0 0
      %1488 = vmatpush1.bf16.xpose.msra.mxu0 0
      %1489 = vmatprep.subr.bf16.mxu0 0
      %1490 = vmatpush1.bf16.xpose.msra.mxu0 0
      %1491 = vmatprep.subr.bf16.mxu0 0
      %1492 = vmatpush1.bf16.xpose.msra.mxu0 0
      %1493 = vmatprep.subr.bf16.mxu0 0
      %1494 = vmatpush1.bf16.xpose.msra.mxu0 0
      %1495 = vmatprep.subr.bf16.mxu0 0
      %1496 = vmatpush1.bf16.xpose.msra.mxu0 0
      %1497 = vmatprep.subr.bf16.mxu0 0
      %1498 = vmatpush1.bf16.xpose.msra.mxu0 0
      %1499 = vmatprep.subr.bf16.mxu0 0
      %1500 = vmatpush1.bf16.xpose.msra.mxu0 0
      %1501 = vmatprep.subr.bf16.mxu0 0
      %1502 = vmatpush1.bf16.xpose.msra.mxu0 0
      %1503 = vmatprep.subr.bf16.mxu0 0
      %1504 = vmatpush1.bf16.xpose.msra.mxu0 0
      %1505 = vmatprep.subr.bf16.mxu0 0
      %1506 = vmatpush1.bf16.xpose.msra.mxu0 0
      %1507 = vmatprep.mubr.bf16.mxu0 0
      %1508 = vmatmul.mubr.bf16.gmra.mrb[0].mxu0 %v1470
      %v1509 = vpop.f32.mrb[0].mxu0
      %v1510 = vadd.f32 0.0, %v1509
      %v1511 = vpop.f32.mrb[0].mxu0
      %v1512 = vpop.f32.mrb[0].mxu0
      %v1513 = vadd.f32 0.0, %v1512
      %v1514 = vpop.f32.mrb[0].mxu0
      %1515 = vdwg.mxu0
      %1516 = vrot.lane.b32.xlu0 %v720, 104
      %v1517 = vpop.permute.xlu0 %1516
      %1518 = vrot.lane.b32.xlu0 %v722, 104
      %v1519 = vpop.permute.xlu0 %1518
      %v1521 = vsel %vm723, %v1517, 0
      %v1524 = vsel %vm723, %v1519, 0
      %1526 = vmatprep.subr.bf16.mxu0 0
      %1527 = vmatpush1.bf16.xpose.msra.mxu0 %v1524
      %1528 = vmatprep.subr.bf16.mxu0 0
      %1529 = vmatpush1.bf16.xpose.msra.mxu0 0
      %1530 = vmatprep.subr.bf16.mxu0 0
      %1531 = vmatpush1.bf16.xpose.msra.mxu0 0
      %1532 = vmatprep.subr.bf16.mxu0 0
      %1533 = vmatpush1.bf16.xpose.msra.mxu0 0
      %1534 = vmatprep.subr.bf16.mxu0 0
      %1535 = vmatpush1.bf16.xpose.msra.mxu0 0
      %1536 = vmatprep.subr.bf16.mxu0 0
      %1537 = vmatpush1.bf16.xpose.msra.mxu0 0
      %1538 = vmatprep.subr.bf16.mxu0 0
      %1539 = vmatpush1.bf16.xpose.msra.mxu0 0
      %1540 = vmatprep.subr.bf16.mxu0 0
      %1541 = vmatpush1.bf16.xpose.msra.mxu0 0
      %1542 = vmatprep.subr.bf16.mxu0 0
      %1543 = vmatpush1.bf16.xpose.msra.mxu0 0
      %1544 = vmatprep.subr.bf16.mxu0 0
      %1545 = vmatpush1.bf16.xpose.msra.mxu0 0
      %1546 = vmatprep.subr.bf16.mxu0 0
      %1547 = vmatpush1.bf16.xpose.msra.mxu0 0
      %1548 = vmatprep.subr.bf16.mxu0 0
      %1549 = vmatpush1.bf16.xpose.msra.mxu0 0
      %1550 = vmatprep.subr.bf16.mxu0 0
      %1551 = vmatpush1.bf16.xpose.msra.mxu0 0
      %1552 = vmatprep.subr.bf16.mxu0 0
      %1553 = vmatpush1.bf16.xpose.msra.mxu0 0
      %1554 = vmatprep.subr.bf16.mxu0 0
      %1555 = vmatpush1.bf16.xpose.msra.mxu0 0
      %1556 = vmatprep.subr.bf16.mxu0 0
      %1557 = vmatpush1.bf16.xpose.msra.mxu0 0
      %1558 = vmatprep.mubr.bf16.mxu0 0
      %1559 = vmatmul.mubr.bf16.gmra.mrb[0].mxu0 %v1521
      %v1560 = vpop.f32.mrb[0].mxu0
      %v1561 = vadd.f32 0.0, %v1560
      %v1562 = vpop.f32.mrb[0].mxu0
      %v1563 = vpop.f32.mrb[0].mxu0
      %v1564 = vadd.f32 0.0, %v1563
      %v1565 = vpop.f32.mrb[0].mxu0
      %1566 = vdwg.mxu0
      %v1567 = vsel %vm723, %v1510, -inf
      %1568 = vmax.xlane.f32.xlu0 %v1567
      %v1569 = vpop.xlane.xlu0 %1568
      %v1570 = vsel %vm723, %v1513, -inf
      %1571 = vmax.xlane.f32.xlu0 %v1570
      %v1572 = vpop.xlane.xlu0 %1571
      %v1573 = vsel %vm723, %v1561, -inf
      %1574 = vmax.xlane.f32.xlu0 %v1573
      %v1575 = vpop.xlane.xlu0 %1574
      %v1576 = vsel %vm723, %v1564, -inf
      %1577 = vmax.xlane.f32.xlu0 %v1576
      %v1578 = vpop.xlane.xlu0 %1577
      %v1579 = vsub.f32 %v1510, %v1569
      %v1580 = vsub.f32 %v1513, %v1572
      %v1581 = vsub.f32 %v1561, %v1575
      %v1582 = vsub.f32 %v1564, %v1578
      %v1583 = vmul.f32 %v1579, 1.442695
      %v1584 = vpow.pop %v1583
      %v1585 = vmul.f32 %v1580, 1.442695
      %v1586 = vpow.pop %v1585
      %v1587 = vmul.f32 %v1581, 1.442695
      %v1588 = vpow.pop %v1587
      %v1589 = vmul.f32 %v1582, 1.442695
      %v1590 = vpow.pop %v1589
      %v1591 = vsel %vm723, %v1584, 0.0
      %1592 = vadd.xlane.f32.xlu0 %v1591
      %v1593 = vpop.xlane.xlu0 %1592
      %v1594 = vsel %vm723, %v1586, 0.0
      %1595 = vadd.xlane.f32.xlu0 %v1594
      %v1596 = vpop.xlane.xlu0 %1595
      %v1597 = vsel %vm723, %v1588, 0.0
      %1598 = vadd.xlane.f32.xlu0 %v1597
      %v1599 = vpop.xlane.xlu0 %1598
      %v1600 = vsel %vm723, %v1590, 0.0
      %1601 = vadd.xlane.f32.xlu0 %v1600
      %v1602 = vpop.xlane.xlu0 %1601
      %v1603 = vrcp.pop %v1593
      %v1604 = vrcp.pop %v1596
      %v1605 = vrcp.pop %v1599
      %v1606 = vrcp.pop %v1602
      %v1607 = vmul.f32 %v1584, %v1603
      %v1608 = vmul.f32 %v1586, %v1604
      %v1609 = vmul.f32 %v1588, %v1605
      %v1610 = vmul.f32 %v1590, %v1606
      %v1611 = vpack.c.bf16 %v1608, %v1607
      %v1612 = vpack.c.bf16 %v1610, %v1609
      %1613 = vrot.lane.b32.xlu0 %v721, 56
      %v1614 = vpop.permute.xlu0 %1613
      %v1616 = vsel %vm723, %v1611, 0
      %v1619 = vsel %vm870, %v1614, 0
      %1621 = vmatprep.subr.bf16.mxu0 0
      %1622 = vmatpush1.bf16.msra.mxu0 %v1619
      %1623 = vmatprep.subr.bf16.mxu0 0
      %1624 = vmatpush1.bf16.msra.mxu0 0
      %1625 = vmatprep.subr.bf16.mxu0 0
      %1626 = vmatpush1.bf16.msra.mxu0 0
      %1627 = vmatprep.subr.bf16.mxu0 0
      %1628 = vmatpush1.bf16.msra.mxu0 0
      %1629 = vmatprep.subr.bf16.mxu0 0
      %1630 = vmatpush1.bf16.msra.mxu0 0
      %1631 = vmatprep.subr.bf16.mxu0 0
      %1632 = vmatpush1.bf16.msra.mxu0 0
      %1633 = vmatprep.subr.bf16.mxu0 0
      %1634 = vmatpush1.bf16.msra.mxu0 0
      %1635 = vmatprep.subr.bf16.mxu0 0
      %1636 = vmatpush1.bf16.msra.mxu0 0
      %1637 = vmatprep.subr.bf16.mxu0 0
      %1638 = vmatpush1.bf16.msra.mxu0 0
      %1639 = vmatprep.subr.bf16.mxu0 0
      %1640 = vmatpush1.bf16.msra.mxu0 0
      %1641 = vmatprep.subr.bf16.mxu0 0
      %1642 = vmatpush1.bf16.msra.mxu0 0
      %1643 = vmatprep.subr.bf16.mxu0 0
      %1644 = vmatpush1.bf16.msra.mxu0 0
      %1645 = vmatprep.subr.bf16.mxu0 0
      %1646 = vmatpush1.bf16.msra.mxu0 0
      %1647 = vmatprep.subr.bf16.mxu0 0
      %1648 = vmatpush1.bf16.msra.mxu0 0
      %1649 = vmatprep.subr.bf16.mxu0 0
      %1650 = vmatpush1.bf16.msra.mxu0 0
      %1651 = vmatprep.subr.bf16.mxu0 0
      %1652 = vmatpush1.bf16.msra.mxu0 0
      %1653 = vmatprep.mubr.bf16.mxu0 0
      %1654 = vmatmul.mubr.bf16.gmra.mrb[0].mxu0 %v1616
      %v1655 = vpop.f32.mrb[0].mxu0
      %v1656 = vadd.f32 0.0, %v1655
      %v1657 = vpop.f32.mrb[0].mxu0
      %v1658 = vpop.f32.mrb[0].mxu0
      %v1659 = vadd.f32 0.0, %v1658
      %v1660 = vpop.f32.mrb[0].mxu0
      %1661 = vdwg.mxu0
      %1662 = vrot.lane.b32.xlu0 %v722, 56
      %v1663 = vpop.permute.xlu0 %1662
      %v1665 = vsel %vm723, %v1612, 0
      %v1668 = vsel %vm870, %v1663, 0
      %1670 = vmatprep.subr.bf16.mxu0 0
      %1671 = vmatpush1.bf16.msra.mxu0 %v1668
      %1672 = vmatprep.subr.bf16.mxu0 0
      %1673 = vmatpush1.bf16.msra.mxu0 0
      %1674 = vmatprep.subr.bf16.mxu0 0
      %1675 = vmatpush1.bf16.msra.mxu0 0
      %1676 = vmatprep.subr.bf16.mxu0 0
      %1677 = vmatpush1.bf16.msra.mxu0 0
      %1678 = vmatprep.subr.bf16.mxu0 0
      %1679 = vmatpush1.bf16.msra.mxu0 0
      %1680 = vmatprep.subr.bf16.mxu0 0
      %1681 = vmatpush1.bf16.msra.mxu0 0
      %1682 = vmatprep.subr.bf16.mxu0 0
      %1683 = vmatpush1.bf16.msra.mxu0 0
      %1684 = vmatprep.subr.bf16.mxu0 0
      %1685 = vmatpush1.bf16.msra.mxu0 0
      %1686 = vmatprep.subr.bf16.mxu0 0
      %1687 = vmatpush1.bf16.msra.mxu0 0
      %1688 = vmatprep.subr.bf16.mxu0 0
      %1689 = vmatpush1.bf16.msra.mxu0 0
      %1690 = vmatprep.subr.bf16.mxu0 0
      %1691 = vmatpush1.bf16.msra.mxu0 0
      %1692 = vmatprep.subr.bf16.mxu0 0
      %1693 = vmatpush1.bf16.msra.mxu0 0
      %1694 = vmatprep.subr.bf16.mxu0 0
      %1695 = vmatpush1.bf16.msra.mxu0 0
      %1696 = vmatprep.subr.bf16.mxu0 0
      %1697 = vmatpush1.bf16.msra.mxu0 0
      %1698 = vmatprep.subr.bf16.mxu0 0
      %1699 = vmatpush1.bf16.msra.mxu0 0
      %1700 = vmatprep.subr.bf16.mxu0 0
      %1701 = vmatpush1.bf16.msra.mxu0 0
      %1702 = vmatprep.mubr.bf16.mxu0 0
      %1703 = vmatmul.mubr.bf16.gmra.mrb[0].mxu0 %v1665
      %v1704 = vpop.f32.mrb[0].mxu0
      %v1705 = vadd.f32 0.0, %v1704
      %v1706 = vpop.f32.mrb[0].mxu0
      %v1707 = vpop.f32.mrb[0].mxu0
      %v1708 = vadd.f32 0.0, %v1707
      %v1709 = vpop.f32.mrb[0].mxu0
      %1710 = vdwg.mxu0
      %v1711 = vpack.c.bf16 %v1659, %v1656
      %v1712 = vpack.c.bf16 %v1708, %v1705
      %1713 = vrot.lane.b32.xlu0 %v719, 96
      %v1714 = vpop.permute.xlu0 %1713
      %1715 = vrot.lane.b32.xlu0 %v721, 96
      %v1716 = vpop.permute.xlu0 %1715
      %v1718 = vsel %vm723, %v1714, 0
      %v1721 = vsel %vm723, %v1716, 0
      %1723 = vmatprep.subr.bf16.mxu0 0
      %1724 = vmatpush1.bf16.xpose.msra.mxu0 %v1721
      %1725 = vmatprep.subr.bf16.mxu0 0
      %1726 = vmatpush1.bf16.xpose.msra.mxu0 0
      %1727 = vmatprep.subr.bf16.mxu0 0
      %1728 = vmatpush1.bf16.xpose.msra.mxu0 0
      %1729 = vmatprep.subr.bf16.mxu0 0
      %1730 = vmatpush1.bf16.xpose.msra.mxu0 0
      %1731 = vmatprep.subr.bf16.mxu0 0
      %1732 = vmatpush1.bf16.xpose.msra.mxu0 0
      %1733 = vmatprep.subr.bf16.mxu0 0
      %1734 = vmatpush1.bf16.xpose.msra.mxu0 0
      %1735 = vmatprep.subr.bf16.mxu0 0
      %1736 = vmatpush1.bf16.xpose.msra.mxu0 0
      %1737 = vmatprep.subr.bf16.mxu0 0
      %1738 = vmatpush1.bf16.xpose.msra.mxu0 0
      %1739 = vmatprep.subr.bf16.mxu0 0
      %1740 = vmatpush1.bf16.xpose.msra.mxu0 0
      %1741 = vmatprep.subr.bf16.mxu0 0
      %1742 = vmatpush1.bf16.xpose.msra.mxu0 0
      %1743 = vmatprep.subr.bf16.mxu0 0
      %1744 = vmatpush1.bf16.xpose.msra.mxu0 0
      %1745 = vmatprep.subr.bf16.mxu0 0
      %1746 = vmatpush1.bf16.xpose.msra.mxu0 0
      %1747 = vmatprep.subr.bf16.mxu0 0
      %1748 = vmatpush1.bf16.xpose.msra.mxu0 0
      %1749 = vmatprep.subr.bf16.mxu0 0
      %1750 = vmatpush1.bf16.xpose.msra.mxu0 0
      %1751 = vmatprep.subr.bf16.mxu0 0
      %1752 = vmatpush1.bf16.xpose.msra.mxu0 0
      %1753 = vmatprep.subr.bf16.mxu0 0
      %1754 = vmatpush1.bf16.xpose.msra.mxu0 0
      %1755 = vmatprep.mubr.bf16.mxu0 0
      %1756 = vmatmul.mubr.bf16.gmra.mrb[0].mxu0 %v1718
      %v1757 = vpop.f32.mrb[0].mxu0
      %v1758 = vadd.f32 0.0, %v1757
      %v1759 = vpop.f32.mrb[0].mxu0
      %v1760 = vpop.f32.mrb[0].mxu0
      %v1761 = vadd.f32 0.0, %v1760
      %v1762 = vpop.f32.mrb[0].mxu0
      %1763 = vdwg.mxu0
      %1764 = vrot.lane.b32.xlu0 %v720, 96
      %v1765 = vpop.permute.xlu0 %1764
      %1766 = vrot.lane.b32.xlu0 %v722, 96
      %v1767 = vpop.permute.xlu0 %1766
      %v1769 = vsel %vm723, %v1765, 0
      %v1772 = vsel %vm723, %v1767, 0
      %1774 = vmatprep.subr.bf16.mxu0 0
      %1775 = vmatpush1.bf16.xpose.msra.mxu0 %v1772
      %1776 = vmatprep.subr.bf16.mxu0 0
      %1777 = vmatpush1.bf16.xpose.msra.mxu0 0
      %1778 = vmatprep.subr.bf16.mxu0 0
      %1779 = vmatpush1.bf16.xpose.msra.mxu0 0
      %1780 = vmatprep.subr.bf16.mxu0 0
      %1781 = vmatpush1.bf16.xpose.msra.mxu0 0
      %1782 = vmatprep.subr.bf16.mxu0 0
      %1783 = vmatpush1.bf16.xpose.msra.mxu0 0
      %1784 = vmatprep.subr.bf16.mxu0 0
      %1785 = vmatpush1.bf16.xpose.msra.mxu0 0
      %1786 = vmatprep.subr.bf16.mxu0 0
      %1787 = vmatpush1.bf16.xpose.msra.mxu0 0
      %1788 = vmatprep.subr.bf16.mxu0 0
      %1789 = vmatpush1.bf16.xpose.msra.mxu0 0
      %1790 = vmatprep.subr.bf16.mxu0 0
      %1791 = vmatpush1.bf16.xpose.msra.mxu0 0
      %1792 = vmatprep.subr.bf16.mxu0 0
      %1793 = vmatpush1.bf16.xpose.msra.mxu0 0
      %1794 = vmatprep.subr.bf16.mxu0 0
      %1795 = vmatpush1.bf16.xpose.msra.mxu0 0
      %1796 = vmatprep.subr.bf16.mxu0 0
      %1797 = vmatpush1.bf16.xpose.msra.mxu0 0
      %1798 = vmatprep.subr.bf16.mxu0 0
      %1799 = vmatpush1.bf16.xpose.msra.mxu0 0
      %1800 = vmatprep.subr.bf16.mxu0 0
      %1801 = vmatpush1.bf16.xpose.msra.mxu0 0
      %1802 = vmatprep.subr.bf16.mxu0 0
      %1803 = vmatpush1.bf16.xpose.msra.mxu0 0
      %1804 = vmatprep.subr.bf16.mxu0 0
      %1805 = vmatpush1.bf16.xpose.msra.mxu0 0
      %1806 = vmatprep.mubr.bf16.mxu0 0
      %1807 = vmatmul.mubr.bf16.gmra.mrb[0].mxu0 %v1769
      %v1808 = vpop.f32.mrb[0].mxu0
      %v1809 = vadd.f32 0.0, %v1808
      %v1810 = vpop.f32.mrb[0].mxu0
      %v1811 = vpop.f32.mrb[0].mxu0
      %v1812 = vadd.f32 0.0, %v1811
      %v1813 = vpop.f32.mrb[0].mxu0
      %1814 = vdwg.mxu0
      %v1815 = vsel %vm723, %v1758, -inf
      %1816 = vmax.xlane.f32.xlu0 %v1815
      %v1817 = vpop.xlane.xlu0 %1816
      %v1818 = vsel %vm723, %v1761, -inf
      %1819 = vmax.xlane.f32.xlu0 %v1818
      %v1820 = vpop.xlane.xlu0 %1819
      %v1821 = vsel %vm723, %v1809, -inf
      %1822 = vmax.xlane.f32.xlu0 %v1821
      %v1823 = vpop.xlane.xlu0 %1822
      %v1824 = vsel %vm723, %v1812, -inf
      %1825 = vmax.xlane.f32.xlu0 %v1824
      %v1826 = vpop.xlane.xlu0 %1825
      %v1827 = vsub.f32 %v1758, %v1817
      %v1828 = vsub.f32 %v1761, %v1820
      %v1829 = vsub.f32 %v1809, %v1823
      %v1830 = vsub.f32 %v1812, %v1826
      %v1831 = vmul.f32 %v1827, 1.442695
      %v1832 = vpow.pop %v1831
      %v1833 = vmul.f32 %v1828, 1.442695
      %v1834 = vpow.pop %v1833
      %v1835 = vmul.f32 %v1829, 1.442695
      %v1836 = vpow.pop %v1835
      %v1837 = vmul.f32 %v1830, 1.442695
      %v1838 = vpow.pop %v1837
      %v1839 = vsel %vm723, %v1832, 0.0
      %1840 = vadd.xlane.f32.xlu0 %v1839
      %v1841 = vpop.xlane.xlu0 %1840
      %v1842 = vsel %vm723, %v1834, 0.0
      %1843 = vadd.xlane.f32.xlu0 %v1842
      %v1844 = vpop.xlane.xlu0 %1843
      %v1845 = vsel %vm723, %v1836, 0.0
      %1846 = vadd.xlane.f32.xlu0 %v1845
      %v1847 = vpop.xlane.xlu0 %1846
      %v1848 = vsel %vm723, %v1838, 0.0
      %1849 = vadd.xlane.f32.xlu0 %v1848
      %v1850 = vpop.xlane.xlu0 %1849
      %v1851 = vrcp.pop %v1841
      %v1852 = vrcp.pop %v1844
      %v1853 = vrcp.pop %v1847
      %v1854 = vrcp.pop %v1850
      %v1855 = vmul.f32 %v1832, %v1851
      %v1856 = vmul.f32 %v1834, %v1852
      %v1857 = vmul.f32 %v1836, %v1853
      %v1858 = vmul.f32 %v1838, %v1854
      %v1859 = vpack.c.bf16 %v1856, %v1855
      %v1860 = vpack.c.bf16 %v1858, %v1857
      %1861 = vrot.lane.b32.xlu0 %v721, 48
      %v1862 = vpop.permute.xlu0 %1861
      %v1864 = vsel %vm723, %v1859, 0
      %v1867 = vsel %vm870, %v1862, 0
      %1869 = vmatprep.subr.bf16.mxu0 0
      %1870 = vmatpush1.bf16.msra.mxu0 %v1867
      %1871 = vmatprep.subr.bf16.mxu0 0
      %1872 = vmatpush1.bf16.msra.mxu0 0
      %1873 = vmatprep.subr.bf16.mxu0 0
      %1874 = vmatpush1.bf16.msra.mxu0 0
      %1875 = vmatprep.subr.bf16.mxu0 0
      %1876 = vmatpush1.bf16.msra.mxu0 0
      %1877 = vmatprep.subr.bf16.mxu0 0
      %1878 = vmatpush1.bf16.msra.mxu0 0
      %1879 = vmatprep.subr.bf16.mxu0 0
      %1880 = vmatpush1.bf16.msra.mxu0 0
      %1881 = vmatprep.subr.bf16.mxu0 0
      %1882 = vmatpush1.bf16.msra.mxu0 0
      %1883 = vmatprep.subr.bf16.mxu0 0
      %1884 = vmatpush1.bf16.msra.mxu0 0
      %1885 = vmatprep.subr.bf16.mxu0 0
      %1886 = vmatpush1.bf16.msra.mxu0 0
      %1887 = vmatprep.subr.bf16.mxu0 0
      %1888 = vmatpush1.bf16.msra.mxu0 0
      %1889 = vmatprep.subr.bf16.mxu0 0
      %1890 = vmatpush1.bf16.msra.mxu0 0
      %1891 = vmatprep.subr.bf16.mxu0 0
      %1892 = vmatpush1.bf16.msra.mxu0 0
      %1893 = vmatprep.subr.bf16.mxu0 0
      %1894 = vmatpush1.bf16.msra.mxu0 0
      %1895 = vmatprep.subr.bf16.mxu0 0
      %1896 = vmatpush1.bf16.msra.mxu0 0
      %1897 = vmatprep.subr.bf16.mxu0 0
      %1898 = vmatpush1.bf16.msra.mxu0 0
      %1899 = vmatprep.subr.bf16.mxu0 0
      %1900 = vmatpush1.bf16.msra.mxu0 0
      %1901 = vmatprep.mubr.bf16.mxu0 0
      %1902 = vmatmul.mubr.bf16.gmra.mrb[0].mxu0 %v1864
      %v1903 = vpop.f32.mrb[0].mxu0
      %v1904 = vadd.f32 0.0, %v1903
      %v1905 = vpop.f32.mrb[0].mxu0
      %v1906 = vpop.f32.mrb[0].mxu0
      %v1907 = vadd.f32 0.0, %v1906
      %v1908 = vpop.f32.mrb[0].mxu0
      %1909 = vdwg.mxu0
      %1910 = vrot.lane.b32.xlu0 %v722, 48
      %v1911 = vpop.permute.xlu0 %1910
      %v1913 = vsel %vm723, %v1860, 0
      %v1916 = vsel %vm870, %v1911, 0
      %1918 = vmatprep.subr.bf16.mxu0 0
      %1919 = vmatpush1.bf16.msra.mxu0 %v1916
      %1920 = vmatprep.subr.bf16.mxu0 0
      %1921 = vmatpush1.bf16.msra.mxu0 0
      %1922 = vmatprep.subr.bf16.mxu0 0
      %1923 = vmatpush1.bf16.msra.mxu0 0
      %1924 = vmatprep.subr.bf16.mxu0 0
      %1925 = vmatpush1.bf16.msra.mxu0 0
      %1926 = vmatprep.subr.bf16.mxu0 0
      %1927 = vmatpush1.bf16.msra.mxu0 0
      %1928 = vmatprep.subr.bf16.mxu0 0
      %1929 = vmatpush1.bf16.msra.mxu0 0
      %1930 = vmatprep.subr.bf16.mxu0 0
      %1931 = vmatpush1.bf16.msra.mxu0 0
      %1932 = vmatprep.subr.bf16.mxu0 0
      %1933 = vmatpush1.bf16.msra.mxu0 0
      %1934 = vmatprep.subr.bf16.mxu0 0
      %1935 = vmatpush1.bf16.msra.mxu0 0
      %1936 = vmatprep.subr.bf16.mxu0 0
      %1937 = vmatpush1.bf16.msra.mxu0 0
      %1938 = vmatprep.subr.bf16.mxu0 0
      %1939 = vmatpush1.bf16.msra.mxu0 0
      %1940 = vmatprep.subr.bf16.mxu0 0
      %1941 = vmatpush1.bf16.msra.mxu0 0
      %1942 = vmatprep.subr.bf16.mxu0 0
      %1943 = vmatpush1.bf16.msra.mxu0 0
      %1944 = vmatprep.subr.bf16.mxu0 0
      %1945 = vmatpush1.bf16.msra.mxu0 0
      %1946 = vmatprep.subr.bf16.mxu0 0
      %1947 = vmatpush1.bf16.msra.mxu0 0
      %1948 = vmatprep.subr.bf16.mxu0 0
      %1949 = vmatpush1.bf16.msra.mxu0 0
      %1950 = vmatprep.mubr.bf16.mxu0 0
      %1951 = vmatmul.mubr.bf16.gmra.mrb[0].mxu0 %v1913
      %v1952 = vpop.f32.mrb[0].mxu0
      %v1953 = vadd.f32 0.0, %v1952
      %v1954 = vpop.f32.mrb[0].mxu0
      %v1955 = vpop.f32.mrb[0].mxu0
      %v1956 = vadd.f32 0.0, %v1955
      %v1957 = vpop.f32.mrb[0].mxu0
      %1958 = vdwg.mxu0
      %v1959 = vpack.c.bf16 %v1907, %v1904
      %v1960 = vpack.c.bf16 %v1956, %v1953
      %1961 = vrot.lane.b32.xlu0 %v719, 88
      %v1962 = vpop.permute.xlu0 %1961
      %1963 = vrot.lane.b32.xlu0 %v721, 88
      %v1964 = vpop.permute.xlu0 %1963
      %v1966 = vsel %vm723, %v1962, 0
      %v1969 = vsel %vm723, %v1964, 0
      %1971 = vmatprep.subr.bf16.mxu0 0
      %1972 = vmatpush1.bf16.xpose.msra.mxu0 %v1969
      %1973 = vmatprep.subr.bf16.mxu0 0
      %1974 = vmatpush1.bf16.xpose.msra.mxu0 0
      %1975 = vmatprep.subr.bf16.mxu0 0
      %1976 = vmatpush1.bf16.xpose.msra.mxu0 0
      %1977 = vmatprep.subr.bf16.mxu0 0
      %1978 = vmatpush1.bf16.xpose.msra.mxu0 0
      %1979 = vmatprep.subr.bf16.mxu0 0
      %1980 = vmatpush1.bf16.xpose.msra.mxu0 0
      %1981 = vmatprep.subr.bf16.mxu0 0
      %1982 = vmatpush1.bf16.xpose.msra.mxu0 0
      %1983 = vmatprep.subr.bf16.mxu0 0
      %1984 = vmatpush1.bf16.xpose.msra.mxu0 0
      %1985 = vmatprep.subr.bf16.mxu0 0
      %1986 = vmatpush1.bf16.xpose.msra.mxu0 0
      %1987 = vmatprep.subr.bf16.mxu0 0
      %1988 = vmatpush1.bf16.xpose.msra.mxu0 0
      %1989 = vmatprep.subr.bf16.mxu0 0
      %1990 = vmatpush1.bf16.xpose.msra.mxu0 0
      %1991 = vmatprep.subr.bf16.mxu0 0
      %1992 = vmatpush1.bf16.xpose.msra.mxu0 0
      %1993 = vmatprep.subr.bf16.mxu0 0
      %1994 = vmatpush1.bf16.xpose.msra.mxu0 0
      %1995 = vmatprep.subr.bf16.mxu0 0
      %1996 = vmatpush1.bf16.xpose.msra.mxu0 0
      %1997 = vmatprep.subr.bf16.mxu0 0
      %1998 = vmatpush1.bf16.xpose.msra.mxu0 0
      %1999 = vmatprep.subr.bf16.mxu0 0
      %2000 = vmatpush1.bf16.xpose.msra.mxu0 0
      %2001 = vmatprep.subr.bf16.mxu0 0
      %2002 = vmatpush1.bf16.xpose.msra.mxu0 0
      %2003 = vmatprep.mubr.bf16.mxu0 0
      %2004 = vmatmul.mubr.bf16.gmra.mrb[0].mxu0 %v1966
      %v2005 = vpop.f32.mrb[0].mxu0
      %v2006 = vadd.f32 0.0, %v2005
      %v2007 = vpop.f32.mrb[0].mxu0
      %v2008 = vpop.f32.mrb[0].mxu0
      %v2009 = vadd.f32 0.0, %v2008
      %v2010 = vpop.f32.mrb[0].mxu0
      %2011 = vdwg.mxu0
      %2012 = vrot.lane.b32.xlu0 %v720, 88
      %v2013 = vpop.permute.xlu0 %2012
      %2014 = vrot.lane.b32.xlu0 %v722, 88
      %v2015 = vpop.permute.xlu0 %2014
      %v2017 = vsel %vm723, %v2013, 0
      %v2020 = vsel %vm723, %v2015, 0
      %2022 = vmatprep.subr.bf16.mxu0 0
      %2023 = vmatpush1.bf16.xpose.msra.mxu0 %v2020
      %2024 = vmatprep.subr.bf16.mxu0 0
      %2025 = vmatpush1.bf16.xpose.msra.mxu0 0
      %2026 = vmatprep.subr.bf16.mxu0 0
      %2027 = vmatpush1.bf16.xpose.msra.mxu0 0
      %2028 = vmatprep.subr.bf16.mxu0 0
      %2029 = vmatpush1.bf16.xpose.msra.mxu0 0
      %2030 = vmatprep.subr.bf16.mxu0 0
      %2031 = vmatpush1.bf16.xpose.msra.mxu0 0
      %2032 = vmatprep.subr.bf16.mxu0 0
      %2033 = vmatpush1.bf16.xpose.msra.mxu0 0
      %2034 = vmatprep.subr.bf16.mxu0 0
      %2035 = vmatpush1.bf16.xpose.msra.mxu0 0
      %2036 = vmatprep.subr.bf16.mxu0 0
      %2037 = vmatpush1.bf16.xpose.msra.mxu0 0
      %2038 = vmatprep.subr.bf16.mxu0 0
      %2039 = vmatpush1.bf16.xpose.msra.mxu0 0
      %2040 = vmatprep.subr.bf16.mxu0 0
      %2041 = vmatpush1.bf16.xpose.msra.mxu0 0
      %2042 = vmatprep.subr.bf16.mxu0 0
      %2043 = vmatpush1.bf16.xpose.msra.mxu0 0
      %2044 = vmatprep.subr.bf16.mxu0 0
      %2045 = vmatpush1.bf16.xpose.msra.mxu0 0
      %2046 = vmatprep.subr.bf16.mxu0 0
      %2047 = vmatpush1.bf16.xpose.msra.mxu0 0
      %2048 = vmatprep.subr.bf16.mxu0 0
      %2049 = vmatpush1.bf16.xpose.msra.mxu0 0
      %2050 = vmatprep.subr.bf16.mxu0 0
      %2051 = vmatpush1.bf16.xpose.msra.mxu0 0
      %2052 = vmatprep.subr.bf16.mxu0 0
      %2053 = vmatpush1.bf16.xpose.msra.mxu0 0
      %2054 = vmatprep.mubr.bf16.mxu0 0
      %2055 = vmatmul.mubr.bf16.gmra.mrb[0].mxu0 %v2017
      %v2056 = vpop.f32.mrb[0].mxu0
      %v2057 = vadd.f32 0.0, %v2056
      %v2058 = vpop.f32.mrb[0].mxu0
      %v2059 = vpop.f32.mrb[0].mxu0
      %v2060 = vadd.f32 0.0, %v2059
      %v2061 = vpop.f32.mrb[0].mxu0
      %2062 = vdwg.mxu0
      %v2063 = vsel %vm723, %v2006, -inf
      %2064 = vmax.xlane.f32.xlu0 %v2063
      %v2065 = vpop.xlane.xlu0 %2064
      %v2066 = vsel %vm723, %v2009, -inf
      %2067 = vmax.xlane.f32.xlu0 %v2066
      %v2068 = vpop.xlane.xlu0 %2067
      %v2069 = vsel %vm723, %v2057, -inf
      %2070 = vmax.xlane.f32.xlu0 %v2069
      %v2071 = vpop.xlane.xlu0 %2070
      %v2072 = vsel %vm723, %v2060, -inf
      %2073 = vmax.xlane.f32.xlu0 %v2072
      %v2074 = vpop.xlane.xlu0 %2073
      %v2075 = vsub.f32 %v2006, %v2065
      %v2076 = vsub.f32 %v2009, %v2068
      %v2077 = vsub.f32 %v2057, %v2071
      %v2078 = vsub.f32 %v2060, %v2074
      %v2079 = vmul.f32 %v2075, 1.442695
      %v2080 = vpow.pop %v2079
      %v2081 = vmul.f32 %v2076, 1.442695
      %v2082 = vpow.pop %v2081
      %v2083 = vmul.f32 %v2077, 1.442695
      %v2084 = vpow.pop %v2083
      %v2085 = vmul.f32 %v2078, 1.442695
      %v2086 = vpow.pop %v2085
      %v2087 = vsel %vm723, %v2080, 0.0
      %2088 = vadd.xlane.f32.xlu0 %v2087
      %v2089 = vpop.xlane.xlu0 %2088
      %v2090 = vsel %vm723, %v2082, 0.0
      %2091 = vadd.xlane.f32.xlu0 %v2090
      %v2092 = vpop.xlane.xlu0 %2091
      %v2093 = vsel %vm723, %v2084, 0.0
      %2094 = vadd.xlane.f32.xlu0 %v2093
      %v2095 = vpop.xlane.xlu0 %2094
      %v2096 = vsel %vm723, %v2086, 0.0
      %2097 = vadd.xlane.f32.xlu0 %v2096
      %v2098 = vpop.xlane.xlu0 %2097
      %v2099 = vrcp.pop %v2089
      %v2100 = vrcp.pop %v2092
      %v2101 = vrcp.pop %v2095
      %v2102 = vrcp.pop %v2098
      %v2103 = vmul.f32 %v2080, %v2099
      %v2104 = vmul.f32 %v2082, %v2100
      %v2105 = vmul.f32 %v2084, %v2101
      %v2106 = vmul.f32 %v2086, %v2102
      %v2107 = vpack.c.bf16 %v2104, %v2103
      %v2108 = vpack.c.bf16 %v2106, %v2105
      %2109 = vrot.lane.b32.xlu0 %v721, 40
      %v2110 = vpop.permute.xlu0 %2109
      %v2112 = vsel %vm723, %v2107, 0
      %v2115 = vsel %vm870, %v2110, 0
      %2117 = vmatprep.subr.bf16.mxu0 0
      %2118 = vmatpush1.bf16.msra.mxu0 %v2115
      %2119 = vmatprep.subr.bf16.mxu0 0
      %2120 = vmatpush1.bf16.msra.mxu0 0
      %2121 = vmatprep.subr.bf16.mxu0 0
      %2122 = vmatpush1.bf16.msra.mxu0 0
      %2123 = vmatprep.subr.bf16.mxu0 0
      %2124 = vmatpush1.bf16.msra.mxu0 0
      %2125 = vmatprep.subr.bf16.mxu0 0
      %2126 = vmatpush1.bf16.msra.mxu0 0
      %2127 = vmatprep.subr.bf16.mxu0 0
      %2128 = vmatpush1.bf16.msra.mxu0 0
      %2129 = vmatprep.subr.bf16.mxu0 0
      %2130 = vmatpush1.bf16.msra.mxu0 0
      %2131 = vmatprep.subr.bf16.mxu0 0
      %2132 = vmatpush1.bf16.msra.mxu0 0
      %2133 = vmatprep.subr.bf16.mxu0 0
      %2134 = vmatpush1.bf16.msra.mxu0 0
      %2135 = vmatprep.subr.bf16.mxu0 0
      %2136 = vmatpush1.bf16.msra.mxu0 0
      %2137 = vmatprep.subr.bf16.mxu0 0
      %2138 = vmatpush1.bf16.msra.mxu0 0
      %2139 = vmatprep.subr.bf16.mxu0 0
      %2140 = vmatpush1.bf16.msra.mxu0 0
      %2141 = vmatprep.subr.bf16.mxu0 0
      %2142 = vmatpush1.bf16.msra.mxu0 0
      %2143 = vmatprep.subr.bf16.mxu0 0
      %2144 = vmatpush1.bf16.msra.mxu0 0
      %2145 = vmatprep.subr.bf16.mxu0 0
      %2146 = vmatpush1.bf16.msra.mxu0 0
      %2147 = vmatprep.subr.bf16.mxu0 0
      %2148 = vmatpush1.bf16.msra.mxu0 0
      %2149 = vmatprep.mubr.bf16.mxu0 0
      %2150 = vmatmul.mubr.bf16.gmra.mrb[0].mxu0 %v2112
      %v2151 = vpop.f32.mrb[0].mxu0
      %v2152 = vadd.f32 0.0, %v2151
      %v2153 = vpop.f32.mrb[0].mxu0
      %v2154 = vpop.f32.mrb[0].mxu0
      %v2155 = vadd.f32 0.0, %v2154
      %v2156 = vpop.f32.mrb[0].mxu0
      %2157 = vdwg.mxu0
      %2158 = vrot.lane.b32.xlu0 %v722, 40
      %v2159 = vpop.permute.xlu0 %2158
      %v2161 = vsel %vm723, %v2108, 0
      %v2164 = vsel %vm870, %v2159, 0
      %2166 = vmatprep.subr.bf16.mxu0 0
      %2167 = vmatpush1.bf16.msra.mxu0 %v2164
      %2168 = vmatprep.subr.bf16.mxu0 0
      %2169 = vmatpush1.bf16.msra.mxu0 0
      %2170 = vmatprep.subr.bf16.mxu0 0
      %2171 = vmatpush1.bf16.msra.mxu0 0
      %2172 = vmatprep.subr.bf16.mxu0 0
      %2173 = vmatpush1.bf16.msra.mxu0 0
      %2174 = vmatprep.subr.bf16.mxu0 0
      %2175 = vmatpush1.bf16.msra.mxu0 0
      %2176 = vmatprep.subr.bf16.mxu0 0
      %2177 = vmatpush1.bf16.msra.mxu0 0
      %2178 = vmatprep.subr.bf16.mxu0 0
      %2179 = vmatpush1.bf16.msra.mxu0 0
      %2180 = vmatprep.subr.bf16.mxu0 0
      %2181 = vmatpush1.bf16.msra.mxu0 0
      %2182 = vmatprep.subr.bf16.mxu0 0
      %2183 = vmatpush1.bf16.msra.mxu0 0
      %2184 = vmatprep.subr.bf16.mxu0 0
      %2185 = vmatpush1.bf16.msra.mxu0 0
      %2186 = vmatprep.subr.bf16.mxu0 0
      %2187 = vmatpush1.bf16.msra.mxu0 0
      %2188 = vmatprep.subr.bf16.mxu0 0
      %2189 = vmatpush1.bf16.msra.mxu0 0
      %2190 = vmatprep.subr.bf16.mxu0 0
      %2191 = vmatpush1.bf16.msra.mxu0 0
      %2192 = vmatprep.subr.bf16.mxu0 0
      %2193 = vmatpush1.bf16.msra.mxu0 0
      %2194 = vmatprep.subr.bf16.mxu0 0
      %2195 = vmatpush1.bf16.msra.mxu0 0
      %2196 = vmatprep.subr.bf16.mxu0 0
      %2197 = vmatpush1.bf16.msra.mxu0 0
      %2198 = vmatprep.mubr.bf16.mxu0 0
      %2199 = vmatmul.mubr.bf16.gmra.mrb[0].mxu0 %v2161
      %v2200 = vpop.f32.mrb[0].mxu0
      %v2201 = vadd.f32 0.0, %v2200
      %v2202 = vpop.f32.mrb[0].mxu0
      %v2203 = vpop.f32.mrb[0].mxu0
      %v2204 = vadd.f32 0.0, %v2203
      %v2205 = vpop.f32.mrb[0].mxu0
      %2206 = vdwg.mxu0
      %v2207 = vpack.c.bf16 %v2155, %v2152
      %v2208 = vpack.c.bf16 %v2204, %v2201
      %2211 = vrot.lane.b32.xlu0 %v1215, 8
      %v2212 = vpop.permute.xlu0 %2211
      %2213 = vrot.lane.b32.xlu0 %v1216, 8
      %v2214 = vpop.permute.xlu0 %2213
      %2217 = vrot.lane.b32.xlu0 %v1463, 16
      %v2218 = vpop.permute.xlu0 %2217
      %2219 = vrot.lane.b32.xlu0 %v1464, 16
      %v2220 = vpop.permute.xlu0 %2219
      %2223 = vrot.lane.b32.xlu0 %v1711, 24
      %v2224 = vpop.permute.xlu0 %2223
      %2225 = vrot.lane.b32.xlu0 %v1712, 24
      %v2226 = vpop.permute.xlu0 %2225
      %2229 = vrot.lane.b32.xlu0 %v1959, 32
      %v2230 = vpop.permute.xlu0 %2229
      %2231 = vrot.lane.b32.xlu0 %v1960, 32
      %v2232 = vpop.permute.xlu0 %2231
      %2235 = vrot.lane.b32.xlu0 %v2207, 40
      %v2236 = vpop.permute.xlu0 %2235
      %2237 = vrot.lane.b32.xlu0 %v2208, 40
      %v2238 = vpop.permute.xlu0 %2237
      %v2241 = vsel %vm723, %v965, %v2212
      %v2244 = vsel %vm723, %v966, %v2214
      %vm2245 = vcmask 130048
      %v2247 = vsel %vm2245, %v2241, %v2218
      %v2249 = vsel %vm2245, %v2244, %v2220
      %vm2250 = vcmask 195584
      %v2252 = vsel %vm2250, %v2247, %v2224
      %v2254 = vsel %vm2250, %v2249, %v2226
      %vm2255 = vcmask 261120
      %v2257 = vsel %vm2255, %v2252, %v2230
      %v2259 = vsel %vm2255, %v2254, %v2232
      %vm2260 = vcmask 326656
      %v2262 = vsel %vm2260, %v2257, %v2236
      %v2264 = vsel %vm2260, %v2259, %v2238
      %v2265 = vld [vmem:[%s6] sm:$0xf]
      %v2266 = vld [vmem:[%s6 + $0x4] sm:$0xf]
      %v2267 = vld [vmem:[%s6 + $0x8] sm:$0xf]
      %v2268 = vld [vmem:[%s6 + $0xc] sm:$0xf]
      %v2269 = vld [vmem:[%s6 + $0x10] sm:$0xf]
      %v2270 = vld [vmem:[%s6 + $0x14] sm:$0xf]
      %v2271 = vld [vmem:[%s7] sm:$0x1]
      %v2273 = vlaneseq
      %v2274 = vshrl.u32 %v2273, 7
      %v2275 = vsub.s32 0, %v2274
      %v2276 = vrot.slane %v2271, %v2275
      %v2284 = vunpack.c.l.b16 %v2265
      %v2285 = vunpack.c.l.b16 %v2266
      %v2286 = vunpack.c.l.b16 %v2267
      %v2287 = vunpack.c.l.b16 %v2268
      %v2288 = vunpack.c.l.b16 %v2269
      %v2289 = vunpack.c.l.b16 %v2270
      %v2290 = vpack.c.b16 %v2285, %v2284
      %v2291 = vpack.c.b16 %v2287, %v2286
      %v2292 = vpack.c.b16 %v2289, %v2288
      %v2296 = vsel %vm587, %v2262, 0
      %v2298 = vsel %vm587, %v2264, 0
      %2300 = vmatprep.subr.bf16.mxu0 0
      %2301 = vmatpush1.bf16.msra.mxu0 %v2290
      %2302 = vmatprep.subr.bf16.mxu0 0
      %2303 = vmatpush1.bf16.msra.mxu0 %v2291
      %2304 = vmatprep.subr.bf16.mxu0 0
      %2305 = vmatpush1.bf16.msra.mxu0 %v2292
      %2306 = vmatprep.subr.bf16.mxu0 0
      %2307 = vmatpush1.bf16.msra.mxu0 0
      %2308 = vmatprep.subr.bf16.mxu0 0
      %2309 = vmatpush1.bf16.msra.mxu0 0
      %2310 = vmatprep.subr.bf16.mxu0 0
      %2311 = vmatpush1.bf16.msra.mxu0 0
      %2312 = vmatprep.subr.bf16.mxu0 0
      %2313 = vmatpush1.bf16.msra.mxu0 0
      %2314 = vmatprep.subr.bf16.mxu0 0
      %2315 = vmatpush1.bf16.msra.mxu0 0
      %2316 = vmatprep.subr.bf16.mxu0 0
      %2317 = vmatpush1.bf16.msra.mxu0 0
      %2318 = vmatprep.subr.bf16.mxu0 0
      %2319 = vmatpush1.bf16.msra.mxu0 0
      %2320 = vmatprep.subr.bf16.mxu0 0
      %2321 = vmatpush1.bf16.msra.mxu0 0
      %2322 = vmatprep.subr.bf16.mxu0 0
      %2323 = vmatpush1.bf16.msra.mxu0 0
      %2324 = vmatprep.subr.bf16.mxu0 0
      %2325 = vmatpush1.bf16.msra.mxu0 0
      %2326 = vmatprep.subr.bf16.mxu0 0
      %2327 = vmatpush1.bf16.msra.mxu0 0
      %2328 = vmatprep.subr.bf16.mxu0 0
      %2329 = vmatpush1.bf16.msra.mxu0 0
      %2330 = vmatprep.subr.bf16.mxu0 0
      %2331 = vmatpush1.bf16.msra.mxu0 0
      %2332 = vmatprep.mubr.bf16.mxu0 0
      %2333 = vmatmul.mubr.bf16.gmra.mrb[0].mxu0 %v2296
      %v2334 = vpop.f32.mrb[0].mxu0
      %v2335 = vadd.f32 %v2276, %v2334
      %v2336 = vpop.f32.mrb[0].mxu0
      %v2337 = vpop.f32.mrb[0].mxu0
      %v2338 = vadd.f32 %v2276, %v2337
      %v2339 = vpop.f32.mrb[0].mxu0
      %2340 = vmatprep.mubr.bf16.mxu0 0
      %2341 = vmatmul.mubr.bf16.gmra.mrb[0].mxu0 %v2298
      %v2342 = vpop.f32.mrb[0].mxu0
      %v2343 = vadd.f32 %v2276, %v2342
      %v2344 = vpop.f32.mrb[0].mxu0
      %v2345 = vpop.f32.mrb[0].mxu0
      %v2346 = vadd.f32 %v2276, %v2345
      %v2347 = vpop.f32.mrb[0].mxu0
      %2348 = vdwg.mxu0
      %v2349 = vadd.f32 %v548, %v2335
      %v2350 = vadd.f32 %v549, %v2338
      %v2351 = vadd.f32 %v550, %v2343
      %v2352 = vadd.f32 %v551, %v2346
      %v2353 = vld [vmem:[%s8] sm:$0x1]
      %v2354 = vld [vmem:[%s9] sm:$0x1]
      %v2355 = vsel %vm587, %v2349, 0.0
      %2356 = vadd.xlane.f32.xlu0 %v2355
      %v2357 = vpop.xlane.xlu0 %2356
      %v2358 = vsel %vm587, %v2350, 0.0
      %2359 = vadd.xlane.f32.xlu0 %v2358
      %v2360 = vpop.xlane.xlu0 %2359
      %v2361 = vsel %vm587, %v2351, 0.0
      %2362 = vadd.xlane.f32.xlu0 %v2361
      %v2363 = vpop.xlane.xlu0 %2362
      %v2364 = vsel %vm587, %v2352, 0.0
      %2365 = vadd.xlane.f32.xlu0 %v2364
      %v2366 = vpop.xlane.xlu0 %2365
      %v2367 = vrcp.pop 48.0
      %v2368 = vmul.f32 %v2357, %v2367
      %v2369 = vmul.f32 %v2360, %v2367
      %v2370 = vmul.f32 %v2363, %v2367
      %v2371 = vmul.f32 %v2366, %v2367
      %v2372 = vsub.f32 %v2349, %v2368
      %v2373 = vsub.f32 %v2350, %v2369
      %v2374 = vsub.f32 %v2351, %v2370
      %v2375 = vsub.f32 %v2352, %v2371
      %v2376 = vmul.f32 %v2372, %v2372
      %v2377 = vmul.f32 %v2373, %v2373
      %v2378 = vmul.f32 %v2374, %v2374
      %v2379 = vmul.f32 %v2375, %v2375
      %v2380 = vsel %vm587, %v2376, 0.0
      %2381 = vadd.xlane.f32.xlu0 %v2380
      %v2382 = vpop.xlane.xlu0 %2381
      %v2383 = vsel %vm587, %v2377, 0.0
      %2384 = vadd.xlane.f32.xlu0 %v2383
      %v2385 = vpop.xlane.xlu0 %2384
      %v2386 = vsel %vm587, %v2378, 0.0
      %2387 = vadd.xlane.f32.xlu0 %v2386
      %v2388 = vpop.xlane.xlu0 %2387
      %v2389 = vsel %vm587, %v2379, 0.0
      %2390 = vadd.xlane.f32.xlu0 %v2389
      %v2391 = vpop.xlane.xlu0 %2390
      %v2392 = vmul.f32 %v2382, %v2367
      %v2393 = vmul.f32 %v2385, %v2367
      %v2394 = vmul.f32 %v2388, %v2367
      %v2395 = vmul.f32 %v2391, %v2367
      %v2396 = vadd.f32 %v2392, 1e-05
      %v2397 = vadd.f32 %v2393, 1e-05
      %v2398 = vadd.f32 %v2394, 1e-05
      %v2399 = vadd.f32 %v2395, 1e-05
      %v2400 = vrsqrt.pop %v2396
      %v2401 = vrsqrt.pop %v2397
      %v2402 = vrsqrt.pop %v2398
      %v2403 = vrsqrt.pop %v2399
      %v2404 = vmul.f32 %v2372, %v2400
      %v2405 = vmul.f32 %v2373, %v2401
      %v2406 = vmul.f32 %v2374, %v2402
      %v2407 = vmul.f32 %v2375, %v2403
      %v2409 = vlaneseq
      %v2410 = vshrl.u32 %v2409, 7
      %v2411 = vsub.s32 0, %v2410
      %v2412 = vrot.slane %v2353, %v2411
      %v2414 = vmul.f32 %v2404, %v2412
      %v2415 = vmul.f32 %v2405, %v2412
      %v2416 = vmul.f32 %v2406, %v2412
      %v2417 = vmul.f32 %v2407, %v2412
      %v2419 = vlaneseq
      %v2420 = vshrl.u32 %v2419, 7
      %v2421 = vsub.s32 0, %v2420
      %v2422 = vrot.slane %v2354, %v2421
      %v2424 = vadd.f32 %v2414, %v2422
      %v2425 = vadd.f32 %v2415, %v2422
      %v2426 = vadd.f32 %v2416, %v2422
      %v2427 = vadd.f32 %v2417, %v2422
      %v2428 = vpack.c.bf16 %v2425, %v2424
      %v2429 = vpack.c.bf16 %v2427, %v2426
      %v2430 = vld [vmem:[%s10] sm:$0xff]
      %v2431 = vld [vmem:[%s10 + $0x8] sm:$0xff]
      %v2432 = vld [vmem:[%s10 + $0x10] sm:$0xff]
      %v2433 = vld [vmem:[%s10 + $0x18] sm:$0xff]
      %v2434 = vld [vmem:[%s10 + $0x20] sm:$0xff]
      %v2435 = vld [vmem:[%s10 + $0x28] sm:$0xff]
      %v2436 = vld [vmem:[%s11] sm:$0x3]
      %v2438 = vlaneseq
      %v2439 = vshrl.u32 %v2438, 7
      %v2440 = vsub.s32 0, %v2439
      %v2441 = vrot.slane %v2436, %v2440
      %v2442 = vlaneseq
      %v2443 = vshrl.u32 %v2442, 7
      %v2444 = vsub.s32 1, %v2443
      %v2445 = vrot.slane %v2436, %v2444
      %v2454 = vunpack.c.l.b16 %v2430
      %v2455 = vunpack.c.h.b16 %v2430
      %v2456 = vunpack.c.l.b16 %v2431
      %v2457 = vunpack.c.h.b16 %v2431
      %v2458 = vunpack.c.l.b16 %v2432
      %v2459 = vunpack.c.h.b16 %v2432
      %v2460 = vunpack.c.l.b16 %v2433
      %v2461 = vunpack.c.h.b16 %v2433
      %v2462 = vunpack.c.l.b16 %v2434
      %v2463 = vunpack.c.h.b16 %v2434
      %v2464 = vunpack.c.l.b16 %v2435
      %v2465 = vunpack.c.h.b16 %v2435
      %v2466 = vpack.c.b16 %v2456, %v2454
      %v2467 = vpack.c.b16 %v2457, %v2455
      %v2468 = vpack.c.b16 %v2460, %v2458
      %v2469 = vpack.c.b16 %v2461, %v2459
      %v2470 = vpack.c.b16 %v2464, %v2462
      %v2471 = vpack.c.b16 %v2465, %v2463
      %v2479 = vsel %vm587, %v2428, 0
      %v2482 = vsel %vm587, %v2429, 0
      %2484 = vmatprep.subr.bf16.mxu0 %v2467
      %2485 = vmatpush1.bf16.msra.mxu0 %v2466
      %2486 = vmatprep.subr.bf16.mxu0 %v2469
      %2487 = vmatpush1.bf16.msra.mxu0 %v2468
      %2488 = vmatprep.subr.bf16.mxu0 %v2471
      %2489 = vmatpush1.bf16.msra.mxu0 %v2470
      %2490 = vmatprep.subr.bf16.mxu0 0
      %2491 = vmatpush1.bf16.msra.mxu0 0
      %2492 = vmatprep.subr.bf16.mxu0 0
      %2493 = vmatpush1.bf16.msra.mxu0 0
      %2494 = vmatprep.subr.bf16.mxu0 0
      %2495 = vmatpush1.bf16.msra.mxu0 0
      %2496 = vmatprep.subr.bf16.mxu0 0
      %2497 = vmatpush1.bf16.msra.mxu0 0
      %2498 = vmatprep.subr.bf16.mxu0 0
      %2499 = vmatpush1.bf16.msra.mxu0 0
      %2500 = vmatprep.subr.bf16.mxu0 0
      %2501 = vmatpush1.bf16.msra.mxu0 0
      %2502 = vmatprep.subr.bf16.mxu0 0
      %2503 = vmatpush1.bf16.msra.mxu0 0
      %2504 = vmatprep.subr.bf16.mxu0 0
      %2505 = vmatpush1.bf16.msra.mxu0 0
      %2506 = vmatprep.subr.bf16.mxu0 0
      %2507 = vmatpush1.bf16.msra.mxu0 0
      %2508 = vmatprep.subr.bf16.mxu0 0
      %2509 = vmatpush1.bf16.msra.mxu0 0
      %2510 = vmatprep.subr.bf16.mxu0 0
      %2511 = vmatpush1.bf16.msra.mxu0 0
      %2512 = vmatprep.subr.bf16.mxu0 0
      %2513 = vmatpush1.bf16.msra.mxu0 0
      %2514 = vmatprep.subr.bf16.mxu0 0
      %2515 = vmatpush1.bf16.msra.mxu0 0
      %2516 = vmatprep.mubr.bf16.mxu0 0
      %2517 = vmatmul.mubr.bf16.gmra.mrb[0].mxu0 %v2479
      %v2518 = vpop.f32.mrb[0].mxu0
      %v2519 = vadd.f32 %v2441, %v2518
      %v2520 = vpop.f32.mrb[0].mxu0
      %v2521 = vadd.f32 %v2445, %v2520
      %v2522 = vpop.f32.mrb[0].mxu0
      %v2523 = vadd.f32 %v2441, %v2522
      %v2524 = vpop.f32.mrb[0].mxu0
      %v2525 = vadd.f32 %v2445, %v2524
      %2526 = vmatprep.mubr.bf16.mxu0 0
      %2527 = vmatmul.mubr.bf16.gmra.mrb[0].mxu0 %v2482
      %v2528 = vpop.f32.mrb[0].mxu0
      %v2529 = vadd.f32 %v2441, %v2528
      %v2530 = vpop.f32.mrb[0].mxu0
      %v2531 = vadd.f32 %v2445, %v2530
      %v2532 = vpop.f32.mrb[0].mxu0
      %v2533 = vadd.f32 %v2441, %v2532
      %v2534 = vpop.f32.mrb[0].mxu0
      %v2535 = vadd.f32 %v2445, %v2534
      %2536 = vdwg.mxu0
      %v2537 = vmax.f32 %v2519, 0.0
      %v2538 = vmax.f32 %v2521, 0.0
      %v2539 = vmax.f32 %v2523, 0.0
      %v2540 = vmax.f32 %v2525, 0.0
      %v2541 = vmax.f32 %v2529, 0.0
      %v2542 = vmax.f32 %v2531, 0.0
      %v2543 = vmax.f32 %v2533, 0.0
      %v2544 = vmax.f32 %v2535, 0.0
      %v2545 = vpack.c.bf16 %v2539, %v2537
      %v2546 = vpack.c.bf16 %v2540, %v2538
      %v2547 = vpack.c.bf16 %v2543, %v2541
      %v2548 = vpack.c.bf16 %v2544, %v2542
      %v2549 = vld [vmem:[%s12] sm:$0xf]
      %v2550 = vld [vmem:[%s12 + $0x4] sm:$0xf]
      %v2551 = vld [vmem:[%s12 + $0x8] sm:$0xf]
      %v2552 = vld [vmem:[%s12 + $0xc] sm:$0xf]
      %v2553 = vld [vmem:[%s12 + $0x10] sm:$0xf]
      %v2554 = vld [vmem:[%s12 + $0x14] sm:$0xf]
      %v2555 = vld [vmem:[%s12 + $0x18] sm:$0xf]
      %v2556 = vld [vmem:[%s12 + $0x1c] sm:$0xf]
      %v2557 = vld [vmem:[%s12 + $0x20] sm:$0xf]
      %v2558 = vld [vmem:[%s12 + $0x24] sm:$0xf]
      %v2559 = vld [vmem:[%s12 + $0x28] sm:$0xf]
      %v2560 = vld [vmem:[%s12 + $0x2c] sm:$0xf]
      %v2561 = vld [vmem:[%s12 + $0x30] sm:$0xf]
      %v2562 = vld [vmem:[%s12 + $0x34] sm:$0xf]
      %v2563 = vld [vmem:[%s12 + $0x38] sm:$0xf]
      %v2564 = vld [vmem:[%s12 + $0x3c] sm:$0xf]
      %v2565 = vld [vmem:[%s12 + $0x40] sm:$0xf]
      %v2566 = vld [vmem:[%s12 + $0x44] sm:$0xf]
      %v2567 = vld [vmem:[%s12 + $0x48] sm:$0xf]
      %v2568 = vld [vmem:[%s12 + $0x4c] sm:$0xf]
      %v2569 = vld [vmem:[%s12 + $0x50] sm:$0xf]
      %v2570 = vld [vmem:[%s12 + $0x54] sm:$0xf]
      %v2571 = vld [vmem:[%s12 + $0x58] sm:$0xf]
      %v2572 = vld [vmem:[%s12 + $0x5c] sm:$0xf]
      %v2573 = vld [vmem:[%s13] sm:$0x1]
      %v2575 = vlaneseq
      %v2576 = vshrl.u32 %v2575, 7
      %v2577 = vsub.s32 0, %v2576
      %v2578 = vrot.slane %v2573, %v2577
      %v2604 = vunpack.c.l.b16 %v2549
      %v2605 = vunpack.c.l.b16 %v2550
      %v2606 = vunpack.c.l.b16 %v2551
      %v2607 = vunpack.c.l.b16 %v2552
      %v2608 = vunpack.c.l.b16 %v2553
      %v2609 = vunpack.c.l.b16 %v2554
      %v2610 = vunpack.c.l.b16 %v2555
      %v2611 = vunpack.c.l.b16 %v2556
      %v2612 = vunpack.c.l.b16 %v2557
      %v2613 = vunpack.c.l.b16 %v2558
      %v2614 = vunpack.c.l.b16 %v2559
      %v2615 = vunpack.c.l.b16 %v2560
      %v2616 = vunpack.c.l.b16 %v2561
      %v2617 = vunpack.c.l.b16 %v2562
      %v2618 = vunpack.c.l.b16 %v2563
      %v2619 = vunpack.c.l.b16 %v2564
      %v2620 = vunpack.c.l.b16 %v2565
      %v2621 = vunpack.c.l.b16 %v2566
      %v2622 = vunpack.c.l.b16 %v2567
      %v2623 = vunpack.c.l.b16 %v2568
      %v2624 = vunpack.c.l.b16 %v2569
      %v2625 = vunpack.c.l.b16 %v2570
      %v2626 = vunpack.c.l.b16 %v2571
      %v2627 = vunpack.c.l.b16 %v2572
      %v2628 = vpack.c.b16 %v2605, %v2604
      %v2629 = vpack.c.b16 %v2607, %v2606
      %v2630 = vpack.c.b16 %v2609, %v2608
      %v2631 = vpack.c.b16 %v2611, %v2610
      %v2632 = vpack.c.b16 %v2613, %v2612
      %v2633 = vpack.c.b16 %v2615, %v2614
      %v2634 = vpack.c.b16 %v2617, %v2616
      %v2635 = vpack.c.b16 %v2619, %v2618
      %v2636 = vpack.c.b16 %v2621, %v2620
      %v2637 = vpack.c.b16 %v2623, %v2622
      %v2638 = vpack.c.b16 %v2625, %v2624
      %v2639 = vpack.c.b16 %v2627, %v2626
      %vm2652 = vcmask 523264
      %v2654 = vsel %vm2652, %v2546, 0
      %v2657 = vsel %vm2652, %v2548, 0
      %2659 = vmatprep.subr.bf16.mxu0 0
      %2660 = vmatpush1.bf16.msra.mxu0 %v2628
      %2661 = vmatprep.subr.bf16.mxu0 0
      %2662 = vmatpush1.bf16.msra.mxu0 %v2629
      %2663 = vmatprep.subr.bf16.mxu0 0
      %2664 = vmatpush1.bf16.msra.mxu0 %v2630
      %2665 = vmatprep.subr.bf16.mxu0 0
      %2666 = vmatpush1.bf16.msra.mxu0 %v2631
      %2667 = vmatprep.subr.bf16.mxu0 0
      %2668 = vmatpush1.bf16.msra.mxu0 %v2632
      %2669 = vmatprep.subr.bf16.mxu0 0
      %2670 = vmatpush1.bf16.msra.mxu0 %v2633
      %2671 = vmatprep.subr.bf16.mxu0 0
      %2672 = vmatpush1.bf16.msra.mxu0 %v2634
      %2673 = vmatprep.subr.bf16.mxu0 0
      %2674 = vmatpush1.bf16.msra.mxu0 %v2635
      %2675 = vmatprep.subr.bf16.mxu0 0
      %2676 = vmatpush1.bf16.msra.mxu0 %v2636
      %2677 = vmatprep.subr.bf16.mxu0 0
      %2678 = vmatpush1.bf16.msra.mxu0 %v2637
      %2679 = vmatprep.subr.bf16.mxu0 0
      %2680 = vmatpush1.bf16.msra.mxu0 %v2638
      %2681 = vmatprep.subr.bf16.mxu0 0
      %2682 = vmatpush1.bf16.msra.mxu0 %v2639
      %2683 = vmatprep.subr.bf16.mxu0 0
      %2684 = vmatpush1.bf16.msra.mxu0 0
      %2685 = vmatprep.subr.bf16.mxu0 0
      %2686 = vmatpush1.bf16.msra.mxu0 0
      %2687 = vmatprep.subr.bf16.mxu0 0
      %2688 = vmatpush1.bf16.msra.mxu0 0
      %2689 = vmatprep.subr.bf16.mxu0 0
      %2690 = vmatpush1.bf16.msra.mxu0 0
      %2691 = vmatprep.mubr.bf16.mxu0 %v2654
      %2692 = vmatmul.mubr.bf16.gmra.mrb[0].mxu0 %v2545
      %v2693 = vpop.f32.mrb[0].mxu0
      %v2694 = vadd.f32 %v2578, %v2693
      %v2695 = vpop.f32.mrb[0].mxu0
      %v2696 = vpop.f32.mrb[0].mxu0
      %v2697 = vadd.f32 %v2578, %v2696
      %v2698 = vpop.f32.mrb[0].mxu0
      %2699 = vmatprep.mubr.bf16.mxu0 %v2657
      %2700 = vmatmul.mubr.bf16.gmra.mrb[0].mxu0 %v2547
      %v2701 = vpop.f32.mrb[0].mxu0
      %v2702 = vadd.f32 %v2578, %v2701
      %v2703 = vpop.f32.mrb[0].mxu0
      %v2704 = vpop.f32.mrb[0].mxu0
      %v2705 = vadd.f32 %v2578, %v2704
      %v2706 = vpop.f32.mrb[0].mxu0
      %2707 = vdwg.mxu0
      %v2708 = vadd.f32 %v2424, %v2694
      %v2709 = vadd.f32 %v2425, %v2697
      %v2710 = vadd.f32 %v2426, %v2702
      %v2711 = vadd.f32 %v2427, %v2705
      %v2712 = vld [vmem:[%s14] sm:$0x1]
      %v2713 = vld [vmem:[%s15] sm:$0x1]
      %v2714 = vsel %vm587, %v2708, 0.0
      %2715 = vadd.xlane.f32.xlu0 %v2714
      %v2716 = vpop.xlane.xlu0 %2715
      %v2717 = vsel %vm587, %v2709, 0.0
      %2718 = vadd.xlane.f32.xlu0 %v2717
      %v2719 = vpop.xlane.xlu0 %2718
      %v2720 = vsel %vm587, %v2710, 0.0
      %2721 = vadd.xlane.f32.xlu0 %v2720
      %v2722 = vpop.xlane.xlu0 %2721
      %v2723 = vsel %vm587, %v2711, 0.0
      %2724 = vadd.xlane.f32.xlu0 %v2723
      %v2725 = vpop.xlane.xlu0 %2724
      %v2726 = vmul.f32 %v2716, %v2367
      %v2727 = vmul.f32 %v2719, %v2367
      %v2728 = vmul.f32 %v2722, %v2367
      %v2729 = vmul.f32 %v2725, %v2367
      %v2730 = vsub.f32 %v2708, %v2726
      %v2731 = vsub.f32 %v2709, %v2727
      %v2732 = vsub.f32 %v2710, %v2728
      %v2733 = vsub.f32 %v2711, %v2729
      %v2734 = vmul.f32 %v2730, %v2730
      %v2735 = vmul.f32 %v2731, %v2731
      %v2736 = vmul.f32 %v2732, %v2732
      %v2737 = vmul.f32 %v2733, %v2733
      %v2738 = vsel %vm587, %v2734, 0.0
      %2739 = vadd.xlane.f32.xlu0 %v2738
      %v2740 = vpop.xlane.xlu0 %2739
      %v2741 = vsel %vm587, %v2735, 0.0
      %2742 = vadd.xlane.f32.xlu0 %v2741
      %v2743 = vpop.xlane.xlu0 %2742
      %v2744 = vsel %vm587, %v2736, 0.0
      %2745 = vadd.xlane.f32.xlu0 %v2744
      %v2746 = vpop.xlane.xlu0 %2745
      %v2747 = vsel %vm587, %v2737, 0.0
      %2748 = vadd.xlane.f32.xlu0 %v2747
      %v2749 = vpop.xlane.xlu0 %2748
      %v2750 = vmul.f32 %v2740, %v2367
      %v2751 = vmul.f32 %v2743, %v2367
      %v2752 = vmul.f32 %v2746, %v2367
      %v2753 = vmul.f32 %v2749, %v2367
      %v2754 = vadd.f32 %v2750, 1e-05
      %v2755 = vadd.f32 %v2751, 1e-05
      %v2756 = vadd.f32 %v2752, 1e-05
      %v2757 = vadd.f32 %v2753, 1e-05
      %v2758 = vrsqrt.pop %v2754
      %v2759 = vrsqrt.pop %v2755
      %v2760 = vrsqrt.pop %v2756
      %v2761 = vrsqrt.pop %v2757
      %v2762 = vmul.f32 %v2730, %v2758
      %v2763 = vmul.f32 %v2731, %v2759
      %v2764 = vmul.f32 %v2732, %v2760
      %v2765 = vmul.f32 %v2733, %v2761
      %v2767 = vlaneseq
      %v2768 = vshrl.u32 %v2767, 7
      %v2769 = vsub.s32 0, %v2768
      %v2770 = vrot.slane %v2712, %v2769
      %v2772 = vmul.f32 %v2762, %v2770
      %v2773 = vmul.f32 %v2763, %v2770
      %v2774 = vmul.f32 %v2764, %v2770
      %v2775 = vmul.f32 %v2765, %v2770
      %v2777 = vlaneseq
      %v2778 = vshrl.u32 %v2777, 7
      %v2779 = vsub.s32 0, %v2778
      %v2780 = vrot.slane %v2713, %v2779
      %v2782 = vadd.f32 %v2772, %v2780
      %v2783 = vadd.f32 %v2773, %v2780
      %v2784 = vadd.f32 %v2774, %v2780
      %v2785 = vadd.f32 %v2775, %v2780
      %2786 = vst.msk [vmem:[%s545] sm:$0xff] %vm587, %v2782
      %2787 = vst.msk [vmem:[%s545 + $0x8] sm:$0xff] %vm587, %v2783
      %2788 = vst.msk [vmem:[%s545 + $0x10] sm:$0xff] %vm587, %v2784
      %2789 = vst.msk [vmem:[%s545 + $0x18] sm:$0xff] %vm587, %v2785
      %s2790 = smul.u32 4, %s27
      %p2791 = scmp.lt.s32.totalorder %s2790, 7
      %s2792 = scalar_select %p2791, %s2790, 7
      %s2793 = smul.addr %s2792, 8
      %s2794 = scalar_lea.vmem %s16, %s2793
      // Predicated region
      $region85: #{tpu_custom_call.1} parent=83 // pred_check
        %p2795 = pneg %p391
      $region86: #{tpu_custom_call.1} parent=83 // pred_check_branch
        %2797 = sbr.rel (%p2795) target = $region88
      $region87: #{tpu_custom_call.1} parent=83 // pred_region
        %s2798 = smul.u32 4, %s27
      $region88: #{tpu_custom_call.1} parent=83 // pred_fallthru
        _
    $region84: #{tpu_custom_call.1} parent=5 // pred_fallthru
      _
    %p2799 = scmp.le.s32.totalorder 2, %s22
    // Predicated region
    $region89: #{tpu_custom_call.1} parent=5 // pred_check
      %p2800 = pneg %p2799
    $region90: #{tpu_custom_call.1} parent=5 // pred_check_branch
      %2802 = sbr.rel (%p2800) target = $region92
    $region91: #{tpu_custom_call.1} parent=5 // pred_region
      %s2803 = ssub.s32 %s22, 2
      // Predicated region
      $region93: #{tpu_custom_call.1} parent=91 // pred_check
        %p2804 = pneg %p397
      $region94: #{tpu_custom_call.1} parent=91 // pred_check_branch
        %2806 = sbr.rel (%p2804) target = $region96
      $region95: #{tpu_custom_call.1} parent=91 // pred_region
        %s2807 = smul.u32 4, %s28
        %p2808 = scmp.lt.s32.totalorder %s2807, 7
        %s2809 = scalar_select %p2808, %s2807, 7
        %s2810 = smul.addr %s2809, 8
        %s2811 = scalar_lea.vmem %s16, %s2810
      $region96: #{tpu_custom_call.1} parent=91 // pred_fallthru
        _
    $region92: #{tpu_custom_call.1} parent=5 // pred_fallthru
      _
  $region6: #{tpu_custom_call.1} parent=0 // loop_footer
    %s26 = sadd.s32 1, %s22
  $region7: #{tpu_custom_call.1} parent=0 // loop_footer_branch
    %21 = sbr.rel target = $region3
  $region8: #{tpu_custom_call.1} parent=0 // loop_exit
    _

// kernel: tpu_custom_call.1
$region0: #{tpu_custom_call.1}
  #allocation0 [shape = 'u32[]', space=smem, size = 0x4, offset = 0x4, fixed_abs, tag = 'smem constant byte address 0x4 - core index']
  #allocation1 [shape = 'u32[144,128]{1,0:T(1,128)}', space=vmem, size = 0x12000, scoped, tag = 'internal scratch']
  %s0 = inlined_call_operand.vmem [shape: f32[64,48], index: 0, kind: input, shape index: {}]
  %s1 = inlined_call_operand.vmem [shape: f32[32,48], index: 1, kind: input, shape index: {}]
  %s2 = inlined_call_operand.vmem [shape: bf16[48,48], index: 2, kind: input, shape index: {}]
  %s3 = inlined_call_operand.vmem [shape: f32[1,48], index: 3, kind: input, shape index: {}]
  %s4 = inlined_call_operand.vmem [shape: bf16[48,96], index: 4, kind: input, shape index: {}]
  %s5 = inlined_call_operand.vmem [shape: f32[1,96], index: 5, kind: input, shape index: {}]
  %s6 = inlined_call_operand.vmem [shape: bf16[48,48], index: 6, kind: input, shape index: {}]
  %s7 = inlined_call_operand.vmem [shape: f32[1,48], index: 7, kind: input, shape index: {}]
  %s8 = inlined_call_operand.vmem [shape: f32[1,48], index: 8, kind: input, shape index: {}]
  %s9 = inlined_call_operand.vmem [shape: f32[1,48], index: 9, kind: input, shape index: {}]
  %s10 = inlined_call_operand.vmem [shape: bf16[48,192], index: 10, kind: input, shape index: {}]
  %s11 = inlined_call_operand.vmem [shape: f32[1,192], index: 11, kind: input, shape index: {}]
  %s12 = inlined_call_operand.vmem [shape: bf16[192,48], index: 12, kind: input, shape index: {}]
  %s13 = inlined_call_operand.vmem [shape: f32[1,48], index: 13, kind: input, shape index: {}]
  %s14 = inlined_call_operand.vmem [shape: f32[1,48], index: 14, kind: input, shape index: {}]
  %s15 = inlined_call_operand.vmem [shape: f32[1,48], index: 15, kind: input, shape index: {}]
  %s16 = inlined_call_operand.vmem [shape: f32[64,48], index: 16, kind: output, shape index: {}]
  %s17 = sld [smem:[#allocation0]]
  $region97: #{tpu_custom_call.1} parent=0
    _
  %s19 = ssub.s32 1, %s17
  %s20 = scalar_select 0, %s19, %s17
  loop: start=0, step=1, limit=4
  $region2: #{tpu_custom_call.1} parent=0 // loop_pre_header
    _
  $region3: #{tpu_custom_call.1} parent=0 // loop_header
    %s22 = sphi 0, %s26
    %p23 = scmp.ge.s32.totalorder %s22, 4
    %s32 = sphi 0, %s34
    %s35 = sphi 0, %s32
    %s36 = sphi 0, %s35
    %s52 = sphi 0, %s36
    %s58 = sphi 0, %s60
    %s61 = sphi 0, %s58
    %s62 = sphi 0, %s61
    %s78 = sphi 0, %s62
    %s82 = sphi 0, %s82
    %s84 = sphi 0, %s82
    %s85 = sphi 0, %s84
    %s99 = sphi 0, %s85
    %s103 = sphi 0, %s103
    %s105 = sphi 0, %s103
    %s106 = sphi 0, %s105
    %s120 = sphi 0, %s106
    %s124 = sphi 0, %s124
    %s126 = sphi 0, %s124
    %s127 = sphi 0, %s126
    %s141 = sphi 0, %s127
    %s145 = sphi 0, %s145
    %s147 = sphi 0, %s145
    %s148 = sphi 0, %s147
    %s162 = sphi 0, %s148
    %s166 = sphi 0, %s166
    %s168 = sphi 0, %s166
    %s169 = sphi 0, %s168
    %s183 = sphi 0, %s169
    %s187 = sphi 0, %s187
    %s189 = sphi 0, %s187
    %s190 = sphi 0, %s189
    %s204 = sphi 0, %s190
    %s208 = sphi 0, %s208
    %s210 = sphi 0, %s208
    %s211 = sphi 0, %s210
    %s225 = sphi 0, %s211
    %s229 = sphi 0, %s229
    %s231 = sphi 0, %s229
    %s232 = sphi 0, %s231
    %s246 = sphi 0, %s232
    %s250 = sphi 0, %s250
    %s252 = sphi 0, %s250
    %s253 = sphi 0, %s252
    %s267 = sphi 0, %s253
    %s271 = sphi 0, %s271
    %s273 = sphi 0, %s271
    %s274 = sphi 0, %s273
    %s288 = sphi 0, %s274
    %s292 = sphi 0, %s292
    %s294 = sphi 0, %s292
    %s295 = sphi 0, %s294
    %s309 = sphi 0, %s295
    %s313 = sphi 0, %s313
    %s315 = sphi 0, %s313
    %s316 = sphi 0, %s315
    %s330 = sphi 0, %s316
    %s334 = sphi 0, %s334
    %s336 = sphi 0, %s334
    %s337 = sphi 0, %s336
    %s351 = sphi 0, %s337
    %s355 = sphi 0, %s355
    %s357 = sphi 0, %s355
    %s358 = sphi 0, %s357
    %s372 = sphi 0, %s358
    %s378 = sphi 0, %s380
    %s381 = sphi 0, %s378
    %s382 = sphi 0, %s381
    %s398 = sphi 0, %s382
  $region4: #{tpu_custom_call.1} parent=0 // loop_header_branch
    %25 = sbr.rel (%p23) target = $region8
  $region5: #{tpu_custom_call.1} parent=0 // loop_body
    %s27 = ssub.s32 %s22, 1
    %s28 = ssub.s32 %s22, 2
    %s29 = sadd.s32 %s22, 1
    %s30 = ssub.s32 %s22, %s29
    %p31 = scmp.eq.s32.totalorder %s30, 0
    %s33 = sadd.s32 %s32, 1
    %s34 = scalar_select %p31, %s32, %s33
    %p37 = pneg %p31
    %p38 = scmp.eq.s32.totalorder %s22, 1
    %p39 = por %p37, %p38
    %p40 = scmp.ne.s32.totalorder %s32, %s35
    %p41 = scmp.eq.s32.totalorder %s22, 0
    %p42 = por %p40, %p41
    %p43 = scmp.ne.s32.totalorder %s32, %s35
    %p44 = scmp.eq.s32.totalorder %s27, 1
    %p45 = por %p43, %p44
    %p46 = scmp.ne.s32.totalorder %s35, %s36
    %p47 = scmp.eq.s32.totalorder %s27, 0
    %p48 = por %p46, %p47
    %p49 = scmp.ne.s32.totalorder %s35, %s36
    %p50 = scmp.eq.s32.totalorder %s28, 1
    %p51 = por %p49, %p50
    %p53 = scmp.ne.s32.totalorder %s36, %s52
    %p54 = scmp.eq.s32.totalorder %s28, 0
    %p55 = por %p53, %p54
    %s56 = ssub.s32 %s22, %s29
    %p57 = scmp.eq.s32.totalorder %s56, 0
    %s59 = sadd.s32 %s58, 1
    %s60 = scalar_select %p57, %s58, %s59
    %p63 = pneg %p57
    %p64 = scmp.eq.s32.totalorder %s22, 1
    %p65 = por %p63, %p64
    %p66 = scmp.ne.s32.totalorder %s58, %s61
    %p67 = scmp.eq.s32.totalorder %s22, 0
    %p68 = por %p66, %p67
    %p69 = scmp.ne.s32.totalorder %s58, %s61
    %p70 = scmp.eq.s32.totalorder %s27, 1
    %p71 = por %p69, %p70
    %p72 = scmp.ne.s32.totalorder %s61, %s62
    %p73 = scmp.eq.s32.totalorder %s27, 0
    %p74 = por %p72, %p73
    %p75 = scmp.ne.s32.totalorder %s61, %s62
    %p76 = scmp.eq.s32.totalorder %s28, 1
    %p77 = por %p75, %p76
    %p79 = scmp.ne.s32.totalorder %s62, %s78
    %p80 = scmp.eq.s32.totalorder %s28, 0
    %p81 = por %p79, %p80
    %s83 = sadd.s32 %s82, 1
    %p86 = scmp.eq.s32.totalorder %s22, 1
    %p87 = scmp.ne.s32.totalorder %s82, %s84
    %p88 = scmp.eq.s32.totalorder %s22, 0
    %p89 = por %p87, %p88
    %p90 = scmp.ne.s32.totalorder %s82, %s84
    %p91 = scmp.eq.s32.totalorder %s27, 1
    %p92 = por %p90, %p91
    %p93 = scmp.ne.s32.totalorder %s84, %s85
    %p94 = scmp.eq.s32.totalorder %s27, 0
    %p95 = por %p93, %p94
    %p96 = scmp.ne.s32.totalorder %s84, %s85
    %p97 = scmp.eq.s32.totalorder %s28, 1
    %p98 = por %p96, %p97
    %p100 = scmp.ne.s32.totalorder %s85, %s99
    %p101 = scmp.eq.s32.totalorder %s28, 0
    %p102 = por %p100, %p101
    %s104 = sadd.s32 %s103, 1
    %p107 = scmp.eq.s32.totalorder %s22, 1
    %p108 = scmp.ne.s32.totalorder %s103, %s105
    %p109 = scmp.eq.s32.totalorder %s22, 0
    %p110 = por %p108, %p109
    %p111 = scmp.ne.s32.totalorder %s103, %s105
    %p112 = scmp.eq.s32.totalorder %s27, 1
    %p113 = por %p111, %p112
    %p114 = scmp.ne.s32.totalorder %s105, %s106
    %p115 = scmp.eq.s32.totalorder %s27, 0
    %p116 = por %p114, %p115
    %p117 = scmp.ne.s32.totalorder %s105, %s106
    %p118 = scmp.eq.s32.totalorder %s28, 1
    %p119 = por %p117, %p118
    %p121 = scmp.ne.s32.totalorder %s106, %s120
    %p122 = scmp.eq.s32.totalorder %s28, 0
    %p123 = por %p121, %p122
    %s125 = sadd.s32 %s124, 1
    %p128 = scmp.eq.s32.totalorder %s22, 1
    %p129 = scmp.ne.s32.totalorder %s124, %s126
    %p130 = scmp.eq.s32.totalorder %s22, 0
    %p131 = por %p129, %p130
    %p132 = scmp.ne.s32.totalorder %s124, %s126
    %p133 = scmp.eq.s32.totalorder %s27, 1
    %p134 = por %p132, %p133
    %p135 = scmp.ne.s32.totalorder %s126, %s127
    %p136 = scmp.eq.s32.totalorder %s27, 0
    %p137 = por %p135, %p136
    %p138 = scmp.ne.s32.totalorder %s126, %s127
    %p139 = scmp.eq.s32.totalorder %s28, 1
    %p140 = por %p138, %p139
    %p142 = scmp.ne.s32.totalorder %s127, %s141
    %p143 = scmp.eq.s32.totalorder %s28, 0
    %p144 = por %p142, %p143
    %s146 = sadd.s32 %s145, 1
    %p149 = scmp.eq.s32.totalorder %s22, 1
    %p150 = scmp.ne.s32.totalorder %s145, %s147
    %p151 = scmp.eq.s32.totalorder %s22, 0
    %p152 = por %p150, %p151
    %p153 = scmp.ne.s32.totalorder %s145, %s147
    %p154 = scmp.eq.s32.totalorder %s27, 1
    %p155 = por %p153, %p154
    %p156 = scmp.ne.s32.totalorder %s147, %s148
    %p157 = scmp.eq.s32.totalorder %s27, 0
    %p158 = por %p156, %p157
    %p159 = scmp.ne.s32.totalorder %s147, %s148
    %p160 = scmp.eq.s32.totalorder %s28, 1
    %p161 = por %p159, %p160
    %p163 = scmp.ne.s32.totalorder %s148, %s162
    %p164 = scmp.eq.s32.totalorder %s28, 0
    %p165 = por %p163, %p164
    %s167 = sadd.s32 %s166, 1
    %p170 = scmp.eq.s32.totalorder %s22, 1
    %p171 = scmp.ne.s32.totalorder %s166, %s168
    %p172 = scmp.eq.s32.totalorder %s22, 0
    %p173 = por %p171, %p172
    %p174 = scmp.ne.s32.totalorder %s166, %s168
    %p175 = scmp.eq.s32.totalorder %s27, 1
    %p176 = por %p174, %p175
    %p177 = scmp.ne.s32.totalorder %s168, %s169
    %p178 = scmp.eq.s32.totalorder %s27, 0
    %p179 = por %p177, %p178
    %p180 = scmp.ne.s32.totalorder %s168, %s169
    %p181 = scmp.eq.s32.totalorder %s28, 1
    %p182 = por %p180, %p181
    %p184 = scmp.ne.s32.totalorder %s169, %s183
    %p185 = scmp.eq.s32.totalorder %s28, 0
    %p186 = por %p184, %p185
    %s188 = sadd.s32 %s187, 1
    %p191 = scmp.eq.s32.totalorder %s22, 1
    %p192 = scmp.ne.s32.totalorder %s187, %s189
    %p193 = scmp.eq.s32.totalorder %s22, 0
    %p194 = por %p192, %p193
    %p195 = scmp.ne.s32.totalorder %s187, %s189
    %p196 = scmp.eq.s32.totalorder %s27, 1
    %p197 = por %p195, %p196
    %p198 = scmp.ne.s32.totalorder %s189, %s190
    %p199 = scmp.eq.s32.totalorder %s27, 0
    %p200 = por %p198, %p199
    %p201 = scmp.ne.s32.totalorder %s189, %s190
    %p202 = scmp.eq.s32.totalorder %s28, 1
    %p203 = por %p201, %p202
    %p205 = scmp.ne.s32.totalorder %s190, %s204
    %p206 = scmp.eq.s32.totalorder %s28, 0
    %p207 = por %p205, %p206
    %s209 = sadd.s32 %s208, 1
    %p212 = scmp.eq.s32.totalorder %s22, 1
    %p213 = scmp.ne.s32.totalorder %s208, %s210
    %p214 = scmp.eq.s32.totalorder %s22, 0
    %p215 = por %p213, %p214
    %p216 = scmp.ne.s32.totalorder %s208, %s210
    %p217 = scmp.eq.s32.totalorder %s27, 1
    %p218 = por %p216, %p217
    %p219 = scmp.ne.s32.totalorder %s210, %s211
    %p220 = scmp.eq.s32.totalorder %s27, 0
    %p221 = por %p219, %p220
    %p222 = scmp.ne.s32.totalorder %s210, %s211
    %p223 = scmp.eq.s32.totalorder %s28, 1
    %p224 = por %p222, %p223
    %p226 = scmp.ne.s32.totalorder %s211, %s225
    %p227 = scmp.eq.s32.totalorder %s28, 0
    %p228 = por %p226, %p227
    %s230 = sadd.s32 %s229, 1
    %p233 = scmp.eq.s32.totalorder %s22, 1
    %p234 = scmp.ne.s32.totalorder %s229, %s231
    %p235 = scmp.eq.s32.totalorder %s22, 0
    %p236 = por %p234, %p235
    %p237 = scmp.ne.s32.totalorder %s229, %s231
    %p238 = scmp.eq.s32.totalorder %s27, 1
    %p239 = por %p237, %p238
    %p240 = scmp.ne.s32.totalorder %s231, %s232
    %p241 = scmp.eq.s32.totalorder %s27, 0
    %p242 = por %p240, %p241
    %p243 = scmp.ne.s32.totalorder %s231, %s232
    %p244 = scmp.eq.s32.totalorder %s28, 1
    %p245 = por %p243, %p244
    %p247 = scmp.ne.s32.totalorder %s232, %s246
    %p248 = scmp.eq.s32.totalorder %s28, 0
    %p249 = por %p247, %p248
    %s251 = sadd.s32 %s250, 1
    %p254 = scmp.eq.s32.totalorder %s22, 1
    %p255 = scmp.ne.s32.totalorder %s250, %s252
    %p256 = scmp.eq.s32.totalorder %s22, 0
    %p257 = por %p255, %p256
    %p258 = scmp.ne.s32.totalorder %s250, %s252
    %p259 = scmp.eq.s32.totalorder %s27, 1
    %p260 = por %p258, %p259
    %p261 = scmp.ne.s32.totalorder %s252, %s253
    %p262 = scmp.eq.s32.totalorder %s27, 0
    %p263 = por %p261, %p262
    %p264 = scmp.ne.s32.totalorder %s252, %s253
    %p265 = scmp.eq.s32.totalorder %s28, 1
    %p266 = por %p264, %p265
    %p268 = scmp.ne.s32.totalorder %s253, %s267
    %p269 = scmp.eq.s32.totalorder %s28, 0
    %p270 = por %p268, %p269
    %s272 = sadd.s32 %s271, 1
    %p275 = scmp.eq.s32.totalorder %s22, 1
    %p276 = scmp.ne.s32.totalorder %s271, %s273
    %p277 = scmp.eq.s32.totalorder %s22, 0
    %p278 = por %p276, %p277
    %p279 = scmp.ne.s32.totalorder %s271, %s273
    %p280 = scmp.eq.s32.totalorder %s27, 1
    %p281 = por %p279, %p280
    %p282 = scmp.ne.s32.totalorder %s273, %s274
    %p283 = scmp.eq.s32.totalorder %s27, 0
    %p284 = por %p282, %p283
    %p285 = scmp.ne.s32.totalorder %s273, %s274
    %p286 = scmp.eq.s32.totalorder %s28, 1
    %p287 = por %p285, %p286
    %p289 = scmp.ne.s32.totalorder %s274, %s288
    %p290 = scmp.eq.s32.totalorder %s28, 0
    %p291 = por %p289, %p290
    %s293 = sadd.s32 %s292, 1
    %p296 = scmp.eq.s32.totalorder %s22, 1
    %p297 = scmp.ne.s32.totalorder %s292, %s294
    %p298 = scmp.eq.s32.totalorder %s22, 0
    %p299 = por %p297, %p298
    %p300 = scmp.ne.s32.totalorder %s292, %s294
    %p301 = scmp.eq.s32.totalorder %s27, 1
    %p302 = por %p300, %p301
    %p303 = scmp.ne.s32.totalorder %s294, %s295
    %p304 = scmp.eq.s32.totalorder %s27, 0
    %p305 = por %p303, %p304
    %p306 = scmp.ne.s32.totalorder %s294, %s295
    %p307 = scmp.eq.s32.totalorder %s28, 1
    %p308 = por %p306, %p307
    %p310 = scmp.ne.s32.totalorder %s295, %s309
    %p311 = scmp.eq.s32.totalorder %s28, 0
    %p312 = por %p310, %p311
    %s314 = sadd.s32 %s313, 1
    %p317 = scmp.eq.s32.totalorder %s22, 1
    %p318 = scmp.ne.s32.totalorder %s313, %s315
    %p319 = scmp.eq.s32.totalorder %s22, 0
    %p320 = por %p318, %p319
    %p321 = scmp.ne.s32.totalorder %s313, %s315
    %p322 = scmp.eq.s32.totalorder %s27, 1
    %p323 = por %p321, %p322
    %p324 = scmp.ne.s32.totalorder %s315, %s316
    %p325 = scmp.eq.s32.totalorder %s27, 0
    %p326 = por %p324, %p325
    %p327 = scmp.ne.s32.totalorder %s315, %s316
    %p328 = scmp.eq.s32.totalorder %s28, 1
    %p329 = por %p327, %p328
    %p331 = scmp.ne.s32.totalorder %s316, %s330
    %p332 = scmp.eq.s32.totalorder %s28, 0
    %p333 = por %p331, %p332
    %s335 = sadd.s32 %s334, 1
    %p338 = scmp.eq.s32.totalorder %s22, 1
    %p339 = scmp.ne.s32.totalorder %s334, %s336
    %p340 = scmp.eq.s32.totalorder %s22, 0
    %p341 = por %p339, %p340
    %p342 = scmp.ne.s32.totalorder %s334, %s336
    %p343 = scmp.eq.s32.totalorder %s27, 1
    %p344 = por %p342, %p343
    %p345 = scmp.ne.s32.totalorder %s336, %s337
    %p346 = scmp.eq.s32.totalorder %s27, 0
    %p347 = por %p345, %p346
    %p348 = scmp.ne.s32.totalorder %s336, %s337
    %p349 = scmp.eq.s32.totalorder %s28, 1
    %p350 = por %p348, %p349
    %p352 = scmp.ne.s32.totalorder %s337, %s351
    %p353 = scmp.eq.s32.totalorder %s28, 0
    %p354 = por %p352, %p353
    %s356 = sadd.s32 %s355, 1
    %p359 = scmp.eq.s32.totalorder %s22, 1
    %p360 = scmp.ne.s32.totalorder %s355, %s357
    %p361 = scmp.eq.s32.totalorder %s22, 0
    %p362 = por %p360, %p361
    %p363 = scmp.ne.s32.totalorder %s355, %s357
    %p364 = scmp.eq.s32.totalorder %s27, 1
    %p365 = por %p363, %p364
    %p366 = scmp.ne.s32.totalorder %s357, %s358
    %p367 = scmp.eq.s32.totalorder %s27, 0
    %p368 = por %p366, %p367
    %p369 = scmp.ne.s32.totalorder %s357, %s358
    %p370 = scmp.eq.s32.totalorder %s28, 1
    %p371 = por %p369, %p370
    %p373 = scmp.ne.s32.totalorder %s358, %s372
    %p374 = scmp.eq.s32.totalorder %s28, 0
    %p375 = por %p373, %p374
    %s376 = ssub.s32 %s22, %s29
    %p377 = scmp.eq.s32.totalorder %s376, 0
    %s379 = sadd.s32 %s378, 1
    %s380 = scalar_select %p377, %s378, %s379
    %p383 = pneg %p377
    %p384 = scmp.eq.s32.totalorder %s22, 1
    %p385 = por %p383, %p384
    %p386 = scmp.ne.s32.totalorder %s378, %s381
    %p387 = scmp.eq.s32.totalorder %s22, 0
    %p388 = por %p386, %p387
    %p389 = scmp.ne.s32.totalorder %s378, %s381
    %p390 = scmp.eq.s32.totalorder %s27, 1
    %p391 = por %p389, %p390
    %p392 = scmp.ne.s32.totalorder %s381, %s382
    %p393 = scmp.eq.s32.totalorder %s27, 0
    %p394 = por %p392, %p393
    %p395 = scmp.ne.s32.totalorder %s381, %s382
    %p396 = scmp.eq.s32.totalorder %s28, 1
    %p397 = por %p395, %p396
    %p399 = scmp.ne.s32.totalorder %s382, %s398
    %p400 = scmp.eq.s32.totalorder %s28, 0
    %p401 = por %p399, %p400
    %p402 = scmp.le.s32.totalorder 1, %s22
    %p403 = scmp.lt.s32.totalorder %s22, 3
    %p404 = pnand %p402, %p403
    %p405 = pneg %p404
    // Predicated region
    $region9: #{tpu_custom_call.1} parent=5 // pred_check
      _
    $region10: #{tpu_custom_call.1} parent=5 // pred_check_branch
      %407 = sbr.rel (%p404) target = $region12
    $region11: #{tpu_custom_call.1} parent=5 // pred_region
      %s408 = ssub.s32 %s22, 1
      // Predicated region
      $region13: #{tpu_custom_call.1} parent=11 // pred_check
        %p409 = pneg %p95
      $region14: #{tpu_custom_call.1} parent=11 // pred_check_branch
        %411 = sbr.rel (%p409) target = $region16
      $region15: #{tpu_custom_call.1} parent=11 // pred_region
        _
      $region16: #{tpu_custom_call.1} parent=11 // pred_fallthru
        _
      // Predicated region
      $region17: #{tpu_custom_call.1} parent=11 // pred_check
        %p412 = pneg %p116
      $region18: #{tpu_custom_call.1} parent=11 // pred_check_branch
        %414 = sbr.rel (%p412) target = $region20
      $region19: #{tpu_custom_call.1} parent=11 // pred_region
        _
      $region20: #{tpu_custom_call.1} parent=11 // pred_fallthru
        _
      // Predicated region
      $region21: #{tpu_custom_call.1} parent=11 // pred_check
        %p415 = pneg %p137
      $region22: #{tpu_custom_call.1} parent=11 // pred_check_branch
        %417 = sbr.rel (%p415) target = $region24
      $region23: #{tpu_custom_call.1} parent=11 // pred_region
        _
      $region24: #{tpu_custom_call.1} parent=11 // pred_fallthru
        _
      // Predicated region
      $region25: #{tpu_custom_call.1} parent=11 // pred_check
        %p418 = pneg %p158
      $region26: #{tpu_custom_call.1} parent=11 // pred_check_branch
        %420 = sbr.rel (%p418) target = $region28
      $region27: #{tpu_custom_call.1} parent=11 // pred_region
        _
      $region28: #{tpu_custom_call.1} parent=11 // pred_fallthru
        _
      // Predicated region
      $region29: #{tpu_custom_call.1} parent=11 // pred_check
        %p421 = pneg %p179
      $region30: #{tpu_custom_call.1} parent=11 // pred_check_branch
        %423 = sbr.rel (%p421) target = $region32
      $region31: #{tpu_custom_call.1} parent=11 // pred_region
        _
      $region32: #{tpu_custom_call.1} parent=11 // pred_fallthru
        _
      // Predicated region
      $region33: #{tpu_custom_call.1} parent=11 // pred_check
        %p424 = pneg %p200
      $region34: #{tpu_custom_call.1} parent=11 // pred_check_branch
        %426 = sbr.rel (%p424) target = $region36
      $region35: #{tpu_custom_call.1} parent=11 // pred_region
        _
      $region36: #{tpu_custom_call.1} parent=11 // pred_fallthru
        _
      // Predicated region
      $region37: #{tpu_custom_call.1} parent=11 // pred_check
        %p427 = pneg %p221
      $region38: #{tpu_custom_call.1} parent=11 // pred_check_branch
        %429 = sbr.rel (%p427) target = $region40
      $region39: #{tpu_custom_call.1} parent=11 // pred_region
        _
      $region40: #{tpu_custom_call.1} parent=11 // pred_fallthru
        _
      // Predicated region
      $region41: #{tpu_custom_call.1} parent=11 // pred_check
        %p430 = pneg %p242
      $region42: #{tpu_custom_call.1} parent=11 // pred_check_branch
        %432 = sbr.rel (%p430) target = $region44
      $region43: #{tpu_custom_call.1} parent=11 // pred_region
        _
      $region44: #{tpu_custom_call.1} parent=11 // pred_fallthru
        _
      // Predicated region
      $region45: #{tpu_custom_call.1} parent=11 // pred_check
        %p433 = pneg %p263
      $region46: #{tpu_custom_call.1} parent=11 // pred_check_branch
        %435 = sbr.rel (%p433) target = $region48
      $region47: #{tpu_custom_call.1} parent=11 // pred_region
        _
      $region48: #{tpu_custom_call.1} parent=11 // pred_fallthru
        _
      // Predicated region
      $region49: #{tpu_custom_call.1} parent=11 // pred_check
        %p436 = pneg %p284
      $region50: #{tpu_custom_call.1} parent=11 // pred_check_branch
        %438 = sbr.rel (%p436) target = $region52
      $region51: #{tpu_custom_call.1} parent=11 // pred_region
        _
      $region52: #{tpu_custom_call.1} parent=11 // pred_fallthru
        _
      // Predicated region
      $region53: #{tpu_custom_call.1} parent=11 // pred_check
        %p439 = pneg %p305
      $region54: #{tpu_custom_call.1} parent=11 // pred_check_branch
        %441 = sbr.rel (%p439) target = $region56
      $region55: #{tpu_custom_call.1} parent=11 // pred_region
        _
      $region56: #{tpu_custom_call.1} parent=11 // pred_fallthru
        _
      // Predicated region
      $region57: #{tpu_custom_call.1} parent=11 // pred_check
        %p442 = pneg %p326
      $region58: #{tpu_custom_call.1} parent=11 // pred_check_branch
        %444 = sbr.rel (%p442) target = $region60
      $region59: #{tpu_custom_call.1} parent=11 // pred_region
        _
      $region60: #{tpu_custom_call.1} parent=11 // pred_fallthru
        _
      // Predicated region
      $region61: #{tpu_custom_call.1} parent=11 // pred_check
        %p445 = pneg %p347
      $region62: #{tpu_custom_call.1} parent=11 // pred_check_branch
        %447 = sbr.rel (%p445) target = $region64
      $region63: #{tpu_custom_call.1} parent=11 // pred_region
        _
      $region64: #{tpu_custom_call.1} parent=11 // pred_fallthru
        _
      // Predicated region
      $region65: #{tpu_custom_call.1} parent=11 // pred_check
        %p448 = pneg %p368
      $region66: #{tpu_custom_call.1} parent=11 // pred_check_branch
        %450 = sbr.rel (%p448) target = $region68
      $region67: #{tpu_custom_call.1} parent=11 // pred_region
        _
      $region68: #{tpu_custom_call.1} parent=11 // pred_fallthru
        _
    $region12: #{tpu_custom_call.1} parent=5 // pred_fallthru
      _
    %p451 = scmp.lt.s32.totalorder %s22, 2
    // Predicated region
    $region69: #{tpu_custom_call.1} parent=5 // pred_check
      %p452 = pneg %p451
    $region70: #{tpu_custom_call.1} parent=5 // pred_check_branch
      %454 = sbr.rel (%p452) target = $region72
    $region71: #{tpu_custom_call.1} parent=5 // pred_region
      // Predicated region
      $region73: #{tpu_custom_call.1} parent=71 // pred_check
        %p455 = pneg %p42
      $region74: #{tpu_custom_call.1} parent=71 // pred_check_branch
        %457 = sbr.rel (%p455) target = $region76
      $region75: #{tpu_custom_call.1} parent=71 // pred_region
        %s458 = smul.u32 4, %s22
        %p459 = scmp.lt.s32.totalorder %s458, 7
        %s460 = scalar_select %p459, %s458, 7
        %s461 = smul.addr %s460, 8
        %s462 = scalar_lea.vmem %s0, %s461
        %s463 = smul.u32 4, %s22
      $region76: #{tpu_custom_call.1} parent=71 // pred_fallthru
        _
      // Predicated region
      $region77: #{tpu_custom_call.1} parent=71 // pred_check
        %p464 = pneg %p68
      $region78: #{tpu_custom_call.1} parent=71 // pred_check_branch
        %466 = sbr.rel (%p464) target = $region80
      $region79: #{tpu_custom_call.1} parent=71 // pred_region
        %s467 = smul.u32 2, %s22
        %p468 = scmp.lt.s32.totalorder %s467, 3
        %s469 = scalar_select %p468, %s467, 3
        %s470 = smul.addr %s469, 8
        %s471 = scalar_lea.vmem %s1, %s470
        %s472 = smul.u32 2, %s22
      $region80: #{tpu_custom_call.1} parent=71 // pred_fallthru
        _
    $region72: #{tpu_custom_call.1} parent=5 // pred_fallthru
      _
    %p473 = scmp.le.s32.totalorder 1, %s22
    %p474 = scmp.lt.s32.totalorder %s22, 3
    %p475 = pnand %p473, %p474
    %p476 = pneg %p475
    // Predicated region
    $region81: #{tpu_custom_call.1} parent=5 // pred_check
      _
    $region82: #{tpu_custom_call.1} parent=5 // pred_check_branch
      %478 = sbr.rel (%p475) target = $region84
    $region83: #{tpu_custom_call.1} parent=5 // pred_region
      %s479 = ssub.s32 %s22, 1
      %s480 = smul.u32 4, %s27
      %p481 = scmp.lt.s32.totalorder %s480, 7
      %s482 = scalar_select %p481, %s480, 7
      %s483 = smul.addr %s482, 8
      %s484 = scalar_lea.vmem %s0, %s483
      %p485 = pneg %p48
      %p486 = pneg %p45
      %s487 = smul.u32 2, %s27
      %p488 = scmp.lt.s32.totalorder %s487, 3
      %s489 = scalar_select %p488, %s487, 3
      %s490 = smul.addr %s489, 8
      %s491 = scalar_lea.vmem %s1, %s490
      %p492 = pneg %p74
      %p493 = pneg %p71
      %p494 = pneg %p95
      %p495 = pneg %p92
      %p496 = pneg %p116
      %p497 = pneg %p113
      %p498 = pneg %p137
      %p499 = pneg %p134
      %p500 = pneg %p158
      %p501 = pneg %p155
      %p502 = pneg %p179
      %p503 = pneg %p176
      %p504 = pneg %p200
      %p505 = pneg %p197
      %p506 = pneg %p221
      %p507 = pneg %p218
      %p508 = pneg %p242
      %p509 = pneg %p239
      %p510 = pneg %p263
      %p511 = pneg %p260
      %p512 = pneg %p284
      %p513 = pneg %p281
      %p514 = pneg %p305
      %p515 = pneg %p302
      %p516 = pneg %p326
      %p517 = pneg %p323
      %p518 = pneg %p347
      %p519 = pneg %p344
      %p520 = pneg %p368
      %p521 = pneg %p365
      %p522 = pneg %p394
      %p523 = pneg %p391
      %s524 = smul.u32 4, %s27
      %p525 = scmp.lt.s32.totalorder %s524, 7
      %s526 = scalar_select %p525, %s524, 7
      %s527 = smul.addr %s526, 8
      %s528 = scalar_lea.vmem %s16, %s527
      %s529 = smul.u32 4, %s27
      %p530 = scmp.lt.s32.totalorder %s529, 7
      %s531 = scalar_select %p530, %s529, 7
      %s532 = smul.addr %s531, 8
      %s533 = scalar_lea.vmem %s0, %s532
      %s534 = smul.u32 4, %s27
      %s535 = smul.u32 2, %s27
      %p536 = scmp.lt.s32.totalorder %s535, 3
      %s537 = scalar_select %p536, %s535, 3
      %s538 = smul.addr %s537, 8
      %s539 = scalar_lea.vmem %s1, %s538
      %s540 = smul.u32 2, %s27
      %s541 = smul.u32 4, %s27
      %p542 = scmp.lt.s32.totalorder %s541, 7
      %s543 = scalar_select %p542, %s541, 7
      %s544 = smul.addr %s543, 8
      %s545 = scalar_lea.vmem %s16, %s544
      %s546 = smul.u32 4, %s27
      %v548 = vld [vmem:[%s533] sm:$0xff]
      %v549 = vld [vmem:[%s533 + $0x8] sm:$0xff]
      %v550 = vld [vmem:[%s533 + $0x10] sm:$0xff]
      %v551 = vld [vmem:[%s533 + $0x18] sm:$0xff]
      %v552 = vld [vmem:[%s539] sm:$0xff]
      %v553 = vld [vmem:[%s539 + $0x8] sm:$0xff]
      %v554 = vpack.c.bf16 %v549, %v548
      %v555 = vpack.c.bf16 %v551, %v550
      %v556 = vld [vmem:[%s2] sm:$0xf]
      %v557 = vld [vmem:[%s2 + $0x4] sm:$0xf]
      %v558 = vld [vmem:[%s2 + $0x8] sm:$0xf]
      %v559 = vld [vmem:[%s2 + $0xc] sm:$0xf]
      %v560 = vld [vmem:[%s2 + $0x10] sm:$0xf]
      %v561 = vld [vmem:[%s2 + $0x14] sm:$0xf]
      %v562 = vld [vmem:[%s3] sm:$0x1]
      %v564 = vlaneseq
      %v565 = vshrl.u32 %v564, 7
      %v566 = vsub.s32 0, %v565
      %v567 = vrot.slane %v562, %v566
      %v575 = vunpack.c.l.b16 %v556
      %v576 = vunpack.c.l.b16 %v557
      %v577 = vunpack.c.l.b16 %v558
      %v578 = vunpack.c.l.b16 %v559
      %v579 = vunpack.c.l.b16 %v560
      %v580 = vunpack.c.l.b16 %v561
      %v581 = vpack.c.b16 %v576, %v575
      %v582 = vpack.c.b16 %v578, %v577
      %v583 = vpack.c.b16 %v580, %v579
      %vm587 = vcmask 392192
      %v589 = vsel %vm587, %v554, 0
      %v592 = vsel %vm587, %v555, 0
      %594 = vmatprep.subr.bf16.mxu0 0
      %595 = vmatpush1.bf16.msra.mxu0 %v581
      %596 = vmatprep.subr.bf16.mxu0 0
      %597 = vmatpush1.bf16.msra.mxu0 %v582
      %598 = vmatprep.subr.bf16.mxu0 0
      %599 = vmatpush1.bf16.msra.mxu0 %v583
      %600 = vmatprep.subr.bf16.mxu0 0
      %601 = vmatpush1.bf16.msra.mxu0 0
      %602 = vmatprep.subr.bf16.mxu0 0
      %603 = vmatpush1.bf16.msra.mxu0 0
      %604 = vmatprep.subr.bf16.mxu0 0
      %605 = vmatpush1.bf16.msra.mxu0 0
      %606 = vmatprep.subr.bf16.mxu0 0
      %607 = vmatpush1.bf16.msra.mxu0 0
      %608 = vmatprep.subr.bf16.mxu0 0
      %609 = vmatpush1.bf16.msra.mxu0 0
      %610 = vmatprep.subr.bf16.mxu0 0
      %611 = vmatpush1.bf16.msra.mxu0 0
      %612 = vmatprep.subr.bf16.mxu0 0
      %613 = vmatpush1.bf16.msra.mxu0 0
      %614 = vmatprep.subr.bf16.mxu0 0
      %615 = vmatpush1.bf16.msra.mxu0 0
      %616 = vmatprep.subr.bf16.mxu0 0
      %617 = vmatpush1.bf16.msra.mxu0 0
      %618 = vmatprep.subr.bf16.mxu0 0
      %619 = vmatpush1.bf16.msra.mxu0 0
      %620 = vmatprep.subr.bf16.mxu0 0
      %621 = vmatpush1.bf16.msra.mxu0 0
      %622 = vmatprep.subr.bf16.mxu0 0
      %623 = vmatpush1.bf16.msra.mxu0 0
      %624 = vmatprep.subr.bf16.mxu0 0
      %625 = vmatpush1.bf16.msra.mxu0 0
      %626 = vmatprep.mubr.bf16.mxu0 0
      %627 = vmatmul.mubr.bf16.gmra.mrb[0].mxu0 %v589
      %v628 = vpop.f32.mrb[0].mxu0
      %v629 = vadd.f32 %v567, %v628
      %v630 = vpop.f32.mrb[0].mxu0
      %v631 = vpop.f32.mrb[0].mxu0
      %v632 = vadd.f32 %v567, %v631
      %v633 = vpop.f32.mrb[0].mxu0
      %634 = vmatprep.mubr.bf16.mxu0 0
      %635 = vmatmul.mubr.bf16.gmra.mrb[0].mxu0 %v592
      %v636 = vpop.f32.mrb[0].mxu0
      %v637 = vadd.f32 %v567, %v636
      %v638 = vpop.f32.mrb[0].mxu0
      %v639 = vpop.f32.mrb[0].mxu0
      %v640 = vadd.f32 %v567, %v639
      %v641 = vpop.f32.mrb[0].mxu0
      %642 = vdwg.mxu0
      %v643 = vpack.c.bf16 %v553, %v552
      %v644 = vld [vmem:[%s4] sm:$0xf]
      %v645 = vld [vmem:[%s4 + $0x4] sm:$0xf]
      %v646 = vld [vmem:[%s4 + $0x8] sm:$0xf]
      %v647 = vld [vmem:[%s4 + $0xc] sm:$0xf]
      %v648 = vld [vmem:[%s4 + $0x10] sm:$0xf]
      %v649 = vld [vmem:[%s4 + $0x14] sm:$0xf]
      %v650 = vld [vmem:[%s5] sm:$0x1]
      %v652 = vlaneseq
      %v653 = vshrl.u32 %v652, 7
      %v654 = vsub.s32 0, %v653
      %v655 = vrot.slane %v650, %v654
      %v663 = vunpack.c.l.b16 %v644
      %v664 = vunpack.c.l.b16 %v645
      %v665 = vunpack.c.l.b16 %v646
      %v666 = vunpack.c.l.b16 %v647
      %v667 = vunpack.c.l.b16 %v648
      %v668 = vunpack.c.l.b16 %v649
      %v669 = vpack.c.b16 %v664, %v663
      %v670 = vpack.c.b16 %v666, %v665
      %v671 = vpack.c.b16 %v668, %v667
      %v676 = vsel %vm587, %v643, 0
      %678 = vmatprep.subr.bf16.mxu0 0
      %679 = vmatpush1.bf16.msra.mxu0 %v669
      %680 = vmatprep.subr.bf16.mxu0 0
      %681 = vmatpush1.bf16.msra.mxu0 %v670
      %682 = vmatprep.subr.bf16.mxu0 0
      %683 = vmatpush1.bf16.msra.mxu0 %v671
      %684 = vmatprep.subr.bf16.mxu0 0
      %685 = vmatpush1.bf16.msra.mxu0 0
      %686 = vmatprep.subr.bf16.mxu0 0
      %687 = vmatpush1.bf16.msra.mxu0 0
      %688 = vmatprep.subr.bf16.mxu0 0
      %689 = vmatpush1.bf16.msra.mxu0 0
      %690 = vmatprep.subr.bf16.mxu0 0
      %691 = vmatpush1.bf16.msra.mxu0 0
      %692 = vmatprep.subr.bf16.mxu0 0
      %693 = vmatpush1.bf16.msra.mxu0 0
      %694 = vmatprep.subr.bf16.mxu0 0
      %695 = vmatpush1.bf16.msra.mxu0 0
      %696 = vmatprep.subr.bf16.mxu0 0
      %697 = vmatpush1.bf16.msra.mxu0 0
      %698 = vmatprep.subr.bf16.mxu0 0
      %699 = vmatpush1.bf16.msra.mxu0 0
      %700 = vmatprep.subr.bf16.mxu0 0
      %701 = vmatpush1.bf16.msra.mxu0 0
      %702 = vmatprep.subr.bf16.mxu0 0
      %703 = vmatpush1.bf16.msra.mxu0 0
      %704 = vmatprep.subr.bf16.mxu0 0
      %705 = vmatpush1.bf16.msra.mxu0 0
      %706 = vmatprep.subr.bf16.mxu0 0
      %707 = vmatpush1.bf16.msra.mxu0 0
      %708 = vmatprep.subr.bf16.mxu0 0
      %709 = vmatpush1.bf16.msra.mxu0 0
      %710 = vmatprep.mubr.bf16.mxu0 0
      %711 = vmatmul.mubr.bf16.gmra.mrb[0].mxu0 %v676
      %v712 = vpop.f32.mrb[0].mxu0
      %v713 = vadd.f32 %v655, %v712
      %v714 = vpop.f32.mrb[0].mxu0
      %v715 = vpop.f32.mrb[0].mxu0
      %v716 = vadd.f32 %v655, %v715
      %v717 = vpop.f32.mrb[0].mxu0
      %718 = vdwg.mxu0
      %v719 = vpack.c.bf16 %v632, %v629
      %v720 = vpack.c.bf16 %v640, %v637
      %v721 = vpack.c.bf16 %v713, %v713
      %v722 = vpack.c.bf16 %v716, %v716
      %vm723 = vcmask 64512
      %v725 = vsel %vm723, %v719, 0
      %v728 = vsel %vm723, %v721, 0
      %730 = vmatprep.subr.bf16.mxu0 0
      %731 = vmatpush1.bf16.xpose.msra.mxu0 %v728
      %732 = vmatprep.subr.bf16.mxu0 0
      %733 = vmatpush1.bf16.xpose.msra.mxu0 0
      %734 = vmatprep.subr.bf16.mxu0 0
      %735 = vmatpush1.bf16.xpose.msra.mxu0 0
      %736 = vmatprep.subr.bf16.mxu0 0
      %737 = vmatpush1.bf16.xpose.msra.mxu0 0
      %738 = vmatprep.subr.bf16.mxu0 0
      %739 = vmatpush1.bf16.xpose.msra.mxu0 0
      %740 = vmatprep.subr.bf16.mxu0 0
      %741 = vmatpush1.bf16.xpose.msra.mxu0 0
      %742 = vmatprep.subr.bf16.mxu0 0
      %743 = vmatpush1.bf16.xpose.msra.mxu0 0
      %744 = vmatprep.subr.bf16.mxu0 0
      %745 = vmatpush1.bf16.xpose.msra.mxu0 0
      %746 = vmatprep.subr.bf16.mxu0 0
      %747 = vmatpush1.bf16.xpose.msra.mxu0 0
      %748 = vmatprep.subr.bf16.mxu0 0
      %749 = vmatpush1.bf16.xpose.msra.mxu0 0
      %750 = vmatprep.subr.bf16.mxu0 0
      %751 = vmatpush1.bf16.xpose.msra.mxu0 0
      %752 = vmatprep.subr.bf16.mxu0 0
      %753 = vmatpush1.bf16.xpose.msra.mxu0 0
      %754 = vmatprep.subr.bf16.mxu0 0
      %755 = vmatpush1.bf16.xpose.msra.mxu0 0
      %756 = vmatprep.subr.bf16.mxu0 0
      %757 = vmatpush1.bf16.xpose.msra.mxu0 0
      %758 = vmatprep.subr.bf16.mxu0 0
      %759 = vmatpush1.bf16.xpose.msra.mxu0 0
      %760 = vmatprep.subr.bf16.mxu0 0
      %761 = vmatpush1.bf16.xpose.msra.mxu0 0
      %762 = vmatprep.mubr.bf16.mxu0 0
      %763 = vmatmul.mubr.bf16.gmra.mrb[0].mxu0 %v725
      %v764 = vpop.f32.mrb[0].mxu0
      %v765 = vadd.f32 0.0, %v764
      %v766 = vpop.f32.mrb[0].mxu0
      %v767 = vpop.f32.mrb[0].mxu0
      %v768 = vadd.f32 0.0, %v767
      %v769 = vpop.f32.mrb[0].mxu0
      %770 = vdwg.mxu0
      %v772 = vsel %vm723, %v720, 0
      %v775 = vsel %vm723, %v722, 0
      %777 = vmatprep.subr.bf16.mxu0 0
      %778 = vmatpush1.bf16.xpose.msra.mxu0 %v775
      %779 = vmatprep.subr.bf16.mxu0 0
      %780 = vmatpush1.bf16.xpose.msra.mxu0 0
      %781 = vmatprep.subr.bf16.mxu0 0
      %782 = vmatpush1.bf16.xpose.msra.mxu0 0
      %783 = vmatprep.subr.bf16.mxu0 0
      %784 = vmatpush1.bf16.xpose.msra.mxu0 0
      %785 = vmatprep.subr.bf16.mxu0 0
      %786 = vmatpush1.bf16.xpose.msra.mxu0 0
      %787 = vmatprep.subr.bf16.mxu0 0
      %788 = vmatpush1.bf16.xpose.msra.mxu0 0
      %789 = vmatprep.subr.bf16.mxu0 0
      %790 = vmatpush1.bf16.xpose.msra.mxu0 0
      %791 = vmatprep.subr.bf16.mxu0 0
      %792 = vmatpush1.bf16.xpose.msra.mxu0 0
      %793 = vmatprep.subr.bf16.mxu0 0
      %794 = vmatpush1.bf16.xpose.msra.mxu0 0
      %795 = vmatprep.subr.bf16.mxu0 0
      %796 = vmatpush1.bf16.xpose.msra.mxu0 0
      %797 = vmatprep.subr.bf16.mxu0 0
      %798 = vmatpush1.bf16.xpose.msra.mxu0 0
      %799 = vmatprep.subr.bf16.mxu0 0
      %800 = vmatpush1.bf16.xpose.msra.mxu0 0
      %801 = vmatprep.subr.bf16.mxu0 0
      %802 = vmatpush1.bf16.xpose.msra.mxu0 0
      %803 = vmatprep.subr.bf16.mxu0 0
      %804 = vmatpush1.bf16.xpose.msra.mxu0 0
      %805 = vmatprep.subr.bf16.mxu0 0
      %806 = vmatpush1.bf16.xpose.msra.mxu0 0
      %807 = vmatprep.subr.bf16.mxu0 0
      %808 = vmatpush1.bf16.xpose.msra.mxu0 0
      %809 = vmatprep.mubr.bf16.mxu0 0
      %810 = vmatmul.mubr.bf16.gmra.mrb[0].mxu0 %v772
      %v811 = vpop.f32.mrb[0].mxu0
      %v812 = vadd.f32 0.0, %v811
      %v813 = vpop.f32.mrb[0].mxu0
      %v814 = vpop.f32.mrb[0].mxu0
      %v815 = vadd.f32 0.0, %v814
      %v816 = vpop.f32.mrb[0].mxu0
      %817 = vdwg.mxu0
      %v818 = vsel %vm723, %v765, -inf
      %819 = vmax.xlane.f32.xlu0 %v818
      %v820 = vpop.xlane.xlu0 %819
      %v821 = vsel %vm723, %v768, -inf
      %822 = vmax.xlane.f32.xlu0 %v821
      %v823 = vpop.xlane.xlu0 %822
      %v824 = vsel %vm723, %v812, -inf
      %825 = vmax.xlane.f32.xlu0 %v824
      %v826 = vpop.xlane.xlu0 %825
      %v827 = vsel %vm723, %v815, -inf
      %828 = vmax.xlane.f32.xlu0 %v827
      %v829 = vpop.xlane.xlu0 %828
      %v830 = vsub.f32 %v765, %v820
      %v831 = vsub.f32 %v768, %v823
      %v832 = vsub.f32 %v812, %v826
      %v833 = vsub.f32 %v815, %v829
      %v834 = vmul.f32 %v830, 1.442695
      %v835 = vpow.pop %v834
      %v836 = vmul.f32 %v831, 1.442695
      %v837 = vpow.pop %v836
      %v838 = vmul.f32 %v832, 1.442695
      %v839 = vpow.pop %v838
      %v840 = vmul.f32 %v833, 1.442695
      %v841 = vpow.pop %v840
      %v842 = vsel %vm723, %v835, 0.0
      %843 = vadd.xlane.f32.xlu0 %v842
      %v844 = vpop.xlane.xlu0 %843
      %v845 = vsel %vm723, %v837, 0.0
      %846 = vadd.xlane.f32.xlu0 %v845
      %v847 = vpop.xlane.xlu0 %846
      %v848 = vsel %vm723, %v839, 0.0
      %849 = vadd.xlane.f32.xlu0 %v848
      %v850 = vpop.xlane.xlu0 %849
      %v851 = vsel %vm723, %v841, 0.0
      %852 = vadd.xlane.f32.xlu0 %v851
      %v853 = vpop.xlane.xlu0 %852
      %v854 = vrcp.pop %v844
      %v855 = vrcp.pop %v847
      %v856 = vrcp.pop %v850
      %v857 = vrcp.pop %v853
      %v858 = vmul.f32 %v835, %v854
      %v859 = vmul.f32 %v837, %v855
      %v860 = vmul.f32 %v839, %v856
      %v861 = vmul.f32 %v841, %v857
      %v862 = vpack.c.bf16 %v859, %v858
      %v863 = vpack.c.bf16 %v861, %v860
      %865 = vrot.lane.b32.xlu0 %v721, 80
      %v866 = vpop.permute.xlu0 %865
      %v868 = vsel %vm723, %v862, 0
      %vm870 = vcmask 1043456
      %v872 = vsel %vm870, %v866, 0
      %874 = vmatprep.subr.bf16.mxu0 0
      %875 = vmatpush1.bf16.msra.mxu0 %v872
      %876 = vmatprep.subr.bf16.mxu0 0
      %877 = vmatpush1.bf16.msra.mxu0 0
      %878 = vmatprep.subr.bf16.mxu0 0
      %879 = vmatpush1.bf16.msra.mxu0 0
      %880 = vmatprep.subr.bf16.mxu0 0
      %881 = vmatpush1.bf16.msra.mxu0 0
      %882 = vmatprep.subr.bf16.mxu0 0
      %883 = vmatpush1.bf16.msra.mxu0 0
      %884 = vmatprep.subr.bf16.mxu0 0
      %885 = vmatpush1.bf16.msra.mxu0 0
      %886 = vmatprep.subr.bf16.mxu0 0
      %887 = vmatpush1.bf16.msra.mxu0 0
      %888 = vmatprep.subr.bf16.mxu0 0
      %889 = vmatpush1.bf16.msra.mxu0 0
      %890 = vmatprep.subr.bf16.mxu0 0
      %891 = vmatpush1.bf16.msra.mxu0 0
      %892 = vmatprep.subr.bf16.mxu0 0
      %893 = vmatpush1.bf16.msra.mxu0 0
      %894 = vmatprep.subr.bf16.mxu0 0
      %895 = vmatpush1.bf16.msra.mxu0 0
      %896 = vmatprep.subr.bf16.mxu0 0
      %897 = vmatpush1.bf16.msra.mxu0 0
      %898 = vmatprep.subr.bf16.mxu0 0
      %899 = vmatpush1.bf16.msra.mxu0 0
      %900 = vmatprep.subr.bf16.mxu0 0
      %901 = vmatpush1.bf16.msra.mxu0 0
      %902 = vmatprep.subr.bf16.mxu0 0
      %903 = vmatpush1.bf16.msra.mxu0 0
      %904 = vmatprep.subr.bf16.mxu0 0
      %905 = vmatpush1.bf16.msra.mxu0 0
      %906 = vmatprep.mubr.bf16.mxu0 0
      %907 = vmatmul.mubr.bf16.gmra.mrb[0].mxu0 %v868
      %v908 = vpop.f32.mrb[0].mxu0
      %v909 = vadd.f32 0.0, %v908
      %v910 = vpop.f32.mrb[0].mxu0
      %v911 = vpop.f32.mrb[0].mxu0
      %v912 = vadd.f32 0.0, %v911
      %v913 = vpop.f32.mrb[0].mxu0
      %914 = vdwg.mxu0
      %916 = vrot.lane.b32.xlu0 %v722, 80
      %v917 = vpop.permute.xlu0 %916
      %v919 = vsel %vm723, %v863, 0
      %v922 = vsel %vm870, %v917, 0
      %924 = vmatprep.subr.bf16.mxu0 0
      %925 = vmatpush1.bf16.msra.mxu0 %v922
      %926 = vmatprep.subr.bf16.mxu0 0
      %927 = vmatpush1.bf16.msra.mxu0 0
      %928 = vmatprep.subr.bf16.mxu0 0
      %929 = vmatpush1.bf16.msra.mxu0 0
      %930 = vmatprep.subr.bf16.mxu0 0
      %931 = vmatpush1.bf16.msra.mxu0 0
      %932 = vmatprep.subr.bf16.mxu0 0
      %933 = vmatpush1.bf16.msra.mxu0 0
      %934 = vmatprep.subr.bf16.mxu0 0
      %935 = vmatpush1.bf16.msra.mxu0 0
      %936 = vmatprep.subr.bf16.mxu0 0
      %937 = vmatpush1.bf16.msra.mxu0 0
      %938 = vmatprep.subr.bf16.mxu0 0
      %939 = vmatpush1.bf16.msra.mxu0 0
      %940 = vmatprep.subr.bf16.mxu0 0
      %941 = vmatpush1.bf16.msra.mxu0 0
      %942 = vmatprep.subr.bf16.mxu0 0
      %943 = vmatpush1.bf16.msra.mxu0 0
      %944 = vmatprep.subr.bf16.mxu0 0
      %945 = vmatpush1.bf16.msra.mxu0 0
      %946 = vmatprep.subr.bf16.mxu0 0
      %947 = vmatpush1.bf16.msra.mxu0 0
      %948 = vmatprep.subr.bf16.mxu0 0
      %949 = vmatpush1.bf16.msra.mxu0 0
      %950 = vmatprep.subr.bf16.mxu0 0
      %951 = vmatpush1.bf16.msra.mxu0 0
      %952 = vmatprep.subr.bf16.mxu0 0
      %953 = vmatpush1.bf16.msra.mxu0 0
      %954 = vmatprep.subr.bf16.mxu0 0
      %955 = vmatpush1.bf16.msra.mxu0 0
      %956 = vmatprep.mubr.bf16.mxu0 0
      %957 = vmatmul.mubr.bf16.gmra.mrb[0].mxu0 %v919
      %v958 = vpop.f32.mrb[0].mxu0
      %v959 = vadd.f32 0.0, %v958
      %v960 = vpop.f32.mrb[0].mxu0
      %v961 = vpop.f32.mrb[0].mxu0
      %v962 = vadd.f32 0.0, %v961
      %v963 = vpop.f32.mrb[0].mxu0
      %964 = vdwg.mxu0
      %v965 = vpack.c.bf16 %v912, %v909
      %v966 = vpack.c.bf16 %v962, %v959
      %968 = vrot.lane.b32.xlu0 %v719, 120
      %v969 = vpop.permute.xlu0 %968
      %970 = vrot.lane.b32.xlu0 %v721, 120
      %v971 = vpop.permute.xlu0 %970
      %v973 = vsel %vm723, %v969, 0
      %v976 = vsel %vm723, %v971, 0
      %978 = vmatprep.subr.bf16.mxu0 0
      %979 = vmatpush1.bf16.xpose.msra.mxu0 %v976
      %980 = vmatprep.subr.bf16.mxu0 0
      %981 = vmatpush1.bf16.xpose.msra.mxu0 0
      %982 = vmatprep.subr.bf16.mxu0 0
      %983 = vmatpush1.bf16.xpose.msra.mxu0 0
      %984 = vmatprep.subr.bf16.mxu0 0
      %985 = vmatpush1.bf16.xpose.msra.mxu0 0
      %986 = vmatprep.subr.bf16.mxu0 0
      %987 = vmatpush1.bf16.xpose.msra.mxu0 0
      %988 = vmatprep.subr.bf16.mxu0 0
      %989 = vmatpush1.bf16.xpose.msra.mxu0 0
      %990 = vmatprep.subr.bf16.mxu0 0
      %991 = vmatpush1.bf16.xpose.msra.mxu0 0
      %992 = vmatprep.subr.bf16.mxu0 0
      %993 = vmatpush1.bf16.xpose.msra.mxu0 0
      %994 = vmatprep.subr.bf16.mxu0 0
      %995 = vmatpush1.bf16.xpose.msra.mxu0 0
      %996 = vmatprep.subr.bf16.mxu0 0
      %997 = vmatpush1.bf16.xpose.msra.mxu0 0
      %998 = vmatprep.subr.bf16.mxu0 0
      %999 = vmatpush1.bf16.xpose.msra.mxu0 0
      %1000 = vmatprep.subr.bf16.mxu0 0
      %1001 = vmatpush1.bf16.xpose.msra.mxu0 0
      %1002 = vmatprep.subr.bf16.mxu0 0
      %1003 = vmatpush1.bf16.xpose.msra.mxu0 0
      %1004 = vmatprep.subr.bf16.mxu0 0
      %1005 = vmatpush1.bf16.xpose.msra.mxu0 0
      %1006 = vmatprep.subr.bf16.mxu0 0
      %1007 = vmatpush1.bf16.xpose.msra.mxu0 0
      %1008 = vmatprep.subr.bf16.mxu0 0
      %1009 = vmatpush1.bf16.xpose.msra.mxu0 0
      %1010 = vmatprep.mubr.bf16.mxu0 0
      %1011 = vmatmul.mubr.bf16.gmra.mrb[0].mxu0 %v973
      %v1012 = vpop.f32.mrb[0].mxu0
      %v1013 = vadd.f32 0.0, %v1012
      %v1014 = vpop.f32.mrb[0].mxu0
      %v1015 = vpop.f32.mrb[0].mxu0
      %v1016 = vadd.f32 0.0, %v1015
      %v1017 = vpop.f32.mrb[0].mxu0
      %1018 = vdwg.mxu0
      %1020 = vrot.lane.b32.xlu0 %v720, 120
      %v1021 = vpop.permute.xlu0 %1020
      %1022 = vrot.lane.b32.xlu0 %v722, 120
      %v1023 = vpop.permute.xlu0 %1022
      %v1025 = vsel %vm723, %v1021, 0
      %v1028 = vsel %vm723, %v1023, 0
      %1030 = vmatprep.subr.bf16.mxu0 0
      %1031 = vmatpush1.bf16.xpose.msra.mxu0 %v1028
      %1032 = vmatprep.subr.bf16.mxu0 0
      %1033 = vmatpush1.bf16.xpose.msra.mxu0 0
      %1034 = vmatprep.subr.bf16.mxu0 0
      %1035 = vmatpush1.bf16.xpose.msra.mxu0 0
      %1036 = vmatprep.subr.bf16.mxu0 0
      %1037 = vmatpush1.bf16.xpose.msra.mxu0 0
      %1038 = vmatprep.subr.bf16.mxu0 0
      %1039 = vmatpush1.bf16.xpose.msra.mxu0 0
      %1040 = vmatprep.subr.bf16.mxu0 0
      %1041 = vmatpush1.bf16.xpose.msra.mxu0 0
      %1042 = vmatprep.subr.bf16.mxu0 0
      %1043 = vmatpush1.bf16.xpose.msra.mxu0 0
      %1044 = vmatprep.subr.bf16.mxu0 0
      %1045 = vmatpush1.bf16.xpose.msra.mxu0 0
      %1046 = vmatprep.subr.bf16.mxu0 0
      %1047 = vmatpush1.bf16.xpose.msra.mxu0 0
      %1048 = vmatprep.subr.bf16.mxu0 0
      %1049 = vmatpush1.bf16.xpose.msra.mxu0 0
      %1050 = vmatprep.subr.bf16.mxu0 0
      %1051 = vmatpush1.bf16.xpose.msra.mxu0 0
      %1052 = vmatprep.subr.bf16.mxu0 0
      %1053 = vmatpush1.bf16.xpose.msra.mxu0 0
      %1054 = vmatprep.subr.bf16.mxu0 0
      %1055 = vmatpush1.bf16.xpose.msra.mxu0 0
      %1056 = vmatprep.subr.bf16.mxu0 0
      %1057 = vmatpush1.bf16.xpose.msra.mxu0 0
      %1058 = vmatprep.subr.bf16.mxu0 0
      %1059 = vmatpush1.bf16.xpose.msra.mxu0 0
      %1060 = vmatprep.subr.bf16.mxu0 0
      %1061 = vmatpush1.bf16.xpose.msra.mxu0 0
      %1062 = vmatprep.mubr.bf16.mxu0 0
      %1063 = vmatmul.mubr.bf16.gmra.mrb[0].mxu0 %v1025
      %v1064 = vpop.f32.mrb[0].mxu0
      %v1065 = vadd.f32 0.0, %v1064
      %v1066 = vpop.f32.mrb[0].mxu0
      %v1067 = vpop.f32.mrb[0].mxu0
      %v1068 = vadd.f32 0.0, %v1067
      %v1069 = vpop.f32.mrb[0].mxu0
      %1070 = vdwg.mxu0
      %v1071 = vsel %vm723, %v1013, -inf
      %1072 = vmax.xlane.f32.xlu0 %v1071
      %v1073 = vpop.xlane.xlu0 %1072
      %v1074 = vsel %vm723, %v1016, -inf
      %1075 = vmax.xlane.f32.xlu0 %v1074
      %v1076 = vpop.xlane.xlu0 %1075
      %v1077 = vsel %vm723, %v1065, -inf
      %1078 = vmax.xlane.f32.xlu0 %v1077
      %v1079 = vpop.xlane.xlu0 %1078
      %v1080 = vsel %vm723, %v1068, -inf
      %1081 = vmax.xlane.f32.xlu0 %v1080
      %v1082 = vpop.xlane.xlu0 %1081
      %v1083 = vsub.f32 %v1013, %v1073
      %v1084 = vsub.f32 %v1016, %v1076
      %v1085 = vsub.f32 %v1065, %v1079
      %v1086 = vsub.f32 %v1068, %v1082
      %v1087 = vmul.f32 %v1083, 1.442695
      %v1088 = vpow.pop %v1087
      %v1089 = vmul.f32 %v1084, 1.442695
      %v1090 = vpow.pop %v1089
      %v1091 = vmul.f32 %v1085, 1.442695
      %v1092 = vpow.pop %v1091
      %v1093 = vmul.f32 %v1086, 1.442695
      %v1094 = vpow.pop %v1093
      %v1095 = vsel %vm723, %v1088, 0.0
      %1096 = vadd.xlane.f32.xlu0 %v1095
      %v1097 = vpop.xlane.xlu0 %1096
      %v1098 = vsel %vm723, %v1090, 0.0
      %1099 = vadd.xlane.f32.xlu0 %v1098
      %v1100 = vpop.xlane.xlu0 %1099
      %v1101 = vsel %vm723, %v1092, 0.0
      %1102 = vadd.xlane.f32.xlu0 %v1101
      %v1103 = vpop.xlane.xlu0 %1102
      %v1104 = vsel %vm723, %v1094, 0.0
      %1105 = vadd.xlane.f32.xlu0 %v1104
      %v1106 = vpop.xlane.xlu0 %1105
      %v1107 = vrcp.pop %v1097
      %v1108 = vrcp.pop %v1100
      %v1109 = vrcp.pop %v1103
      %v1110 = vrcp.pop %v1106
      %v1111 = vmul.f32 %v1088, %v1107
      %v1112 = vmul.f32 %v1090, %v1108
      %v1113 = vmul.f32 %v1092, %v1109
      %v1114 = vmul.f32 %v1094, %v1110
      %v1115 = vpack.c.bf16 %v1112, %v1111
      %v1116 = vpack.c.bf16 %v1114, %v1113
      %1117 = vrot.lane.b32.xlu0 %v721, 72
      %v1118 = vpop.permute.xlu0 %1117
      %v1120 = vsel %vm723, %v1115, 0
      %v1123 = vsel %vm870, %v1118, 0
      %1125 = vmatprep.subr.bf16.mxu0 0
      %1126 = vmatpush1.bf16.msra.mxu0 %v1123
      %1127 = vmatprep.subr.bf16.mxu0 0
      %1128 = vmatpush1.bf16.msra.mxu0 0
      %1129 = vmatprep.subr.bf16.mxu0 0
      %1130 = vmatpush1.bf16.msra.mxu0 0
      %1131 = vmatprep.subr.bf16.mxu0 0
      %1132 = vmatpush1.bf16.msra.mxu0 0
      %1133 = vmatprep.subr.bf16.mxu0 0
      %1134 = vmatpush1.bf16.msra.mxu0 0
      %1135 = vmatprep.subr.bf16.mxu0 0
      %1136 = vmatpush1.bf16.msra.mxu0 0
      %1137 = vmatprep.subr.bf16.mxu0 0
      %1138 = vmatpush1.bf16.msra.mxu0 0
      %1139 = vmatprep.subr.bf16.mxu0 0
      %1140 = vmatpush1.bf16.msra.mxu0 0
      %1141 = vmatprep.subr.bf16.mxu0 0
      %1142 = vmatpush1.bf16.msra.mxu0 0
      %1143 = vmatprep.subr.bf16.mxu0 0
      %1144 = vmatpush1.bf16.msra.mxu0 0
      %1145 = vmatprep.subr.bf16.mxu0 0
      %1146 = vmatpush1.bf16.msra.mxu0 0
      %1147 = vmatprep.subr.bf16.mxu0 0
      %1148 = vmatpush1.bf16.msra.mxu0 0
      %1149 = vmatprep.subr.bf16.mxu0 0
      %1150 = vmatpush1.bf16.msra.mxu0 0
      %1151 = vmatprep.subr.bf16.mxu0 0
      %1152 = vmatpush1.bf16.msra.mxu0 0
      %1153 = vmatprep.subr.bf16.mxu0 0
      %1154 = vmatpush1.bf16.msra.mxu0 0
      %1155 = vmatprep.subr.bf16.mxu0 0
      %1156 = vmatpush1.bf16.msra.mxu0 0
      %1157 = vmatprep.mubr.bf16.mxu0 0
      %1158 = vmatmul.mubr.bf16.gmra.mrb[0].mxu0 %v1120
      %v1159 = vpop.f32.mrb[0].mxu0
      %v1160 = vadd.f32 0.0, %v1159
      %v1161 = vpop.f32.mrb[0].mxu0
      %v1162 = vpop.f32.mrb[0].mxu0
      %v1163 = vadd.f32 0.0, %v1162
      %v1164 = vpop.f32.mrb[0].mxu0
      %1165 = vdwg.mxu0
      %1166 = vrot.lane.b32.xlu0 %v722, 72
      %v1167 = vpop.permute.xlu0 %1166
      %v1169 = vsel %vm723, %v1116, 0
      %v1172 = vsel %vm870, %v1167, 0
      %1174 = vmatprep.subr.bf16.mxu0 0
      %1175 = vmatpush1.bf16.msra.mxu0 %v1172
      %1176 = vmatprep.subr.bf16.mxu0 0
      %1177 = vmatpush1.bf16.msra.mxu0 0
      %1178 = vmatprep.subr.bf16.mxu0 0
      %1179 = vmatpush1.bf16.msra.mxu0 0
      %1180 = vmatprep.subr.bf16.mxu0 0
      %1181 = vmatpush1.bf16.msra.mxu0 0
      %1182 = vmatprep.subr.bf16.mxu0 0
      %1183 = vmatpush1.bf16.msra.mxu0 0
      %1184 = vmatprep.subr.bf16.mxu0 0
      %1185 = vmatpush1.bf16.msra.mxu0 0
      %1186 = vmatprep.subr.bf16.mxu0 0
      %1187 = vmatpush1.bf16.msra.mxu0 0
      %1188 = vmatprep.subr.bf16.mxu0 0
      %1189 = vmatpush1.bf16.msra.mxu0 0
      %1190 = vmatprep.subr.bf16.mxu0 0
      %1191 = vmatpush1.bf16.msra.mxu0 0
      %1192 = vmatprep.subr.bf16.mxu0 0
      %1193 = vmatpush1.bf16.msra.mxu0 0
      %1194 = vmatprep.subr.bf16.mxu0 0
      %1195 = vmatpush1.bf16.msra.mxu0 0
      %1196 = vmatprep.subr.bf16.mxu0 0
      %1197 = vmatpush1.bf16.msra.mxu0 0
      %1198 = vmatprep.subr.bf16.mxu0 0
      %1199 = vmatpush1.bf16.msra.mxu0 0
      %1200 = vmatprep.subr.bf16.mxu0 0
      %1201 = vmatpush1.bf16.msra.mxu0 0
      %1202 = vmatprep.subr.bf16.mxu0 0
      %1203 = vmatpush1.bf16.msra.mxu0 0
      %1204 = vmatprep.subr.bf16.mxu0 0
      %1205 = vmatpush1.bf16.msra.mxu0 0
      %1206 = vmatprep.mubr.bf16.mxu0 0
      %1207 = vmatmul.mubr.bf16.gmra.mrb[0].mxu0 %v1169
      %v1208 = vpop.f32.mrb[0].mxu0
      %v1209 = vadd.f32 0.0, %v1208
      %v1210 = vpop.f32.mrb[0].mxu0
      %v1211 = vpop.f32.mrb[0].mxu0
      %v1212 = vadd.f32 0.0, %v1211
      %v1213 = vpop.f32.mrb[0].mxu0
      %1214 = vdwg.mxu0
      %v1215 = vpack.c.bf16 %v1163, %v1160
      %v1216 = vpack.c.bf16 %v1212, %v1209
      %1217 = vrot.lane.b32.xlu0 %v719, 112
      %v1218 = vpop.permute.xlu0 %1217
      %1219 = vrot.lane.b32.xlu0 %v721, 112
      %v1220 = vpop.permute.xlu0 %1219
      %v1222 = vsel %vm723, %v1218, 0
      %v1225 = vsel %vm723, %v1220, 0
      %1227 = vmatprep.subr.bf16.mxu0 0
      %1228 = vmatpush1.bf16.xpose.msra.mxu0 %v1225
      %1229 = vmatprep.subr.bf16.mxu0 0
      %1230 = vmatpush1.bf16.xpose.msra.mxu0 0
      %1231 = vmatprep.subr.bf16.mxu0 0
      %1232 = vmatpush1.bf16.xpose.msra.mxu0 0
      %1233 = vmatprep.subr.bf16.mxu0 0
      %1234 = vmatpush1.bf16.xpose.msra.mxu0 0
      %1235 = vmatprep.subr.bf16.mxu0 0
      %1236 = vmatpush1.bf16.xpose.msra.mxu0 0
      %1237 = vmatprep.subr.bf16.mxu0 0
      %1238 = vmatpush1.bf16.xpose.msra.mxu0 0
      %1239 = vmatprep.subr.bf16.mxu0 0
      %1240 = vmatpush1.bf16.xpose.msra.mxu0 0
      %1241 = vmatprep.subr.bf16.mxu0 0
      %1242 = vmatpush1.bf16.xpose.msra.mxu0 0
      %1243 = vmatprep.subr.bf16.mxu0 0
      %1244 = vmatpush1.bf16.xpose.msra.mxu0 0
      %1245 = vmatprep.subr.bf16.mxu0 0
      %1246 = vmatpush1.bf16.xpose.msra.mxu0 0
      %1247 = vmatprep.subr.bf16.mxu0 0
      %1248 = vmatpush1.bf16.xpose.msra.mxu0 0
      %1249 = vmatprep.subr.bf16.mxu0 0
      %1250 = vmatpush1.bf16.xpose.msra.mxu0 0
      %1251 = vmatprep.subr.bf16.mxu0 0
      %1252 = vmatpush1.bf16.xpose.msra.mxu0 0
      %1253 = vmatprep.subr.bf16.mxu0 0
      %1254 = vmatpush1.bf16.xpose.msra.mxu0 0
      %1255 = vmatprep.subr.bf16.mxu0 0
      %1256 = vmatpush1.bf16.xpose.msra.mxu0 0
      %1257 = vmatprep.subr.bf16.mxu0 0
      %1258 = vmatpush1.bf16.xpose.msra.mxu0 0
      %1259 = vmatprep.mubr.bf16.mxu0 0
      %1260 = vmatmul.mubr.bf16.gmra.mrb[0].mxu0 %v1222
      %v1261 = vpop.f32.mrb[0].mxu0
      %v1262 = vadd.f32 0.0, %v1261
      %v1263 = vpop.f32.mrb[0].mxu0
      %v1264 = vpop.f32.mrb[0].mxu0
      %v1265 = vadd.f32 0.0, %v1264
      %v1266 = vpop.f32.mrb[0].mxu0
      %1267 = vdwg.mxu0
      %1268 = vrot.lane.b32.xlu0 %v720, 112
      %v1269 = vpop.permute.xlu0 %1268
      %1270 = vrot.lane.b32.xlu0 %v722, 112
      %v1271 = vpop.permute.xlu0 %1270
      %v1273 = vsel %vm723, %v1269, 0
      %v1276 = vsel %vm723, %v1271, 0
      %1278 = vmatprep.subr.bf16.mxu0 0
      %1279 = vmatpush1.bf16.xpose.msra.mxu0 %v1276
      %1280 = vmatprep.subr.bf16.mxu0 0
      %1281 = vmatpush1.bf16.xpose.msra.mxu0 0
      %1282 = vmatprep.subr.bf16.mxu0 0
      %1283 = vmatpush1.bf16.xpose.msra.mxu0 0
      %1284 = vmatprep.subr.bf16.mxu0 0
      %1285 = vmatpush1.bf16.xpose.msra.mxu0 0
      %1286 = vmatprep.subr.bf16.mxu0 0
      %1287 = vmatpush1.bf16.xpose.msra.mxu0 0
      %1288 = vmatprep.subr.bf16.mxu0 0
      %1289 = vmatpush1.bf16.xpose.msra.mxu0 0
      %1290 = vmatprep.subr.bf16.mxu0 0
      %1291 = vmatpush1.bf16.xpose.msra.mxu0 0
      %1292 = vmatprep.subr.bf16.mxu0 0
      %1293 = vmatpush1.bf16.xpose.msra.mxu0 0
      %1294 = vmatprep.subr.bf16.mxu0 0
      %1295 = vmatpush1.bf16.xpose.msra.mxu0 0
      %1296 = vmatprep.subr.bf16.mxu0 0
      %1297 = vmatpush1.bf16.xpose.msra.mxu0 0
      %1298 = vmatprep.subr.bf16.mxu0 0
      %1299 = vmatpush1.bf16.xpose.msra.mxu0 0
      %1300 = vmatprep.subr.bf16.mxu0 0
      %1301 = vmatpush1.bf16.xpose.msra.mxu0 0
      %1302 = vmatprep.subr.bf16.mxu0 0
      %1303 = vmatpush1.bf16.xpose.msra.mxu0 0
      %1304 = vmatprep.subr.bf16.mxu0 0
      %1305 = vmatpush1.bf16.xpose.msra.mxu0 0
      %1306 = vmatprep.subr.bf16.mxu0 0
      %1307 = vmatpush1.bf16.xpose.msra.mxu0 0
      %1308 = vmatprep.subr.bf16.mxu0 0
      %1309 = vmatpush1.bf16.xpose.msra.mxu0 0
      %1310 = vmatprep.mubr.bf16.mxu0 0
      %1311 = vmatmul.mubr.bf16.gmra.mrb[0].mxu0 %v1273
      %v1312 = vpop.f32.mrb[0].mxu0
      %v1313 = vadd.f32 0.0, %v1312
      %v1314 = vpop.f32.mrb[0].mxu0
      %v1315 = vpop.f32.mrb[0].mxu0
      %v1316 = vadd.f32 0.0, %v1315
      %v1317 = vpop.f32.mrb[0].mxu0
      %1318 = vdwg.mxu0
      %v1319 = vsel %vm723, %v1262, -inf
      %1320 = vmax.xlane.f32.xlu0 %v1319
      %v1321 = vpop.xlane.xlu0 %1320
      %v1322 = vsel %vm723, %v1265, -inf
      %1323 = vmax.xlane.f32.xlu0 %v1322
      %v1324 = vpop.xlane.xlu0 %1323
      %v1325 = vsel %vm723, %v1313, -inf
      %1326 = vmax.xlane.f32.xlu0 %v1325
      %v1327 = vpop.xlane.xlu0 %1326
      %v1328 = vsel %vm723, %v1316, -inf
      %1329 = vmax.xlane.f32.xlu0 %v1328
      %v1330 = vpop.xlane.xlu0 %1329
      %v1331 = vsub.f32 %v1262, %v1321
      %v1332 = vsub.f32 %v1265, %v1324
      %v1333 = vsub.f32 %v1313, %v1327
      %v1334 = vsub.f32 %v1316, %v1330
      %v1335 = vmul.f32 %v1331, 1.442695
      %v1336 = vpow.pop %v1335
      %v1337 = vmul.f32 %v1332, 1.442695
      %v1338 = vpow.pop %v1337
      %v1339 = vmul.f32 %v1333, 1.442695
      %v1340 = vpow.pop %v1339
      %v1341 = vmul.f32 %v1334, 1.442695
      %v1342 = vpow.pop %v1341
      %v1343 = vsel %vm723, %v1336, 0.0
      %1344 = vadd.xlane.f32.xlu0 %v1343
      %v1345 = vpop.xlane.xlu0 %1344
      %v1346 = vsel %vm723, %v1338, 0.0
      %1347 = vadd.xlane.f32.xlu0 %v1346
      %v1348 = vpop.xlane.xlu0 %1347
      %v1349 = vsel %vm723, %v1340, 0.0
      %1350 = vadd.xlane.f32.xlu0 %v1349
      %v1351 = vpop.xlane.xlu0 %1350
      %v1352 = vsel %vm723, %v1342, 0.0
      %1353 = vadd.xlane.f32.xlu0 %v1352
      %v1354 = vpop.xlane.xlu0 %1353
      %v1355 = vrcp.pop %v1345
      %v1356 = vrcp.pop %v1348
      %v1357 = vrcp.pop %v1351
      %v1358 = vrcp.pop %v1354
      %v1359 = vmul.f32 %v1336, %v1355
      %v1360 = vmul.f32 %v1338, %v1356
      %v1361 = vmul.f32 %v1340, %v1357
      %v1362 = vmul.f32 %v1342, %v1358
      %v1363 = vpack.c.bf16 %v1360, %v1359
      %v1364 = vpack.c.bf16 %v1362, %v1361
      %1365 = vrot.lane.b32.xlu0 %v721, 64
      %v1366 = vpop.permute.xlu0 %1365
      %v1368 = vsel %vm723, %v1363, 0
      %v1371 = vsel %vm870, %v1366, 0
      %1373 = vmatprep.subr.bf16.mxu0 0
      %1374 = vmatpush1.bf16.msra.mxu0 %v1371
      %1375 = vmatprep.subr.bf16.mxu0 0
      %1376 = vmatpush1.bf16.msra.mxu0 0
      %1377 = vmatprep.subr.bf16.mxu0 0
      %1378 = vmatpush1.bf16.msra.mxu0 0
      %1379 = vmatprep.subr.bf16.mxu0 0
      %1380 = vmatpush1.bf16.msra.mxu0 0
      %1381 = vmatprep.subr.bf16.mxu0 0
      %1382 = vmatpush1.bf16.msra.mxu0 0
      %1383 = vmatprep.subr.bf16.mxu0 0
      %1384 = vmatpush1.bf16.msra.mxu0 0
      %1385 = vmatprep.subr.bf16.mxu0 0
      %1386 = vmatpush1.bf16.msra.mxu0 0
      %1387 = vmatprep.subr.bf16.mxu0 0
      %1388 = vmatpush1.bf16.msra.mxu0 0
      %1389 = vmatprep.subr.bf16.mxu0 0
      %1390 = vmatpush1.bf16.msra.mxu0 0
      %1391 = vmatprep.subr.bf16.mxu0 0
      %1392 = vmatpush1.bf16.msra.mxu0 0
      %1393 = vmatprep.subr.bf16.mxu0 0
      %1394 = vmatpush1.bf16.msra.mxu0 0
      %1395 = vmatprep.subr.bf16.mxu0 0
      %1396 = vmatpush1.bf16.msra.mxu0 0
      %1397 = vmatprep.subr.bf16.mxu0 0
      %1398 = vmatpush1.bf16.msra.mxu0 0
      %1399 = vmatprep.subr.bf16.mxu0 0
      %1400 = vmatpush1.bf16.msra.mxu0 0
      %1401 = vmatprep.subr.bf16.mxu0 0
      %1402 = vmatpush1.bf16.msra.mxu0 0
      %1403 = vmatprep.subr.bf16.mxu0 0
      %1404 = vmatpush1.bf16.msra.mxu0 0
      %1405 = vmatprep.mubr.bf16.mxu0 0
      %1406 = vmatmul.mubr.bf16.gmra.mrb[0].mxu0 %v1368
      %v1407 = vpop.f32.mrb[0].mxu0
      %v1408 = vadd.f32 0.0, %v1407
      %v1409 = vpop.f32.mrb[0].mxu0
      %v1410 = vpop.f32.mrb[0].mxu0
      %v1411 = vadd.f32 0.0, %v1410
      %v1412 = vpop.f32.mrb[0].mxu0
      %1413 = vdwg.mxu0
      %1414 = vrot.lane.b32.xlu0 %v722, 64
      %v1415 = vpop.permute.xlu0 %1414
      %v1417 = vsel %vm723, %v1364, 0
      %v1420 = vsel %vm870, %v1415, 0
      %1422 = vmatprep.subr.bf16.mxu0 0
      %1423 = vmatpush1.bf16.msra.mxu0 %v1420
      %1424 = vmatprep.subr.bf16.mxu0 0
      %1425 = vmatpush1.bf16.msra.mxu0 0
      %1426 = vmatprep.subr.bf16.mxu0 0
      %1427 = vmatpush1.bf16.msra.mxu0 0
      %1428 = vmatprep.subr.bf16.mxu0 0
      %1429 = vmatpush1.bf16.msra.mxu0 0
      %1430 = vmatprep.subr.bf16.mxu0 0
      %1431 = vmatpush1.bf16.msra.mxu0 0
      %1432 = vmatprep.subr.bf16.mxu0 0
      %1433 = vmatpush1.bf16.msra.mxu0 0
      %1434 = vmatprep.subr.bf16.mxu0 0
      %1435 = vmatpush1.bf16.msra.mxu0 0
      %1436 = vmatprep.subr.bf16.mxu0 0
      %1437 = vmatpush1.bf16.msra.mxu0 0
      %1438 = vmatprep.subr.bf16.mxu0 0
      %1439 = vmatpush1.bf16.msra.mxu0 0
      %1440 = vmatprep.subr.bf16.mxu0 0
      %1441 = vmatpush1.bf16.msra.mxu0 0
      %1442 = vmatprep.subr.bf16.mxu0 0
      %1443 = vmatpush1.bf16.msra.mxu0 0
      %1444 = vmatprep.subr.bf16.mxu0 0
      %1445 = vmatpush1.bf16.msra.mxu0 0
      %1446 = vmatprep.subr.bf16.mxu0 0
      %1447 = vmatpush1.bf16.msra.mxu0 0
      %1448 = vmatprep.subr.bf16.mxu0 0
      %1449 = vmatpush1.bf16.msra.mxu0 0
      %1450 = vmatprep.subr.bf16.mxu0 0
      %1451 = vmatpush1.bf16.msra.mxu0 0
      %1452 = vmatprep.subr.bf16.mxu0 0
      %1453 = vmatpush1.bf16.msra.mxu0 0
      %1454 = vmatprep.mubr.bf16.mxu0 0
      %1455 = vmatmul.mubr.bf16.gmra.mrb[0].mxu0 %v1417
      %v1456 = vpop.f32.mrb[0].mxu0
      %v1457 = vadd.f32 0.0, %v1456
      %v1458 = vpop.f32.mrb[0].mxu0
      %v1459 = vpop.f32.mrb[0].mxu0
      %v1460 = vadd.f32 0.0, %v1459
      %v1461 = vpop.f32.mrb[0].mxu0
      %1462 = vdwg.mxu0
      %v1463 = vpack.c.bf16 %v1411, %v1408
      %v1464 = vpack.c.bf16 %v1460, %v1457
      %1465 = vrot.lane.b32.xlu0 %v719, 104
      %v1466 = vpop.permute.xlu0 %1465
      %1467 = vrot.lane.b32.xlu0 %v721, 104
      %v1468 = vpop.permute.xlu0 %1467
      %v1470 = vsel %vm723, %v1466, 0
      %v1473 = vsel %vm723, %v1468, 0
      %1475 = vmatprep.subr.bf16.mxu0 0
      %1476 = vmatpush1.bf16.xpose.msra.mxu0 %v1473
      %1477 = vmatprep.subr.bf16.mxu0 0
      %1478 = vmatpush1.bf16.xpose.msra.mxu0 0
      %1479 = vmatprep.subr.bf16.mxu0 0
      %1480 = vmatpush1.bf16.xpose.msra.mxu0 0
      %1481 = vmatprep.subr.bf16.mxu0 0
      %1482 = vmatpush1.bf16.xpose.msra.mxu0 0
      %1483 = vmatprep.subr.bf16.mxu0 0
      %1484 = vmatpush1.bf16.xpose.msra.mxu0 0
      %1485 = vmatprep.subr.bf16.mxu0 0
      %1486 = vmatpush1.bf16.xpose.msra.mxu0 0
      %1487 = vmatprep.subr.bf16.mxu0 0
      %1488 = vmatpush1.bf16.xpose.msra.mxu0 0
      %1489 = vmatprep.subr.bf16.mxu0 0
      %1490 = vmatpush1.bf16.xpose.msra.mxu0 0
      %1491 = vmatprep.subr.bf16.mxu0 0
      %1492 = vmatpush1.bf16.xpose.msra.mxu0 0
      %1493 = vmatprep.subr.bf16.mxu0 0
      %1494 = vmatpush1.bf16.xpose.msra.mxu0 0
      %1495 = vmatprep.subr.bf16.mxu0 0
      %1496 = vmatpush1.bf16.xpose.msra.mxu0 0
      %1497 = vmatprep.subr.bf16.mxu0 0
      %1498 = vmatpush1.bf16.xpose.msra.mxu0 0
      %1499 = vmatprep.subr.bf16.mxu0 0
      %1500 = vmatpush1.bf16.xpose.msra.mxu0 0
      %1501 = vmatprep.subr.bf16.mxu0 0
      %1502 = vmatpush1.bf16.xpose.msra.mxu0 0
      %1503 = vmatprep.subr.bf16.mxu0 0
      %1504 = vmatpush1.bf16.xpose.msra.mxu0 0
      %1505 = vmatprep.subr.bf16.mxu0 0
      %1506 = vmatpush1.bf16.xpose.msra.mxu0 0
      %1507 = vmatprep.mubr.bf16.mxu0 0
      %1508 = vmatmul.mubr.bf16.gmra.mrb[0].mxu0 %v1470
      %v1509 = vpop.f32.mrb[0].mxu0
      %v1510 = vadd.f32 0.0, %v1509
      %v1511 = vpop.f32.mrb[0].mxu0
      %v1512 = vpop.f32.mrb[0].mxu0
      %v1513 = vadd.f32 0.0, %v1512
      %v1514 = vpop.f32.mrb[0].mxu0
      %1515 = vdwg.mxu0
      %1516 = vrot.lane.b32.xlu0 %v720, 104
      %v1517 = vpop.permute.xlu0 %1516
      %1518 = vrot.lane.b32.xlu0 %v722, 104
      %v1519 = vpop.permute.xlu0 %1518
      %v1521 = vsel %vm723, %v1517, 0
      %v1524 = vsel %vm723, %v1519, 0
      %1526 = vmatprep.subr.bf16.mxu0 0
      %1527 = vmatpush1.bf16.xpose.msra.mxu0 %v1524
      %1528 = vmatprep.subr.bf16.mxu0 0
      %1529 = vmatpush1.bf16.xpose.msra.mxu0 0
      %1530 = vmatprep.subr.bf16.mxu0 0
      %1531 = vmatpush1.bf16.xpose.msra.mxu0 0
      %1532 = vmatprep.subr.bf16.mxu0 0
      %1533 = vmatpush1.bf16.xpose.msra.mxu0 0
      %1534 = vmatprep.subr.bf16.mxu0 0
      %1535 = vmatpush1.bf16.xpose.msra.mxu0 0
      %1536 = vmatprep.subr.bf16.mxu0 0
      %1537 = vmatpush1.bf16.xpose.msra.mxu0 0
      %1538 = vmatprep.subr.bf16.mxu0 0
      %1539 = vmatpush1.bf16.xpose.msra.mxu0 0
      %1540 = vmatprep.subr.bf16.mxu0 0
      %1541 = vmatpush1.bf16.xpose.msra.mxu0 0
      %1542 = vmatprep.subr.bf16.mxu0 0
      %1543 = vmatpush1.bf16.xpose.msra.mxu0 0
      %1544 = vmatprep.subr.bf16.mxu0 0
      %1545 = vmatpush1.bf16.xpose.msra.mxu0 0
      %1546 = vmatprep.subr.bf16.mxu0 0
      %1547 = vmatpush1.bf16.xpose.msra.mxu0 0
      %1548 = vmatprep.subr.bf16.mxu0 0
      %1549 = vmatpush1.bf16.xpose.msra.mxu0 0
      %1550 = vmatprep.subr.bf16.mxu0 0
      %1551 = vmatpush1.bf16.xpose.msra.mxu0 0
      %1552 = vmatprep.subr.bf16.mxu0 0
      %1553 = vmatpush1.bf16.xpose.msra.mxu0 0
      %1554 = vmatprep.subr.bf16.mxu0 0
      %1555 = vmatpush1.bf16.xpose.msra.mxu0 0
      %1556 = vmatprep.subr.bf16.mxu0 0
      %1557 = vmatpush1.bf16.xpose.msra.mxu0 0
      %1558 = vmatprep.mubr.bf16.mxu0 0
      %1559 = vmatmul.mubr.bf16.gmra.mrb[0].mxu0 %v1521
      %v1560 = vpop.f32.mrb[0].mxu0
      %v1561 = vadd.f32 0.0, %v1560
      %v1562 = vpop.f32.mrb[0].mxu0
      %v1563 = vpop.f32.mrb[0].mxu0
      %v1564 = vadd.f32 0.0, %v1563
      %v1565 = vpop.f32.mrb[0].mxu0
      %1566 = vdwg.mxu0
      %v1567 = vsel %vm723, %v1510, -inf
      %1568 = vmax.xlane.f32.xlu0 %v1567
      %v1569 = vpop.xlane.xlu0 %1568
      %v1570 = vsel %vm723, %v1513, -inf
      %1571 = vmax.xlane.f32.xlu0 %v1570
      %v1572 = vpop.xlane.xlu0 %1571
      %v1573 = vsel %vm723, %v1561, -inf
      %1574 = vmax.xlane.f32.xlu0 %v1573
      %v1575 = vpop.xlane.xlu0 %1574
      %v1576 = vsel %vm723, %v1564, -inf
      %1577 = vmax.xlane.f32.xlu0 %v1576
      %v1578 = vpop.xlane.xlu0 %1577
      %v1579 = vsub.f32 %v1510, %v1569
      %v1580 = vsub.f32 %v1513, %v1572
      %v1581 = vsub.f32 %v1561, %v1575
      %v1582 = vsub.f32 %v1564, %v1578
      %v1583 = vmul.f32 %v1579, 1.442695
      %v1584 = vpow.pop %v1583
      %v1585 = vmul.f32 %v1580, 1.442695
      %v1586 = vpow.pop %v1585
      %v1587 = vmul.f32 %v1581, 1.442695
      %v1588 = vpow.pop %v1587
      %v1589 = vmul.f32 %v1582, 1.442695
      %v1590 = vpow.pop %v1589
      %v1591 = vsel %vm723, %v1584, 0.0
      %1592 = vadd.xlane.f32.xlu0 %v1591
      %v1593 = vpop.xlane.xlu0 %1592
      %v1594 = vsel %vm723, %v1586, 0.0
      %1595 = vadd.xlane.f32.xlu0 %v1594
      %v1596 = vpop.xlane.xlu0 %1595
      %v1597 = vsel %vm723, %v1588, 0.0
      %1598 = vadd.xlane.f32.xlu0 %v1597
      %v1599 = vpop.xlane.xlu0 %1598
      %v1600 = vsel %vm723, %v1590, 0.0
      %1601 = vadd.xlane.f32.xlu0 %v1600
      %v1602 = vpop.xlane.xlu0 %1601
      %v1603 = vrcp.pop %v1593
      %v1604 = vrcp.pop %v1596
      %v1605 = vrcp.pop %v1599
      %v1606 = vrcp.pop %v1602
      %v1607 = vmul.f32 %v1584, %v1603
      %v1608 = vmul.f32 %v1586, %v1604
      %v1609 = vmul.f32 %v1588, %v1605
      %v1610 = vmul.f32 %v1590, %v1606
      %v1611 = vpack.c.bf16 %v1608, %v1607
      %v1612 = vpack.c.bf16 %v1610, %v1609
      %1613 = vrot.lane.b32.xlu0 %v721, 56
      %v1614 = vpop.permute.xlu0 %1613
      %v1616 = vsel %vm723, %v1611, 0
      %v1619 = vsel %vm870, %v1614, 0
      %1621 = vmatprep.subr.bf16.mxu0 0
      %1622 = vmatpush1.bf16.msra.mxu0 %v1619
      %1623 = vmatprep.subr.bf16.mxu0 0
      %1624 = vmatpush1.bf16.msra.mxu0 0
      %1625 = vmatprep.subr.bf16.mxu0 0
      %1626 = vmatpush1.bf16.msra.mxu0 0
      %1627 = vmatprep.subr.bf16.mxu0 0
      %1628 = vmatpush1.bf16.msra.mxu0 0
      %1629 = vmatprep.subr.bf16.mxu0 0
      %1630 = vmatpush1.bf16.msra.mxu0 0
      %1631 = vmatprep.subr.bf16.mxu0 0
      %1632 = vmatpush1.bf16.msra.mxu0 0
      %1633 = vmatprep.subr.bf16.mxu0 0
      %1634 = vmatpush1.bf16.msra.mxu0 0
      %1635 = vmatprep.subr.bf16.mxu0 0
      %1636 = vmatpush1.bf16.msra.mxu0 0
      %1637 = vmatprep.subr.bf16.mxu0 0
      %1638 = vmatpush1.bf16.msra.mxu0 0
      %1639 = vmatprep.subr.bf16.mxu0 0
      %1640 = vmatpush1.bf16.msra.mxu0 0
      %1641 = vmatprep.subr.bf16.mxu0 0
      %1642 = vmatpush1.bf16.msra.mxu0 0
      %1643 = vmatprep.subr.bf16.mxu0 0
      %1644 = vmatpush1.bf16.msra.mxu0 0
      %1645 = vmatprep.subr.bf16.mxu0 0
      %1646 = vmatpush1.bf16.msra.mxu0 0
      %1647 = vmatprep.subr.bf16.mxu0 0
      %1648 = vmatpush1.bf16.msra.mxu0 0
      %1649 = vmatprep.subr.bf16.mxu0 0
      %1650 = vmatpush1.bf16.msra.mxu0 0
      %1651 = vmatprep.subr.bf16.mxu0 0
      %1652 = vmatpush1.bf16.msra.mxu0 0
      %1653 = vmatprep.mubr.bf16.mxu0 0
      %1654 = vmatmul.mubr.bf16.gmra.mrb[0].mxu0 %v1616
      %v1655 = vpop.f32.mrb[0].mxu0
      %v1656 = vadd.f32 0.0, %v1655
      %v1657 = vpop.f32.mrb[0].mxu0
      %v1658 = vpop.f32.mrb[0].mxu0
      %v1659 = vadd.f32 0.0, %v1658
      %v1660 = vpop.f32.mrb[0].mxu0
      %1661 = vdwg.mxu0
      %1662 = vrot.lane.b32.xlu0 %v722, 56
      %v1663 = vpop.permute.xlu0 %1662
      %v1665 = vsel %vm723, %v1612, 0
      %v1668 = vsel %vm870, %v1663, 0
      %1670 = vmatprep.subr.bf16.mxu0 0
      %1671 = vmatpush1.bf16.msra.mxu0 %v1668
      %1672 = vmatprep.subr.bf16.mxu0 0
      %1673 = vmatpush1.bf16.msra.mxu0 0
      %1674 = vmatprep.subr.bf16.mxu0 0
      %1675 = vmatpush1.bf16.msra.mxu0 0
      %1676 = vmatprep.subr.bf16.mxu0 0
      %1677 = vmatpush1.bf16.msra.mxu0 0
      %1678 = vmatprep.subr.bf16.mxu0 0
      %1679 = vmatpush1.bf16.msra.mxu0 0
      %1680 = vmatprep.subr.bf16.mxu0 0
      %1681 = vmatpush1.bf16.msra.mxu0 0
      %1682 = vmatprep.subr.bf16.mxu0 0
      %1683 = vmatpush1.bf16.msra.mxu0 0
      %1684 = vmatprep.subr.bf16.mxu0 0
      %1685 = vmatpush1.bf16.msra.mxu0 0
      %1686 = vmatprep.subr.bf16.mxu0 0
      %1687 = vmatpush1.bf16.msra.mxu0 0
      %1688 = vmatprep.subr.bf16.mxu0 0
      %1689 = vmatpush1.bf16.msra.mxu0 0
      %1690 = vmatprep.subr.bf16.mxu0 0
      %1691 = vmatpush1.bf16.msra.mxu0 0
      %1692 = vmatprep.subr.bf16.mxu0 0
      %1693 = vmatpush1.bf16.msra.mxu0 0
      %1694 = vmatprep.subr.bf16.mxu0 0
      %1695 = vmatpush1.bf16.msra.mxu0 0
      %1696 = vmatprep.subr.bf16.mxu0 0
      %1697 = vmatpush1.bf16.msra.mxu0 0
      %1698 = vmatprep.subr.bf16.mxu0 0
      %1699 = vmatpush1.bf16.msra.mxu0 0
      %1700 = vmatprep.subr.bf16.mxu0 0
      %1701 = vmatpush1.bf16.msra.mxu0 0
      %1702 = vmatprep.mubr.bf16.mxu0 0
      %1703 = vmatmul.mubr.bf16.gmra.mrb[0].mxu0 %v1665
      %v1704 = vpop.f32.mrb[0].mxu0
      %v1705 = vadd.f32 0.0, %v1704
      %v1706 = vpop.f32.mrb[0].mxu0
      %v1707 = vpop.f32.mrb[0].mxu0
      %v1708 = vadd.f32 0.0, %v1707
      %v1709 = vpop.f32.mrb[0].mxu0
      %1710 = vdwg.mxu0
      %v1711 = vpack.c.bf16 %v1659, %v1656
      %v1712 = vpack.c.bf16 %v1708, %v1705
      %1713 = vrot.lane.b32.xlu0 %v719, 96
      %v1714 = vpop.permute.xlu0 %1713
      %1715 = vrot.lane.b32.xlu0 %v721, 96
      %v1716 = vpop.permute.xlu0 %1715
      %v1718 = vsel %vm723, %v1714, 0
      %v1721 = vsel %vm723, %v1716, 0
      %1723 = vmatprep.subr.bf16.mxu0 0
      %1724 = vmatpush1.bf16.xpose.msra.mxu0 %v1721
      %1725 = vmatprep.subr.bf16.mxu0 0
      %1726 = vmatpush1.bf16.xpose.msra.mxu0 0
      %1727 = vmatprep.subr.bf16.mxu0 0
      %1728 = vmatpush1.bf16.xpose.msra.mxu0 0
      %1729 = vmatprep.subr.bf16.mxu0 0
      %1730 = vmatpush1.bf16.xpose.msra.mxu0 0
      %1731 = vmatprep.subr.bf16.mxu0 0
      %1732 = vmatpush1.bf16.xpose.msra.mxu0 0
      %1733 = vmatprep.subr.bf16.mxu0 0
      %1734 = vmatpush1.bf16.xpose.msra.mxu0 0
      %1735 = vmatprep.subr.bf16.mxu0 0
      %1736 = vmatpush1.bf16.xpose.msra.mxu0 0
      %1737 = vmatprep.subr.bf16.mxu0 0
      %1738 = vmatpush1.bf16.xpose.msra.mxu0 0
      %1739 = vmatprep.subr.bf16.mxu0 0
      %1740 = vmatpush1.bf16.xpose.msra.mxu0 0
      %1741 = vmatprep.subr.bf16.mxu0 0
      %1742 = vmatpush1.bf16.xpose.msra.mxu0 0
      %1743 = vmatprep.subr.bf16.mxu0 0
      %1744 = vmatpush1.bf16.xpose.msra.mxu0 0
      %1745 = vmatprep.subr.bf16.mxu0 0
      %1746 = vmatpush1.bf16.xpose.msra.mxu0 0
      %1747 = vmatprep.subr.bf16.mxu0 0
      %1748 = vmatpush1.bf16.xpose.msra.mxu0 0
      %1749 = vmatprep.subr.bf16.mxu0 0
      %1750 = vmatpush1.bf16.xpose.msra.mxu0 0
      %1751 = vmatprep.subr.bf16.mxu0 0
      %1752 = vmatpush1.bf16.xpose.msra.mxu0 0
      %1753 = vmatprep.subr.bf16.mxu0 0
      %1754 = vmatpush1.bf16.xpose.msra.mxu0 0
      %1755 = vmatprep.mubr.bf16.mxu0 0
      %1756 = vmatmul.mubr.bf16.gmra.mrb[0].mxu0 %v1718
      %v1757 = vpop.f32.mrb[0].mxu0
      %v1758 = vadd.f32 0.0, %v1757
      %v1759 = vpop.f32.mrb[0].mxu0
      %v1760 = vpop.f32.mrb[0].mxu0
      %v1761 = vadd.f32 0.0, %v1760
      %v1762 = vpop.f32.mrb[0].mxu0
      %1763 = vdwg.mxu0
      %1764 = vrot.lane.b32.xlu0 %v720, 96
      %v1765 = vpop.permute.xlu0 %1764
      %1766 = vrot.lane.b32.xlu0 %v722, 96
      %v1767 = vpop.permute.xlu0 %1766
      %v1769 = vsel %vm723, %v1765, 0
      %v1772 = vsel %vm723, %v1767, 0
      %1774 = vmatprep.subr.bf16.mxu0 0
      %1775 = vmatpush1.bf16.xpose.msra.mxu0 %v1772
      %1776 = vmatprep.subr.bf16.mxu0 0
      %1777 = vmatpush1.bf16.xpose.msra.mxu0 0
      %1778 = vmatprep.subr.bf16.mxu0 0
      %1779 = vmatpush1.bf16.xpose.msra.mxu0 0
      %1780 = vmatprep.subr.bf16.mxu0 0
      %1781 = vmatpush1.bf16.xpose.msra.mxu0 0
      %1782 = vmatprep.subr.bf16.mxu0 0
      %1783 = vmatpush1.bf16.xpose.msra.mxu0 0
      %1784 = vmatprep.subr.bf16.mxu0 0
      %1785 = vmatpush1.bf16.xpose.msra.mxu0 0
      %1786 = vmatprep.subr.bf16.mxu0 0
      %1787 = vmatpush1.bf16.xpose.msra.mxu0 0
      %1788 = vmatprep.subr.bf16.mxu0 0
      %1789 = vmatpush1.bf16.xpose.msra.mxu0 0
      %1790 = vmatprep.subr.bf16.mxu0 0
      %1791 = vmatpush1.bf16.xpose.msra.mxu0 0
      %1792 = vmatprep.subr.bf16.mxu0 0
      %1793 = vmatpush1.bf16.xpose.msra.mxu0 0
      %1794 = vmatprep.subr.bf16.mxu0 0
      %1795 = vmatpush1.bf16.xpose.msra.mxu0 0
      %1796 = vmatprep.subr.bf16.mxu0 0
      %1797 = vmatpush1.bf16.xpose.msra.mxu0 0
      %1798 = vmatprep.subr.bf16.mxu0 0
      %1799 = vmatpush1.bf16.xpose.msra.mxu0 0
      %1800 = vmatprep.subr.bf16.mxu0 0
      %1801 = vmatpush1.bf16.xpose.msra.mxu0 0
      %1802 = vmatprep.subr.bf16.mxu0 0
      %1803 = vmatpush1.bf16.xpose.msra.mxu0 0
      %1804 = vmatprep.subr.bf16.mxu0 0
      %1805 = vmatpush1.bf16.xpose.msra.mxu0 0
      %1806 = vmatprep.mubr.bf16.mxu0 0
      %1807 = vmatmul.mubr.bf16.gmra.mrb[0].mxu0 %v1769
      %v1808 = vpop.f32.mrb[0].mxu0
      %v1809 = vadd.f32 0.0, %v1808
      %v1810 = vpop.f32.mrb[0].mxu0
      %v1811 = vpop.f32.mrb[0].mxu0
      %v1812 = vadd.f32 0.0, %v1811
      %v1813 = vpop.f32.mrb[0].mxu0
      %1814 = vdwg.mxu0
      %v1815 = vsel %vm723, %v1758, -inf
      %1816 = vmax.xlane.f32.xlu0 %v1815
      %v1817 = vpop.xlane.xlu0 %1816
      %v1818 = vsel %vm723, %v1761, -inf
      %1819 = vmax.xlane.f32.xlu0 %v1818
      %v1820 = vpop.xlane.xlu0 %1819
      %v1821 = vsel %vm723, %v1809, -inf
      %1822 = vmax.xlane.f32.xlu0 %v1821
      %v1823 = vpop.xlane.xlu0 %1822
      %v1824 = vsel %vm723, %v1812, -inf
      %1825 = vmax.xlane.f32.xlu0 %v1824
      %v1826 = vpop.xlane.xlu0 %1825
      %v1827 = vsub.f32 %v1758, %v1817
      %v1828 = vsub.f32 %v1761, %v1820
      %v1829 = vsub.f32 %v1809, %v1823
      %v1830 = vsub.f32 %v1812, %v1826
      %v1831 = vmul.f32 %v1827, 1.442695
      %v1832 = vpow.pop %v1831
      %v1833 = vmul.f32 %v1828, 1.442695
      %v1834 = vpow.pop %v1833
      %v1835 = vmul.f32 %v1829, 1.442695
      %v1836 = vpow.pop %v1835
      %v1837 = vmul.f32 %v1830, 1.442695
      %v1838 = vpow.pop %v1837
      %v1839 = vsel %vm723, %v1832, 0.0
      %1840 = vadd.xlane.f32.xlu0 %v1839
      %v1841 = vpop.xlane.xlu0 %1840
      %v1842 = vsel %vm723, %v1834, 0.0
      %1843 = vadd.xlane.f32.xlu0 %v1842
      %v1844 = vpop.xlane.xlu0 %1843
      %v1845 = vsel %vm723, %v1836, 0.0
      %1846 = vadd.xlane.f32.xlu0 %v1845
      %v1847 = vpop.xlane.xlu0 %1846
      %v1848 = vsel %vm723, %v1838, 0.0
      %1849 = vadd.xlane.f32.xlu0 %v1848
      %v1850 = vpop.xlane.xlu0 %1849
      %v1851 = vrcp.pop %v1841
      %v1852 = vrcp.pop %v1844
      %v1853 = vrcp.pop %v1847
      %v1854 = vrcp.pop %v1850
      %v1855 = vmul.f32 %v1832, %v1851
      %v1856 = vmul.f32 %v1834, %v1852
      %v1857 = vmul.f32 %v1836, %v1853
      %v1858 = vmul.f32 %v1838, %v1854
      %v1859 = vpack.c.bf16 %v1856, %v1855
      %v1860 = vpack.c.bf16 %v1858, %v1857
      %1861 = vrot.lane.b32.xlu0 %v721, 48
      %v1862 = vpop.permute.xlu0 %1861
      %v1864 = vsel %vm723, %v1859, 0
      %v1867 = vsel %vm870, %v1862, 0
      %1869 = vmatprep.subr.bf16.mxu0 0
      %1870 = vmatpush1.bf16.msra.mxu0 %v1867
      %1871 = vmatprep.subr.bf16.mxu0 0
      %1872 = vmatpush1.bf16.msra.mxu0 0
      %1873 = vmatprep.subr.bf16.mxu0 0
      %1874 = vmatpush1.bf16.msra.mxu0 0
      %1875 = vmatprep.subr.bf16.mxu0 0
      %1876 = vmatpush1.bf16.msra.mxu0 0
      %1877 = vmatprep.subr.bf16.mxu0 0
      %1878 = vmatpush1.bf16.msra.mxu0 0
      %1879 = vmatprep.subr.bf16.mxu0 0
      %1880 = vmatpush1.bf16.msra.mxu0 0
      %1881 = vmatprep.subr.bf16.mxu0 0
      %1882 = vmatpush1.bf16.msra.mxu0 0
      %1883 = vmatprep.subr.bf16.mxu0 0
      %1884 = vmatpush1.bf16.msra.mxu0 0
      %1885 = vmatprep.subr.bf16.mxu0 0
      %1886 = vmatpush1.bf16.msra.mxu0 0
      %1887 = vmatprep.subr.bf16.mxu0 0
      %1888 = vmatpush1.bf16.msra.mxu0 0
      %1889 = vmatprep.subr.bf16.mxu0 0
      %1890 = vmatpush1.bf16.msra.mxu0 0
      %1891 = vmatprep.subr.bf16.mxu0 0
      %1892 = vmatpush1.bf16.msra.mxu0 0
      %1893 = vmatprep.subr.bf16.mxu0 0
      %1894 = vmatpush1.bf16.msra.mxu0 0
      %1895 = vmatprep.subr.bf16.mxu0 0
      %1896 = vmatpush1.bf16.msra.mxu0 0
      %1897 = vmatprep.subr.bf16.mxu0 0
      %1898 = vmatpush1.bf16.msra.mxu0 0
      %1899 = vmatprep.subr.bf16.mxu0 0
      %1900 = vmatpush1.bf16.msra.mxu0 0
      %1901 = vmatprep.mubr.bf16.mxu0 0
      %1902 = vmatmul.mubr.bf16.gmra.mrb[0].mxu0 %v1864
      %v1903 = vpop.f32.mrb[0].mxu0
      %v1904 = vadd.f32 0.0, %v1903
      %v1905 = vpop.f32.mrb[0].mxu0
      %v1906 = vpop.f32.mrb[0].mxu0
      %v1907 = vadd.f32 0.0, %v1906
      %v1908 = vpop.f32.mrb[0].mxu0
      %1909 = vdwg.mxu0
      %1910 = vrot.lane.b32.xlu0 %v722, 48
      %v1911 = vpop.permute.xlu0 %1910
      %v1913 = vsel %vm723, %v1860, 0
      %v1916 = vsel %vm870, %v1911, 0
      %1918 = vmatprep.subr.bf16.mxu0 0
      %1919 = vmatpush1.bf16.msra.mxu0 %v1916
      %1920 = vmatprep.subr.bf16.mxu0 0
      %1921 = vmatpush1.bf16.msra.mxu0 0
      %1922 = vmatprep.subr.bf16.mxu0 0
      %1923 = vmatpush1.bf16.msra.mxu0 0
      %1924 = vmatprep.subr.bf16.mxu0 0
      %1925 = vmatpush1.bf16.msra.mxu0 0
      %1926 = vmatprep.subr.bf16.mxu0 0
      %1927 = vmatpush1.bf16.msra.mxu0 0
      %1928 = vmatprep.subr.bf16.mxu0 0
      %1929 = vmatpush1.bf16.msra.mxu0 0
      %1930 = vmatprep.subr.bf16.mxu0 0
      %1931 = vmatpush1.bf16.msra.mxu0 0
      %1932 = vmatprep.subr.bf16.mxu0 0
      %1933 = vmatpush1.bf16.msra.mxu0 0
      %1934 = vmatprep.subr.bf16.mxu0 0
      %1935 = vmatpush1.bf16.msra.mxu0 0
      %1936 = vmatprep.subr.bf16.mxu0 0
      %1937 = vmatpush1.bf16.msra.mxu0 0
      %1938 = vmatprep.subr.bf16.mxu0 0
      %1939 = vmatpush1.bf16.msra.mxu0 0
      %1940 = vmatprep.subr.bf16.mxu0 0
      %1941 = vmatpush1.bf16.msra.mxu0 0
      %1942 = vmatprep.subr.bf16.mxu0 0
      %1943 = vmatpush1.bf16.msra.mxu0 0
      %1944 = vmatprep.subr.bf16.mxu0 0
      %1945 = vmatpush1.bf16.msra.mxu0 0
      %1946 = vmatprep.subr.bf16.mxu0 0
      %1947 = vmatpush1.bf16.msra.mxu0 0
      %1948 = vmatprep.subr.bf16.mxu0 0
      %1949 = vmatpush1.bf16.msra.mxu0 0
      %1950 = vmatprep.mubr.bf16.mxu0 0
      %1951 = vmatmul.mubr.bf16.gmra.mrb[0].mxu0 %v1913
      %v1952 = vpop.f32.mrb[0].mxu0
      %v1953 = vadd.f32 0.0, %v1952
      %v1954 = vpop.f32.mrb[0].mxu0
      %v1955 = vpop.f32.mrb[0].mxu0
      %v1956 = vadd.f32 0.0, %v1955
      %v1957 = vpop.f32.mrb[0].mxu0
      %1958 = vdwg.mxu0
      %v1959 = vpack.c.bf16 %v1907, %v1904
      %v1960 = vpack.c.bf16 %v1956, %v1953
      %1961 = vrot.lane.b32.xlu0 %v719, 88
      %v1962 = vpop.permute.xlu0 %1961
      %1963 = vrot.lane.b32.xlu0 %v721, 88
      %v1964 = vpop.permute.xlu0 %1963
      %v1966 = vsel %vm723, %v1962, 0
      %v1969 = vsel %vm723, %v1964, 0
      %1971 = vmatprep.subr.bf16.mxu0 0
      %1972 = vmatpush1.bf16.xpose.msra.mxu0 %v1969
      %1973 = vmatprep.subr.bf16.mxu0 0
      %1974 = vmatpush1.bf16.xpose.msra.mxu0 0
      %1975 = vmatprep.subr.bf16.mxu0 0
      %1976 = vmatpush1.bf16.xpose.msra.mxu0 0
      %1977 = vmatprep.subr.bf16.mxu0 0
      %1978 = vmatpush1.bf16.xpose.msra.mxu0 0
      %1979 = vmatprep.subr.bf16.mxu0 0
      %1980 = vmatpush1.bf16.xpose.msra.mxu0 0
      %1981 = vmatprep.subr.bf16.mxu0 0
      %1982 = vmatpush1.bf16.xpose.msra.mxu0 0
      %1983 = vmatprep.subr.bf16.mxu0 0
      %1984 = vmatpush1.bf16.xpose.msra.mxu0 0
      %1985 = vmatprep.subr.bf16.mxu0 0
      %1986 = vmatpush1.bf16.xpose.msra.mxu0 0
      %1987 = vmatprep.subr.bf16.mxu0 0
      %1988 = vmatpush1.bf16.xpose.msra.mxu0 0
      %1989 = vmatprep.subr.bf16.mxu0 0
      %1990 = vmatpush1.bf16.xpose.msra.mxu0 0
      %1991 = vmatprep.subr.bf16.mxu0 0
      %1992 = vmatpush1.bf16.xpose.msra.mxu0 0
      %1993 = vmatprep.subr.bf16.mxu0 0
      %1994 = vmatpush1.bf16.xpose.msra.mxu0 0
      %1995 = vmatprep.subr.bf16.mxu0 0
      %1996 = vmatpush1.bf16.xpose.msra.mxu0 0
      %1997 = vmatprep.subr.bf16.mxu0 0
      %1998 = vmatpush1.bf16.xpose.msra.mxu0 0
      %1999 = vmatprep.subr.bf16.mxu0 0
      %2000 = vmatpush1.bf16.xpose.msra.mxu0 0
      %2001 = vmatprep.subr.bf16.mxu0 0
      %2002 = vmatpush1.bf16.xpose.msra.mxu0 0
      %2003 = vmatprep.mubr.bf16.mxu0 0
      %2004 = vmatmul.mubr.bf16.gmra.mrb[0].mxu0 %v1966
      %v2005 = vpop.f32.mrb[0].mxu0
      %v2006 = vadd.f32 0.0, %v2005
      %v2007 = vpop.f32.mrb[0].mxu0
      %v2008 = vpop.f32.mrb[0].mxu0
      %v2009 = vadd.f32 0.0, %v2008
      %v2010 = vpop.f32.mrb[0].mxu0
      %2011 = vdwg.mxu0
      %2012 = vrot.lane.b32.xlu0 %v720, 88
      %v2013 = vpop.permute.xlu0 %2012
      %2014 = vrot.lane.b32.xlu0 %v722, 88
      %v2015 = vpop.permute.xlu0 %2014
      %v2017 = vsel %vm723, %v2013, 0
      %v2020 = vsel %vm723, %v2015, 0
      %2022 = vmatprep.subr.bf16.mxu0 0
      %2023 = vmatpush1.bf16.xpose.msra.mxu0 %v2020
      %2024 = vmatprep.subr.bf16.mxu0 0
      %2025 = vmatpush1.bf16.xpose.msra.mxu0 0
      %2026 = vmatprep.subr.bf16.mxu0 0
      %2027 = vmatpush1.bf16.xpose.msra.mxu0 0
      %2028 = vmatprep.subr.bf16.mxu0 0
      %2029 = vmatpush1.bf16.xpose.msra.mxu0 0
      %2030 = vmatprep.subr.bf16.mxu0 0
      %2031 = vmatpush1.bf16.xpose.msra.mxu0 0
      %2032 = vmatprep.subr.bf16.mxu0 0
      %2033 = vmatpush1.bf16.xpose.msra.mxu0 0
      %2034 = vmatprep.subr.bf16.mxu0 0
      %2035 = vmatpush1.bf16.xpose.msra.mxu0 0
      %2036 = vmatprep.subr.bf16.mxu0 0
      %2037 = vmatpush1.bf16.xpose.msra.mxu0 0
      %2038 = vmatprep.subr.bf16.mxu0 0
      %2039 = vmatpush1.bf16.xpose.msra.mxu0 0
      %2040 = vmatprep.subr.bf16.mxu0 0
      %2041 = vmatpush1.bf16.xpose.msra.mxu0 0
      %2042 = vmatprep.subr.bf16.mxu0 0
      %2043 = vmatpush1.bf16.xpose.msra.mxu0 0
      %2044 = vmatprep.subr.bf16.mxu0 0
      %2045 = vmatpush1.bf16.xpose.msra.mxu0 0
      %2046 = vmatprep.subr.bf16.mxu0 0
      %2047 = vmatpush1.bf16.xpose.msra.mxu0 0
      %2048 = vmatprep.subr.bf16.mxu0 0
      %2049 = vmatpush1.bf16.xpose.msra.mxu0 0
      %2050 = vmatprep.subr.bf16.mxu0 0
      %2051 = vmatpush1.bf16.xpose.msra.mxu0 0
      %2052 = vmatprep.subr.bf16.mxu0 0
      %2053 = vmatpush1.bf16.xpose.msra.mxu0 0
      %2054 = vmatprep.mubr.bf16.mxu0 0
      %2055 = vmatmul.mubr.bf16.gmra.mrb[0].mxu0 %v2017
      %v2056 = vpop.f32.mrb[0].mxu0
      %v2057 = vadd.f32 0.0, %v2056
      %v2058 = vpop.f32.mrb[0].mxu0
      %v2059 = vpop.f32.mrb[0].mxu0
      %v2060 = vadd.f32 0.0, %v2059
      %v2061 = vpop.f32.mrb[0].mxu0
      %2062 = vdwg.mxu0
      %v2063 = vsel %vm723, %v2006, -inf
      %2064 = vmax.xlane.f32.xlu0 %v2063
      %v2065 = vpop.xlane.xlu0 %2064
      %v2066 = vsel %vm723, %v2009, -inf
      %2067 = vmax.xlane.f32.xlu0 %v2066
      %v2068 = vpop.xlane.xlu0 %2067
      %v2069 = vsel %vm723, %v2057, -inf
      %2070 = vmax.xlane.f32.xlu0 %v2069
      %v2071 = vpop.xlane.xlu0 %2070
      %v2072 = vsel %vm723, %v2060, -inf
      %2073 = vmax.xlane.f32.xlu0 %v2072
      %v2074 = vpop.xlane.xlu0 %2073
      %v2075 = vsub.f32 %v2006, %v2065
      %v2076 = vsub.f32 %v2009, %v2068
      %v2077 = vsub.f32 %v2057, %v2071
      %v2078 = vsub.f32 %v2060, %v2074
      %v2079 = vmul.f32 %v2075, 1.442695
      %v2080 = vpow.pop %v2079
      %v2081 = vmul.f32 %v2076, 1.442695
      %v2082 = vpow.pop %v2081
      %v2083 = vmul.f32 %v2077, 1.442695
      %v2084 = vpow.pop %v2083
      %v2085 = vmul.f32 %v2078, 1.442695
      %v2086 = vpow.pop %v2085
      %v2087 = vsel %vm723, %v2080, 0.0
      %2088 = vadd.xlane.f32.xlu0 %v2087
      %v2089 = vpop.xlane.xlu0 %2088
      %v2090 = vsel %vm723, %v2082, 0.0
      %2091 = vadd.xlane.f32.xlu0 %v2090
      %v2092 = vpop.xlane.xlu0 %2091
      %v2093 = vsel %vm723, %v2084, 0.0
      %2094 = vadd.xlane.f32.xlu0 %v2093
      %v2095 = vpop.xlane.xlu0 %2094
      %v2096 = vsel %vm723, %v2086, 0.0
      %2097 = vadd.xlane.f32.xlu0 %v2096
      %v2098 = vpop.xlane.xlu0 %2097
      %v2099 = vrcp.pop %v2089
      %v2100 = vrcp.pop %v2092
      %v2101 = vrcp.pop %v2095
      %v2102 = vrcp.pop %v2098
      %v2103 = vmul.f32 %v2080, %v2099
      %v2104 = vmul.f32 %v2082, %v2100
      %v2105 = vmul.f32 %v2084, %v2101
      %v2106 = vmul.f32 %v2086, %v2102
      %v2107 = vpack.c.bf16 %v2104, %v2103
      %v2108 = vpack.c.bf16 %v2106, %v2105
      %2109 = vrot.lane.b32.xlu0 %v721, 40
      %v2110 = vpop.permute.xlu0 %2109
      %v2112 = vsel %vm723, %v2107, 0
      %v2115 = vsel %vm870, %v2110, 0
      %2117 = vmatprep.subr.bf16.mxu0 0
      %2118 = vmatpush1.bf16.msra.mxu0 %v2115
      %2119 = vmatprep.subr.bf16.mxu0 0
      %2120 = vmatpush1.bf16.msra.mxu0 0
      %2121 = vmatprep.subr.bf16.mxu0 0
      %2122 = vmatpush1.bf16.msra.mxu0 0
      %2123 = vmatprep.subr.bf16.mxu0 0
      %2124 = vmatpush1.bf16.msra.mxu0 0
      %2125 = vmatprep.subr.bf16.mxu0 0
      %2126 = vmatpush1.bf16.msra.mxu0 0
      %2127 = vmatprep.subr.bf16.mxu0 0
      %2128 = vmatpush1.bf16.msra.mxu0 0
      %2129 = vmatprep.subr.bf16.mxu0 0
      %2130 = vmatpush1.bf16.msra.mxu0 0
      %2131 = vmatprep.subr.bf16.mxu0 0
      %2132 = vmatpush1.bf16.msra.mxu0 0
      %2133 = vmatprep.subr.bf16.mxu0 0
      %2134 = vmatpush1.bf16.msra.mxu0 0
      %2135 = vmatprep.subr.bf16.mxu0 0
      %2136 = vmatpush1.bf16.msra.mxu0 0
      %2137 = vmatprep.subr.bf16.mxu0 0
      %2138 = vmatpush1.bf16.msra.mxu0 0
      %2139 = vmatprep.subr.bf16.mxu0 0
      %2140 = vmatpush1.bf16.msra.mxu0 0
      %2141 = vmatprep.subr.bf16.mxu0 0
      %2142 = vmatpush1.bf16.msra.mxu0 0
      %2143 = vmatprep.subr.bf16.mxu0 0
      %2144 = vmatpush1.bf16.msra.mxu0 0
      %2145 = vmatprep.subr.bf16.mxu0 0
      %2146 = vmatpush1.bf16.msra.mxu0 0
      %2147 = vmatprep.subr.bf16.mxu0 0
      %2148 = vmatpush1.bf16.msra.mxu0 0
      %2149 = vmatprep.mubr.bf16.mxu0 0
      %2150 = vmatmul.mubr.bf16.gmra.mrb[0].mxu0 %v2112
      %v2151 = vpop.f32.mrb[0].mxu0
      %v2152 = vadd.f32 0.0, %v2151
      %v2153 = vpop.f32.mrb[0].mxu0
      %v2154 = vpop.f32.mrb[0].mxu0
      %v2155 = vadd.f32 0.0, %v2154
      %v2156 = vpop.f32.mrb[0].mxu0
      %2157 = vdwg.mxu0
      %2158 = vrot.lane.b32.xlu0 %v722, 40
      %v2159 = vpop.permute.xlu0 %2158
      %v2161 = vsel %vm723, %v2108, 0
      %v2164 = vsel %vm870, %v2159, 0
      %2166 = vmatprep.subr.bf16.mxu0 0
      %2167 = vmatpush1.bf16.msra.mxu0 %v2164
      %2168 = vmatprep.subr.bf16.mxu0 0
      %2169 = vmatpush1.bf16.msra.mxu0 0
      %2170 = vmatprep.subr.bf16.mxu0 0
      %2171 = vmatpush1.bf16.msra.mxu0 0
      %2172 = vmatprep.subr.bf16.mxu0 0
      %2173 = vmatpush1.bf16.msra.mxu0 0
      %2174 = vmatprep.subr.bf16.mxu0 0
      %2175 = vmatpush1.bf16.msra.mxu0 0
      %2176 = vmatprep.subr.bf16.mxu0 0
      %2177 = vmatpush1.bf16.msra.mxu0 0
      %2178 = vmatprep.subr.bf16.mxu0 0
      %2179 = vmatpush1.bf16.msra.mxu0 0
      %2180 = vmatprep.subr.bf16.mxu0 0
      %2181 = vmatpush1.bf16.msra.mxu0 0
      %2182 = vmatprep.subr.bf16.mxu0 0
      %2183 = vmatpush1.bf16.msra.mxu0 0
      %2184 = vmatprep.subr.bf16.mxu0 0
      %2185 = vmatpush1.bf16.msra.mxu0 0
      %2186 = vmatprep.subr.bf16.mxu0 0
      %2187 = vmatpush1.bf16.msra.mxu0 0
      %2188 = vmatprep.subr.bf16.mxu0 0
      %2189 = vmatpush1.bf16.msra.mxu0 0
      %2190 = vmatprep.subr.bf16.mxu0 0
      %2191 = vmatpush1.bf16.msra.mxu0 0
      %2192 = vmatprep.subr.bf16.mxu0 0
      %2193 = vmatpush1.bf16.msra.mxu0 0
      %2194 = vmatprep.subr.bf16.mxu0 0
      %2195 = vmatpush1.bf16.msra.mxu0 0
      %2196 = vmatprep.subr.bf16.mxu0 0
      %2197 = vmatpush1.bf16.msra.mxu0 0
      %2198 = vmatprep.mubr.bf16.mxu0 0
      %2199 = vmatmul.mubr.bf16.gmra.mrb[0].mxu0 %v2161
      %v2200 = vpop.f32.mrb[0].mxu0
      %v2201 = vadd.f32 0.0, %v2200
      %v2202 = vpop.f32.mrb[0].mxu0
      %v2203 = vpop.f32.mrb[0].mxu0
      %v2204 = vadd.f32 0.0, %v2203
      %v2205 = vpop.f32.mrb[0].mxu0
      %2206 = vdwg.mxu0
      %v2207 = vpack.c.bf16 %v2155, %v2152
      %v2208 = vpack.c.bf16 %v2204, %v2201
      %2211 = vrot.lane.b32.xlu0 %v1215, 8
      %v2212 = vpop.permute.xlu0 %2211
      %2213 = vrot.lane.b32.xlu0 %v1216, 8
      %v2214 = vpop.permute.xlu0 %2213
      %2217 = vrot.lane.b32.xlu0 %v1463, 16
      %v2218 = vpop.permute.xlu0 %2217
      %2219 = vrot.lane.b32.xlu0 %v1464, 16
      %v2220 = vpop.permute.xlu0 %2219
      %2223 = vrot.lane.b32.xlu0 %v1711, 24
      %v2224 = vpop.permute.xlu0 %2223
      %2225 = vrot.lane.b32.xlu0 %v1712, 24
      %v2226 = vpop.permute.xlu0 %2225
      %2229 = vrot.lane.b32.xlu0 %v1959, 32
      %v2230 = vpop.permute.xlu0 %2229
      %2231 = vrot.lane.b32.xlu0 %v1960, 32
      %v2232 = vpop.permute.xlu0 %2231
      %2235 = vrot.lane.b32.xlu0 %v2207, 40
      %v2236 = vpop.permute.xlu0 %2235
      %2237 = vrot.lane.b32.xlu0 %v2208, 40
      %v2238 = vpop.permute.xlu0 %2237
      %v2241 = vsel %vm723, %v965, %v2212
      %v2244 = vsel %vm723, %v966, %v2214
      %vm2245 = vcmask 130048
      %v2247 = vsel %vm2245, %v2241, %v2218
      %v2249 = vsel %vm2245, %v2244, %v2220
      %vm2250 = vcmask 195584
      %v2252 = vsel %vm2250, %v2247, %v2224
      %v2254 = vsel %vm2250, %v2249, %v2226
      %vm2255 = vcmask 261120
      %v2257 = vsel %vm2255, %v2252, %v2230
      %v2259 = vsel %vm2255, %v2254, %v2232
      %vm2260 = vcmask 326656
      %v2262 = vsel %vm2260, %v2257, %v2236
      %v2264 = vsel %vm2260, %v2259, %v2238
      %v2265 = vld [vmem:[%s6] sm:$0xf]
      %v2266 = vld [vmem:[%s6 + $0x4] sm:$0xf]
      %v2267 = vld [vmem:[%s6 + $0x8] sm:$0xf]
      %v2268 = vld [vmem:[%s6 + $0xc] sm:$0xf]
      %v2269 = vld [vmem:[%s6 + $0x10] sm:$0xf]
      %v2270 = vld [vmem:[%s6 + $0x14] sm:$0xf]
      %v2271 = vld [vmem:[%s7] sm:$0x1]
      %v2273 = vlaneseq
      %v2274 = vshrl.u32 %v2273, 7
      %v2275 = vsub.s32 0, %v2274
      %v2276 = vrot.slane %v2271, %v2275
      %v2284 = vunpack.c.l.b16 %v2265
      %v2285 = vunpack.c.l.b16 %v2266
      %v2286 = vunpack.c.l.b16 %v2267
      %v2287 = vunpack.c.l.b16 %v2268
      %v2288 = vunpack.c.l.b16 %v2269
      %v2289 = vunpack.c.l.b16 %v2270
      %v2290 = vpack.c.b16 %v2285, %v2284
      %v2291 = vpack.c.b16 %v2287, %v2286
      %v2292 = vpack.c.b16 %v2289, %v2288
      %v2296 = vsel %vm587, %v2262, 0
      %v2298 = vsel %vm587, %v2264, 0
      %2300 = vmatprep.subr.bf16.mxu0 0
      %2301 = vmatpush1.bf16.msra.mxu0 %v2290
      %2302 = vmatprep.subr.bf16.mxu0 0
      %2303 = vmatpush1.bf16.msra.mxu0 %v2291
      %2304 = vmatprep.subr.bf16.mxu0 0
      %2305 = vmatpush1.bf16.msra.mxu0 %v2292
      %2306 = vmatprep.subr.bf16.mxu0 0
      %2307 = vmatpush1.bf16.msra.mxu0 0
      %2308 = vmatprep.subr.bf16.mxu0 0
      %2309 = vmatpush1.bf16.msra.mxu0 0
      %2310 = vmatprep.subr.bf16.mxu0 0
      %2311 = vmatpush1.bf16.msra.mxu0 0
      %2312 = vmatprep.subr.bf16.mxu0 0
      %2313 = vmatpush1.bf16.msra.mxu0 0
      %2314 = vmatprep.subr.bf16.mxu0 0
      %2315 = vmatpush1.bf16.msra.mxu0 0
      %2316 = vmatprep.subr.bf16.mxu0 0
      %2317 = vmatpush1.bf16.msra.mxu0 0
      %2318 = vmatprep.subr.bf16.mxu0 0
      %2319 = vmatpush1.bf16.msra.mxu0 0
      %2320 = vmatprep.subr.bf16.mxu0 0
      %2321 = vmatpush1.bf16.msra.mxu0 0
      %2322 = vmatprep.subr.bf16.mxu0 0
      %2323 = vmatpush1.bf16.msra.mxu0 0
      %2324 = vmatprep.subr.bf16.mxu0 0
      %2325 = vmatpush1.bf16.msra.mxu0 0
      %2326 = vmatprep.subr.bf16.mxu0 0
      %2327 = vmatpush1.bf16.msra.mxu0 0
      %2328 = vmatprep.subr.bf16.mxu0 0
      %2329 = vmatpush1.bf16.msra.mxu0 0
      %2330 = vmatprep.subr.bf16.mxu0 0
      %2331 = vmatpush1.bf16.msra.mxu0 0
      %2332 = vmatprep.mubr.bf16.mxu0 0
      %2333 = vmatmul.mubr.bf16.gmra.mrb[0].mxu0 %v2296
      %v2334 = vpop.f32.mrb[0].mxu0
      %v2335 = vadd.f32 %v2276, %v2334
      %v2336 = vpop.f32.mrb[0].mxu0
      %v2337 = vpop.f32.mrb[0].mxu0
      %v2338 = vadd.f32 %v2276, %v2337
      %v2339 = vpop.f32.mrb[0].mxu0
      %2340 = vmatprep.mubr.bf16.mxu0 0
      %2341 = vmatmul.mubr.bf16.gmra.mrb[0].mxu0 %v2298
      %v2342 = vpop.f32.mrb[0].mxu0
      %v2343 = vadd.f32 %v2276, %v2342
      %v2344 = vpop.f32.mrb[0].mxu0
      %v2345 = vpop.f32.mrb[0].mxu0
      %v2346 = vadd.f32 %v2276, %v2345
      %v2347 = vpop.f32.mrb[0].mxu0
      %2348 = vdwg.mxu0
      %v2349 = vadd.f32 %v548, %v2335
      %v2350 = vadd.f32 %v549, %v2338
      %v2351 = vadd.f32 %v550, %v2343
      %v2352 = vadd.f32 %v551, %v2346
      %v2353 = vld [vmem:[%s8] sm:$0x1]
      %v2354 = vld [vmem:[%s9] sm:$0x1]
      %v2355 = vsel %vm587, %v2349, 0.0
      %2356 = vadd.xlane.f32.xlu0 %v2355
      %v2357 = vpop.xlane.xlu0 %2356
      %v2358 = vsel %vm587, %v2350, 0.0
      %2359 = vadd.xlane.f32.xlu0 %v2358
      %v2360 = vpop.xlane.xlu0 %2359
      %v2361 = vsel %vm587, %v2351, 0.0
      %2362 = vadd.xlane.f32.xlu0 %v2361
      %v2363 = vpop.xlane.xlu0 %2362
      %v2364 = vsel %vm587, %v2352, 0.0
      %2365 = vadd.xlane.f32.xlu0 %v2364
      %v2366 = vpop.xlane.xlu0 %2365
      %v2367 = vrcp.pop 48.0
      %v2368 = vmul.f32 %v2357, %v2367
      %v2369 = vmul.f32 %v2360, %v2367
      %v2370 = vmul.f32 %v2363, %v2367
      %v2371 = vmul.f32 %v2366, %v2367
      %v2372 = vsub.f32 %v2349, %v2368
      %v2373 = vsub.f32 %v2350, %v2369
      %v2374 = vsub.f32 %v2351, %v2370
      %v2375 = vsub.f32 %v2352, %v2371
      %v2376 = vmul.f32 %v2372, %v2372
      %v2377 = vmul.f32 %v2373, %v2373
      %v2378 = vmul.f32 %v2374, %v2374
      %v2379 = vmul.f32 %v2375, %v2375
      %v2380 = vsel %vm587, %v2376, 0.0
      %2381 = vadd.xlane.f32.xlu0 %v2380
      %v2382 = vpop.xlane.xlu0 %2381
      %v2383 = vsel %vm587, %v2377, 0.0
      %2384 = vadd.xlane.f32.xlu0 %v2383
      %v2385 = vpop.xlane.xlu0 %2384
      %v2386 = vsel %vm587, %v2378, 0.0
      %2387 = vadd.xlane.f32.xlu0 %v2386
      %v2388 = vpop.xlane.xlu0 %2387
      %v2389 = vsel %vm587, %v2379, 0.0
      %2390 = vadd.xlane.f32.xlu0 %v2389
      %v2391 = vpop.xlane.xlu0 %2390
      %v2392 = vmul.f32 %v2382, %v2367
      %v2393 = vmul.f32 %v2385, %v2367
      %v2394 = vmul.f32 %v2388, %v2367
      %v2395 = vmul.f32 %v2391, %v2367
      %v2396 = vadd.f32 %v2392, 1e-05
      %v2397 = vadd.f32 %v2393, 1e-05
      %v2398 = vadd.f32 %v2394, 1e-05
      %v2399 = vadd.f32 %v2395, 1e-05
      %v2400 = vrsqrt.pop %v2396
      %v2401 = vrsqrt.pop %v2397
      %v2402 = vrsqrt.pop %v2398
      %v2403 = vrsqrt.pop %v2399
      %v2404 = vmul.f32 %v2372, %v2400
      %v2405 = vmul.f32 %v2373, %v2401
      %v2406 = vmul.f32 %v2374, %v2402
      %v2407 = vmul.f32 %v2375, %v2403
      %v2409 = vlaneseq
      %v2410 = vshrl.u32 %v2409, 7
      %v2411 = vsub.s32 0, %v2410
      %v2412 = vrot.slane %v2353, %v2411
      %v2414 = vmul.f32 %v2404, %v2412
      %v2415 = vmul.f32 %v2405, %v2412
      %v2416 = vmul.f32 %v2406, %v2412
      %v2417 = vmul.f32 %v2407, %v2412
      %v2419 = vlaneseq
      %v2420 = vshrl.u32 %v2419, 7
      %v2421 = vsub.s32 0, %v2420
      %v2422 = vrot.slane %v2354, %v2421
      %v2424 = vadd.f32 %v2414, %v2422
      %v2425 = vadd.f32 %v2415, %v2422
      %v2426 = vadd.f32 %v2416, %v2422
      %v2427 = vadd.f32 %v2417, %v2422
      %v2428 = vpack.c.bf16 %v2425, %v2424
      %v2429 = vpack.c.bf16 %v2427, %v2426
      %v2430 = vld [vmem:[%s10] sm:$0xff]
      %v2431 = vld [vmem:[%s10 + $0x8] sm:$0xff]
      %v2432 = vld [vmem:[%s10 + $0x10] sm:$0xff]
      %v2433 = vld [vmem:[%s10 + $0x18] sm:$0xff]
      %v2434 = vld [vmem:[%s10 + $0x20] sm:$0xff]
      %v2435 = vld [vmem:[%s10 + $0x28] sm:$0xff]
      %v2436 = vld [vmem:[%s11] sm:$0x3]
      %v2438 = vlaneseq
      %v2439 = vshrl.u32 %v2438, 7
      %v2440 = vsub.s32 0, %v2439
      %v2441 = vrot.slane %v2436, %v2440
      %v2442 = vlaneseq
      %v2443 = vshrl.u32 %v2442, 7
      %v2444 = vsub.s32 1, %v2443
      %v2445 = vrot.slane %v2436, %v2444
      %v2454 = vunpack.c.l.b16 %v2430
      %v2455 = vunpack.c.h.b16 %v2430
      %v2456 = vunpack.c.l.b16 %v2431
      %v2457 = vunpack.c.h.b16 %v2431
      %v2458 = vunpack.c.l.b16 %v2432
      %v2459 = vunpack.c.h.b16 %v2432
      %v2460 = vunpack.c.l.b16 %v2433
      %v2461 = vunpack.c.h.b16 %v2433
      %v2462 = vunpack.c.l.b16 %v2434
      %v2463 = vunpack.c.h.b16 %v2434
      %v2464 = vunpack.c.l.b16 %v2435
      %v2465 = vunpack.c.h.b16 %v2435
      %v2466 = vpack.c.b16 %v2456, %v2454
      %v2467 = vpack.c.b16 %v2457, %v2455
      %v2468 = vpack.c.b16 %v2460, %v2458
      %v2469 = vpack.c.b16 %v2461, %v2459
      %v2470 = vpack.c.b16 %v2464, %v2462
      %v2471 = vpack.c.b16 %v2465, %v2463
      %v2479 = vsel %vm587, %v2428, 0
      %v2482 = vsel %vm587, %v2429, 0
      %2484 = vmatprep.subr.bf16.mxu0 %v2467
      %2485 = vmatpush1.bf16.msra.mxu0 %v2466
      %2486 = vmatprep.subr.bf16.mxu0 %v2469
      %2487 = vmatpush1.bf16.msra.mxu0 %v2468
      %2488 = vmatprep.subr.bf16.mxu0 %v2471
      %2489 = vmatpush1.bf16.msra.mxu0 %v2470
      %2490 = vmatprep.subr.bf16.mxu0 0
      %2491 = vmatpush1.bf16.msra.mxu0 0
      %2492 = vmatprep.subr.bf16.mxu0 0
      %2493 = vmatpush1.bf16.msra.mxu0 0
      %2494 = vmatprep.subr.bf16.mxu0 0
      %2495 = vmatpush1.bf16.msra.mxu0 0
      %2496 = vmatprep.subr.bf16.mxu0 0
      %2497 = vmatpush1.bf16.msra.mxu0 0
      %2498 = vmatprep.subr.bf16.mxu0 0
      %2499 = vmatpush1.bf16.msra.mxu0 0
      %2500 = vmatprep.subr.bf16.mxu0 0
      %2501 = vmatpush1.bf16.msra.mxu0 0
      %2502 = vmatprep.subr.bf16.mxu0 0
      %2503 = vmatpush1.bf16.msra.mxu0 0
      %2504 = vmatprep.subr.bf16.mxu0 0
      %2505 = vmatpush1.bf16.msra.mxu0 0
      %2506 = vmatprep.subr.bf16.mxu0 0
      %2507 = vmatpush1.bf16.msra.mxu0 0
      %2508 = vmatprep.subr.bf16.mxu0 0
      %2509 = vmatpush1.bf16.msra.mxu0 0
      %2510 = vmatprep.subr.bf16.mxu0 0
      %2511 = vmatpush1.bf16.msra.mxu0 0
      %2512 = vmatprep.subr.bf16.mxu0 0
      %2513 = vmatpush1.bf16.msra.mxu0 0
      %2514 = vmatprep.subr.bf16.mxu0 0
      %2515 = vmatpush1.bf16.msra.mxu0 0
      %2516 = vmatprep.mubr.bf16.mxu0 0
      %2517 = vmatmul.mubr.bf16.gmra.mrb[0].mxu0 %v2479
      %v2518 = vpop.f32.mrb[0].mxu0
      %v2519 = vadd.f32 %v2441, %v2518
      %v2520 = vpop.f32.mrb[0].mxu0
      %v2521 = vadd.f32 %v2445, %v2520
      %v2522 = vpop.f32.mrb[0].mxu0
      %v2523 = vadd.f32 %v2441, %v2522
      %v2524 = vpop.f32.mrb[0].mxu0
      %v2525 = vadd.f32 %v2445, %v2524
      %2526 = vmatprep.mubr.bf16.mxu0 0
      %2527 = vmatmul.mubr.bf16.gmra.mrb[0].mxu0 %v2482
      %v2528 = vpop.f32.mrb[0].mxu0
      %v2529 = vadd.f32 %v2441, %v2528
      %v2530 = vpop.f32.mrb[0].mxu0
      %v2531 = vadd.f32 %v2445, %v2530
      %v2532 = vpop.f32.mrb[0].mxu0
      %v2533 = vadd.f32 %v2441, %v2532
      %v2534 = vpop.f32.mrb[0].mxu0
      %v2535 = vadd.f32 %v2445, %v2534
      %2536 = vdwg.mxu0
      %v2537 = vmax.f32 %v2519, 0.0
      %v2538 = vmax.f32 %v2521, 0.0
      %v2539 = vmax.f32 %v2523, 0.0
      %v2540 = vmax.f32 %v2525, 0.0
      %v2541 = vmax.f32 %v2529, 0.0
      %v2542 = vmax.f32 %v2531, 0.0
      %v2543 = vmax.f32 %v2533, 0.0
      %v2544 = vmax.f32 %v2535, 0.0
      %v2545 = vpack.c.bf16 %v2539, %v2537
      %v2546 = vpack.c.bf16 %v2540, %v2538
      %v2547 = vpack.c.bf16 %v2543, %v2541
      %v2548 = vpack.c.bf16 %v2544, %v2542
      %v2549 = vld [vmem:[%s12] sm:$0xf]
      %v2550 = vld [vmem:[%s12 + $0x4] sm:$0xf]
      %v2551 = vld [vmem:[%s12 + $0x8] sm:$0xf]
      %v2552 = vld [vmem:[%s12 + $0xc] sm:$0xf]
      %v2553 = vld [vmem:[%s12 + $0x10] sm:$0xf]
      %v2554 = vld [vmem:[%s12 + $0x14] sm:$0xf]
      %v2555 = vld [vmem:[%s12 + $0x18] sm:$0xf]
      %v2556 = vld [vmem:[%s12 + $0x1c] sm:$0xf]
      %v2557 = vld [vmem:[%s12 + $0x20] sm:$0xf]
      %v2558 = vld [vmem:[%s12 + $0x24] sm:$0xf]
      %v2559 = vld [vmem:[%s12 + $0x28] sm:$0xf]
      %v2560 = vld [vmem:[%s12 + $0x2c] sm:$0xf]
      %v2561 = vld [vmem:[%s12 + $0x30] sm:$0xf]
      %v2562 = vld [vmem:[%s12 + $0x34] sm:$0xf]
      %v2563 = vld [vmem:[%s12 + $0x38] sm:$0xf]
      %v2564 = vld [vmem:[%s12 + $0x3c] sm:$0xf]
      %v2565 = vld [vmem:[%s12 + $0x40] sm:$0xf]
      %v2566 = vld [vmem:[%s12 + $0x44] sm:$0xf]
      %v2567 = vld [vmem:[%s12 + $0x48] sm:$0xf]
      %v2568 = vld [vmem:[%s12 + $0x4c] sm:$0xf]
      %v2569 = vld [vmem:[%s12 + $0x50] sm:$0xf]
      %v2570 = vld [vmem:[%s12 + $0x54] sm:$0xf]
      %v2571 = vld [vmem:[%s12 + $0x58] sm:$0xf]
      %v2572 = vld [vmem:[%s12 + $0x5c] sm:$0xf]
      %v2573 = vld [vmem:[%s13] sm:$0x1]
      %v2575 = vlaneseq
      %v2576 = vshrl.u32 %v2575, 7
      %v2577 = vsub.s32 0, %v2576
      %v2578 = vrot.slane %v2573, %v2577
      %v2604 = vunpack.c.l.b16 %v2549
      %v2605 = vunpack.c.l.b16 %v2550
      %v2606 = vunpack.c.l.b16 %v2551
      %v2607 = vunpack.c.l.b16 %v2552
      %v2608 = vunpack.c.l.b16 %v2553
      %v2609 = vunpack.c.l.b16 %v2554
      %v2610 = vunpack.c.l.b16 %v2555
      %v2611 = vunpack.c.l.b16 %v2556
      %v2612 = vunpack.c.l.b16 %v2557
      %v2613 = vunpack.c.l.b16 %v2558
      %v2614 = vunpack.c.l.b16 %v2559
      %v2615 = vunpack.c.l.b16 %v2560
      %v2616 = vunpack.c.l.b16 %v2561
      %v2617 = vunpack.c.l.b16 %v2562
      %v2618 = vunpack.c.l.b16 %v2563
      %v2619 = vunpack.c.l.b16 %v2564
      %v2620 = vunpack.c.l.b16 %v2565
      %v2621 = vunpack.c.l.b16 %v2566
      %v2622 = vunpack.c.l.b16 %v2567
      %v2623 = vunpack.c.l.b16 %v2568
      %v2624 = vunpack.c.l.b16 %v2569
      %v2625 = vunpack.c.l.b16 %v2570
      %v2626 = vunpack.c.l.b16 %v2571
      %v2627 = vunpack.c.l.b16 %v2572
      %v2628 = vpack.c.b16 %v2605, %v2604
      %v2629 = vpack.c.b16 %v2607, %v2606
      %v2630 = vpack.c.b16 %v2609, %v2608
      %v2631 = vpack.c.b16 %v2611, %v2610
      %v2632 = vpack.c.b16 %v2613, %v2612
      %v2633 = vpack.c.b16 %v2615, %v2614
      %v2634 = vpack.c.b16 %v2617, %v2616
      %v2635 = vpack.c.b16 %v2619, %v2618
      %v2636 = vpack.c.b16 %v2621, %v2620
      %v2637 = vpack.c.b16 %v2623, %v2622
      %v2638 = vpack.c.b16 %v2625, %v2624
      %v2639 = vpack.c.b16 %v2627, %v2626
      %vm2652 = vcmask 523264
      %v2654 = vsel %vm2652, %v2546, 0
      %v2657 = vsel %vm2652, %v2548, 0
      %2659 = vmatprep.subr.bf16.mxu0 0
      %2660 = vmatpush1.bf16.msra.mxu0 %v2628
      %2661 = vmatprep.subr.bf16.mxu0 0
      %2662 = vmatpush1.bf16.msra.mxu0 %v2629
      %2663 = vmatprep.subr.bf16.mxu0 0
      %2664 = vmatpush1.bf16.msra.mxu0 %v2630
      %2665 = vmatprep.subr.bf16.mxu0 0
      %2666 = vmatpush1.bf16.msra.mxu0 %v2631
      %2667 = vmatprep.subr.bf16.mxu0 0
      %2668 = vmatpush1.bf16.msra.mxu0 %v2632
      %2669 = vmatprep.subr.bf16.mxu0 0
      %2670 = vmatpush1.bf16.msra.mxu0 %v2633
      %2671 = vmatprep.subr.bf16.mxu0 0
      %2672 = vmatpush1.bf16.msra.mxu0 %v2634
      %2673 = vmatprep.subr.bf16.mxu0 0
      %2674 = vmatpush1.bf16.msra.mxu0 %v2635
      %2675 = vmatprep.subr.bf16.mxu0 0
      %2676 = vmatpush1.bf16.msra.mxu0 %v2636
      %2677 = vmatprep.subr.bf16.mxu0 0
      %2678 = vmatpush1.bf16.msra.mxu0 %v2637
      %2679 = vmatprep.subr.bf16.mxu0 0
      %2680 = vmatpush1.bf16.msra.mxu0 %v2638
      %2681 = vmatprep.subr.bf16.mxu0 0
      %2682 = vmatpush1.bf16.msra.mxu0 %v2639
      %2683 = vmatprep.subr.bf16.mxu0 0
      %2684 = vmatpush1.bf16.msra.mxu0 0
      %2685 = vmatprep.subr.bf16.mxu0 0
      %2686 = vmatpush1.bf16.msra.mxu0 0
      %2687 = vmatprep.subr.bf16.mxu0 0
      %2688 = vmatpush1.bf16.msra.mxu0 0
      %2689 = vmatprep.subr.bf16.mxu0 0
      %2690 = vmatpush1.bf16.msra.mxu0 0
      %2691 = vmatprep.mubr.bf16.mxu0 %v2654
      %2692 = vmatmul.mubr.bf16.gmra.mrb[0].mxu0 %v2545
      %v2693 = vpop.f32.mrb[0].mxu0
      %v2694 = vadd.f32 %v2578, %v2693
      %v2695 = vpop.f32.mrb[0].mxu0
      %v2696 = vpop.f32.mrb[0].mxu0
      %v2697 = vadd.f32 %v2578, %v2696
      %v2698 = vpop.f32.mrb[0].mxu0
      %2699 = vmatprep.mubr.bf16.mxu0 %v2657
      %2700 = vmatmul.mubr.bf16.gmra.mrb[0].mxu0 %v2547
      %v2701 = vpop.f32.mrb[0].mxu0
      %v2702 = vadd.f32 %v2578, %v2701
      %v2703 = vpop.f32.mrb[0].mxu0
      %v2704 = vpop.f32.mrb[0].mxu0
      %v2705 = vadd.f32 %v2578, %v2704
      %v2706 = vpop.f32.mrb[0].mxu0
      %2707 = vdwg.mxu0
      %v2708 = vadd.f32 %v2424, %v2694
      %v2709 = vadd.f32 %v2425, %v2697
      %v2710 = vadd.f32 %v2426, %v2702
      %v2711 = vadd.f32 %v2427, %v2705
      %v2712 = vld [vmem:[%s14] sm:$0x1]
      %v2713 = vld [vmem:[%s15] sm:$0x1]
      %v2714 = vsel %vm587, %v2708, 0.0
      %2715 = vadd.xlane.f32.xlu0 %v2714
      %v2716 = vpop.xlane.xlu0 %2715
      %v2717 = vsel %vm587, %v2709, 0.0
      %2718 = vadd.xlane.f32.xlu0 %v2717
      %v2719 = vpop.xlane.xlu0 %2718
      %v2720 = vsel %vm587, %v2710, 0.0
      %2721 = vadd.xlane.f32.xlu0 %v2720
      %v2722 = vpop.xlane.xlu0 %2721
      %v2723 = vsel %vm587, %v2711, 0.0
      %2724 = vadd.xlane.f32.xlu0 %v2723
      %v2725 = vpop.xlane.xlu0 %2724
      %v2726 = vmul.f32 %v2716, %v2367
      %v2727 = vmul.f32 %v2719, %v2367
      %v2728 = vmul.f32 %v2722, %v2367
      %v2729 = vmul.f32 %v2725, %v2367
      %v2730 = vsub.f32 %v2708, %v2726
      %v2731 = vsub.f32 %v2709, %v2727
      %v2732 = vsub.f32 %v2710, %v2728
      %v2733 = vsub.f32 %v2711, %v2729
      %v2734 = vmul.f32 %v2730, %v2730
      %v2735 = vmul.f32 %v2731, %v2731
      %v2736 = vmul.f32 %v2732, %v2732
      %v2737 = vmul.f32 %v2733, %v2733
      %v2738 = vsel %vm587, %v2734, 0.0
      %2739 = vadd.xlane.f32.xlu0 %v2738
      %v2740 = vpop.xlane.xlu0 %2739
      %v2741 = vsel %vm587, %v2735, 0.0
      %2742 = vadd.xlane.f32.xlu0 %v2741
      %v2743 = vpop.xlane.xlu0 %2742
      %v2744 = vsel %vm587, %v2736, 0.0
      %2745 = vadd.xlane.f32.xlu0 %v2744
      %v2746 = vpop.xlane.xlu0 %2745
      %v2747 = vsel %vm587, %v2737, 0.0
      %2748 = vadd.xlane.f32.xlu0 %v2747
      %v2749 = vpop.xlane.xlu0 %2748
      %v2750 = vmul.f32 %v2740, %v2367
      %v2751 = vmul.f32 %v2743, %v2367
      %v2752 = vmul.f32 %v2746, %v2367
      %v2753 = vmul.f32 %v2749, %v2367
      %v2754 = vadd.f32 %v2750, 1e-05
      %v2755 = vadd.f32 %v2751, 1e-05
      %v2756 = vadd.f32 %v2752, 1e-05
      %v2757 = vadd.f32 %v2753, 1e-05
      %v2758 = vrsqrt.pop %v2754
      %v2759 = vrsqrt.pop %v2755
      %v2760 = vrsqrt.pop %v2756
      %v2761 = vrsqrt.pop %v2757
      %v2762 = vmul.f32 %v2730, %v2758
      %v2763 = vmul.f32 %v2731, %v2759
      %v2764 = vmul.f32 %v2732, %v2760
      %v2765 = vmul.f32 %v2733, %v2761
      %v2767 = vlaneseq
      %v2768 = vshrl.u32 %v2767, 7
      %v2769 = vsub.s32 0, %v2768
      %v2770 = vrot.slane %v2712, %v2769
      %v2772 = vmul.f32 %v2762, %v2770
      %v2773 = vmul.f32 %v2763, %v2770
      %v2774 = vmul.f32 %v2764, %v2770
      %v2775 = vmul.f32 %v2765, %v2770
      %v2777 = vlaneseq
      %v2778 = vshrl.u32 %v2777, 7
      %v2779 = vsub.s32 0, %v2778
      %v2780 = vrot.slane %v2713, %v2779
      %v2782 = vadd.f32 %v2772, %v2780
      %v2783 = vadd.f32 %v2773, %v2780
      %v2784 = vadd.f32 %v2774, %v2780
      %v2785 = vadd.f32 %v2775, %v2780
      %2786 = vst.msk [vmem:[%s545] sm:$0xff] %vm587, %v2782
      %2787 = vst.msk [vmem:[%s545 + $0x8] sm:$0xff] %vm587, %v2783
      %2788 = vst.msk [vmem:[%s545 + $0x10] sm:$0xff] %vm587, %v2784
      %2789 = vst.msk [vmem:[%s545 + $0x18] sm:$0xff] %vm587, %v2785
      %s2790 = smul.u32 4, %s27
      %p2791 = scmp.lt.s32.totalorder %s2790, 7
      %s2792 = scalar_select %p2791, %s2790, 7
      %s2793 = smul.addr %s2792, 8
      %s2794 = scalar_lea.vmem %s16, %s2793
      // Predicated region
      $region85: #{tpu_custom_call.1} parent=83 // pred_check
        %p2795 = pneg %p391
      $region86: #{tpu_custom_call.1} parent=83 // pred_check_branch
        %2797 = sbr.rel (%p2795) target = $region88
      $region87: #{tpu_custom_call.1} parent=83 // pred_region
        %s2798 = smul.u32 4, %s27
      $region88: #{tpu_custom_call.1} parent=83 // pred_fallthru
        _
    $region84: #{tpu_custom_call.1} parent=5 // pred_fallthru
      _
    %p2799 = scmp.le.s32.totalorder 2, %s22
    // Predicated region
    $region89: #{tpu_custom_call.1} parent=5 // pred_check
      %p2800 = pneg %p2799
    $region90: #{tpu_custom_call.1} parent=5 // pred_check_branch
      %2802 = sbr.rel (%p2800) target = $region92
    $region91: #{tpu_custom_call.1} parent=5 // pred_region
      %s2803 = ssub.s32 %s22, 2
      // Predicated region
      $region93: #{tpu_custom_call.1} parent=91 // pred_check
        %p2804 = pneg %p397
      $region94: #{tpu_custom_call.1} parent=91 // pred_check_branch
        %2806 = sbr.rel (%p2804) target = $region96
      $region95: #{tpu_custom_call.1} parent=91 // pred_region
        %s2807 = smul.u32 4, %s28
        %p2808 = scmp.lt.s32.totalorder %s2807, 7
        %s2809 = scalar_select %p2808, %s2807, 7
        %s2810 = smul.addr %s2809, 8
        %s2811 = scalar_lea.vmem %s16, %s2810
      $region96: #{tpu_custom_call.1} parent=91 // pred_fallthru
        _
    $region92: #{tpu_custom_call.1} parent=5 // pred_fallthru
      _
  $region6: #{tpu_custom_call.1} parent=0 // loop_footer
    %s26 = sadd.s32 1, %s22
  $region7: #{tpu_custom_call.1} parent=0 // loop_footer_branch
    %21 = sbr.rel target = $region3
  $region8: #{tpu_custom_call.1} parent=0 // loop_exit
    _

</llo_original>
